<compile_context>
chip_gen: v6e
topology: v6e:2x2x1
jax: 0.10.0
libtpu: 0.0.40
codegen_flags: <defaults>
</compile_context>

<pallas_src>
import functools

import jax
import jax.numpy as jnp
from jax.experimental import pallas as pl
from jax.experimental.pallas import tpu as pltpu


# ----------------------------------------------------------------------------- hw-derived knobs

def _tpu_vmem_capacity_bytes():
    try:
        return int(pltpu.get_tpu_info().vmem_capacity_bytes)
    except Exception:
        return 128 * 1024 * 1024


_VMEM_CAP = _tpu_vmem_capacity_bytes()
# leave headroom below physical VMEM; v5e/v6e -> ~96 MiB, v7x -> ~48 MiB
_VMEM_LIMIT = min(int(_VMEM_CAP * 3 // 4), 96 * 1024 * 1024)
# measured mem-bound tiling: 512-1024 row tiles hit ~85% of HBM roofline on
# 128 MiB parts; keep 256 on v7x (64 MiB VMEM).
_ROW_TILE_CAP = 512 if _VMEM_CAP >= 100 * 1024 * 1024 else 256
_Q_TILE_CAP = 128


def _cparams(n_axes=1):
    return pltpu.CompilerParams(
        dimension_semantics=("parallel",) * n_axes,
        vmem_limit_bytes=_VMEM_LIMIT,
    )


def _grid_rows(M, cap=_ROW_TILE_CAP):
    """Row tile + grid size. Full-array block if small, else cap (multiple of 8)."""
    tm = M if M <= cap else cap
    return tm, pl.cdiv(M, tm)


def _const_spec(block_shape):
    """BlockSpec for a grid-invariant operand (weights/biases).

    Single-buffered (Buffered(1)) where supported: the block index never
    changes, so double-buffering it only burns VMEM (important on v7x).
    """
    index_map = lambda *_: (0,) * len(block_shape)
    try:
        return pl.BlockSpec(block_shape, index_map,
                            pipeline_mode=pl.Buffered(buffer_count=1))
    except (AttributeError, TypeError):
        return pl.BlockSpec(block_shape, index_map)


def _gelu_exact(x):
    # erf-based GELU matching nn.GELU(); erf via Abramowitz-Stegun 7.1.26
    # polynomial (|abs err| < 1.5e-7) so it lowers with only exp/arithmetic.
    # NOTE: this is ~10 VALU ops/element of filler under MXU slack at real C;
    # do not micro-optimize unless a bundle profile shows VALU saturation.
    z = x * 0.7071067811865476
    az = jnp.abs(z)
    t = 1.0 / (1.0 + 0.3275911 * az)
    poly = ((((1.061405429 * t - 1.453152027) * t + 1.421413741) * t
             - 0.284496736) * t + 0.254829592) * t
    erf_abs = 1.0 - poly * jnp.exp(-az * az)
    erf_z = jnp.where(z >= 0, erf_abs, -erf_abs)
    return 0.5 * x * (1.0 + erf_z)


# ----------------------------------------------------------------------------- kernels

def _matmul_bias_kernel(x_ref, w_ref, b_ref, o_ref):
    # x: (TM, K), w: (K, N), b: (1, N)
    o_ref[...] = (
        jnp.dot(x_ref[...], w_ref[...], preferred_element_type=jnp.float32)
        + b_ref[...]
    )


def _ln_matmul_kernel(x_ref, g_ref, bln_ref, w_ref, b_ref, o_ref, *, eps):
    # Fused LayerNorm + Linear: out = LN(x) @ w + b
    # (padding rows of a partial last tile produce garbage that is discarded)
    x = x_ref[...]
    mu = jnp.mean(x, axis=-1, keepdims=True)
    var = jnp.mean((x - mu) * (x - mu), axis=-1, keepdims=True)
    h = (x - mu) * jax.lax.rsqrt(var + eps) * g_ref[...] + bln_ref[...]
    o_ref[...] = (
        jnp.dot(h, w_ref[...], preferred_element_type=jnp.float32) + b_ref[...]
    )


def _layernorm_kernel(x_ref, g_ref, b_ref, o_ref, *, eps):
    x = x_ref[...]
    mu = jnp.mean(x, axis=-1, keepdims=True)
    var = jnp.mean((x - mu) * (x - mu), axis=-1, keepdims=True)
    o_ref[...] = (x - mu) * jax.lax.rsqrt(var + eps) * g_ref[...] + b_ref[...]


def _mlp_block_kernel(x_ref, g_ref, bln_ref, w1_ref, b1_ref, w2_ref, b2_ref,
                      o_ref, *, eps):
    # Fused LN2 -> fc1 -> GELU -> fc2 -> residual add. The (TM, 4C) hidden
    # activation never leaves VMEM.
    x = x_ref[...]
    mu = jnp.mean(x, axis=-1, keepdims=True)
    var = jnp.mean((x - mu) * (x - mu), axis=-1, keepdims=True)
    h = (x - mu) * jax.lax.rsqrt(var + eps) * g_ref[...] + bln_ref[...]
    h = jnp.dot(h, w1_ref[...], preferred_element_type=jnp.float32) + b1_ref[...]
    h = _gelu_exact(h)
    o_ref[...] = x + (
        jnp.dot(h, w2_ref[...], preferred_element_type=jnp.float32) + b2_ref[...]
    )


def _attn_block_kernel(x_ref, q_ref, kv_ref, pw_ref, pb_ref, o_ref):
    """Fused MHSA + output projection + residual for one (batch, q-tile) step.

    x_ref : (tq, C)        residual input rows
    q_ref : (H, tq, D)     queries, heads on leading axis (scale pre-folded)
    kv_ref: (2, H, N, D)   keys / values for the full sequence
    pw_ref: (H, D, C)      output projection, reshaped so each head's strip
                           contracts without any lane-dim repacking
    pb_ref: (1, C)
    """
    x = x_ref[...]
    q = q_ref[...]
    k = kv_ref[0]
    v = kv_ref[1]
    # scores: heads batched, contraction over head_dim (no k transpose)
    s = jax.lax.dot_general(q, k, (((2,), (2,)), ((0,), (0,))),
                            preferred_element_type=jnp.float32)        # (H, tq, N)
    s = s - jnp.max(s, axis=-1, keepdims=True)
    p = jnp.exp(s)
    p = p * pl.reciprocal(jnp.sum(p, axis=-1, keepdims=True), approx=True)
    a = jax.lax.dot_general(p, v, (((2,), (1,)), ((0,), (0,))),
                            preferred_element_type=jnp.float32)        # (H, tq, D)
    # per-head projection strips, then sum over heads (cheap VPU adds) ->
    # no (H,tq,D)->(tq,H*D) relayout / concatenate needed.
    o = jax.lax.dot_general(a, pw_ref[...], (((2,), (1,)), ((0,), (0,))),
                            preferred_element_type=jnp.float32)        # (H, tq, C)
    o_ref[...] = x + jnp.sum(o, axis=0) + pb_ref[...]


# ----------------------------------------------------------------------------- wrappers

def matmul_bias(x2d, wT, b):
    """y = x2d @ wT + b  (weights pre-transposed to (K, N), bias (1, N))."""
    M, K = x2d.shape
    N = wT.shape[1]
    tm, g = _grid_rows(M)
    return pl.pallas_call(
        _matmul_bias_kernel,
        grid=(g,),
        in_specs=[
            pl.BlockSpec((tm, K), lambda i: (i, 0)),
            _const_spec((K, N)),
            _const_spec((1, N)),
        ],
        out_specs=pl.BlockSpec((tm, N), lambda i: (i, 0)),
        out_shape=jax.ShapeDtypeStruct((M, N), jnp.float32),
        compiler_params=_cparams(),
    )(x2d, wT, b)


def ln_matmul_bias(x2d, g, bln, wT, b, eps=1e-5):
    """y = LayerNorm(x2d) @ wT + b, fused, tiled over rows."""
    M, C = x2d.shape
    N = wT.shape[1]
    tm, grd = _grid_rows(M)
    return pl.pallas_call(
        functools.partial(_ln_matmul_kernel, eps=eps),
        grid=(grd,),
        in_specs=[
            pl.BlockSpec((tm, C), lambda i: (i, 0)),
            _const_spec((1, C)),
            _const_spec((1, C)),
            _const_spec((C, N)),
            _const_spec((1, N)),
        ],
        out_specs=pl.BlockSpec((tm, N), lambda i: (i, 0)),
        out_shape=jax.ShapeDtypeStruct((M, N), jnp.float32),
        compiler_params=_cparams(),
    )(x2d, g, bln, wT, b)


def layernorm(x2d, g, b, eps=1e-5):
    M, C = x2d.shape
    tm, grd = _grid_rows(M)
    return pl.pallas_call(
        functools.partial(_layernorm_kernel, eps=eps),
        grid=(grd,),
        in_specs=[
            pl.BlockSpec((tm, C), lambda i: (i, 0)),
            _const_spec((1, C)),
            _const_spec((1, C)),
        ],
        out_specs=pl.BlockSpec((tm, C), lambda i: (i, 0)),
        out_shape=jax.ShapeDtypeStruct((M, C), jnp.float32),
        compiler_params=_cparams(),
    )(x2d, g, b)


def mlp_block(x2d, g, bln, w1T, b1, w2T, b2, eps=1e-5):
    """x + fc2(GELU(fc1(LN(x)))), one fused kernel, tiled over rows."""
    M, C = x2d.shape
    Hd = w1T.shape[1]
    tm, grd = _grid_rows(M)
    return pl.pallas_call(
        functools.partial(_mlp_block_kernel, eps=eps),
        grid=(grd,),
        in_specs=[
            pl.BlockSpec((tm, C), lambda i: (i, 0)),
            _const_spec((1, C)),
            _const_spec((1, C)),
            _const_spec((C, Hd)),
            _const_spec((1, Hd)),
            _const_spec((Hd, C)),
            _const_spec((1, C)),
        ],
        out_specs=pl.BlockSpec((tm, C), lambda i: (i, 0)),
        out_shape=jax.ShapeDtypeStruct((M, C), jnp.float32),
        compiler_params=_cparams(),
    )(x2d, g, bln, w1T, b1, w2T, b2)


def attn_block(x, q, kv, proj_w_hdc, proj_b):
    """x + proj(MHSA(q, kv)), fused; grid = (batch, query tiles), both parallel.

    x          : (B, N, C)
    q          : (B, H, N, D)      (attention scale already folded in)
    kv         : (B, 2, H, N, D)
    proj_w_hdc : (H, D, C)
    proj_b     : (1, C)
    """
    B, N, C = x.shape
    H, D = q.shape[1], q.shape[3]
    tq = N if N <= _Q_TILE_CAP else _Q_TILE_CAP
    gq = pl.cdiv(N, tq)
    return pl.pallas_call(
        _attn_block_kernel,
        grid=(B, gq),
        in_specs=[
            pl.BlockSpec((None, tq, C), lambda b, qi: (b, qi, 0)),
            pl.BlockSpec((None, H, tq, D), lambda b, qi: (b, 0, qi, 0)),
            pl.BlockSpec((None, 2, H, N, D), lambda b, qi: (b, 0, 0, 0, 0)),
            _const_spec((H, D, C)),
            _const_spec((1, C)),
        ],
        out_specs=pl.BlockSpec((None, tq, C), lambda b, qi: (b, qi, 0)),
        out_shape=jax.ShapeDtypeStruct((B, N, C), jnp.float32),
        compiler_params=_cparams(2),
    )(x, q, kv, proj_w_hdc, proj_b)


# ----------------------------------------------------------------------------- model glue

def eeg_block(x, p, num_heads):
    """EEGBlock forward (eval mode, drop_path=0). x: (B, N, C)."""
    B, N, C = x.shape
    H = num_heads
    D = C // H
    # fused LN1 + QKV projection (scale folded into the Q weight columns)
    qkv = ln_matmul_bias(x.reshape(B * N, C), p["norm1_w"], p["norm1_b"],
                         p["qkv_wT"], p["qkv_b"])                    # (B*N, 3C)
    # host-side relayout so heads live on a leading axis inside the kernel
    qkv5 = qkv.reshape(B, N, 3, H, D).transpose(0, 2, 3, 1, 4)       # (B, 3, H, N, D)
    q = qkv5[:, 0]                                                    # (B, H, N, D)
    kv = qkv5[:, 1:]                                                  # (B, 2, H, N, D)
    # fused attention + output projection + residual
    x = attn_block(x, q, kv, p["proj_wT"].reshape(H, D, C), p["proj_b"])
    # fused LN2 + MLP + residual
    x = mlp_block(x.reshape(B * N, C), p["norm2_w"], p["norm2_b"],
                  p["fc1_wT"], p["fc1_b"], p["fc2_wT"], p["fc2_b"]).reshape(B, N, C)
    return x


def encoder_forward(x_nchw, params, cfg):
    """EEGEncoder forward. x_nchw: (B, in_chans, H, W)."""
    B, Cin, H, W = x_nchw.shape
    P = cfg["patch_size"]
    E = cfg["embed_dim"]
    Wp = W // P
    N = H * Wp

    # Conv2d(kernel=(1,P), stride=(1,P)) == per-patch matmul.
    patches = (
        x_nchw.reshape(B, Cin, H, Wp, P)
        .transpose(0, 2, 3, 1, 4)          # (B, H, Wp, Cin, P)
        .reshape(B * H * Wp, Cin * P)
    )
    tok = matmul_bias(patches, params["patch_wT"], params["patch_b"])  # (B*N, E)
    tok = tok.reshape(B, N, E) + params["pos_embed"][:, :N, :]

    for blk in params["blocks"]:
        tok = eeg_block(tok, blk, cfg["num_heads"])

    tok = layernorm(tok.reshape(B * N, E), params["norm_w"], params["norm_b"])
    return tok.reshape(B, N, E)


def gather_masked(x, masks, out_len):
    """Pack rows where mask is True to the front (original order), zero-pad to out_len."""
    B, N, C = x.shape
    order = jnp.argsort((~masks).astype(jnp.int32), axis=1, stable=True)  # True indices first
    gathered = jnp.take_along_axis(x, order[:, :, None], axis=1)          # (B, N, C)
    counts = jnp.sum(masks.astype(jnp.int32), axis=1)
    valid = jnp.arange(N)[None, :] < counts[:, None]
    gathered = jnp.where(valid[:, :, None], gathered, 0.0)
    if out_len <= N:
        return gathered[:, :out_len]
    return jnp.concatenate(
        [gathered, jnp.zeros((B, out_len - N, C), x.dtype)], axis=1)


def pad_to(x, L):
    B, cur, C = x.shape
    if cur == L:
        return x
    return jnp.concatenate([x, jnp.zeros((B, L - cur, C), x.dtype)], axis=1)


def predictor_forward(context, target_masks, params, cfg):
    """EEGPredictor forward. context: (B, N, E), target_masks: (B, N) bool."""
    B, N, E = context.shape
    pd = cfg["predictor_embed_dim"]
    if target_masks.shape[0] != B:
        target_masks = jnp.broadcast_to(target_masks, (B, target_masks.shape[1]))
    # TODO(synk): F.interpolate branch (mask length != N) not implemented; not exercised here.

    ctx = matmul_bias(context.reshape(B * N, E),
                      params["pe_wT"], params["pe_b"]).reshape(B, N, pd)
    mask_tokens = jnp.broadcast_to(params["mask_token"], (B, N, pd)) * \
        target_masks[:, :, None].astype(jnp.float32)

    xcat = jnp.concatenate([ctx, mask_tokens], axis=0)             # (2B, N, pd)
    for blk in params["blocks"]:
        xcat = eeg_block(xcat, blk, cfg["num_heads"])
    xcat = layernorm(xcat.reshape(2 * B * N, pd),
                     params["norm_w"], params["norm_b"]).reshape(2 * B, N, pd)

    pred = matmul_bias(xcat[B:].reshape(B * N, pd),
                       params["head_wT"], params["head_b"]).reshape(B, N, E)

    # Static packed length N (no device->host sync). The PyTorch reference packs
    # to max(mask counts) and EEGJEPA then zero-pads back to N; padding here to
    # N directly yields the same final (pred, target) pair.
    return gather_masked(pred, target_masks, N)


def eegjepa_forward(x, masks_enc, masks_pred, params, *, enc_cfg, pred_cfg,
                    share_target=False):
    del masks_enc  # unused in the reference forward as well
    context = encoder_forward(x, params["encoder"], enc_cfg)
    if share_target:
        # Target encoder is a frozen, identical copy of the encoder ->
        # reuse the context activations (stop_gradient mirrors torch.no_grad()).
        target = jax.lax.stop_gradient(context)
    else:
        target = jax.lax.stop_gradient(
            encoder_forward(x, params["target_encoder"], enc_cfg))

    if masks_pred.ndim == 1:
        masks_pred = masks_pred[None, :]

    pred = predictor_forward(context, masks_pred, params["predictor"], pred_cfg)
    target_m = gather_masked(target, masks_pred, target.shape[1])   # apply_masks pads to N

    if pred.shape[1] != target_m.shape[1]:
        L = max(pred.shape[1], target_m.shape[1])
        pred = pad_to(pred, L)
        target_m = pad_to(target_m, L)
    return pred, target_m


# ----------------------------------------------------------------------------- deterministic init
# Weights are stored pre-transposed as (in, out) and biases as (1, out), and the
# attention scale is folded into the Q columns of the QKV projection: the
# per-call transposes/scales of the nn.Linear layout are hoisted into this
# one-time parameter-prep step (a PyTorch checkpoint would be prepped once here).

def trunc_normal(key, shape, std=0.02):
    return std * jax.random.truncated_normal(key, -2.0, 2.0, shape, jnp.float32)


def init_block_params(key, dim, num_heads, mlp_ratio):
    hidden = int(dim * mlp_ratio)
    scale = (dim // num_heads) ** (-0.5)
    ks = jax.random.split(key, 4)
    qkv_wT = trunc_normal(ks[0], (dim, 3 * dim))
    qkv_b = jnp.zeros((1, 3 * dim), jnp.float32)
    # fold attention scale into Q columns (equivalent to (q @ k.T) * scale)
    col_scale = jnp.concatenate(
        [jnp.full((3 * dim // 3,), scale, jnp.float32),
         jnp.ones((2 * dim,), jnp.float32)])[None, :]
    return dict(
        norm1_w=jnp.ones((1, dim), jnp.float32), norm1_b=jnp.zeros((1, dim), jnp.float32),
        qkv_wT=qkv_wT * col_scale, qkv_b=qkv_b * col_scale,
        proj_wT=trunc_normal(ks[1], (dim, dim)), proj_b=jnp.zeros((1, dim), jnp.float32),
        norm2_w=jnp.ones((1, dim), jnp.float32), norm2_b=jnp.zeros((1, dim), jnp.float32),
        fc1_wT=trunc_normal(ks[2], (dim, hidden)), fc1_b=jnp.zeros((1, hidden), jnp.float32),
        fc2_wT=trunc_normal(ks[3], (hidden, dim)), fc2_b=jnp.zeros((1, dim), jnp.float32),
    )


def init_encoder_params(key, cfg):
    E, Cin, P, depth = cfg["embed_dim"], cfg["in_chans"], cfg["patch_size"], cfg["depth"]
    keys = jax.random.split(key, depth + 3)
    return dict(
        patch_wT=trunc_normal(keys[0], (Cin * P, E)),   # Conv2d(1,P) flattened as (Cin*P, E)
        patch_b=trunc_normal(keys[1], (1, E)),
        pos_embed=trunc_normal(keys[2], (1, 64 * (2048 // P), E)),
        blocks=[init_block_params(keys[3 + i], E, cfg["num_heads"], cfg["mlp_ratio"])
                for i in range(depth)],
        norm_w=jnp.ones((1, E), jnp.float32),
        norm_b=jnp.zeros((1, E), jnp.float32),
    )


def init_predictor_params(key, cfg):
    E, pd, depth = cfg["embed_dim"], cfg["predictor_embed_dim"], cfg["depth"]
    keys = jax.random.split(key, depth + 3)
    return dict(
        pe_wT=trunc_normal(keys[0], (E, pd)), pe_b=jnp.zeros((1, pd), jnp.float32),
        mask_token=trunc_normal(keys[1], (1, 1, pd)),
        blocks=[init_block_params(keys[3 + i], pd, cfg["num_heads"], cfg["mlp_ratio"])
                for i in range(depth)],
        norm_w=jnp.ones((1, pd), jnp.float32), norm_b=jnp.zeros((1, pd), jnp.float32),
        head_wT=trunc_normal(keys[2], (pd, E)), head_b=jnp.zeros((1, E), jnp.float32),
    )


# ----------------------------------------------------------------------------- main

if __name__ == "__main__":
    key = jax.random.PRNGKey(0)
    k_enc, k_pred, k_x = jax.random.split(key, 3)

    enc_cfg = dict(in_chans=1, embed_dim=32, depth=2, num_heads=4,
                   mlp_ratio=4.0, patch_size=8, qkv_bias=True)
    pred_cfg = dict(embed_dim=32, predictor_embed_dim=16, depth=1,
                    num_heads=4, mlp_ratio=4.0, qkv_bias=True)

    enc_params = init_encoder_params(k_enc, enc_cfg)
    params = dict(
        encoder=enc_params,
        target_encoder=enc_params,          # target encoder is a frozen copy of the encoder
        predictor=init_predictor_params(k_pred, pred_cfg),
    )

    # input: (B, in_chans, H=EEG channels, W=time) -> N = H * (W // patch_size) = 16 tokens
    B, Cin, H, W = 2, 1, 4, 32
    x = jax.random.normal(k_x, (B, Cin, H, W), jnp.float32)
    N = H * (W // enc_cfg["patch_size"])

    masks_pred = jnp.zeros((B, N), dtype=bool)
    masks_pred = masks_pred.at[0, jnp.array([1, 3, 5, 7, 9, 11])].set(True)
    masks_pred = masks_pred.at[1, jnp.array([0, 2, 4, 8, 10])].set(True)
    masks_enc = jnp.zeros((B, N), dtype=bool).at[:, :4].set(True)

    # Decide (statically) whether the target encoder is the same frozen copy.
    share = params["encoder"] is params["target_encoder"]
    fwd = jax.jit(functools.partial(
        eegjepa_forward, enc_cfg=enc_cfg, pred_cfg=pred_cfg, share_target=share))

    pred, target = fwd(x, masks_enc, masks_pred, params)
    jax.block_until_ready(pred)
    jax.block_until_ready(target)
    assert pred.shape == target.shape == (B, N, enc_cfg["embed_dim"])
    assert bool(jnp.all(jnp.isfinite(pred))) and bool(jnp.all(jnp.isfinite(target)))
    print("KERNEL_OK")
</pallas_src>

<mosaic_0001>
module attributes {stable_mosaic.version = 11 : i64} {
  func.func @_ln_matmul_kernel(%arg0: i32, %arg1: memref<32x32xf32, #tpu.memory_space<vmem>>, %arg2: memref<1x32xf32, #tpu.memory_space<vmem>>, %arg3: memref<1x32xf32, #tpu.memory_space<vmem>>, %arg4: memref<32x96xf32, #tpu.memory_space<vmem>>, %arg5: memref<1x96xf32, #tpu.memory_space<vmem>>, %arg6: memref<32x96xf32, #tpu.memory_space<vmem>>) attributes {dimension_semantics = [#tpu.dimension_semantics<parallel>], iteration_bounds = array<i64: 1>, scalar_prefetch = 0 : i64, scratch_operands = 0 : i64, tpu.core_type = #tpu.core_type<tc>, window_params = [{transform_indices = @transform_0, window_bounds = array<i64: 32, 32>}, {pipeline_mode = #tpu.pipeline_mode<synchronous>, transform_indices = @transform_1, window_bounds = array<i64: 1, 32>}, {pipeline_mode = #tpu.pipeline_mode<synchronous>, transform_indices = @transform_2, window_bounds = array<i64: 1, 32>}, {pipeline_mode = #tpu.pipeline_mode<synchronous>, transform_indices = @transform_3, window_bounds = array<i64: 32, 96>}, {pipeline_mode = #tpu.pipeline_mode<synchronous>, transform_indices = @transform_4, window_bounds = array<i64: 1, 96>}, {transform_indices = @transform_5, window_bounds = array<i64: 32, 96>}]} {
    %c0 = arith.constant 0 : index
    %c0_0 = arith.constant 0 : index
    %0 = vector.load %arg1[%c0, %c0_0] : memref<32x32xf32, #tpu.memory_space<vmem>>, vector<32x32xf32>
    %cst = arith.constant dense<0.000000e+00> : vector<32xf32>
    %1 = vector.multi_reduction <add>, %0, %cst [1] : vector<32x32xf32> to vector<32xf32>
    %2 = vector.shape_cast %1 : vector<32xf32> to vector<32x1xf32>
    %cst_1 = arith.constant 3.200000e+01 : f32
    %3 = vector.broadcast %cst_1 : f32 to vector<32x1xf32>
    %4 = arith.divf %2, %3 : vector<32x1xf32>
    %5 = vector.broadcast %4 : vector<32x1xf32> to vector<32x32xf32>
    %6 = arith.subf %0, %5 : vector<32x32xf32>
    %7 = vector.broadcast %4 : vector<32x1xf32> to vector<32x32xf32>
    %8 = arith.subf %0, %7 : vector<32x32xf32>
    %9 = arith.mulf %6, %8 : vector<32x32xf32>
    %cst_2 = arith.constant dense<0.000000e+00> : vector<32xf32>
    %10 = vector.multi_reduction <add>, %9, %cst_2 [1] : vector<32x32xf32> to vector<32xf32>
    %11 = vector.shape_cast %10 : vector<32xf32> to vector<32x1xf32>
    %cst_3 = arith.constant 3.200000e+01 : f32
    %12 = vector.broadcast %cst_3 : f32 to vector<32x1xf32>
    %13 = arith.divf %11, %12 : vector<32x1xf32>
    %14 = vector.broadcast %4 : vector<32x1xf32> to vector<32x32xf32>
    %15 = arith.subf %0, %14 : vector<32x32xf32>
    %cst_4 = arith.constant 9.99999974E-6 : f32
    %16 = vector.broadcast %cst_4 : f32 to vector<32x1xf32>
    %17 = arith.addf %13, %16 : vector<32x1xf32>
    %18 = math.rsqrt %17 : vector<32x1xf32>
    %19 = vector.broadcast %18 : vector<32x1xf32> to vector<32x32xf32>
    %20 = arith.mulf %15, %19 : vector<32x32xf32>
    %c0_5 = arith.constant 0 : index
    %c0_6 = arith.constant 0 : index
    %21 = vector.load %arg2[%c0_5, %c0_6] : memref<1x32xf32, #tpu.memory_space<vmem>>, vector<1x32xf32>
    %22 = vector.broadcast %21 : vector<1x32xf32> to vector<32x32xf32>
    %23 = arith.mulf %20, %22 : vector<32x32xf32>
    %c0_7 = arith.constant 0 : index
    %c0_8 = arith.constant 0 : index
    %24 = vector.load %arg3[%c0_7, %c0_8] : memref<1x32xf32, #tpu.memory_space<vmem>>, vector<1x32xf32>
    %25 = vector.broadcast %24 : vector<1x32xf32> to vector<32x32xf32>
    %26 = arith.addf %23, %25 : vector<32x32xf32>
    %c0_9 = arith.constant 0 : index
    %c0_10 = arith.constant 0 : index
    %27 = vector.load %arg4[%c0_9, %c0_10] : memref<32x96xf32, #tpu.memory_space<vmem>>, vector<32x96xf32>
    %cst_11 = arith.constant dense<0.000000e+00> : vector<32x96xf32>
    %28 = tpu.matmul %26, %27, %cst_11 {dimension_numbers = #tpu.dot_dimension_numbers<[1], [0], [0], [1], [0, 0, 1, 1], [], []>} : vector<32x32xf32>, vector<32x96xf32>, vector<32x96xf32> -> vector<32x96xf32>
    %c0_12 = arith.constant 0 : index
    %c0_13 = arith.constant 0 : index
    %29 = vector.load %arg5[%c0_12, %c0_13] : memref<1x96xf32, #tpu.memory_space<vmem>>, vector<1x96xf32>
    %30 = vector.broadcast %29 : vector<1x96xf32> to vector<32x96xf32>
    %31 = arith.addf %28, %30 : vector<32x96xf32>
    %c0_14 = arith.constant 0 : index
    %c0_15 = arith.constant 0 : index
    %32 = vector.load %arg6[%c0_14, %c0_15] : memref<32x96xf32, #tpu.memory_space<vmem>>, vector<32x96xf32>
    tpu.vector_store %arg6[%c0_14, %c0_15], %31 {strides = array<i32>} : memref<32x96xf32, #tpu.memory_space<vmem>>, vector<32x96xf32>,
    return
  }
  func.func @transform_0(%arg0: i32) -> (i32, i32) {
    %c0_i32 = arith.constant 0 : i32
    %c0_i32_0 = arith.constant 0 : i32
    return %arg0, %c0_i32 : i32, i32
  }
  func.func @transform_1(%arg0: i32) -> (i32, i32) {
    %c0_i32 = arith.constant 0 : i32
    %c0_i32_0 = arith.constant 0 : i32
    %c0_i32_1 = arith.constant 0 : i32
    return %c0_i32, %c0_i32_0 : i32, i32
  }
  func.func @transform_2(%arg0: i32) -> (i32, i32) {
    %c0_i32 = arith.constant 0 : i32
    %c0_i32_0 = arith.constant 0 : i32
    %c0_i32_1 = arith.constant 0 : i32
    return %c0_i32, %c0_i32_0 : i32, i32
  }
  func.func @transform_3(%arg0: i32) -> (i32, i32) {
    %c0_i32 = arith.constant 0 : i32
    %c0_i32_0 = arith.constant 0 : i32
    %c0_i32_1 = arith.constant 0 : i32
    return %c0_i32, %c0_i32_0 : i32, i32
  }
  func.func @transform_4(%arg0: i32) -> (i32, i32) {
    %c0_i32 = arith.constant 0 : i32
    %c0_i32_0 = arith.constant 0 : i32
    %c0_i32_1 = arith.constant 0 : i32
    return %c0_i32, %c0_i32_0 : i32, i32
  }
  func.func @transform_5(%arg0: i32) -> (i32, i32) {
    %c0_i32 = arith.constant 0 : i32
    %c0_i32_0 = arith.constant 0 : i32
    return %arg0, %c0_i32 : i32, i32
  }
}

module attributes {stable_mosaic.version = 11 : i64} {
  func.func @_matmul_bias_kernel(%arg0: i32, %arg1: memref<32x8xf32, #tpu.memory_space<vmem>>, %arg2: memref<8x32xf32, #tpu.memory_space<vmem>>, %arg3: memref<1x32xf32, #tpu.memory_space<vmem>>, %arg4: memref<32x32xf32, #tpu.memory_space<vmem>>) attributes {dimension_semantics = [#tpu.dimension_semantics<parallel>], iteration_bounds = array<i64: 1>, scalar_prefetch = 0 : i64, scratch_operands = 0 : i64, tpu.core_type = #tpu.core_type<tc>, window_params = [{transform_indices = @transform_0, window_bounds = array<i64: 32, 8>}, {pipeline_mode = #tpu.pipeline_mode<synchronous>, transform_indices = @transform_1, window_bounds = array<i64: 8, 32>}, {pipeline_mode = #tpu.pipeline_mode<synchronous>, transform_indices = @transform_2, window_bounds = array<i64: 1, 32>}, {transform_indices = @transform_3, window_bounds = array<i64: 32, 32>}]} {
    %c0 = arith.constant 0 : index
    %c0_0 = arith.constant 0 : index
    %0 = vector.load %arg1[%c0, %c0_0] : memref<32x8xf32, #tpu.memory_space<vmem>>, vector<32x8xf32>
    %c0_1 = arith.constant 0 : index
    %c0_2 = arith.constant 0 : index
    %1 = vector.load %arg2[%c0_1, %c0_2] : memref<8x32xf32, #tpu.memory_space<vmem>>, vector<8x32xf32>
    %cst = arith.constant dense<0.000000e+00> : vector<32x32xf32>
    %2 = tpu.matmul %0, %1, %cst {dimension_numbers = #tpu.dot_dimension_numbers<[1], [0], [0], [1], [0, 0, 1, 1], [], []>} : vector<32x8xf32>, vector<8x32xf32>, vector<32x32xf32> -> vector<32x32xf32>
    %c0_3 = arith.constant 0 : index
    %c0_4 = arith.constant 0 : index
    %3 = vector.load %arg3[%c0_3, %c0_4] : memref<1x32xf32, #tpu.memory_space<vmem>>, vector<1x32xf32>
    %4 = vector.broadcast %3 : vector<1x32xf32> to vector<32x32xf32>
    %5 = arith.addf %2, %4 : vector<32x32xf32>
    %c0_5 = arith.constant 0 : index
    %c0_6 = arith.constant 0 : index
    %6 = vector.load %arg4[%c0_5, %c0_6] : memref<32x32xf32, #tpu.memory_space<vmem>>, vector<32x32xf32>
    tpu.vector_store %arg4[%c0_5, %c0_6], %5 {strides = array<i32>} : memref<32x32xf32, #tpu.memory_space<vmem>>, vector<32x32xf32>,
    return
  }
  func.func @transform_0(%arg0: i32) -> (i32, i32) {
    %c0_i32 = arith.constant 0 : i32
    %c0_i32_0 = arith.constant 0 : i32
    return %arg0, %c0_i32 : i32, i32
  }
  func.func @transform_1(%arg0: i32) -> (i32, i32) {
    %c0_i32 = arith.constant 0 : i32
    %c0_i32_0 = arith.constant 0 : i32
    %c0_i32_1 = arith.constant 0 : i32
    return %c0_i32, %c0_i32_0 : i32, i32
  }
  func.func @transform_2(%arg0: i32) -> (i32, i32) {
    %c0_i32 = arith.constant 0 : i32
    %c0_i32_0 = arith.constant 0 : i32
    %c0_i32_1 = arith.constant 0 : i32
    return %c0_i32, %c0_i32_0 : i32, i32
  }
  func.func @transform_3(%arg0: i32) -> (i32, i32) {
    %c0_i32 = arith.constant 0 : i32
    %c0_i32_0 = arith.constant 0 : i32
    return %arg0, %c0_i32 : i32, i32
  }
}

module attributes {stable_mosaic.version = 11 : i64} {
  func.func @_mlp_block_kernel(%arg0: i32, %arg1: memref<32x32xf32, #tpu.memory_space<vmem>>, %arg2: memref<1x32xf32, #tpu.memory_space<vmem>>, %arg3: memref<1x32xf32, #tpu.memory_space<vmem>>, %arg4: memref<32x128xf32, #tpu.memory_space<vmem>>, %arg5: memref<1x128xf32, #tpu.memory_space<vmem>>, %arg6: memref<128x32xf32, #tpu.memory_space<vmem>>, %arg7: memref<1x32xf32, #tpu.memory_space<vmem>>, %arg8: memref<32x32xf32, #tpu.memory_space<vmem>>) attributes {dimension_semantics = [#tpu.dimension_semantics<parallel>], iteration_bounds = array<i64: 1>, scalar_prefetch = 0 : i64, scratch_operands = 0 : i64, tpu.core_type = #tpu.core_type<tc>, window_params = [{transform_indices = @transform_0, window_bounds = array<i64: 32, 32>}, {pipeline_mode = #tpu.pipeline_mode<synchronous>, transform_indices = @transform_1, window_bounds = array<i64: 1, 32>}, {pipeline_mode = #tpu.pipeline_mode<synchronous>, transform_indices = @transform_2, window_bounds = array<i64: 1, 32>}, {pipeline_mode = #tpu.pipeline_mode<synchronous>, transform_indices = @transform_3, window_bounds = array<i64: 32, 128>}, {pipeline_mode = #tpu.pipeline_mode<synchronous>, transform_indices = @transform_4, window_bounds = array<i64: 1, 128>}, {pipeline_mode = #tpu.pipeline_mode<synchronous>, transform_indices = @transform_5, window_bounds = array<i64: 128, 32>}, {pipeline_mode = #tpu.pipeline_mode<synchronous>, transform_indices = @transform_6, window_bounds = array<i64: 1, 32>}, {transform_indices = @transform_7, window_bounds = array<i64: 32, 32>}]} {
    %c0 = arith.constant 0 : index
    %c0_0 = arith.constant 0 : index
    %0 = vector.load %arg1[%c0, %c0_0] : memref<32x32xf32, #tpu.memory_space<vmem>>, vector<32x32xf32>
    %cst = arith.constant dense<0.000000e+00> : vector<32xf32>
    %1 = vector.multi_reduction <add>, %0, %cst [1] : vector<32x32xf32> to vector<32xf32>
    %2 = vector.shape_cast %1 : vector<32xf32> to vector<32x1xf32>
    %cst_1 = arith.constant 3.200000e+01 : f32
    %3 = vector.broadcast %cst_1 : f32 to vector<32x1xf32>
    %4 = arith.divf %2, %3 : vector<32x1xf32>
    %5 = vector.broadcast %4 : vector<32x1xf32> to vector<32x32xf32>
    %6 = arith.subf %0, %5 : vector<32x32xf32>
    %7 = vector.broadcast %4 : vector<32x1xf32> to vector<32x32xf32>
    %8 = arith.subf %0, %7 : vector<32x32xf32>
    %9 = arith.mulf %6, %8 : vector<32x32xf32>
    %cst_2 = arith.constant dense<0.000000e+00> : vector<32xf32>
    %10 = vector.multi_reduction <add>, %9, %cst_2 [1] : vector<32x32xf32> to vector<32xf32>
    %11 = vector.shape_cast %10 : vector<32xf32> to vector<32x1xf32>
    %cst_3 = arith.constant 3.200000e+01 : f32
    %12 = vector.broadcast %cst_3 : f32 to vector<32x1xf32>
    %13 = arith.divf %11, %12 : vector<32x1xf32>
    %14 = vector.broadcast %4 : vector<32x1xf32> to vector<32x32xf32>
    %15 = arith.subf %0, %14 : vector<32x32xf32>
    %cst_4 = arith.constant 9.99999974E-6 : f32
    %16 = vector.broadcast %cst_4 : f32 to vector<32x1xf32>
    %17 = arith.addf %13, %16 : vector<32x1xf32>
    %18 = math.rsqrt %17 : vector<32x1xf32>
    %19 = vector.broadcast %18 : vector<32x1xf32> to vector<32x32xf32>
    %20 = arith.mulf %15, %19 : vector<32x32xf32>
    %c0_5 = arith.constant 0 : index
    %c0_6 = arith.constant 0 : index
    %21 = vector.load %arg2[%c0_5, %c0_6] : memref<1x32xf32, #tpu.memory_space<vmem>>, vector<1x32xf32>
    %22 = vector.broadcast %21 : vector<1x32xf32> to vector<32x32xf32>
    %23 = arith.mulf %20, %22 : vector<32x32xf32>
    %c0_7 = arith.constant 0 : index
    %c0_8 = arith.constant 0 : index
    %24 = vector.load %arg3[%c0_7, %c0_8] : memref<1x32xf32, #tpu.memory_space<vmem>>, vector<1x32xf32>
    %25 = vector.broadcast %24 : vector<1x32xf32> to vector<32x32xf32>
    %26 = arith.addf %23, %25 : vector<32x32xf32>
    %c0_9 = arith.constant 0 : index
    %c0_10 = arith.constant 0 : index
    %27 = vector.load %arg4[%c0_9, %c0_10] : memref<32x128xf32, #tpu.memory_space<vmem>>, vector<32x128xf32>
    %cst_11 = arith.constant dense<0.000000e+00> : vector<32x128xf32>
    %28 = tpu.matmul %26, %27, %cst_11 {dimension_numbers = #tpu.dot_dimension_numbers<[1], [0], [0], [1], [0, 0, 1, 1], [], []>} : vector<32x32xf32>, vector<32x128xf32>, vector<32x128xf32> -> vector<32x128xf32>
    %c0_12 = arith.constant 0 : index
    %c0_13 = arith.constant 0 : index
    %29 = vector.load %arg5[%c0_12, %c0_13] : memref<1x128xf32, #tpu.memory_space<vmem>>, vector<1x128xf32>
    %30 = vector.broadcast %29 : vector<1x128xf32> to vector<32x128xf32>
    %31 = arith.addf %28, %30 : vector<32x128xf32>
    %cst_14 = arith.constant 0.707106769 : f32
    %32 = vector.broadcast %cst_14 : f32 to vector<32x128xf32>
    %33 = arith.mulf %31, %32 : vector<32x128xf32>
    %34 = math.absf %33 : vector<32x128xf32>
    %cst_15 = arith.constant 0.327591091 : f32
    %35 = vector.broadcast %cst_15 : f32 to vector<32x128xf32>
    %36 = arith.mulf %35, %34 : vector<32x128xf32>
    %cst_16 = arith.constant 1.000000e+00 : f32
    %37 = vector.broadcast %cst_16 : f32 to vector<32x128xf32>
    %38 = arith.addf %37, %36 : vector<32x128xf32>
    %cst_17 = arith.constant 1.000000e+00 : f32
    %39 = vector.broadcast %cst_17 : f32 to vector<32x128xf32>
    %40 = arith.divf %39, %38 : vector<32x128xf32>
    %cst_18 = arith.constant 1.06140542 : f32
    %41 = vector.broadcast %cst_18 : f32 to vector<32x128xf32>
    %42 = arith.mulf %41, %40 : vector<32x128xf32>
    %cst_19 = arith.constant 1.45315206 : f32
    %43 = vector.broadcast %cst_19 : f32 to vector<32x128xf32>
    %44 = arith.subf %42, %43 : vector<32x128xf32>
    %45 = arith.mulf %44, %40 : vector<32x128xf32>
    %cst_20 = arith.constant 1.42141378 : f32
    %46 = vector.broadcast %cst_20 : f32 to vector<32x128xf32>
    %47 = arith.addf %45, %46 : vector<32x128xf32>
    %48 = arith.mulf %47, %40 : vector<32x128xf32>
    %cst_21 = arith.constant 0.284496725 : f32
    %49 = vector.broadcast %cst_21 : f32 to vector<32x128xf32>
    %50 = arith.subf %48, %49 : vector<32x128xf32>
    %51 = arith.mulf %50, %40 : vector<32x128xf32>
    %cst_22 = arith.constant 0.254829586 : f32
    %52 = vector.broadcast %cst_22 : f32 to vector<32x128xf32>
    %53 = arith.addf %51, %52 : vector<32x128xf32>
    %54 = arith.mulf %53, %40 : vector<32x128xf32>
    %cst_23 = arith.constant 0.000000e+00 : f32
    %55 = vector.broadcast %cst_23 : f32 to vector<32x128xf32>
    %56 = arith.subf %55, %34 : vector<32x128xf32>
    %57 = arith.mulf %56, %34 : vector<32x128xf32>
    %58 = math.exp %57 : vector<32x128xf32>
    %59 = arith.mulf %54, %58 : vector<32x128xf32>
    %cst_24 = arith.constant 1.000000e+00 : f32
    %60 = vector.broadcast %cst_24 : f32 to vector<32x128xf32>
    %61 = arith.subf %60, %59 : vector<32x128xf32>
    %cst_25 = arith.constant 0.000000e+00 : f32
    %62 = vector.broadcast %cst_25 : f32 to vector<32x128xf32>
    %63 = arith.cmpf oge, %33, %62 : vector<32x128xf32>
    %cst_26 = arith.constant 0.000000e+00 : f32
    %64 = vector.broadcast %cst_26 : f32 to vector<32x128xf32>
    %65 = arith.subf %64, %61 : vector<32x128xf32>
    %66 = arith.select %63, %61, %65 : vector<32x128xi1>, vector<32x128xf32>
    %cst_27 = arith.constant 5.000000e-01 : f32
    %67 = vector.broadcast %cst_27 : f32 to vector<32x128xf32>
    %68 = arith.mulf %67, %31 : vector<32x128xf32>
    %cst_28 = arith.constant 1.000000e+00 : f32
    %69 = vector.broadcast %cst_28 : f32 to vector<32x128xf32>
    %70 = arith.addf %69, %66 : vector<32x128xf32>
    %71 = arith.mulf %68, %70 : vector<32x128xf32>
    %c0_29 = arith.constant 0 : index
    %c0_30 = arith.constant 0 : index
    %72 = vector.load %arg6[%c0_29, %c0_30] : memref<128x32xf32, #tpu.memory_space<vmem>>, vector<128x32xf32>
    %cst_31 = arith.constant dense<0.000000e+00> : vector<32x32xf32>
    %73 = tpu.matmul %71, %72, %cst_31 {dimension_numbers = #tpu.dot_dimension_numbers<[1], [0], [0], [1], [0, 0, 1, 1], [], []>} : vector<32x128xf32>, vector<128x32xf32>, vector<32x32xf32> -> vector<32x32xf32>
    %c0_32 = arith.constant 0 : index
    %c0_33 = arith.constant 0 : index
    %74 = vector.load %arg7[%c0_32, %c0_33] : memref<1x32xf32, #tpu.memory_space<vmem>>, vector<1x32xf32>
    %75 = vector.broadcast %74 : vector<1x32xf32> to vector<32x32xf32>
    %76 = arith.addf %73, %75 : vector<32x32xf32>
    %77 = arith.addf %0, %76 : vector<32x32xf32>
    %c0_34 = arith.constant 0 : index
    %c0_35 = arith.constant 0 : index
    %78 = vector.load %arg8[%c0_34, %c0_35] : memref<32x32xf32, #tpu.memory_space<vmem>>, vector<32x32xf32>
    tpu.vector_store %arg8[%c0_34, %c0_35], %77 {strides = array<i32>} : memref<32x32xf32, #tpu.memory_space<vmem>>, vector<32x32xf32>,
    return
  }
  func.func @transform_0(%arg0: i32) -> (i32, i32) {
    %c0_i32 = arith.constant 0 : i32
    %c0_i32_0 = arith.constant 0 : i32
    return %arg0, %c0_i32 : i32, i32
  }
  func.func @transform_1(%arg0: i32) -> (i32, i32) {
    %c0_i32 = arith.constant 0 : i32
    %c0_i32_0 = arith.constant 0 : i32
    %c0_i32_1 = arith.constant 0 : i32
    return %c0_i32, %c0_i32_0 : i32, i32
  }
  func.func @transform_2(%arg0: i32) -> (i32, i32) {
    %c0_i32 = arith.constant 0 : i32
    %c0_i32_0 = arith.constant 0 : i32
    %c0_i32_1 = arith.constant 0 : i32
    return %c0_i32, %c0_i32_0 : i32, i32
  }
  func.func @transform_3(%arg0: i32) -> (i32, i32) {
    %c0_i32 = arith.constant 0 : i32
    %c0_i32_0 = arith.constant 0 : i32
    %c0_i32_1 = arith.constant 0 : i32
    return %c0_i32, %c0_i32_0 : i32, i32
  }
  func.func @transform_4(%arg0: i32) -> (i32, i32) {
    %c0_i32 = arith.constant 0 : i32
    %c0_i32_0 = arith.constant 0 : i32
    %c0_i32_1 = arith.constant 0 : i32
    return %c0_i32, %c0_i32_0 : i32, i32
  }
  func.func @transform_5(%arg0: i32) -> (i32, i32) {
    %c0_i32 = arith.constant 0 : i32
    %c0_i32_0 = arith.constant 0 : i32
    %c0_i32_1 = arith.constant 0 : i32
    return %c0_i32, %c0_i32_0 : i32, i32
  }
  func.func @transform_6(%arg0: i32) -> (i32, i32) {
    %c0_i32 = arith.constant 0 : i32
    %c0_i32_0 = arith.constant 0 : i32
    %c0_i32_1 = arith.constant 0 : i32
    return %c0_i32, %c0_i32_0 : i32, i32
  }
  func.func @transform_7(%arg0: i32) -> (i32, i32) {
    %c0_i32 = arith.constant 0 : i32
    %c0_i32_0 = arith.constant 0 : i32
    return %arg0, %c0_i32 : i32, i32
  }
}

module attributes {stable_mosaic.version = 11 : i64} {
  func.func @_attn_block_kernel(%arg0: i32, %arg1: i32, %arg2: memref<1x16x32xf32, #tpu.memory_space<vmem>>, %arg3: memref<1x4x16x8xf32, #tpu.memory_space<vmem>>, %arg4: memref<1x2x4x16x8xf32, #tpu.memory_space<vmem>>, %arg5: memref<4x8x32xf32, #tpu.memory_space<vmem>>, %arg6: memref<1x32xf32, #tpu.memory_space<vmem>>, %arg7: memref<1x16x32xf32, #tpu.memory_space<vmem>>) attributes {dimension_semantics = [#tpu.dimension_semantics<parallel>, #tpu.dimension_semantics<parallel>], iteration_bounds = array<i64: 2, 1>, scalar_prefetch = 0 : i64, scratch_operands = 0 : i64, tpu.core_type = #tpu.core_type<tc>, window_params = [{transform_indices = @transform_0, window_bounds = array<i64: 1, 16, 32>}, {transform_indices = @transform_1, window_bounds = array<i64: 1, 4, 16, 8>}, {transform_indices = @transform_2, window_bounds = array<i64: 1, 2, 4, 16, 8>}, {pipeline_mode = #tpu.pipeline_mode<synchronous>, transform_indices = @transform_3, window_bounds = array<i64: 4, 8, 32>}, {pipeline_mode = #tpu.pipeline_mode<synchronous>, transform_indices = @transform_4, window_bounds = array<i64: 1, 32>}, {transform_indices = @transform_5, window_bounds = array<i64: 1, 16, 32>}]} {
    %c0 = arith.constant 0 : index
    %c0_0 = arith.constant 0 : index
    %c0_1 = arith.constant 0 : index
    %0 = vector.load %arg2[%c0, %c0_0, %c0_1] : memref<1x16x32xf32, #tpu.memory_space<vmem>>, vector<1x16x32xf32>
    %1 = vector.shape_cast %0 : vector<1x16x32xf32> to vector<16x32xf32>
    %c0_2 = arith.constant 0 : index
    %c0_3 = arith.constant 0 : index
    %c0_4 = arith.constant 0 : index
    %c0_5 = arith.constant 0 : index
    %2 = vector.load %arg3[%c0_2, %c0_3, %c0_4, %c0_5] : memref<1x4x16x8xf32, #tpu.memory_space<vmem>>, vector<1x4x16x8xf32>
    %3 = vector.shape_cast %2 : vector<1x4x16x8xf32> to vector<4x16x8xf32>
    %c0_6 = arith.constant 0 : index
    %c0_7 = arith.constant 0 : index
    %c0_8 = arith.constant 0 : index
    %c0_9 = arith.constant 0 : index
    %c0_10 = arith.constant 0 : index
    %4 = vector.load %arg4[%c0_6, %c0_7, %c0_8, %c0_9, %c0_10] : memref<1x2x4x16x8xf32, #tpu.memory_space<vmem>>, vector<1x1x4x16x8xf32>
    %5 = vector.shape_cast %4 : vector<1x1x4x16x8xf32> to vector<4x16x8xf32>
    %c0_11 = arith.constant 0 : index
    %c1 = arith.constant 1 : index
    %c0_12 = arith.constant 0 : index
    %c0_13 = arith.constant 0 : index
    %c0_14 = arith.constant 0 : index
    %6 = vector.load %arg4[%c0_11, %c1, %c0_12, %c0_13, %c0_14] : memref<1x2x4x16x8xf32, #tpu.memory_space<vmem>>, vector<1x1x4x16x8xf32>
    %7 = vector.shape_cast %6 : vector<1x1x4x16x8xf32> to vector<4x16x8xf32>
    %cst = arith.constant dense<0.000000e+00> : vector<4x16x16xf32>
    %8 = tpu.matmul %3, %5, %cst {dimension_numbers = #tpu.dot_dimension_numbers<[2], [2], [1], [1], [0, 0, 0, 1, 1, 1], [0], [0]>} : vector<4x16x8xf32>, vector<4x16x8xf32>, vector<4x16x16xf32> -> vector<4x16x16xf32>
    %cst_15 = arith.constant dense<0xFF800000> : vector<4x16xf32>
    %9 = vector.multi_reduction <maximumf>, %8, %cst_15 [2] : vector<4x16x16xf32> to vector<4x16xf32>
    %10 = vector.shape_cast %9 : vector<4x16xf32> to vector<4x16x1xf32>
    %11 = vector.broadcast %10 : vector<4x16x1xf32> to vector<4x16x16xf32>
    %12 = arith.subf %8, %11 : vector<4x16x16xf32>
    %13 = math.exp %12 : vector<4x16x16xf32>
    %cst_16 = arith.constant dense<0.000000e+00> : vector<4x16xf32>
    %14 = vector.multi_reduction <add>, %13, %cst_16 [2] : vector<4x16x16xf32> to vector<4x16xf32>
    %15 = vector.shape_cast %14 : vector<4x16xf32> to vector<4x16x1xf32>
    %16 = tpu.reciprocal %15 {approx = true} : vector<4x16x1xf32> -> vector<4x16x1xf32>
    %17 = vector.broadcast %16 : vector<4x16x1xf32> to vector<4x16x16xf32>
    %18 = arith.mulf %13, %17 : vector<4x16x16xf32>
    %cst_17 = arith.constant dense<0.000000e+00> : vector<4x16x8xf32>
    %19 = tpu.matmul %18, %7, %cst_17 {dimension_numbers = #tpu.dot_dimension_numbers<[2], [1], [1], [2], [0, 0, 0, 1, 1, 2], [0], [0]>} : vector<4x16x16xf32>, vector<4x16x8xf32>, vector<4x16x8xf32> -> vector<4x16x8xf32>
    %c0_18 = arith.constant 0 : index
    %c0_19 = arith.constant 0 : index
    %c0_20 = arith.constant 0 : index
    %20 = vector.load %arg5[%c0_18, %c0_19, %c0_20] : memref<4x8x32xf32, #tpu.memory_space<vmem>>, vector<4x8x32xf32>
    %cst_21 = arith.constant dense<0.000000e+00> : vector<4x16x32xf32>
    %21 = tpu.matmul %19, %20, %cst_21 {dimension_numbers = #tpu.dot_dimension_numbers<[2], [1], [1], [2], [0, 0, 0, 1, 1, 2], [0], [0]>} : vector<4x16x8xf32>, vector<4x8x32xf32>, vector<4x16x32xf32> -> vector<4x16x32xf32>
    %cst_22 = arith.constant dense<0.000000e+00> : vector<16x32xf32>
    %22 = vector.multi_reduction <add>, %21, %cst_22 [0] : vector<4x16x32xf32> to vector<16x32xf32>
    %23 = arith.addf %1, %22 : vector<16x32xf32>
    %c0_23 = arith.constant 0 : index
    %c0_24 = arith.constant 0 : index
    %24 = vector.load %arg6[%c0_23, %c0_24] : memref<1x32xf32, #tpu.memory_space<vmem>>, vector<1x32xf32>
    %25 = vector.broadcast %24 : vector<1x32xf32> to vector<16x32xf32>
    %26 = arith.addf %23, %25 : vector<16x32xf32>
    %c0_25 = arith.constant 0 : index
    %c0_26 = arith.constant 0 : index
    %c0_27 = arith.constant 0 : index
    %27 = vector.load %arg7[%c0_25, %c0_26, %c0_27] : memref<1x16x32xf32, #tpu.memory_space<vmem>>, vector<1x16x32xf32>
    %28 = vector.shape_cast %27 : vector<1x16x32xf32> to vector<16x32xf32>
    %29 = vector.shape_cast %26 : vector<16x32xf32> to vector<1x16x32xf32>
    tpu.vector_store %arg7[%c0_25, %c0_26, %c0_27], %29 {strides = array<i32>} : memref<1x16x32xf32, #tpu.memory_space<vmem>>, vector<1x16x32xf32>,
    return
  }
  func.func @transform_0(%arg0: i32, %arg1: i32) -> (i32, i32, i32) {
    %c0_i32 = arith.constant 0 : i32
    %c0_i32_0 = arith.constant 0 : i32
    return %arg0, %arg1, %c0_i32 : i32, i32, i32
  }
  func.func @transform_1(%arg0: i32, %arg1: i32) -> (i32, i32, i32, i32) {
    %c0_i32 = arith.constant 0 : i32
    %c0_i32_0 = arith.constant 0 : i32
    %c0_i32_1 = arith.constant 0 : i32
    return %arg0, %c0_i32, %arg1, %c0_i32_0 : i32, i32, i32, i32
  }
  func.func @transform_2(%arg0: i32, %arg1: i32) -> (i32, i32, i32, i32, i32) {
    %c0_i32 = arith.constant 0 : i32
    %c0_i32_0 = arith.constant 0 : i32
    %c0_i32_1 = arith.constant 0 : i32
    %c0_i32_2 = arith.constant 0 : i32
    %c0_i32_3 = arith.constant 0 : i32
    return %arg0, %c0_i32, %c0_i32_0, %c0_i32_1, %c0_i32_2 : i32, i32, i32, i32, i32
  }
  func.func @transform_3(%arg0: i32, %arg1: i32) -> (i32, i32, i32) {
    %c0_i32 = arith.constant 0 : i32
    %c0_i32_0 = arith.constant 0 : i32
    %c0_i32_1 = arith.constant 0 : i32
    %c0_i32_2 = arith.constant 0 : i32
    return %c0_i32, %c0_i32_0, %c0_i32_1 : i32, i32, i32
  }
  func.func @transform_4(%arg0: i32, %arg1: i32) -> (i32, i32) {
    %c0_i32 = arith.constant 0 : i32
    %c0_i32_0 = arith.constant 0 : i32
    %c0_i32_1 = arith.constant 0 : i32
    return %c0_i32, %c0_i32_0 : i32, i32
  }
  func.func @transform_5(%arg0: i32, %arg1: i32) -> (i32, i32, i32) {
    %c0_i32 = arith.constant 0 : i32
    %c0_i32_0 = arith.constant 0 : i32
    return %arg0, %arg1, %c0_i32 : i32, i32, i32
  }
}

module attributes {stable_mosaic.version = 11 : i64} {
  func.func @_attn_block_kernel(%arg0: i32, %arg1: i32, %arg2: memref<1x16x32xf32, #tpu.memory_space<vmem>>, %arg3: memref<1x4x16x8xf32, #tpu.memory_space<vmem>>, %arg4: memref<1x2x4x16x8xf32, #tpu.memory_space<vmem>>, %arg5: memref<4x8x32xf32, #tpu.memory_space<vmem>>, %arg6: memref<1x32xf32, #tpu.memory_space<vmem>>, %arg7: memref<1x16x32xf32, #tpu.memory_space<vmem>>) attributes {dimension_semantics = [#tpu.dimension_semantics<parallel>, #tpu.dimension_semantics<parallel>], iteration_bounds = array<i64: 2, 1>, scalar_prefetch = 0 : i64, scratch_operands = 0 : i64, tpu.core_type = #tpu.core_type<tc>, window_params = [{transform_indices = @transform_0, window_bounds = array<i64: 1, 16, 32>}, {transform_indices = @transform_1, window_bounds = array<i64: 1, 4, 16, 8>}, {transform_indices = @transform_2, window_bounds = array<i64: 1, 2, 4, 16, 8>}, {pipeline_mode = #tpu.pipeline_mode<synchronous>, transform_indices = @transform_3, window_bounds = array<i64: 4, 8, 32>}, {pipeline_mode = #tpu.pipeline_mode<synchronous>, transform_indices = @transform_4, window_bounds = array<i64: 1, 32>}, {transform_indices = @transform_5, window_bounds = array<i64: 1, 16, 32>}]} {
    %c0 = arith.constant 0 : index
    %c0_0 = arith.constant 0 : index
    %c0_1 = arith.constant 0 : index
    %0 = vector.load %arg2[%c0, %c0_0, %c0_1] : memref<1x16x32xf32, #tpu.memory_space<vmem>>, vector<1x16x32xf32>
    %1 = vector.shape_cast %0 : vector<1x16x32xf32> to vector<16x32xf32>
    %c0_2 = arith.constant 0 : index
    %c0_3 = arith.constant 0 : index
    %c0_4 = arith.constant 0 : index
    %c0_5 = arith.constant 0 : index
    %2 = vector.load %arg3[%c0_2, %c0_3, %c0_4, %c0_5] : memref<1x4x16x8xf32, #tpu.memory_space<vmem>>, vector<1x4x16x8xf32>
    %3 = vector.shape_cast %2 : vector<1x4x16x8xf32> to vector<4x16x8xf32>
    %c0_6 = arith.constant 0 : index
    %c0_7 = arith.constant 0 : index
    %c0_8 = arith.constant 0 : index
    %c0_9 = arith.constant 0 : index
    %c0_10 = arith.constant 0 : index
    %4 = vector.load %arg4[%c0_6, %c0_7, %c0_8, %c0_9, %c0_10] : memref<1x2x4x16x8xf32, #tpu.memory_space<vmem>>, vector<1x1x4x16x8xf32>
    %5 = vector.shape_cast %4 : vector<1x1x4x16x8xf32> to vector<4x16x8xf32>
    %c0_11 = arith.constant 0 : index
    %c1 = arith.constant 1 : index
    %c0_12 = arith.constant 0 : index
    %c0_13 = arith.constant 0 : index
    %c0_14 = arith.constant 0 : index
    %6 = vector.load %arg4[%c0_11, %c1, %c0_12, %c0_13, %c0_14] : memref<1x2x4x16x8xf32, #tpu.memory_space<vmem>>, vector<1x1x4x16x8xf32>
    %7 = vector.shape_cast %6 : vector<1x1x4x16x8xf32> to vector<4x16x8xf32>
    %cst = arith.constant dense<0.000000e+00> : vector<4x16x16xf32>
    %8 = tpu.matmul %3, %5, %cst {dimension_numbers = #tpu.dot_dimension_numbers<[2], [2], [1], [1], [0, 0, 0, 1, 1, 1], [0], [0]>} : vector<4x16x8xf32>, vector<4x16x8xf32>, vector<4x16x16xf32> -> vector<4x16x16xf32>
    %cst_15 = arith.constant dense<0xFF800000> : vector<4x16xf32>
    %9 = vector.multi_reduction <maximumf>, %8, %cst_15 [2] : vector<4x16x16xf32> to vector<4x16xf32>
    %10 = vector.shape_cast %9 : vector<4x16xf32> to vector<4x16x1xf32>
    %11 = vector.broadcast %10 : vector<4x16x1xf32> to vector<4x16x16xf32>
    %12 = arith.subf %8, %11 : vector<4x16x16xf32>
    %13 = math.exp %12 : vector<4x16x16xf32>
    %cst_16 = arith.constant dense<0.000000e+00> : vector<4x16xf32>
    %14 = vector.multi_reduction <add>, %13, %cst_16 [2] : vector<4x16x16xf32> to vector<4x16xf32>
    %15 = vector.shape_cast %14 : vector<4x16xf32> to vector<4x16x1xf32>
    %16 = tpu.reciprocal %15 {approx = true} : vector<4x16x1xf32> -> vector<4x16x1xf32>
    %17 = vector.broadcast %16 : vector<4x16x1xf32> to vector<4x16x16xf32>
    %18 = arith.mulf %13, %17 : vector<4x16x16xf32>
    %cst_17 = arith.constant dense<0.000000e+00> : vector<4x16x8xf32>
    %19 = tpu.matmul %18, %7, %cst_17 {dimension_numbers = #tpu.dot_dimension_numbers<[2], [1], [1], [2], [0, 0, 0, 1, 1, 2], [0], [0]>} : vector<4x16x16xf32>, vector<4x16x8xf32>, vector<4x16x8xf32> -> vector<4x16x8xf32>
    %c0_18 = arith.constant 0 : index
    %c0_19 = arith.constant 0 : index
    %c0_20 = arith.constant 0 : index
    %20 = vector.load %arg5[%c0_18, %c0_19, %c0_20] : memref<4x8x32xf32, #tpu.memory_space<vmem>>, vector<4x8x32xf32>
    %cst_21 = arith.constant dense<0.000000e+00> : vector<4x16x32xf32>
    %21 = tpu.matmul %19, %20, %cst_21 {dimension_numbers = #tpu.dot_dimension_numbers<[2], [1], [1], [2], [0, 0, 0, 1, 1, 2], [0], [0]>} : vector<4x16x8xf32>, vector<4x8x32xf32>, vector<4x16x32xf32> -> vector<4x16x32xf32>
    %cst_22 = arith.constant dense<0.000000e+00> : vector<16x32xf32>
    %22 = vector.multi_reduction <add>, %21, %cst_22 [0] : vector<4x16x32xf32> to vector<16x32xf32>
    %23 = arith.addf %1, %22 : vector<16x32xf32>
    %c0_23 = arith.constant 0 : index
    %c0_24 = arith.constant 0 : index
    %24 = vector.load %arg6[%c0_23, %c0_24] : memref<1x32xf32, #tpu.memory_space<vmem>>, vector<1x32xf32>
    %25 = vector.broadcast %24 : vector<1x32xf32> to vector<16x32xf32>
    %26 = arith.addf %23, %25 : vector<16x32xf32>
    %c0_25 = arith.constant 0 : index
    %c0_26 = arith.constant 0 : index
    %c0_27 = arith.constant 0 : index
    %27 = vector.load %arg7[%c0_25, %c0_26, %c0_27] : memref<1x16x32xf32, #tpu.memory_space<vmem>>, vector<1x16x32xf32>
    %28 = vector.shape_cast %27 : vector<1x16x32xf32> to vector<16x32xf32>
    %29 = vector.shape_cast %26 : vector<16x32xf32> to vector<1x16x32xf32>
    tpu.vector_store %arg7[%c0_25, %c0_26, %c0_27], %29 {strides = array<i32>} : memref<1x16x32xf32, #tpu.memory_space<vmem>>, vector<1x16x32xf32>,
    return
  }
  func.func @transform_0(%arg0: i32, %arg1: i32) -> (i32, i32, i32) {
    %c0_i32 = arith.constant 0 : i32
    %c0_i32_0 = arith.constant 0 : i32
    return %arg0, %arg1, %c0_i32 : i32, i32, i32
  }
  func.func @transform_1(%arg0: i32, %arg1: i32) -> (i32, i32, i32, i32) {
    %c0_i32 = arith.constant 0 : i32
    %c0_i32_0 = arith.constant 0 : i32
    %c0_i32_1 = arith.constant 0 : i32
    return %arg0, %c0_i32, %arg1, %c0_i32_0 : i32, i32, i32, i32
  }
  func.func @transform_2(%arg0: i32, %arg1: i32) -> (i32, i32, i32, i32, i32) {
    %c0_i32 = arith.constant 0 : i32
    %c0_i32_0 = arith.constant 0 : i32
    %c0_i32_1 = arith.constant 0 : i32
    %c0_i32_2 = arith.constant 0 : i32
    %c0_i32_3 = arith.constant 0 : i32
    return %arg0, %c0_i32, %c0_i32_0, %c0_i32_1, %c0_i32_2 : i32, i32, i32, i32, i32
  }
  func.func @transform_3(%arg0: i32, %arg1: i32) -> (i32, i32, i32) {
    %c0_i32 = arith.constant 0 : i32
    %c0_i32_0 = arith.constant 0 : i32
    %c0_i32_1 = arith.constant 0 : i32
    %c0_i32_2 = arith.constant 0 : i32
    return %c0_i32, %c0_i32_0, %c0_i32_1 : i32, i32, i32
  }
  func.func @transform_4(%arg0: i32, %arg1: i32) -> (i32, i32) {
    %c0_i32 = arith.constant 0 : i32
    %c0_i32_0 = arith.constant 0 : i32
    %c0_i32_1 = arith.constant 0 : i32
    return %c0_i32, %c0_i32_0 : i32, i32
  }
  func.func @transform_5(%arg0: i32, %arg1: i32) -> (i32, i32, i32) {
    %c0_i32 = arith.constant 0 : i32
    %c0_i32_0 = arith.constant 0 : i32
    return %arg0, %arg1, %c0_i32 : i32, i32, i32
  }
}

module attributes {stable_mosaic.version = 11 : i64} {
  func.func @_mlp_block_kernel(%arg0: i32, %arg1: memref<32x32xf32, #tpu.memory_space<vmem>>, %arg2: memref<1x32xf32, #tpu.memory_space<vmem>>, %arg3: memref<1x32xf32, #tpu.memory_space<vmem>>, %arg4: memref<32x128xf32, #tpu.memory_space<vmem>>, %arg5: memref<1x128xf32, #tpu.memory_space<vmem>>, %arg6: memref<128x32xf32, #tpu.memory_space<vmem>>, %arg7: memref<1x32xf32, #tpu.memory_space<vmem>>, %arg8: memref<32x32xf32, #tpu.memory_space<vmem>>) attributes {dimension_semantics = [#tpu.dimension_semantics<parallel>], iteration_bounds = array<i64: 1>, scalar_prefetch = 0 : i64, scratch_operands = 0 : i64, tpu.core_type = #tpu.core_type<tc>, window_params = [{transform_indices = @transform_0, window_bounds = array<i64: 32, 32>}, {pipeline_mode = #tpu.pipeline_mode<synchronous>, transform_indices = @transform_1, window_bounds = array<i64: 1, 32>}, {pipeline_mode = #tpu.pipeline_mode<synchronous>, transform_indices = @transform_2, window_bounds = array<i64: 1, 32>}, {pipeline_mode = #tpu.pipeline_mode<synchronous>, transform_indices = @transform_3, window_bounds = array<i64: 32, 128>}, {pipeline_mode = #tpu.pipeline_mode<synchronous>, transform_indices = @transform_4, window_bounds = array<i64: 1, 128>}, {pipeline_mode = #tpu.pipeline_mode<synchronous>, transform_indices = @transform_5, window_bounds = array<i64: 128, 32>}, {pipeline_mode = #tpu.pipeline_mode<synchronous>, transform_indices = @transform_6, window_bounds = array<i64: 1, 32>}, {transform_indices = @transform_7, window_bounds = array<i64: 32, 32>}]} {
    %c0 = arith.constant 0 : index
    %c0_0 = arith.constant 0 : index
    %0 = vector.load %arg1[%c0, %c0_0] : memref<32x32xf32, #tpu.memory_space<vmem>>, vector<32x32xf32>
    %cst = arith.constant dense<0.000000e+00> : vector<32xf32>
    %1 = vector.multi_reduction <add>, %0, %cst [1] : vector<32x32xf32> to vector<32xf32>
    %2 = vector.shape_cast %1 : vector<32xf32> to vector<32x1xf32>
    %cst_1 = arith.constant 3.200000e+01 : f32
    %3 = vector.broadcast %cst_1 : f32 to vector<32x1xf32>
    %4 = arith.divf %2, %3 : vector<32x1xf32>
    %5 = vector.broadcast %4 : vector<32x1xf32> to vector<32x32xf32>
    %6 = arith.subf %0, %5 : vector<32x32xf32>
    %7 = vector.broadcast %4 : vector<32x1xf32> to vector<32x32xf32>
    %8 = arith.subf %0, %7 : vector<32x32xf32>
    %9 = arith.mulf %6, %8 : vector<32x32xf32>
    %cst_2 = arith.constant dense<0.000000e+00> : vector<32xf32>
    %10 = vector.multi_reduction <add>, %9, %cst_2 [1] : vector<32x32xf32> to vector<32xf32>
    %11 = vector.shape_cast %10 : vector<32xf32> to vector<32x1xf32>
    %cst_3 = arith.constant 3.200000e+01 : f32
    %12 = vector.broadcast %cst_3 : f32 to vector<32x1xf32>
    %13 = arith.divf %11, %12 : vector<32x1xf32>
    %14 = vector.broadcast %4 : vector<32x1xf32> to vector<32x32xf32>
    %15 = arith.subf %0, %14 : vector<32x32xf32>
    %cst_4 = arith.constant 9.99999974E-6 : f32
    %16 = vector.broadcast %cst_4 : f32 to vector<32x1xf32>
    %17 = arith.addf %13, %16 : vector<32x1xf32>
    %18 = math.rsqrt %17 : vector<32x1xf32>
    %19 = vector.broadcast %18 : vector<32x1xf32> to vector<32x32xf32>
    %20 = arith.mulf %15, %19 : vector<32x32xf32>
    %c0_5 = arith.constant 0 : index
    %c0_6 = arith.constant 0 : index
    %21 = vector.load %arg2[%c0_5, %c0_6] : memref<1x32xf32, #tpu.memory_space<vmem>>, vector<1x32xf32>
    %22 = vector.broadcast %21 : vector<1x32xf32> to vector<32x32xf32>
    %23 = arith.mulf %20, %22 : vector<32x32xf32>
    %c0_7 = arith.constant 0 : index
    %c0_8 = arith.constant 0 : index
    %24 = vector.load %arg3[%c0_7, %c0_8] : memref<1x32xf32, #tpu.memory_space<vmem>>, vector<1x32xf32>
    %25 = vector.broadcast %24 : vector<1x32xf32> to vector<32x32xf32>
    %26 = arith.addf %23, %25 : vector<32x32xf32>
    %c0_9 = arith.constant 0 : index
    %c0_10 = arith.constant 0 : index
    %27 = vector.load %arg4[%c0_9, %c0_10] : memref<32x128xf32, #tpu.memory_space<vmem>>, vector<32x128xf32>
    %cst_11 = arith.constant dense<0.000000e+00> : vector<32x128xf32>
    %28 = tpu.matmul %26, %27, %cst_11 {dimension_numbers = #tpu.dot_dimension_numbers<[1], [0], [0], [1], [0, 0, 1, 1], [], []>} : vector<32x32xf32>, vector<32x128xf32>, vector<32x128xf32> -> vector<32x128xf32>
    %c0_12 = arith.constant 0 : index
    %c0_13 = arith.constant 0 : index
    %29 = vector.load %arg5[%c0_12, %c0_13] : memref<1x128xf32, #tpu.memory_space<vmem>>, vector<1x128xf32>
    %30 = vector.broadcast %29 : vector<1x128xf32> to vector<32x128xf32>
    %31 = arith.addf %28, %30 : vector<32x128xf32>
    %cst_14 = arith.constant 0.707106769 : f32
    %32 = vector.broadcast %cst_14 : f32 to vector<32x128xf32>
    %33 = arith.mulf %31, %32 : vector<32x128xf32>
    %34 = math.absf %33 : vector<32x128xf32>
    %cst_15 = arith.constant 0.327591091 : f32
    %35 = vector.broadcast %cst_15 : f32 to vector<32x128xf32>
    %36 = arith.mulf %35, %34 : vector<32x128xf32>
    %cst_16 = arith.constant 1.000000e+00 : f32
    %37 = vector.broadcast %cst_16 : f32 to vector<32x128xf32>
    %38 = arith.addf %37, %36 : vector<32x128xf32>
    %cst_17 = arith.constant 1.000000e+00 : f32
    %39 = vector.broadcast %cst_17 : f32 to vector<32x128xf32>
    %40 = arith.divf %39, %38 : vector<32x128xf32>
    %cst_18 = arith.constant 1.06140542 : f32
    %41 = vector.broadcast %cst_18 : f32 to vector<32x128xf32>
    %42 = arith.mulf %41, %40 : vector<32x128xf32>
    %cst_19 = arith.constant 1.45315206 : f32
    %43 = vector.broadcast %cst_19 : f32 to vector<32x128xf32>
    %44 = arith.subf %42, %43 : vector<32x128xf32>
    %45 = arith.mulf %44, %40 : vector<32x128xf32>
    %cst_20 = arith.constant 1.42141378 : f32
    %46 = vector.broadcast %cst_20 : f32 to vector<32x128xf32>
    %47 = arith.addf %45, %46 : vector<32x128xf32>
    %48 = arith.mulf %47, %40 : vector<32x128xf32>
    %cst_21 = arith.constant 0.284496725 : f32
    %49 = vector.broadcast %cst_21 : f32 to vector<32x128xf32>
    %50 = arith.subf %48, %49 : vector<32x128xf32>
    %51 = arith.mulf %50, %40 : vector<32x128xf32>
    %cst_22 = arith.constant 0.254829586 : f32
    %52 = vector.broadcast %cst_22 : f32 to vector<32x128xf32>
    %53 = arith.addf %51, %52 : vector<32x128xf32>
    %54 = arith.mulf %53, %40 : vector<32x128xf32>
    %cst_23 = arith.constant 0.000000e+00 : f32
    %55 = vector.broadcast %cst_23 : f32 to vector<32x128xf32>
    %56 = arith.subf %55, %34 : vector<32x128xf32>
    %57 = arith.mulf %56, %34 : vector<32x128xf32>
    %58 = math.exp %57 : vector<32x128xf32>
    %59 = arith.mulf %54, %58 : vector<32x128xf32>
    %cst_24 = arith.constant 1.000000e+00 : f32
    %60 = vector.broadcast %cst_24 : f32 to vector<32x128xf32>
    %61 = arith.subf %60, %59 : vector<32x128xf32>
    %cst_25 = arith.constant 0.000000e+00 : f32
    %62 = vector.broadcast %cst_25 : f32 to vector<32x128xf32>
    %63 = arith.cmpf oge, %33, %62 : vector<32x128xf32>
    %cst_26 = arith.constant 0.000000e+00 : f32
    %64 = vector.broadcast %cst_26 : f32 to vector<32x128xf32>
    %65 = arith.subf %64, %61 : vector<32x128xf32>
    %66 = arith.select %63, %61, %65 : vector<32x128xi1>, vector<32x128xf32>
    %cst_27 = arith.constant 5.000000e-01 : f32
    %67 = vector.broadcast %cst_27 : f32 to vector<32x128xf32>
    %68 = arith.mulf %67, %31 : vector<32x128xf32>
    %cst_28 = arith.constant 1.000000e+00 : f32
    %69 = vector.broadcast %cst_28 : f32 to vector<32x128xf32>
    %70 = arith.addf %69, %66 : vector<32x128xf32>
    %71 = arith.mulf %68, %70 : vector<32x128xf32>
    %c0_29 = arith.constant 0 : index
    %c0_30 = arith.constant 0 : index
    %72 = vector.load %arg6[%c0_29, %c0_30] : memref<128x32xf32, #tpu.memory_space<vmem>>, vector<128x32xf32>
    %cst_31 = arith.constant dense<0.000000e+00> : vector<32x32xf32>
    %73 = tpu.matmul %71, %72, %cst_31 {dimension_numbers = #tpu.dot_dimension_numbers<[1], [0], [0], [1], [0, 0, 1, 1], [], []>} : vector<32x128xf32>, vector<128x32xf32>, vector<32x32xf32> -> vector<32x32xf32>
    %c0_32 = arith.constant 0 : index
    %c0_33 = arith.constant 0 : index
    %74 = vector.load %arg7[%c0_32, %c0_33] : memref<1x32xf32, #tpu.memory_space<vmem>>, vector<1x32xf32>
    %75 = vector.broadcast %74 : vector<1x32xf32> to vector<32x32xf32>
    %76 = arith.addf %73, %75 : vector<32x32xf32>
    %77 = arith.addf %0, %76 : vector<32x32xf32>
    %c0_34 = arith.constant 0 : index
    %c0_35 = arith.constant 0 : index
    %78 = vector.load %arg8[%c0_34, %c0_35] : memref<32x32xf32, #tpu.memory_space<vmem>>, vector<32x32xf32>
    tpu.vector_store %arg8[%c0_34, %c0_35], %77 {strides = array<i32>} : memref<32x32xf32, #tpu.memory_space<vmem>>, vector<32x32xf32>,
    return
  }
  func.func @transform_0(%arg0: i32) -> (i32, i32) {
    %c0_i32 = arith.constant 0 : i32
    %c0_i32_0 = arith.constant 0 : i32
    return %arg0, %c0_i32 : i32, i32
  }
  func.func @transform_1(%arg0: i32) -> (i32, i32) {
    %c0_i32 = arith.constant 0 : i32
    %c0_i32_0 = arith.constant 0 : i32
    %c0_i32_1 = arith.constant 0 : i32
    return %c0_i32, %c0_i32_0 : i32, i32
  }
  func.func @transform_2(%arg0: i32) -> (i32, i32) {
    %c0_i32 = arith.constant 0 : i32
    %c0_i32_0 = arith.constant 0 : i32
    %c0_i32_1 = arith.constant 0 : i32
    return %c0_i32, %c0_i32_0 : i32, i32
  }
  func.func @transform_3(%arg0: i32) -> (i32, i32) {
    %c0_i32 = arith.constant 0 : i32
    %c0_i32_0 = arith.constant 0 : i32
    %c0_i32_1 = arith.constant 0 : i32
    return %c0_i32, %c0_i32_0 : i32, i32
  }
  func.func @transform_4(%arg0: i32) -> (i32, i32) {
    %c0_i32 = arith.constant 0 : i32
    %c0_i32_0 = arith.constant 0 : i32
    %c0_i32_1 = arith.constant 0 : i32
    return %c0_i32, %c0_i32_0 : i32, i32
  }
  func.func @transform_5(%arg0: i32) -> (i32, i32) {
    %c0_i32 = arith.constant 0 : i32
    %c0_i32_0 = arith.constant 0 : i32
    %c0_i32_1 = arith.constant 0 : i32
    return %c0_i32, %c0_i32_0 : i32, i32
  }
  func.func @transform_6(%arg0: i32) -> (i32, i32) {
    %c0_i32 = arith.constant 0 : i32
    %c0_i32_0 = arith.constant 0 : i32
    %c0_i32_1 = arith.constant 0 : i32
    return %c0_i32, %c0_i32_0 : i32, i32
  }
  func.func @transform_7(%arg0: i32) -> (i32, i32) {
    %c0_i32 = arith.constant 0 : i32
    %c0_i32_0 = arith.constant 0 : i32
    return %arg0, %c0_i32 : i32, i32
  }
}

module attributes {stable_mosaic.version = 11 : i64} {
  func.func @_layernorm_kernel(%arg0: i32, %arg1: memref<32x32xf32, #tpu.memory_space<vmem>>, %arg2: memref<1x32xf32, #tpu.memory_space<vmem>>, %arg3: memref<1x32xf32, #tpu.memory_space<vmem>>, %arg4: memref<32x32xf32, #tpu.memory_space<vmem>>) attributes {dimension_semantics = [#tpu.dimension_semantics<parallel>], iteration_bounds = array<i64: 1>, scalar_prefetch = 0 : i64, scratch_operands = 0 : i64, tpu.core_type = #tpu.core_type<tc>, window_params = [{transform_indices = @transform_0, window_bounds = array<i64: 32, 32>}, {pipeline_mode = #tpu.pipeline_mode<synchronous>, transform_indices = @transform_1, window_bounds = array<i64: 1, 32>}, {pipeline_mode = #tpu.pipeline_mode<synchronous>, transform_indices = @transform_2, window_bounds = array<i64: 1, 32>}, {transform_indices = @transform_3, window_bounds = array<i64: 32, 32>}]} {
    %c0 = arith.constant 0 : index
    %c0_0 = arith.constant 0 : index
    %0 = vector.load %arg1[%c0, %c0_0] : memref<32x32xf32, #tpu.memory_space<vmem>>, vector<32x32xf32>
    %cst = arith.constant dense<0.000000e+00> : vector<32xf32>
    %1 = vector.multi_reduction <add>, %0, %cst [1] : vector<32x32xf32> to vector<32xf32>
    %2 = vector.shape_cast %1 : vector<32xf32> to vector<32x1xf32>
    %cst_1 = arith.constant 3.200000e+01 : f32
    %3 = vector.broadcast %cst_1 : f32 to vector<32x1xf32>
    %4 = arith.divf %2, %3 : vector<32x1xf32>
    %5 = vector.broadcast %4 : vector<32x1xf32> to vector<32x32xf32>
    %6 = arith.subf %0, %5 : vector<32x32xf32>
    %7 = vector.broadcast %4 : vector<32x1xf32> to vector<32x32xf32>
    %8 = arith.subf %0, %7 : vector<32x32xf32>
    %9 = arith.mulf %6, %8 : vector<32x32xf32>
    %cst_2 = arith.constant dense<0.000000e+00> : vector<32xf32>
    %10 = vector.multi_reduction <add>, %9, %cst_2 [1] : vector<32x32xf32> to vector<32xf32>
    %11 = vector.shape_cast %10 : vector<32xf32> to vector<32x1xf32>
    %cst_3 = arith.constant 3.200000e+01 : f32
    %12 = vector.broadcast %cst_3 : f32 to vector<32x1xf32>
    %13 = arith.divf %11, %12 : vector<32x1xf32>
    %14 = vector.broadcast %4 : vector<32x1xf32> to vector<32x32xf32>
    %15 = arith.subf %0, %14 : vector<32x32xf32>
    %cst_4 = arith.constant 9.99999974E-6 : f32
    %16 = vector.broadcast %cst_4 : f32 to vector<32x1xf32>
    %17 = arith.addf %13, %16 : vector<32x1xf32>
    %18 = math.rsqrt %17 : vector<32x1xf32>
    %19 = vector.broadcast %18 : vector<32x1xf32> to vector<32x32xf32>
    %20 = arith.mulf %15, %19 : vector<32x32xf32>
    %c0_5 = arith.constant 0 : index
    %c0_6 = arith.constant 0 : index
    %21 = vector.load %arg2[%c0_5, %c0_6] : memref<1x32xf32, #tpu.memory_space<vmem>>, vector<1x32xf32>
    %22 = vector.broadcast %21 : vector<1x32xf32> to vector<32x32xf32>
    %23 = arith.mulf %20, %22 : vector<32x32xf32>
    %c0_7 = arith.constant 0 : index
    %c0_8 = arith.constant 0 : index
    %24 = vector.load %arg3[%c0_7, %c0_8] : memref<1x32xf32, #tpu.memory_space<vmem>>, vector<1x32xf32>
    %25 = vector.broadcast %24 : vector<1x32xf32> to vector<32x32xf32>
    %26 = arith.addf %23, %25 : vector<32x32xf32>
    %c0_9 = arith.constant 0 : index
    %c0_10 = arith.constant 0 : index
    %27 = vector.load %arg4[%c0_9, %c0_10] : memref<32x32xf32, #tpu.memory_space<vmem>>, vector<32x32xf32>
    tpu.vector_store %arg4[%c0_9, %c0_10], %26 {strides = array<i32>} : memref<32x32xf32, #tpu.memory_space<vmem>>, vector<32x32xf32>,
    return
  }
  func.func @transform_0(%arg0: i32) -> (i32, i32) {
    %c0_i32 = arith.constant 0 : i32
    %c0_i32_0 = arith.constant 0 : i32
    return %arg0, %c0_i32 : i32, i32
  }
  func.func @transform_1(%arg0: i32) -> (i32, i32) {
    %c0_i32 = arith.constant 0 : i32
    %c0_i32_0 = arith.constant 0 : i32
    %c0_i32_1 = arith.constant 0 : i32
    return %c0_i32, %c0_i32_0 : i32, i32
  }
  func.func @transform_2(%arg0: i32) -> (i32, i32) {
    %c0_i32 = arith.constant 0 : i32
    %c0_i32_0 = arith.constant 0 : i32
    %c0_i32_1 = arith.constant 0 : i32
    return %c0_i32, %c0_i32_0 : i32, i32
  }
  func.func @transform_3(%arg0: i32) -> (i32, i32) {
    %c0_i32 = arith.constant 0 : i32
    %c0_i32_0 = arith.constant 0 : i32
    return %arg0, %c0_i32 : i32, i32
  }
}

module attributes {stable_mosaic.version = 11 : i64} {
  func.func @_matmul_bias_kernel(%arg0: i32, %arg1: memref<32x32xf32, #tpu.memory_space<vmem>>, %arg2: memref<32x16xf32, #tpu.memory_space<vmem>>, %arg3: memref<1x16xf32, #tpu.memory_space<vmem>>, %arg4: memref<32x16xf32, #tpu.memory_space<vmem>>) attributes {dimension_semantics = [#tpu.dimension_semantics<parallel>], iteration_bounds = array<i64: 1>, scalar_prefetch = 0 : i64, scratch_operands = 0 : i64, tpu.core_type = #tpu.core_type<tc>, window_params = [{transform_indices = @transform_0, window_bounds = array<i64: 32, 32>}, {pipeline_mode = #tpu.pipeline_mode<synchronous>, transform_indices = @transform_1, window_bounds = array<i64: 32, 16>}, {pipeline_mode = #tpu.pipeline_mode<synchronous>, transform_indices = @transform_2, window_bounds = array<i64: 1, 16>}, {transform_indices = @transform_3, window_bounds = array<i64: 32, 16>}]} {
    %c0 = arith.constant 0 : index
    %c0_0 = arith.constant 0 : index
    %0 = vector.load %arg1[%c0, %c0_0] : memref<32x32xf32, #tpu.memory_space<vmem>>, vector<32x32xf32>
    %c0_1 = arith.constant 0 : index
    %c0_2 = arith.constant 0 : index
    %1 = vector.load %arg2[%c0_1, %c0_2] : memref<32x16xf32, #tpu.memory_space<vmem>>, vector<32x16xf32>
    %cst = arith.constant dense<0.000000e+00> : vector<32x16xf32>
    %2 = tpu.matmul %0, %1, %cst {dimension_numbers = #tpu.dot_dimension_numbers<[1], [0], [0], [1], [0, 0, 1, 1], [], []>} : vector<32x32xf32>, vector<32x16xf32>, vector<32x16xf32> -> vector<32x16xf32>
    %c0_3 = arith.constant 0 : index
    %c0_4 = arith.constant 0 : index
    %3 = vector.load %arg3[%c0_3, %c0_4] : memref<1x16xf32, #tpu.memory_space<vmem>>, vector<1x16xf32>
    %4 = vector.broadcast %3 : vector<1x16xf32> to vector<32x16xf32>
    %5 = arith.addf %2, %4 : vector<32x16xf32>
    %c0_5 = arith.constant 0 : index
    %c0_6 = arith.constant 0 : index
    %6 = vector.load %arg4[%c0_5, %c0_6] : memref<32x16xf32, #tpu.memory_space<vmem>>, vector<32x16xf32>
    tpu.vector_store %arg4[%c0_5, %c0_6], %5 {strides = array<i32>} : memref<32x16xf32, #tpu.memory_space<vmem>>, vector<32x16xf32>,
    return
  }
  func.func @transform_0(%arg0: i32) -> (i32, i32) {
    %c0_i32 = arith.constant 0 : i32
    %c0_i32_0 = arith.constant 0 : i32
    return %arg0, %c0_i32 : i32, i32
  }
  func.func @transform_1(%arg0: i32) -> (i32, i32) {
    %c0_i32 = arith.constant 0 : i32
    %c0_i32_0 = arith.constant 0 : i32
    %c0_i32_1 = arith.constant 0 : i32
    return %c0_i32, %c0_i32_0 : i32, i32
  }
  func.func @transform_2(%arg0: i32) -> (i32, i32) {
    %c0_i32 = arith.constant 0 : i32
    %c0_i32_0 = arith.constant 0 : i32
    %c0_i32_1 = arith.constant 0 : i32
    return %c0_i32, %c0_i32_0 : i32, i32
  }
  func.func @transform_3(%arg0: i32) -> (i32, i32) {
    %c0_i32 = arith.constant 0 : i32
    %c0_i32_0 = arith.constant 0 : i32
    return %arg0, %c0_i32 : i32, i32
  }
}

module attributes {stable_mosaic.version = 11 : i64} {
  func.func @_ln_matmul_kernel(%arg0: i32, %arg1: memref<64x16xf32, #tpu.memory_space<vmem>>, %arg2: memref<1x16xf32, #tpu.memory_space<vmem>>, %arg3: memref<1x16xf32, #tpu.memory_space<vmem>>, %arg4: memref<16x48xf32, #tpu.memory_space<vmem>>, %arg5: memref<1x48xf32, #tpu.memory_space<vmem>>, %arg6: memref<64x48xf32, #tpu.memory_space<vmem>>) attributes {dimension_semantics = [#tpu.dimension_semantics<parallel>], iteration_bounds = array<i64: 1>, scalar_prefetch = 0 : i64, scratch_operands = 0 : i64, tpu.core_type = #tpu.core_type<tc>, window_params = [{transform_indices = @transform_0, window_bounds = array<i64: 64, 16>}, {pipeline_mode = #tpu.pipeline_mode<synchronous>, transform_indices = @transform_1, window_bounds = array<i64: 1, 16>}, {pipeline_mode = #tpu.pipeline_mode<synchronous>, transform_indices = @transform_2, window_bounds = array<i64: 1, 16>}, {pipeline_mode = #tpu.pipeline_mode<synchronous>, transform_indices = @transform_3, window_bounds = array<i64: 16, 48>}, {pipeline_mode = #tpu.pipeline_mode<synchronous>, transform_indices = @transform_4, window_bounds = array<i64: 1, 48>}, {transform_indices = @transform_5, window_bounds = array<i64: 64, 48>}]} {
    %c0 = arith.constant 0 : index
    %c0_0 = arith.constant 0 : index
    %0 = vector.load %arg1[%c0, %c0_0] : memref<64x16xf32, #tpu.memory_space<vmem>>, vector<64x16xf32>
    %cst = arith.constant dense<0.000000e+00> : vector<64xf32>
    %1 = vector.multi_reduction <add>, %0, %cst [1] : vector<64x16xf32> to vector<64xf32>
    %2 = vector.shape_cast %1 : vector<64xf32> to vector<64x1xf32>
    %cst_1 = arith.constant 1.600000e+01 : f32
    %3 = vector.broadcast %cst_1 : f32 to vector<64x1xf32>
    %4 = arith.divf %2, %3 : vector<64x1xf32>
    %5 = vector.broadcast %4 : vector<64x1xf32> to vector<64x16xf32>
    %6 = arith.subf %0, %5 : vector<64x16xf32>
    %7 = vector.broadcast %4 : vector<64x1xf32> to vector<64x16xf32>
    %8 = arith.subf %0, %7 : vector<64x16xf32>
    %9 = arith.mulf %6, %8 : vector<64x16xf32>
    %cst_2 = arith.constant dense<0.000000e+00> : vector<64xf32>
    %10 = vector.multi_reduction <add>, %9, %cst_2 [1] : vector<64x16xf32> to vector<64xf32>
    %11 = vector.shape_cast %10 : vector<64xf32> to vector<64x1xf32>
    %cst_3 = arith.constant 1.600000e+01 : f32
    %12 = vector.broadcast %cst_3 : f32 to vector<64x1xf32>
    %13 = arith.divf %11, %12 : vector<64x1xf32>
    %14 = vector.broadcast %4 : vector<64x1xf32> to vector<64x16xf32>
    %15 = arith.subf %0, %14 : vector<64x16xf32>
    %cst_4 = arith.constant 9.99999974E-6 : f32
    %16 = vector.broadcast %cst_4 : f32 to vector<64x1xf32>
    %17 = arith.addf %13, %16 : vector<64x1xf32>
    %18 = math.rsqrt %17 : vector<64x1xf32>
    %19 = vector.broadcast %18 : vector<64x1xf32> to vector<64x16xf32>
    %20 = arith.mulf %15, %19 : vector<64x16xf32>
    %c0_5 = arith.constant 0 : index
    %c0_6 = arith.constant 0 : index
    %21 = vector.load %arg2[%c0_5, %c0_6] : memref<1x16xf32, #tpu.memory_space<vmem>>, vector<1x16xf32>
    %22 = vector.broadcast %21 : vector<1x16xf32> to vector<64x16xf32>
    %23 = arith.mulf %20, %22 : vector<64x16xf32>
    %c0_7 = arith.constant 0 : index
    %c0_8 = arith.constant 0 : index
    %24 = vector.load %arg3[%c0_7, %c0_8] : memref<1x16xf32, #tpu.memory_space<vmem>>, vector<1x16xf32>
    %25 = vector.broadcast %24 : vector<1x16xf32> to vector<64x16xf32>
    %26 = arith.addf %23, %25 : vector<64x16xf32>
    %c0_9 = arith.constant 0 : index
    %c0_10 = arith.constant 0 : index
    %27 = vector.load %arg4[%c0_9, %c0_10] : memref<16x48xf32, #tpu.memory_space<vmem>>, vector<16x48xf32>
    %cst_11 = arith.constant dense<0.000000e+00> : vector<64x48xf32>
    %28 = tpu.matmul %26, %27, %cst_11 {dimension_numbers = #tpu.dot_dimension_numbers<[1], [0], [0], [1], [0, 0, 1, 1], [], []>} : vector<64x16xf32>, vector<16x48xf32>, vector<64x48xf32> -> vector<64x48xf32>
    %c0_12 = arith.constant 0 : index
    %c0_13 = arith.constant 0 : index
    %29 = vector.load %arg5[%c0_12, %c0_13] : memref<1x48xf32, #tpu.memory_space<vmem>>, vector<1x48xf32>
    %30 = vector.broadcast %29 : vector<1x48xf32> to vector<64x48xf32>
    %31 = arith.addf %28, %30 : vector<64x48xf32>
    %c0_14 = arith.constant 0 : index
    %c0_15 = arith.constant 0 : index
    %32 = vector.load %arg6[%c0_14, %c0_15] : memref<64x48xf32, #tpu.memory_space<vmem>>, vector<64x48xf32>
    tpu.vector_store %arg6[%c0_14, %c0_15], %31 {strides = array<i32>} : memref<64x48xf32, #tpu.memory_space<vmem>>, vector<64x48xf32>,
    return
  }
  func.func @transform_0(%arg0: i32) -> (i32, i32) {
    %c0_i32 = arith.constant 0 : i32
    %c0_i32_0 = arith.constant 0 : i32
    return %arg0, %c0_i32 : i32, i32
  }
  func.func @transform_1(%arg0: i32) -> (i32, i32) {
    %c0_i32 = arith.constant 0 : i32
    %c0_i32_0 = arith.constant 0 : i32
    %c0_i32_1 = arith.constant 0 : i32
    return %c0_i32, %c0_i32_0 : i32, i32
  }
  func.func @transform_2(%arg0: i32) -> (i32, i32) {
    %c0_i32 = arith.constant 0 : i32
    %c0_i32_0 = arith.constant 0 : i32
    %c0_i32_1 = arith.constant 0 : i32
    return %c0_i32, %c0_i32_0 : i32, i32
  }
  func.func @transform_3(%arg0: i32) -> (i32, i32) {
    %c0_i32 = arith.constant 0 : i32
    %c0_i32_0 = arith.constant 0 : i32
    %c0_i32_1 = arith.constant 0 : i32
    return %c0_i32, %c0_i32_0 : i32, i32
  }
  func.func @transform_4(%arg0: i32) -> (i32, i32) {
    %c0_i32 = arith.constant 0 : i32
    %c0_i32_0 = arith.constant 0 : i32
    %c0_i32_1 = arith.constant 0 : i32
    return %c0_i32, %c0_i32_0 : i32, i32
  }
  func.func @transform_5(%arg0: i32) -> (i32, i32) {
    %c0_i32 = arith.constant 0 : i32
    %c0_i32_0 = arith.constant 0 : i32
    return %arg0, %c0_i32 : i32, i32
  }
}

module attributes {stable_mosaic.version = 11 : i64} {
  func.func @_attn_block_kernel(%arg0: i32, %arg1: i32, %arg2: memref<1x16x16xf32, #tpu.memory_space<vmem>>, %arg3: memref<1x4x16x4xf32, #tpu.memory_space<vmem>>, %arg4: memref<1x2x4x16x4xf32, #tpu.memory_space<vmem>>, %arg5: memref<4x4x16xf32, #tpu.memory_space<vmem>>, %arg6: memref<1x16xf32, #tpu.memory_space<vmem>>, %arg7: memref<1x16x16xf32, #tpu.memory_space<vmem>>) attributes {dimension_semantics = [#tpu.dimension_semantics<parallel>, #tpu.dimension_semantics<parallel>], iteration_bounds = array<i64: 4, 1>, scalar_prefetch = 0 : i64, scratch_operands = 0 : i64, tpu.core_type = #tpu.core_type<tc>, window_params = [{transform_indices = @transform_0, window_bounds = array<i64: 1, 16, 16>}, {transform_indices = @transform_1, window_bounds = array<i64: 1, 4, 16, 4>}, {transform_indices = @transform_2, window_bounds = array<i64: 1, 2, 4, 16, 4>}, {pipeline_mode = #tpu.pipeline_mode<synchronous>, transform_indices = @transform_3, window_bounds = array<i64: 4, 4, 16>}, {pipeline_mode = #tpu.pipeline_mode<synchronous>, transform_indices = @transform_4, window_bounds = array<i64: 1, 16>}, {transform_indices = @transform_5, window_bounds = array<i64: 1, 16, 16>}]} {
    %c0 = arith.constant 0 : index
    %c0_0 = arith.constant 0 : index
    %c0_1 = arith.constant 0 : index
    %0 = vector.load %arg2[%c0, %c0_0, %c0_1] : memref<1x16x16xf32, #tpu.memory_space<vmem>>, vector<1x16x16xf32>
    %1 = vector.shape_cast %0 : vector<1x16x16xf32> to vector<16x16xf32>
    %c0_2 = arith.constant 0 : index
    %c0_3 = arith.constant 0 : index
    %c0_4 = arith.constant 0 : index
    %c0_5 = arith.constant 0 : index
    %2 = vector.load %arg3[%c0_2, %c0_3, %c0_4, %c0_5] : memref<1x4x16x4xf32, #tpu.memory_space<vmem>>, vector<1x4x16x4xf32>
    %3 = vector.shape_cast %2 : vector<1x4x16x4xf32> to vector<4x16x4xf32>
    %c0_6 = arith.constant 0 : index
    %c0_7 = arith.constant 0 : index
    %c0_8 = arith.constant 0 : index
    %c0_9 = arith.constant 0 : index
    %c0_10 = arith.constant 0 : index
    %4 = vector.load %arg4[%c0_6, %c0_7, %c0_8, %c0_9, %c0_10] : memref<1x2x4x16x4xf32, #tpu.memory_space<vmem>>, vector<1x1x4x16x4xf32>
    %5 = vector.shape_cast %4 : vector<1x1x4x16x4xf32> to vector<4x16x4xf32>
    %c0_11 = arith.constant 0 : index
    %c1 = arith.constant 1 : index
    %c0_12 = arith.constant 0 : index
    %c0_13 = arith.constant 0 : index
    %c0_14 = arith.constant 0 : index
    %6 = vector.load %arg4[%c0_11, %c1, %c0_12, %c0_13, %c0_14] : memref<1x2x4x16x4xf32, #tpu.memory_space<vmem>>, vector<1x1x4x16x4xf32>
    %7 = vector.shape_cast %6 : vector<1x1x4x16x4xf32> to vector<4x16x4xf32>
    %cst = arith.constant dense<0.000000e+00> : vector<4x16x16xf32>
    %8 = tpu.matmul %3, %5, %cst {dimension_numbers = #tpu.dot_dimension_numbers<[2], [2], [1], [1], [0, 0, 0, 1, 1, 1], [0], [0]>} : vector<4x16x4xf32>, vector<4x16x4xf32>, vector<4x16x16xf32> -> vector<4x16x16xf32>
    %cst_15 = arith.constant dense<0xFF800000> : vector<4x16xf32>
    %9 = vector.multi_reduction <maximumf>, %8, %cst_15 [2] : vector<4x16x16xf32> to vector<4x16xf32>
    %10 = vector.shape_cast %9 : vector<4x16xf32> to vector<4x16x1xf32>
    %11 = vector.broadcast %10 : vector<4x16x1xf32> to vector<4x16x16xf32>
    %12 = arith.subf %8, %11 : vector<4x16x16xf32>
    %13 = math.exp %12 : vector<4x16x16xf32>
    %cst_16 = arith.constant dense<0.000000e+00> : vector<4x16xf32>
    %14 = vector.multi_reduction <add>, %13, %cst_16 [2] : vector<4x16x16xf32> to vector<4x16xf32>
    %15 = vector.shape_cast %14 : vector<4x16xf32> to vector<4x16x1xf32>
    %16 = tpu.reciprocal %15 {approx = true} : vector<4x16x1xf32> -> vector<4x16x1xf32>
    %17 = vector.broadcast %16 : vector<4x16x1xf32> to vector<4x16x16xf32>
    %18 = arith.mulf %13, %17 : vector<4x16x16xf32>
    %cst_17 = arith.constant dense<0.000000e+00> : vector<4x16x4xf32>
    %19 = tpu.matmul %18, %7, %cst_17 {dimension_numbers = #tpu.dot_dimension_numbers<[2], [1], [1], [2], [0, 0, 0, 1, 1, 2], [0], [0]>} : vector<4x16x16xf32>, vector<4x16x4xf32>, vector<4x16x4xf32> -> vector<4x16x4xf32>
    %c0_18 = arith.constant 0 : index
    %c0_19 = arith.constant 0 : index
    %c0_20 = arith.constant 0 : index
    %20 = vector.load %arg5[%c0_18, %c0_19, %c0_20] : memref<4x4x16xf32, #tpu.memory_space<vmem>>, vector<4x4x16xf32>
    %cst_21 = arith.constant dense<0.000000e+00> : vector<4x16x16xf32>
    %21 = tpu.matmul %19, %20, %cst_21 {dimension_numbers = #tpu.dot_dimension_numbers<[2], [1], [1], [2], [0, 0, 0, 1, 1, 2], [0], [0]>} : vector<4x16x4xf32>, vector<4x4x16xf32>, vector<4x16x16xf32> -> vector<4x16x16xf32>
    %cst_22 = arith.constant dense<0.000000e+00> : vector<16x16xf32>
    %22 = vector.multi_reduction <add>, %21, %cst_22 [0] : vector<4x16x16xf32> to vector<16x16xf32>
    %23 = arith.addf %1, %22 : vector<16x16xf32>
    %c0_23 = arith.constant 0 : index
    %c0_24 = arith.constant 0 : index
    %24 = vector.load %arg6[%c0_23, %c0_24] : memref<1x16xf32, #tpu.memory_space<vmem>>, vector<1x16xf32>
    %25 = vector.broadcast %24 : vector<1x16xf32> to vector<16x16xf32>
    %26 = arith.addf %23, %25 : vector<16x16xf32>
    %c0_25 = arith.constant 0 : index
    %c0_26 = arith.constant 0 : index
    %c0_27 = arith.constant 0 : index
    %27 = vector.load %arg7[%c0_25, %c0_26, %c0_27] : memref<1x16x16xf32, #tpu.memory_space<vmem>>, vector<1x16x16xf32>
    %28 = vector.shape_cast %27 : vector<1x16x16xf32> to vector<16x16xf32>
    %29 = vector.shape_cast %26 : vector<16x16xf32> to vector<1x16x16xf32>
    tpu.vector_store %arg7[%c0_25, %c0_26, %c0_27], %29 {strides = array<i32>} : memref<1x16x16xf32, #tpu.memory_space<vmem>>, vector<1x16x16xf32>,
    return
  }
  func.func @transform_0(%arg0: i32, %arg1: i32) -> (i32, i32, i32) {
    %c0_i32 = arith.constant 0 : i32
    %c0_i32_0 = arith.constant 0 : i32
    return %arg0, %arg1, %c0_i32 : i32, i32, i32
  }
  func.func @transform_1(%arg0: i32, %arg1: i32) -> (i32, i32, i32, i32) {
    %c0_i32 = arith.constant 0 : i32
    %c0_i32_0 = arith.constant 0 : i32
    %c0_i32_1 = arith.constant 0 : i32
    return %arg0, %c0_i32, %arg1, %c0_i32_0 : i32, i32, i32, i32
  }
  func.func @transform_2(%arg0: i32, %arg1: i32) -> (i32, i32, i32, i32, i32) {
    %c0_i32 = arith.constant 0 : i32
    %c0_i32_0 = arith.constant 0 : i32
    %c0_i32_1 = arith.constant 0 : i32
    %c0_i32_2 = arith.constant 0 : i32
    %c0_i32_3 = arith.constant 0 : i32
    return %arg0, %c0_i32, %c0_i32_0, %c0_i32_1, %c0_i32_2 : i32, i32, i32, i32, i32
  }
  func.func @transform_3(%arg0: i32, %arg1: i32) -> (i32, i32, i32) {
    %c0_i32 = arith.constant 0 : i32
    %c0_i32_0 = arith.constant 0 : i32
    %c0_i32_1 = arith.constant 0 : i32
    %c0_i32_2 = arith.constant 0 : i32
    return %c0_i32, %c0_i32_0, %c0_i32_1 : i32, i32, i32
  }
  func.func @transform_4(%arg0: i32, %arg1: i32) -> (i32, i32) {
    %c0_i32 = arith.constant 0 : i32
    %c0_i32_0 = arith.constant 0 : i32
    %c0_i32_1 = arith.constant 0 : i32
    return %c0_i32, %c0_i32_0 : i32, i32
  }
  func.func @transform_5(%arg0: i32, %arg1: i32) -> (i32, i32, i32) {
    %c0_i32 = arith.constant 0 : i32
    %c0_i32_0 = arith.constant 0 : i32
    return %arg0, %arg1, %c0_i32 : i32, i32, i32
  }
}

module attributes {stable_mosaic.version = 11 : i64} {
  func.func @_mlp_block_kernel(%arg0: i32, %arg1: memref<64x16xf32, #tpu.memory_space<vmem>>, %arg2: memref<1x16xf32, #tpu.memory_space<vmem>>, %arg3: memref<1x16xf32, #tpu.memory_space<vmem>>, %arg4: memref<16x64xf32, #tpu.memory_space<vmem>>, %arg5: memref<1x64xf32, #tpu.memory_space<vmem>>, %arg6: memref<64x16xf32, #tpu.memory_space<vmem>>, %arg7: memref<1x16xf32, #tpu.memory_space<vmem>>, %arg8: memref<64x16xf32, #tpu.memory_space<vmem>>) attributes {dimension_semantics = [#tpu.dimension_semantics<parallel>], iteration_bounds = array<i64: 1>, scalar_prefetch = 0 : i64, scratch_operands = 0 : i64, tpu.core_type = #tpu.core_type<tc>, window_params = [{transform_indices = @transform_0, window_bounds = array<i64: 64, 16>}, {pipeline_mode = #tpu.pipeline_mode<synchronous>, transform_indices = @transform_1, window_bounds = array<i64: 1, 16>}, {pipeline_mode = #tpu.pipeline_mode<synchronous>, transform_indices = @transform_2, window_bounds = array<i64: 1, 16>}, {pipeline_mode = #tpu.pipeline_mode<synchronous>, transform_indices = @transform_3, window_bounds = array<i64: 16, 64>}, {pipeline_mode = #tpu.pipeline_mode<synchronous>, transform_indices = @transform_4, window_bounds = array<i64: 1, 64>}, {pipeline_mode = #tpu.pipeline_mode<synchronous>, transform_indices = @transform_5, window_bounds = array<i64: 64, 16>}, {pipeline_mode = #tpu.pipeline_mode<synchronous>, transform_indices = @transform_6, window_bounds = array<i64: 1, 16>}, {transform_indices = @transform_7, window_bounds = array<i64: 64, 16>}]} {
    %c0 = arith.constant 0 : index
    %c0_0 = arith.constant 0 : index
    %0 = vector.load %arg1[%c0, %c0_0] : memref<64x16xf32, #tpu.memory_space<vmem>>, vector<64x16xf32>
    %cst = arith.constant dense<0.000000e+00> : vector<64xf32>
    %1 = vector.multi_reduction <add>, %0, %cst [1] : vector<64x16xf32> to vector<64xf32>
    %2 = vector.shape_cast %1 : vector<64xf32> to vector<64x1xf32>
    %cst_1 = arith.constant 1.600000e+01 : f32
    %3 = vector.broadcast %cst_1 : f32 to vector<64x1xf32>
    %4 = arith.divf %2, %3 : vector<64x1xf32>
    %5 = vector.broadcast %4 : vector<64x1xf32> to vector<64x16xf32>
    %6 = arith.subf %0, %5 : vector<64x16xf32>
    %7 = vector.broadcast %4 : vector<64x1xf32> to vector<64x16xf32>
    %8 = arith.subf %0, %7 : vector<64x16xf32>
    %9 = arith.mulf %6, %8 : vector<64x16xf32>
    %cst_2 = arith.constant dense<0.000000e+00> : vector<64xf32>
    %10 = vector.multi_reduction <add>, %9, %cst_2 [1] : vector<64x16xf32> to vector<64xf32>
    %11 = vector.shape_cast %10 : vector<64xf32> to vector<64x1xf32>
    %cst_3 = arith.constant 1.600000e+01 : f32
    %12 = vector.broadcast %cst_3 : f32 to vector<64x1xf32>
    %13 = arith.divf %11, %12 : vector<64x1xf32>
    %14 = vector.broadcast %4 : vector<64x1xf32> to vector<64x16xf32>
    %15 = arith.subf %0, %14 : vector<64x16xf32>
    %cst_4 = arith.constant 9.99999974E-6 : f32
    %16 = vector.broadcast %cst_4 : f32 to vector<64x1xf32>
    %17 = arith.addf %13, %16 : vector<64x1xf32>
    %18 = math.rsqrt %17 : vector<64x1xf32>
    %19 = vector.broadcast %18 : vector<64x1xf32> to vector<64x16xf32>
    %20 = arith.mulf %15, %19 : vector<64x16xf32>
    %c0_5 = arith.constant 0 : index
    %c0_6 = arith.constant 0 : index
    %21 = vector.load %arg2[%c0_5, %c0_6] : memref<1x16xf32, #tpu.memory_space<vmem>>, vector<1x16xf32>
    %22 = vector.broadcast %21 : vector<1x16xf32> to vector<64x16xf32>
    %23 = arith.mulf %20, %22 : vector<64x16xf32>
    %c0_7 = arith.constant 0 : index
    %c0_8 = arith.constant 0 : index
    %24 = vector.load %arg3[%c0_7, %c0_8] : memref<1x16xf32, #tpu.memory_space<vmem>>, vector<1x16xf32>
    %25 = vector.broadcast %24 : vector<1x16xf32> to vector<64x16xf32>
    %26 = arith.addf %23, %25 : vector<64x16xf32>
    %c0_9 = arith.constant 0 : index
    %c0_10 = arith.constant 0 : index
    %27 = vector.load %arg4[%c0_9, %c0_10] : memref<16x64xf32, #tpu.memory_space<vmem>>, vector<16x64xf32>
    %cst_11 = arith.constant dense<0.000000e+00> : vector<64x64xf32>
    %28 = tpu.matmul %26, %27, %cst_11 {dimension_numbers = #tpu.dot_dimension_numbers<[1], [0], [0], [1], [0, 0, 1, 1], [], []>} : vector<64x16xf32>, vector<16x64xf32>, vector<64x64xf32> -> vector<64x64xf32>
    %c0_12 = arith.constant 0 : index
    %c0_13 = arith.constant 0 : index
    %29 = vector.load %arg5[%c0_12, %c0_13] : memref<1x64xf32, #tpu.memory_space<vmem>>, vector<1x64xf32>
    %30 = vector.broadcast %29 : vector<1x64xf32> to vector<64x64xf32>
    %31 = arith.addf %28, %30 : vector<64x64xf32>
    %cst_14 = arith.constant 0.707106769 : f32
    %32 = vector.broadcast %cst_14 : f32 to vector<64x64xf32>
    %33 = arith.mulf %31, %32 : vector<64x64xf32>
    %34 = math.absf %33 : vector<64x64xf32>
    %cst_15 = arith.constant 0.327591091 : f32
    %35 = vector.broadcast %cst_15 : f32 to vector<64x64xf32>
    %36 = arith.mulf %35, %34 : vector<64x64xf32>
    %cst_16 = arith.constant 1.000000e+00 : f32
    %37 = vector.broadcast %cst_16 : f32 to vector<64x64xf32>
    %38 = arith.addf %37, %36 : vector<64x64xf32>
    %cst_17 = arith.constant 1.000000e+00 : f32
    %39 = vector.broadcast %cst_17 : f32 to vector<64x64xf32>
    %40 = arith.divf %39, %38 : vector<64x64xf32>
    %cst_18 = arith.constant 1.06140542 : f32
    %41 = vector.broadcast %cst_18 : f32 to vector<64x64xf32>
    %42 = arith.mulf %41, %40 : vector<64x64xf32>
    %cst_19 = arith.constant 1.45315206 : f32
    %43 = vector.broadcast %cst_19 : f32 to vector<64x64xf32>
    %44 = arith.subf %42, %43 : vector<64x64xf32>
    %45 = arith.mulf %44, %40 : vector<64x64xf32>
    %cst_20 = arith.constant 1.42141378 : f32
    %46 = vector.broadcast %cst_20 : f32 to vector<64x64xf32>
    %47 = arith.addf %45, %46 : vector<64x64xf32>
    %48 = arith.mulf %47, %40 : vector<64x64xf32>
    %cst_21 = arith.constant 0.284496725 : f32
    %49 = vector.broadcast %cst_21 : f32 to vector<64x64xf32>
    %50 = arith.subf %48, %49 : vector<64x64xf32>
    %51 = arith.mulf %50, %40 : vector<64x64xf32>
    %cst_22 = arith.constant 0.254829586 : f32
    %52 = vector.broadcast %cst_22 : f32 to vector<64x64xf32>
    %53 = arith.addf %51, %52 : vector<64x64xf32>
    %54 = arith.mulf %53, %40 : vector<64x64xf32>
    %cst_23 = arith.constant 0.000000e+00 : f32
    %55 = vector.broadcast %cst_23 : f32 to vector<64x64xf32>
    %56 = arith.subf %55, %34 : vector<64x64xf32>
    %57 = arith.mulf %56, %34 : vector<64x64xf32>
    %58 = math.exp %57 : vector<64x64xf32>
    %59 = arith.mulf %54, %58 : vector<64x64xf32>
    %cst_24 = arith.constant 1.000000e+00 : f32
    %60 = vector.broadcast %cst_24 : f32 to vector<64x64xf32>
    %61 = arith.subf %60, %59 : vector<64x64xf32>
    %cst_25 = arith.constant 0.000000e+00 : f32
    %62 = vector.broadcast %cst_25 : f32 to vector<64x64xf32>
    %63 = arith.cmpf oge, %33, %62 : vector<64x64xf32>
    %cst_26 = arith.constant 0.000000e+00 : f32
    %64 = vector.broadcast %cst_26 : f32 to vector<64x64xf32>
    %65 = arith.subf %64, %61 : vector<64x64xf32>
    %66 = arith.select %63, %61, %65 : vector<64x64xi1>, vector<64x64xf32>
    %cst_27 = arith.constant 5.000000e-01 : f32
    %67 = vector.broadcast %cst_27 : f32 to vector<64x64xf32>
    %68 = arith.mulf %67, %31 : vector<64x64xf32>
    %cst_28 = arith.constant 1.000000e+00 : f32
    %69 = vector.broadcast %cst_28 : f32 to vector<64x64xf32>
    %70 = arith.addf %69, %66 : vector<64x64xf32>
    %71 = arith.mulf %68, %70 : vector<64x64xf32>
    %c0_29 = arith.constant 0 : index
    %c0_30 = arith.constant 0 : index
    %72 = vector.load %arg6[%c0_29, %c0_30] : memref<64x16xf32, #tpu.memory_space<vmem>>, vector<64x16xf32>
    %cst_31 = arith.constant dense<0.000000e+00> : vector<64x16xf32>
    %73 = tpu.matmul %71, %72, %cst_31 {dimension_numbers = #tpu.dot_dimension_numbers<[1], [0], [0], [1], [0, 0, 1, 1], [], []>} : vector<64x64xf32>, vector<64x16xf32>, vector<64x16xf32> -> vector<64x16xf32>
    %c0_32 = arith.constant 0 : index
    %c0_33 = arith.constant 0 : index
    %74 = vector.load %arg7[%c0_32, %c0_33] : memref<1x16xf32, #tpu.memory_space<vmem>>, vector<1x16xf32>
    %75 = vector.broadcast %74 : vector<1x16xf32> to vector<64x16xf32>
    %76 = arith.addf %73, %75 : vector<64x16xf32>
    %77 = arith.addf %0, %76 : vector<64x16xf32>
    %c0_34 = arith.constant 0 : index
    %c0_35 = arith.constant 0 : index
    %78 = vector.load %arg8[%c0_34, %c0_35] : memref<64x16xf32, #tpu.memory_space<vmem>>, vector<64x16xf32>
    tpu.vector_store %arg8[%c0_34, %c0_35], %77 {strides = array<i32>} : memref<64x16xf32, #tpu.memory_space<vmem>>, vector<64x16xf32>,
    return
  }
  func.func @transform_0(%arg0: i32) -> (i32, i32) {
    %c0_i32 = arith.constant 0 : i32
    %c0_i32_0 = arith.constant 0 : i32
    return %arg0, %c0_i32 : i32, i32
  }
  func.func @transform_1(%arg0: i32) -> (i32, i32) {
    %c0_i32 = arith.constant 0 : i32
    %c0_i32_0 = arith.constant 0 : i32
    %c0_i32_1 = arith.constant 0 : i32
    return %c0_i32, %c0_i32_0 : i32, i32
  }
  func.func @transform_2(%arg0: i32) -> (i32, i32) {
    %c0_i32 = arith.constant 0 : i32
    %c0_i32_0 = arith.constant 0 : i32
    %c0_i32_1 = arith.constant 0 : i32
    return %c0_i32, %c0_i32_0 : i32, i32
  }
  func.func @transform_3(%arg0: i32) -> (i32, i32) {
    %c0_i32 = arith.constant 0 : i32
    %c0_i32_0 = arith.constant 0 : i32
    %c0_i32_1 = arith.constant 0 : i32
    return %c0_i32, %c0_i32_0 : i32, i32
  }
  func.func @transform_4(%arg0: i32) -> (i32, i32) {
    %c0_i32 = arith.constant 0 : i32
    %c0_i32_0 = arith.constant 0 : i32
    %c0_i32_1 = arith.constant 0 : i32
    return %c0_i32, %c0_i32_0 : i32, i32
  }
  func.func @transform_5(%arg0: i32) -> (i32, i32) {
    %c0_i32 = arith.constant 0 : i32
    %c0_i32_0 = arith.constant 0 : i32
    %c0_i32_1 = arith.constant 0 : i32
    return %c0_i32, %c0_i32_0 : i32, i32
  }
  func.func @transform_6(%arg0: i32) -> (i32, i32) {
    %c0_i32 = arith.constant 0 : i32
    %c0_i32_0 = arith.constant 0 : i32
    %c0_i32_1 = arith.constant 0 : i32
    return %c0_i32, %c0_i32_0 : i32, i32
  }
  func.func @transform_7(%arg0: i32) -> (i32, i32) {
    %c0_i32 = arith.constant 0 : i32
    %c0_i32_0 = arith.constant 0 : i32
    return %arg0, %c0_i32 : i32, i32
  }
}

module attributes {stable_mosaic.version = 11 : i64} {
  func.func @_layernorm_kernel(%arg0: i32, %arg1: memref<64x16xf32, #tpu.memory_space<vmem>>, %arg2: memref<1x16xf32, #tpu.memory_space<vmem>>, %arg3: memref<1x16xf32, #tpu.memory_space<vmem>>, %arg4: memref<64x16xf32, #tpu.memory_space<vmem>>) attributes {dimension_semantics = [#tpu.dimension_semantics<parallel>], iteration_bounds = array<i64: 1>, scalar_prefetch = 0 : i64, scratch_operands = 0 : i64, tpu.core_type = #tpu.core_type<tc>, window_params = [{transform_indices = @transform_0, window_bounds = array<i64: 64, 16>}, {pipeline_mode = #tpu.pipeline_mode<synchronous>, transform_indices = @transform_1, window_bounds = array<i64: 1, 16>}, {pipeline_mode = #tpu.pipeline_mode<synchronous>, transform_indices = @transform_2, window_bounds = array<i64: 1, 16>}, {transform_indices = @transform_3, window_bounds = array<i64: 64, 16>}]} {
    %c0 = arith.constant 0 : index
    %c0_0 = arith.constant 0 : index
    %0 = vector.load %arg1[%c0, %c0_0] : memref<64x16xf32, #tpu.memory_space<vmem>>, vector<64x16xf32>
    %cst = arith.constant dense<0.000000e+00> : vector<64xf32>
    %1 = vector.multi_reduction <add>, %0, %cst [1] : vector<64x16xf32> to vector<64xf32>
    %2 = vector.shape_cast %1 : vector<64xf32> to vector<64x1xf32>
    %cst_1 = arith.constant 1.600000e+01 : f32
    %3 = vector.broadcast %cst_1 : f32 to vector<64x1xf32>
    %4 = arith.divf %2, %3 : vector<64x1xf32>
    %5 = vector.broadcast %4 : vector<64x1xf32> to vector<64x16xf32>
    %6 = arith.subf %0, %5 : vector<64x16xf32>
    %7 = vector.broadcast %4 : vector<64x1xf32> to vector<64x16xf32>
    %8 = arith.subf %0, %7 : vector<64x16xf32>
    %9 = arith.mulf %6, %8 : vector<64x16xf32>
    %cst_2 = arith.constant dense<0.000000e+00> : vector<64xf32>
    %10 = vector.multi_reduction <add>, %9, %cst_2 [1] : vector<64x16xf32> to vector<64xf32>
    %11 = vector.shape_cast %10 : vector<64xf32> to vector<64x1xf32>
    %cst_3 = arith.constant 1.600000e+01 : f32
    %12 = vector.broadcast %cst_3 : f32 to vector<64x1xf32>
    %13 = arith.divf %11, %12 : vector<64x1xf32>
    %14 = vector.broadcast %4 : vector<64x1xf32> to vector<64x16xf32>
    %15 = arith.subf %0, %14 : vector<64x16xf32>
    %cst_4 = arith.constant 9.99999974E-6 : f32
    %16 = vector.broadcast %cst_4 : f32 to vector<64x1xf32>
    %17 = arith.addf %13, %16 : vector<64x1xf32>
    %18 = math.rsqrt %17 : vector<64x1xf32>
    %19 = vector.broadcast %18 : vector<64x1xf32> to vector<64x16xf32>
    %20 = arith.mulf %15, %19 : vector<64x16xf32>
    %c0_5 = arith.constant 0 : index
    %c0_6 = arith.constant 0 : index
    %21 = vector.load %arg2[%c0_5, %c0_6] : memref<1x16xf32, #tpu.memory_space<vmem>>, vector<1x16xf32>
    %22 = vector.broadcast %21 : vector<1x16xf32> to vector<64x16xf32>
    %23 = arith.mulf %20, %22 : vector<64x16xf32>
    %c0_7 = arith.constant 0 : index
    %c0_8 = arith.constant 0 : index
    %24 = vector.load %arg3[%c0_7, %c0_8] : memref<1x16xf32, #tpu.memory_space<vmem>>, vector<1x16xf32>
    %25 = vector.broadcast %24 : vector<1x16xf32> to vector<64x16xf32>
    %26 = arith.addf %23, %25 : vector<64x16xf32>
    %c0_9 = arith.constant 0 : index
    %c0_10 = arith.constant 0 : index
    %27 = vector.load %arg4[%c0_9, %c0_10] : memref<64x16xf32, #tpu.memory_space<vmem>>, vector<64x16xf32>
    tpu.vector_store %arg4[%c0_9, %c0_10], %26 {strides = array<i32>} : memref<64x16xf32, #tpu.memory_space<vmem>>, vector<64x16xf32>,
    return
  }
  func.func @transform_0(%arg0: i32) -> (i32, i32) {
    %c0_i32 = arith.constant 0 : i32
    %c0_i32_0 = arith.constant 0 : i32
    return %arg0, %c0_i32 : i32, i32
  }
  func.func @transform_1(%arg0: i32) -> (i32, i32) {
    %c0_i32 = arith.constant 0 : i32
    %c0_i32_0 = arith.constant 0 : i32
    %c0_i32_1 = arith.constant 0 : i32
    return %c0_i32, %c0_i32_0 : i32, i32
  }
  func.func @transform_2(%arg0: i32) -> (i32, i32) {
    %c0_i32 = arith.constant 0 : i32
    %c0_i32_0 = arith.constant 0 : i32
    %c0_i32_1 = arith.constant 0 : i32
    return %c0_i32, %c0_i32_0 : i32, i32
  }
  func.func @transform_3(%arg0: i32) -> (i32, i32) {
    %c0_i32 = arith.constant 0 : i32
    %c0_i32_0 = arith.constant 0 : i32
    return %arg0, %c0_i32 : i32, i32
  }
}

module attributes {stable_mosaic.version = 11 : i64} {
  func.func @_matmul_bias_kernel(%arg0: i32, %arg1: memref<32x16xf32, #tpu.memory_space<vmem>>, %arg2: memref<16x32xf32, #tpu.memory_space<vmem>>, %arg3: memref<1x32xf32, #tpu.memory_space<vmem>>, %arg4: memref<32x32xf32, #tpu.memory_space<vmem>>) attributes {dimension_semantics = [#tpu.dimension_semantics<parallel>], iteration_bounds = array<i64: 1>, scalar_prefetch = 0 : i64, scratch_operands = 0 : i64, tpu.core_type = #tpu.core_type<tc>, window_params = [{transform_indices = @transform_0, window_bounds = array<i64: 32, 16>}, {pipeline_mode = #tpu.pipeline_mode<synchronous>, transform_indices = @transform_1, window_bounds = array<i64: 16, 32>}, {pipeline_mode = #tpu.pipeline_mode<synchronous>, transform_indices = @transform_2, window_bounds = array<i64: 1, 32>}, {transform_indices = @transform_3, window_bounds = array<i64: 32, 32>}]} {
    %c0 = arith.constant 0 : index
    %c0_0 = arith.constant 0 : index
    %0 = vector.load %arg1[%c0, %c0_0] : memref<32x16xf32, #tpu.memory_space<vmem>>, vector<32x16xf32>
    %c0_1 = arith.constant 0 : index
    %c0_2 = arith.constant 0 : index
    %1 = vector.load %arg2[%c0_1, %c0_2] : memref<16x32xf32, #tpu.memory_space<vmem>>, vector<16x32xf32>
    %cst = arith.constant dense<0.000000e+00> : vector<32x32xf32>
    %2 = tpu.matmul %0, %1, %cst {dimension_numbers = #tpu.dot_dimension_numbers<[1], [0], [0], [1], [0, 0, 1, 1], [], []>} : vector<32x16xf32>, vector<16x32xf32>, vector<32x32xf32> -> vector<32x32xf32>
    %c0_3 = arith.constant 0 : index
    %c0_4 = arith.constant 0 : index
    %3 = vector.load %arg3[%c0_3, %c0_4] : memref<1x32xf32, #tpu.memory_space<vmem>>, vector<1x32xf32>
    %4 = vector.broadcast %3 : vector<1x32xf32> to vector<32x32xf32>
    %5 = arith.addf %2, %4 : vector<32x32xf32>
    %c0_5 = arith.constant 0 : index
    %c0_6 = arith.constant 0 : index
    %6 = vector.load %arg4[%c0_5, %c0_6] : memref<32x32xf32, #tpu.memory_space<vmem>>, vector<32x32xf32>
    tpu.vector_store %arg4[%c0_5, %c0_6], %5 {strides = array<i32>} : memref<32x32xf32, #tpu.memory_space<vmem>>, vector<32x32xf32>,
    return
  }
  func.func @transform_0(%arg0: i32) -> (i32, i32) {
    %c0_i32 = arith.constant 0 : i32
    %c0_i32_0 = arith.constant 0 : i32
    return %arg0, %c0_i32 : i32, i32
  }
  func.func @transform_1(%arg0: i32) -> (i32, i32) {
    %c0_i32 = arith.constant 0 : i32
    %c0_i32_0 = arith.constant 0 : i32
    %c0_i32_1 = arith.constant 0 : i32
    return %c0_i32, %c0_i32_0 : i32, i32
  }
  func.func @transform_2(%arg0: i32) -> (i32, i32) {
    %c0_i32 = arith.constant 0 : i32
    %c0_i32_0 = arith.constant 0 : i32
    %c0_i32_1 = arith.constant 0 : i32
    return %c0_i32, %c0_i32_0 : i32, i32
  }
  func.func @transform_3(%arg0: i32) -> (i32, i32) {
    %c0_i32 = arith.constant 0 : i32
    %c0_i32_0 = arith.constant 0 : i32
    return %arg0, %c0_i32 : i32, i32
  }
}

</mosaic_0001>

<llo_original>
// kernel: eegjepa_forward.14
$region0: #{eegjepa_forward.14}
  #allocation0 [shape = 'u32[]', space=smem, size = 0x4, offset = 0x4, fixed_abs, tag = 'smem constant byte address 0x4 - core index']
  #allocation1 [shape = 'u32[144,128]{1,0:T(1,128)}', space=vmem, size = 0x12000, scoped, tag = 'internal scratch']
  %s0 = inlined_call_operand.vmem [shape: f32[32,8], index: 0, kind: input, shape index: {}]
  %s1 = inlined_call_operand.hbm [shape: f32[8,32], index: 1, kind: input, shape index: {}]
  %s2 = inlined_call_operand.hbm [shape: f32[1,32], index: 2, kind: input, shape index: {}]
  %s3 = inlined_call_operand.vmem [shape: f32[32,32], index: 3, kind: output, shape index: {}]
  %s4 = sld [smem:[#allocation0]]
  $region30: #{eegjepa_forward.14} parent=0
    _
  %s6 = ssub.s32 1, %s4
  %s7 = scalar_select 0, %s6, %s4
  $region1: #{eegjepa_forward.14} parent=0
    #allocation2 [shape = 'u8[4096]{0}', space=vmem, size = 0x1000, scoped, tag = 'input window, operand 1, single buffered']
    #allocation3 [shape = 's32[1]{0}', space=sflag, size = 0x4, scoped, tag = 'scoped memory for eegjepa_forward.14']
    #allocation4 [shape = 'u8[512]{0}', space=vmem, size = 0x400, scoped, tag = 'input window, operand 2, single buffered']
    #allocation5 [shape = 's32[1]{0}', space=sflag, size = 0x4, scoped, tag = 'scoped memory for eegjepa_forward.14']
    %8 = vsyncpa [#allocation3], 0
    %9 = vsyncpa [#allocation5], 0
    // Predicated region
    $region2: #{eegjepa_forward.14} parent=1 // pred_check
      _
    $region3: #{eegjepa_forward.14} parent=1 // pred_check_branch
      %11 = sbr.rel (0) target = $region5
    $region4: #{eegjepa_forward.14} parent=1 // pred_region
      _
    $region5: #{eegjepa_forward.14} parent=1 // pred_fallthru
      _
    // Predicated region
    $region6: #{eegjepa_forward.14} parent=1 // pred_check
      _
    $region7: #{eegjepa_forward.14} parent=1 // pred_check_branch
      %13 = sbr.rel (0) target = $region9
    $region8: #{eegjepa_forward.14} parent=1 // pred_region
      %s15 = ssub.s32 128, 128
      %16 = vsyncadd [#allocation3], %s15
      %s18 = sshll.u32 [#allocation2], 4
      %s19 = int_to_ptr.vmem [resolvable:$true] %s18
      %21 = dma.hbm_to_vmem [thread:$0]  %s1, 128, %s19, [#allocation3]
    $region9: #{eegjepa_forward.14} parent=1 // pred_fallthru
      _
    // Predicated region
    $region10: #{eegjepa_forward.14} parent=1 // pred_check
      _
    $region11: #{eegjepa_forward.14} parent=1 // pred_check_branch
      %23 = sbr.rel (0) target = $region13
    $region12: #{eegjepa_forward.14} parent=1 // pred_region
      %s25 = ssub.s32 16, 16
      %26 = vsyncadd [#allocation5], %s25
      %s28 = sshll.u32 [#allocation4], 4
      %s29 = int_to_ptr.vmem [resolvable:$true] %s28
      %31 = dma.hbm_to_vmem [thread:$0]  %s2, 16, %s29, [#allocation5]
    $region13: #{eegjepa_forward.14} parent=1 // pred_fallthru
      _
    // Predicated region
    $region14: #{eegjepa_forward.14} parent=1 // pred_check
      _
    $region15: #{eegjepa_forward.14} parent=1 // pred_check_branch
      %33 = sbr.rel (0) target = $region17
    $region16: #{eegjepa_forward.14} parent=1 // pred_region
      %34 = dma.done [#allocation3], 128
    $region17: #{eegjepa_forward.14} parent=1 // pred_fallthru
      _
    // Predicated region
    $region18: #{eegjepa_forward.14} parent=1 // pred_check
      _
    $region19: #{eegjepa_forward.14} parent=1 // pred_check_branch
      %36 = sbr.rel (0) target = $region21
    $region20: #{eegjepa_forward.14} parent=1 // pred_region
      %37 = dma.done [#allocation5], 16
    $region21: #{eegjepa_forward.14} parent=1 // pred_fallthru
      _
    %v38 = vld [vmem:[%s0] sm:$0xff]
    %v39 = vld [vmem:[%s0 + $0x8] sm:$0xff]
    %v40 = vld [vmem:[%s0 + $0x10] sm:$0xff]
    %v41 = vld [vmem:[%s0 + $0x18] sm:$0xff]
    %v42 = vld [vmem:[#allocation2] sm:$0xff]
    %v43 = vld [vmem:[#allocation4] sm:$0x1]
    %v45 = vlaneseq
    %v46 = vshrl.u32 %v45, 7
    %v47 = vsub.s32 0, %v46
    %v48 = vrot.slane %v43, %v47
    %vm50 = vcmask 64512
    %v52 = vsel %vm50, %v38, 0
    %v55 = vsel %vm50, %v39, 0
    %v58 = vsel %vm50, %v40, 0
    %v61 = vsel %vm50, %v41, 0
    %63 = vmatprep.subr.mxu0 0.0
    %64 = vmatpush1.msra.mxu0 0.0
    %65 = vmatprep.subr.mxu0 0.0
    %66 = vmatpush1.msra.mxu0 0.0
    %67 = vmatprep.subr.mxu0 0.0
    %68 = vmatpush1.msra.mxu0 0.0
    %69 = vmatprep.subr.mxu0 0.0
    %70 = vmatpush1.msra.mxu0 0.0
    %71 = vmatprep.subr.mxu0 0.0
    %72 = vmatpush1.msra.mxu0 0.0
    %73 = vmatprep.subr.mxu0 0.0
    %74 = vmatpush1.msra.mxu0 0.0
    %75 = vmatprep.subr.mxu0 0.0
    %76 = vmatpush1.msra.mxu0 0.0
    %77 = vmatprep.subr.mxu0 0.0
    %78 = vmatpush1.msra.mxu0 0.0
    %79 = vmatprep.subr.mxu0 0.0
    %80 = vmatpush1.msra.mxu0 0.0
    %81 = vmatprep.subr.mxu0 0.0
    %82 = vmatpush1.msra.mxu0 0.0
    %83 = vmatprep.subr.mxu0 0.0
    %84 = vmatpush1.msra.mxu0 0.0
    %85 = vmatprep.subr.mxu0 0.0
    %86 = vmatpush1.msra.mxu0 0.0
    %87 = vmatprep.subr.mxu0 0.0
    %88 = vmatpush1.msra.mxu0 0.0
    %89 = vmatprep.subr.mxu0 0.0
    %90 = vmatpush1.msra.mxu0 0.0
    %91 = vmatprep.subr.mxu0 0.0
    %92 = vmatpush1.msra.mxu0 0.0
    %93 = vmatprep.subr.mxu0 0.0
    %94 = vmatpush1.msra.mxu0 %v42
    %95 = vmatprep.subr.mxu0 0.0
    %96 = vmatpush2.msra.mxu0 0.0
    %97 = vmatprep.subr.mxu0 0.0
    %98 = vmatpush2.msra.mxu0 0.0
    %99 = vmatprep.subr.mxu0 0.0
    %100 = vmatpush2.msra.mxu0 0.0
    %101 = vmatprep.subr.mxu0 0.0
    %102 = vmatpush2.msra.mxu0 0.0
    %103 = vmatprep.subr.mxu0 0.0
    %104 = vmatpush2.msra.mxu0 0.0
    %105 = vmatprep.subr.mxu0 0.0
    %106 = vmatpush2.msra.mxu0 0.0
    %107 = vmatprep.subr.mxu0 0.0
    %108 = vmatpush2.msra.mxu0 0.0
    %109 = vmatprep.subr.mxu0 0.0
    %110 = vmatpush2.msra.mxu0 0.0
    %111 = vmatprep.subr.mxu0 0.0
    %112 = vmatpush2.msra.mxu0 0.0
    %113 = vmatprep.subr.mxu0 0.0
    %114 = vmatpush2.msra.mxu0 0.0
    %115 = vmatprep.subr.mxu0 0.0
    %116 = vmatpush2.msra.mxu0 0.0
    %117 = vmatprep.subr.mxu0 0.0
    %118 = vmatpush2.msra.mxu0 0.0
    %119 = vmatprep.subr.mxu0 0.0
    %120 = vmatpush2.msra.mxu0 0.0
    %121 = vmatprep.subr.mxu0 0.0
    %122 = vmatpush2.msra.mxu0 0.0
    %123 = vmatprep.subr.mxu0 0.0
    %124 = vmatpush2.msra.mxu0 0.0
    %125 = vmatprep.subr.mxu0 0.0
    %126 = vmatpush2.msra.mxu0 0.0
    %127 = vmatprep.mubr.f32.mxu0 0.0
    %128 = vmatmul.mubr.f32.gmra.mxu0 %v52
    %v129 = vpop.f32.mrf.mxu0
    %v130 = vadd.f32 %v48, %v129
    %v131 = vpop.f32.mrf.mxu0
    %132 = vmatprep.mubr.f32.mxu0 0.0
    %133 = vmatmul.mubr.f32.gmra.mxu0 %v55
    %v134 = vpop.f32.mrf.mxu0
    %v135 = vadd.f32 %v48, %v134
    %v136 = vpop.f32.mrf.mxu0
    %137 = vmatprep.mubr.f32.mxu0 0.0
    %138 = vmatmul.mubr.f32.gmra.mxu0 %v58
    %v139 = vpop.f32.mrf.mxu0
    %v140 = vadd.f32 %v48, %v139
    %v141 = vpop.f32.mrf.mxu0
    %142 = vmatprep.mubr.f32.mxu0 0.0
    %143 = vmatmul.mubr.f32.gmra.mxu0 %v61
    %v144 = vpop.f32.mrf.mxu0
    %v145 = vadd.f32 %v48, %v144
    %v146 = vpop.f32.mrf.mxu0
    %147 = vdwg.mxu0
    %vm148 = vcmask 261120
    %149 = vst.msk [vmem:[%s3] sm:$0xff] %vm148, %v130
    %150 = vst.msk [vmem:[%s3 + $0x8] sm:$0xff] %vm148, %v135
    %151 = vst.msk [vmem:[%s3 + $0x10] sm:$0xff] %vm148, %v140
    %152 = vst.msk [vmem:[%s3 + $0x18] sm:$0xff] %vm148, %v145
    // Predicated region
    $region22: #{eegjepa_forward.14} parent=1 // pred_check
      _
    $region23: #{eegjepa_forward.14} parent=1 // pred_check_branch
      %154 = sbr.rel (0) target = $region25
    $region24: #{eegjepa_forward.14} parent=1 // pred_region
      _
    $region25: #{eegjepa_forward.14} parent=1 // pred_fallthru
      _
    // Predicated region
    $region26: #{eegjepa_forward.14} parent=1 // pred_check
      _
    $region27: #{eegjepa_forward.14} parent=1 // pred_check_branch
      %156 = sbr.rel (0) target = $region29
    $region28: #{eegjepa_forward.14} parent=1 // pred_region
      _
    $region29: #{eegjepa_forward.14} parent=1 // pred_fallthru
      _
    %157 = vsyncpa [#allocation3], 1
    %158 = vsyncpa [#allocation5], 1

// kernel: eegjepa_forward.15
$region0: #{eegjepa_forward.15}
  #allocation0 [shape = 'u32[]', space=smem, size = 0x4, offset = 0x4, fixed_abs, tag = 'smem constant byte address 0x4 - core index']
  #allocation1 [shape = 'u32[144,128]{1,0:T(1,128)}', space=vmem, size = 0x12000, scoped, tag = 'internal scratch']
  %s0 = inlined_call_operand.vmem [shape: f32[32,32], index: 0, kind: input, shape index: {}]
  %s1 = inlined_call_operand.hbm [shape: f32[1,32], index: 1, kind: input, shape index: {}]
  %s2 = inlined_call_operand.hbm [shape: f32[1,32], index: 2, kind: input, shape index: {}]
  %s3 = inlined_call_operand.hbm [shape: f32[32,96], index: 3, kind: input, shape index: {}]
  %s4 = inlined_call_operand.hbm [shape: f32[1,96], index: 4, kind: input, shape index: {}]
  %s5 = inlined_call_operand.vmem [shape: f32[32,96], index: 5, kind: output, shape index: {}]
  %s6 = sld [smem:[#allocation0]]
  $region46: #{eegjepa_forward.15} parent=0
    _
  %s8 = ssub.s32 1, %s6
  %s9 = scalar_select 0, %s8, %s6
  $region1: #{eegjepa_forward.15} parent=0
    #allocation2 [shape = 'u8[512]{0}', space=vmem, size = 0x400, scoped, tag = 'input window, operand 1, single buffered']
    #allocation3 [shape = 's32[1]{0}', space=sflag, size = 0x4, scoped, tag = 'scoped memory for eegjepa_forward.15']
    #allocation4 [shape = 'u8[512]{0}', space=vmem, size = 0x400, scoped, tag = 'input window, operand 2, single buffered']
    #allocation5 [shape = 's32[1]{0}', space=sflag, size = 0x4, scoped, tag = 'scoped memory for eegjepa_forward.15']
    #allocation6 [shape = 'u8[16384]{0}', space=vmem, size = 0x4000, scoped, tag = 'input window, operand 3, single buffered']
    #allocation7 [shape = 'u8[512]{0}', space=vmem, size = 0x400, scoped, tag = 'input window, operand 4, single buffered']
    #allocation8 [shape = 's32[1]{0}', space=sflag, size = 0x4, scoped, tag = 'scoped memory for eegjepa_forward.15']
    %10 = vsyncpa [#allocation3], 0
    %11 = vsyncpa [#allocation5], 0
    %12 = vsyncpa [#allocation8], 0
    // Predicated region
    $region2: #{eegjepa_forward.15} parent=1 // pred_check
      _
    $region3: #{eegjepa_forward.15} parent=1 // pred_check_branch
      %14 = sbr.rel (0) target = $region5
    $region4: #{eegjepa_forward.15} parent=1 // pred_region
      _
    $region5: #{eegjepa_forward.15} parent=1 // pred_fallthru
      _
    // Predicated region
    $region6: #{eegjepa_forward.15} parent=1 // pred_check
      _
    $region7: #{eegjepa_forward.15} parent=1 // pred_check_branch
      %16 = sbr.rel (0) target = $region9
    $region8: #{eegjepa_forward.15} parent=1 // pred_region
      %s18 = ssub.s32 16, 16
      %19 = vsyncadd [#allocation3], %s18
      %s21 = sshll.u32 [#allocation2], 4
      %s22 = int_to_ptr.vmem [resolvable:$true] %s21
      %24 = dma.hbm_to_vmem [thread:$0]  %s1, 16, %s22, [#allocation3]
    $region9: #{eegjepa_forward.15} parent=1 // pred_fallthru
      _
    // Predicated region
    $region10: #{eegjepa_forward.15} parent=1 // pred_check
      _
    $region11: #{eegjepa_forward.15} parent=1 // pred_check_branch
      %26 = sbr.rel (0) target = $region13
    $region12: #{eegjepa_forward.15} parent=1 // pred_region
      %s28 = ssub.s32 16, 16
      %29 = vsyncadd [#allocation5], %s28
      %s31 = sshll.u32 [#allocation4], 4
      %s32 = int_to_ptr.vmem [resolvable:$true] %s31
      %34 = dma.hbm_to_vmem [thread:$0]  %s2, 16, %s32, [#allocation5]
    $region13: #{eegjepa_forward.15} parent=1 // pred_fallthru
      _
    // Predicated region
    $region14: #{eegjepa_forward.15} parent=1 // pred_check
      _
    $region15: #{eegjepa_forward.15} parent=1 // pred_check_branch
      %36 = sbr.rel (0) target = $region17
    $region16: #{eegjepa_forward.15} parent=1 // pred_region
      %s38 = ssub.s32 512, 512
      %39 = vsyncadd [#allocation5], %s38
      %s40 = sshll.u32 [#allocation6], 4
      %s41 = int_to_ptr.vmem [resolvable:$true] %s40
      %46 = dma.hbm_to_vmem [thread:$0]  %s3, 512, %s41, [#allocation5], 128, 128, 8
    $region17: #{eegjepa_forward.15} parent=1 // pred_fallthru
      _
    // Predicated region
    $region18: #{eegjepa_forward.15} parent=1 // pred_check
      _
    $region19: #{eegjepa_forward.15} parent=1 // pred_check_branch
      %48 = sbr.rel (0) target = $region21
    $region20: #{eegjepa_forward.15} parent=1 // pred_region
      %s50 = ssub.s32 16, 16
      %51 = vsyncadd [#allocation8], %s50
      %s53 = sshll.u32 [#allocation7], 4
      %s54 = int_to_ptr.vmem [resolvable:$true] %s53
      %56 = dma.hbm_to_vmem [thread:$0]  %s4, 16, %s54, [#allocation8]
    $region21: #{eegjepa_forward.15} parent=1 // pred_fallthru
      _
    // Predicated region
    $region22: #{eegjepa_forward.15} parent=1 // pred_check
      _
    $region23: #{eegjepa_forward.15} parent=1 // pred_check_branch
      %58 = sbr.rel (0) target = $region25
    $region24: #{eegjepa_forward.15} parent=1 // pred_region
      %59 = dma.done [#allocation3], 16
    $region25: #{eegjepa_forward.15} parent=1 // pred_fallthru
      _
    // Predicated region
    $region26: #{eegjepa_forward.15} parent=1 // pred_check
      _
    $region27: #{eegjepa_forward.15} parent=1 // pred_check_branch
      %61 = sbr.rel (0) target = $region29
    $region28: #{eegjepa_forward.15} parent=1 // pred_region
      %62 = dma.done [#allocation5], 16
    $region29: #{eegjepa_forward.15} parent=1 // pred_fallthru
      _
    // Predicated region
    $region30: #{eegjepa_forward.15} parent=1 // pred_check
      _
    $region31: #{eegjepa_forward.15} parent=1 // pred_check_branch
      %64 = sbr.rel (0) target = $region33
    $region32: #{eegjepa_forward.15} parent=1 // pred_region
      %65 = dma.done [#allocation5], 512
    $region33: #{eegjepa_forward.15} parent=1 // pred_fallthru
      _
    // Predicated region
    $region34: #{eegjepa_forward.15} parent=1 // pred_check
      _
    $region35: #{eegjepa_forward.15} parent=1 // pred_check_branch
      %67 = sbr.rel (0) target = $region37
    $region36: #{eegjepa_forward.15} parent=1 // pred_region
      %68 = dma.done [#allocation8], 16
    $region37: #{eegjepa_forward.15} parent=1 // pred_fallthru
      _
    %v69 = vld [vmem:[%s0] sm:$0xff]
    %v70 = vld [vmem:[%s0 + $0x8] sm:$0xff]
    %v71 = vld [vmem:[%s0 + $0x10] sm:$0xff]
    %v72 = vld [vmem:[%s0 + $0x18] sm:$0xff]
    %vm73 = vcmask 261120
    %v74 = vsel %vm73, %v69, 0.0
    %75 = vadd.xlane.f32.xlu0 %v74
    %v76 = vpop.xlane.xlu0 %75
    %v77 = vsel %vm73, %v70, 0.0
    %78 = vadd.xlane.f32.xlu0 %v77
    %v79 = vpop.xlane.xlu0 %78
    %v80 = vsel %vm73, %v71, 0.0
    %81 = vadd.xlane.f32.xlu0 %v80
    %v82 = vpop.xlane.xlu0 %81
    %v83 = vsel %vm73, %v72, 0.0
    %84 = vadd.xlane.f32.xlu0 %v83
    %v85 = vpop.xlane.xlu0 %84
    %v86 = vrcp.pop 32.0
    %v87 = vmul.f32 %v76, %v86
    %v88 = vmul.f32 %v79, %v86
    %v89 = vmul.f32 %v82, %v86
    %v90 = vmul.f32 %v85, %v86
    %v91 = vsub.f32 %v69, %v87
    %v92 = vsub.f32 %v70, %v88
    %v93 = vsub.f32 %v71, %v89
    %v94 = vsub.f32 %v72, %v90
    %v95 = vmul.f32 %v91, %v91
    %v96 = vmul.f32 %v92, %v92
    %v97 = vmul.f32 %v93, %v93
    %v98 = vmul.f32 %v94, %v94
    %v99 = vsel %vm73, %v95, 0.0
    %100 = vadd.xlane.f32.xlu0 %v99
    %v101 = vpop.xlane.xlu0 %100
    %v102 = vsel %vm73, %v96, 0.0
    %103 = vadd.xlane.f32.xlu0 %v102
    %v104 = vpop.xlane.xlu0 %103
    %v105 = vsel %vm73, %v97, 0.0
    %106 = vadd.xlane.f32.xlu0 %v105
    %v107 = vpop.xlane.xlu0 %106
    %v108 = vsel %vm73, %v98, 0.0
    %109 = vadd.xlane.f32.xlu0 %v108
    %v110 = vpop.xlane.xlu0 %109
    %v111 = vmul.f32 %v101, %v86
    %v112 = vmul.f32 %v104, %v86
    %v113 = vmul.f32 %v107, %v86
    %v114 = vmul.f32 %v110, %v86
    %v115 = vadd.f32 %v111, 1e-05
    %v116 = vadd.f32 %v112, 1e-05
    %v117 = vadd.f32 %v113, 1e-05
    %v118 = vadd.f32 %v114, 1e-05
    %v119 = vrsqrt.pop %v115
    %v120 = vrsqrt.pop %v116
    %v121 = vrsqrt.pop %v117
    %v122 = vrsqrt.pop %v118
    %v123 = vmul.f32 %v91, %v119
    %v124 = vmul.f32 %v92, %v120
    %v125 = vmul.f32 %v93, %v121
    %v126 = vmul.f32 %v94, %v122
    %v127 = vld [vmem:[#allocation2] sm:$0x1]
    %v129 = vlaneseq
    %v130 = vshrl.u32 %v129, 7
    %v131 = vsub.s32 0, %v130
    %v132 = vrot.slane %v127, %v131
    %v134 = vmul.f32 %v123, %v132
    %v135 = vmul.f32 %v124, %v132
    %v136 = vmul.f32 %v125, %v132
    %v137 = vmul.f32 %v126, %v132
    %v138 = vld [vmem:[#allocation4] sm:$0x1]
    %v140 = vlaneseq
    %v141 = vshrl.u32 %v140, 7
    %v142 = vsub.s32 0, %v141
    %v143 = vrot.slane %v138, %v142
    %v145 = vadd.f32 %v134, %v143
    %v146 = vadd.f32 %v135, %v143
    %v147 = vadd.f32 %v136, %v143
    %v148 = vadd.f32 %v137, %v143
    %v149 = vld [vmem:[#allocation6] sm:$0xff]
    %v150 = vld [vmem:[#allocation6 + $0x8] sm:$0xff]
    %v151 = vld [vmem:[#allocation6 + $0x10] sm:$0xff]
    %v152 = vld [vmem:[#allocation6 + $0x18] sm:$0xff]
    %v153 = vld [vmem:[#allocation7] sm:$0x1]
    %v155 = vlaneseq
    %v156 = vshrl.u32 %v155, 7
    %v157 = vsub.s32 0, %v156
    %v158 = vrot.slane %v153, %v157
    %v161 = vsel %vm73, %v145, 0
    %v164 = vsel %vm73, %v146, 0
    %v167 = vsel %vm73, %v147, 0
    %v170 = vsel %vm73, %v148, 0
    %172 = vmatprep.subr.mxu0 0.0
    %173 = vmatpush1.msra.mxu0 0.0
    %174 = vmatprep.subr.mxu0 0.0
    %175 = vmatpush1.msra.mxu0 0.0
    %176 = vmatprep.subr.mxu0 0.0
    %177 = vmatpush1.msra.mxu0 0.0
    %178 = vmatprep.subr.mxu0 0.0
    %179 = vmatpush1.msra.mxu0 0.0
    %180 = vmatprep.subr.mxu0 0.0
    %181 = vmatpush1.msra.mxu0 0.0
    %182 = vmatprep.subr.mxu0 0.0
    %183 = vmatpush1.msra.mxu0 0.0
    %184 = vmatprep.subr.mxu0 0.0
    %185 = vmatpush1.msra.mxu0 0.0
    %186 = vmatprep.subr.mxu0 0.0
    %187 = vmatpush1.msra.mxu0 0.0
    %188 = vmatprep.subr.mxu0 0.0
    %189 = vmatpush1.msra.mxu0 0.0
    %190 = vmatprep.subr.mxu0 0.0
    %191 = vmatpush1.msra.mxu0 0.0
    %192 = vmatprep.subr.mxu0 0.0
    %193 = vmatpush1.msra.mxu0 0.0
    %194 = vmatprep.subr.mxu0 0.0
    %195 = vmatpush1.msra.mxu0 0.0
    %196 = vmatprep.subr.mxu0 0.0
    %197 = vmatpush1.msra.mxu0 %v152
    %198 = vmatprep.subr.mxu0 0.0
    %199 = vmatpush1.msra.mxu0 %v151
    %200 = vmatprep.subr.mxu0 0.0
    %201 = vmatpush1.msra.mxu0 %v150
    %202 = vmatprep.subr.mxu0 0.0
    %203 = vmatpush1.msra.mxu0 %v149
    %204 = vmatprep.subr.mxu0 0.0
    %205 = vmatpush2.msra.mxu0 0.0
    %206 = vmatprep.subr.mxu0 0.0
    %207 = vmatpush2.msra.mxu0 0.0
    %208 = vmatprep.subr.mxu0 0.0
    %209 = vmatpush2.msra.mxu0 0.0
    %210 = vmatprep.subr.mxu0 0.0
    %211 = vmatpush2.msra.mxu0 0.0
    %212 = vmatprep.subr.mxu0 0.0
    %213 = vmatpush2.msra.mxu0 0.0
    %214 = vmatprep.subr.mxu0 0.0
    %215 = vmatpush2.msra.mxu0 0.0
    %216 = vmatprep.subr.mxu0 0.0
    %217 = vmatpush2.msra.mxu0 0.0
    %218 = vmatprep.subr.mxu0 0.0
    %219 = vmatpush2.msra.mxu0 0.0
    %220 = vmatprep.subr.mxu0 0.0
    %221 = vmatpush2.msra.mxu0 0.0
    %222 = vmatprep.subr.mxu0 0.0
    %223 = vmatpush2.msra.mxu0 0.0
    %224 = vmatprep.subr.mxu0 0.0
    %225 = vmatpush2.msra.mxu0 0.0
    %226 = vmatprep.subr.mxu0 0.0
    %227 = vmatpush2.msra.mxu0 0.0
    %228 = vmatprep.subr.mxu0 0.0
    %229 = vmatpush2.msra.mxu0 0.0
    %230 = vmatprep.subr.mxu0 0.0
    %231 = vmatpush2.msra.mxu0 0.0
    %232 = vmatprep.subr.mxu0 0.0
    %233 = vmatpush2.msra.mxu0 0.0
    %234 = vmatprep.subr.mxu0 0.0
    %235 = vmatpush2.msra.mxu0 0.0
    %236 = vmatprep.mubr.f32.mxu0 0.0
    %237 = vmatmul.mubr.f32.gmra.mxu0 %v161
    %v238 = vpop.f32.mrf.mxu0
    %v239 = vadd.f32 %v158, %v238
    %v240 = vpop.f32.mrf.mxu0
    %241 = vmatprep.mubr.f32.mxu0 0.0
    %242 = vmatmul.mubr.f32.gmra.mxu0 %v164
    %v243 = vpop.f32.mrf.mxu0
    %v244 = vadd.f32 %v158, %v243
    %v245 = vpop.f32.mrf.mxu0
    %246 = vmatprep.mubr.f32.mxu0 0.0
    %247 = vmatmul.mubr.f32.gmra.mxu0 %v167
    %v248 = vpop.f32.mrf.mxu0
    %v249 = vadd.f32 %v158, %v248
    %v250 = vpop.f32.mrf.mxu0
    %251 = vmatprep.mubr.f32.mxu0 0.0
    %252 = vmatmul.mubr.f32.gmra.mxu0 %v170
    %v253 = vpop.f32.mrf.mxu0
    %v254 = vadd.f32 %v158, %v253
    %v255 = vpop.f32.mrf.mxu0
    %256 = vdwg.mxu0
    %vm257 = vcmask 785408
    %258 = vst.msk [vmem:[%s5] sm:$0xff] %vm257, %v239
    %259 = vst.msk [vmem:[%s5 + $0x8] sm:$0xff] %vm257, %v244
    %260 = vst.msk [vmem:[%s5 + $0x10] sm:$0xff] %vm257, %v249
    %261 = vst.msk [vmem:[%s5 + $0x18] sm:$0xff] %vm257, %v254
    // Predicated region
    $region38: #{eegjepa_forward.15} parent=1 // pred_check
      _
    $region39: #{eegjepa_forward.15} parent=1 // pred_check_branch
      %263 = sbr.rel (0) target = $region41
    $region40: #{eegjepa_forward.15} parent=1 // pred_region
      _
    $region41: #{eegjepa_forward.15} parent=1 // pred_fallthru
      _
    // Predicated region
    $region42: #{eegjepa_forward.15} parent=1 // pred_check
      _
    $region43: #{eegjepa_forward.15} parent=1 // pred_check_branch
      %265 = sbr.rel (0) target = $region45
    $region44: #{eegjepa_forward.15} parent=1 // pred_region
      _
    $region45: #{eegjepa_forward.15} parent=1 // pred_fallthru
      _
    %266 = vsyncpa [#allocation3], 1
    %267 = vsyncpa [#allocation5], 1
    %268 = vsyncpa [#allocation8], 1

// kernel: eegjepa_forward.17
$region0: #{eegjepa_forward.17}
  #allocation0 [shape = 'u32[]', space=smem, size = 0x4, offset = 0x4, fixed_abs, tag = 'smem constant byte address 0x4 - core index']
  #allocation1 [shape = 'u32[144,128]{1,0:T(1,128)}', space=vmem, size = 0x12000, scoped, tag = 'internal scratch']
  %s0 = inlined_call_operand.vmem [shape: f32[32,32], index: 0, kind: input, shape index: {}]
  %s1 = inlined_call_operand.hbm [shape: f32[1,32], index: 1, kind: input, shape index: {}]
  %s2 = inlined_call_operand.hbm [shape: f32[1,32], index: 2, kind: input, shape index: {}]
  %s3 = inlined_call_operand.hbm [shape: f32[32,128], index: 3, kind: input, shape index: {}]
  %s4 = inlined_call_operand.hbm [shape: f32[1,128], index: 4, kind: input, shape index: {}]
  %s5 = inlined_call_operand.vmem [shape: f32[128,32], index: 5, kind: input, shape index: {}]
  %s6 = inlined_call_operand.hbm [shape: f32[1,32], index: 6, kind: input, shape index: {}]
  %s7 = inlined_call_operand.vmem [shape: f32[32,32], index: 7, kind: output, shape index: {}]
  %s8 = sld [smem:[#allocation0]]
  $region58: #{eegjepa_forward.17} parent=0
    _
  %s10 = ssub.s32 1, %s8
  %s11 = scalar_select 0, %s10, %s8
  $region1: #{eegjepa_forward.17} parent=0
    #allocation2 [shape = 'u8[512]{0}', space=vmem, size = 0x400, scoped, tag = 'input window, operand 1, single buffered']
    #allocation3 [shape = 's32[1]{0}', space=sflag, size = 0x4, scoped, tag = 'scoped memory for eegjepa_forward.17']
    #allocation4 [shape = 'u8[512]{0}', space=vmem, size = 0x400, scoped, tag = 'input window, operand 2, single buffered']
    #allocation5 [shape = 's32[1]{0}', space=sflag, size = 0x4, scoped, tag = 'scoped memory for eegjepa_forward.17']
    #allocation6 [shape = 'u8[16384]{0}', space=vmem, size = 0x4000, scoped, tag = 'input window, operand 3, single buffered']
    #allocation7 [shape = 'u8[512]{0}', space=vmem, size = 0x400, scoped, tag = 'input window, operand 4, single buffered']
    #allocation8 [shape = 's32[1]{0}', space=sflag, size = 0x4, scoped, tag = 'scoped memory for eegjepa_forward.17']
    #allocation9 [shape = 'u8[512]{0}', space=vmem, size = 0x400, scoped, tag = 'input window, operand 6, single buffered']
    %12 = vsyncpa [#allocation3], 0
    %13 = vsyncpa [#allocation5], 0
    %14 = vsyncpa [#allocation8], 0
    // Predicated region
    $region2: #{eegjepa_forward.17} parent=1 // pred_check
      _
    $region3: #{eegjepa_forward.17} parent=1 // pred_check_branch
      %16 = sbr.rel (0) target = $region5
    $region4: #{eegjepa_forward.17} parent=1 // pred_region
      _
    $region5: #{eegjepa_forward.17} parent=1 // pred_fallthru
      _
    // Predicated region
    $region6: #{eegjepa_forward.17} parent=1 // pred_check
      _
    $region7: #{eegjepa_forward.17} parent=1 // pred_check_branch
      %18 = sbr.rel (0) target = $region9
    $region8: #{eegjepa_forward.17} parent=1 // pred_region
      %s20 = ssub.s32 16, 16
      %21 = vsyncadd [#allocation3], %s20
      %s23 = sshll.u32 [#allocation2], 4
      %s24 = int_to_ptr.vmem [resolvable:$true] %s23
      %26 = dma.hbm_to_vmem [thread:$0]  %s1, 16, %s24, [#allocation3]
    $region9: #{eegjepa_forward.17} parent=1 // pred_fallthru
      _
    // Predicated region
    $region10: #{eegjepa_forward.17} parent=1 // pred_check
      _
    $region11: #{eegjepa_forward.17} parent=1 // pred_check_branch
      %28 = sbr.rel (0) target = $region13
    $region12: #{eegjepa_forward.17} parent=1 // pred_region
      %s30 = ssub.s32 16, 16
      %31 = vsyncadd [#allocation5], %s30
      %s33 = sshll.u32 [#allocation4], 4
      %s34 = int_to_ptr.vmem [resolvable:$true] %s33
      %36 = dma.hbm_to_vmem [thread:$0]  %s2, 16, %s34, [#allocation5]
    $region13: #{eegjepa_forward.17} parent=1 // pred_fallthru
      _
    // Predicated region
    $region14: #{eegjepa_forward.17} parent=1 // pred_check
      _
    $region15: #{eegjepa_forward.17} parent=1 // pred_check_branch
      %38 = sbr.rel (0) target = $region17
    $region16: #{eegjepa_forward.17} parent=1 // pred_region
      %s40 = ssub.s32 512, 512
      %41 = vsyncadd [#allocation5], %s40
      %s42 = sshll.u32 [#allocation6], 4
      %s43 = int_to_ptr.vmem [resolvable:$true] %s42
      %48 = dma.hbm_to_vmem [thread:$0]  %s3, 512, %s43, [#allocation5], 128, 128, 8
    $region17: #{eegjepa_forward.17} parent=1 // pred_fallthru
      _
    // Predicated region
    $region18: #{eegjepa_forward.17} parent=1 // pred_check
      _
    $region19: #{eegjepa_forward.17} parent=1 // pred_check_branch
      %50 = sbr.rel (0) target = $region21
    $region20: #{eegjepa_forward.17} parent=1 // pred_region
      %s52 = ssub.s32 16, 16
      %53 = vsyncadd [#allocation8], %s52
      %s55 = sshll.u32 [#allocation7], 4
      %s56 = int_to_ptr.vmem [resolvable:$true] %s55
      %58 = dma.hbm_to_vmem [thread:$0]  %s4, 16, %s56, [#allocation8]
    $region21: #{eegjepa_forward.17} parent=1 // pred_fallthru
      _
    // Predicated region
    $region22: #{eegjepa_forward.17} parent=1 // pred_check
      _
    $region23: #{eegjepa_forward.17} parent=1 // pred_check_branch
      %60 = sbr.rel (0) target = $region25
    $region24: #{eegjepa_forward.17} parent=1 // pred_region
      _
    $region25: #{eegjepa_forward.17} parent=1 // pred_fallthru
      _
    // Predicated region
    $region26: #{eegjepa_forward.17} parent=1 // pred_check
      _
    $region27: #{eegjepa_forward.17} parent=1 // pred_check_branch
      %62 = sbr.rel (0) target = $region29
    $region28: #{eegjepa_forward.17} parent=1 // pred_region
      %s64 = ssub.s32 16, 16
      %65 = vsyncadd [#allocation8], %s64
      %s67 = sshll.u32 [#allocation9], 4
      %s68 = int_to_ptr.vmem [resolvable:$true] %s67
      %70 = dma.hbm_to_vmem [thread:$0]  %s6, 16, %s68, [#allocation8]
    $region29: #{eegjepa_forward.17} parent=1 // pred_fallthru
      _
    // Predicated region
    $region30: #{eegjepa_forward.17} parent=1 // pred_check
      _
    $region31: #{eegjepa_forward.17} parent=1 // pred_check_branch
      %72 = sbr.rel (0) target = $region33
    $region32: #{eegjepa_forward.17} parent=1 // pred_region
      %73 = dma.done [#allocation3], 16
    $region33: #{eegjepa_forward.17} parent=1 // pred_fallthru
      _
    // Predicated region
    $region34: #{eegjepa_forward.17} parent=1 // pred_check
      _
    $region35: #{eegjepa_forward.17} parent=1 // pred_check_branch
      %75 = sbr.rel (0) target = $region37
    $region36: #{eegjepa_forward.17} parent=1 // pred_region
      %76 = dma.done [#allocation5], 16
    $region37: #{eegjepa_forward.17} parent=1 // pred_fallthru
      _
    // Predicated region
    $region38: #{eegjepa_forward.17} parent=1 // pred_check
      _
    $region39: #{eegjepa_forward.17} parent=1 // pred_check_branch
      %78 = sbr.rel (0) target = $region41
    $region40: #{eegjepa_forward.17} parent=1 // pred_region
      %79 = dma.done [#allocation5], 512
    $region41: #{eegjepa_forward.17} parent=1 // pred_fallthru
      _
    // Predicated region
    $region42: #{eegjepa_forward.17} parent=1 // pred_check
      _
    $region43: #{eegjepa_forward.17} parent=1 // pred_check_branch
      %81 = sbr.rel (0) target = $region45
    $region44: #{eegjepa_forward.17} parent=1 // pred_region
      %82 = dma.done [#allocation8], 16
    $region45: #{eegjepa_forward.17} parent=1 // pred_fallthru
      _
    // Predicated region
    $region46: #{eegjepa_forward.17} parent=1 // pred_check
      _
    $region47: #{eegjepa_forward.17} parent=1 // pred_check_branch
      %84 = sbr.rel (0) target = $region49
    $region48: #{eegjepa_forward.17} parent=1 // pred_region
      %85 = dma.done [#allocation8], 16
    $region49: #{eegjepa_forward.17} parent=1 // pred_fallthru
      _
    %v86 = vld [vmem:[%s0] sm:$0xff]
    %v87 = vld [vmem:[%s0 + $0x8] sm:$0xff]
    %v88 = vld [vmem:[%s0 + $0x10] sm:$0xff]
    %v89 = vld [vmem:[%s0 + $0x18] sm:$0xff]
    %vm90 = vcmask 261120
    %v91 = vsel %vm90, %v86, 0.0
    %92 = vadd.xlane.f32.xlu0 %v91
    %v93 = vpop.xlane.xlu0 %92
    %v94 = vsel %vm90, %v87, 0.0
    %95 = vadd.xlane.f32.xlu0 %v94
    %v96 = vpop.xlane.xlu0 %95
    %v97 = vsel %vm90, %v88, 0.0
    %98 = vadd.xlane.f32.xlu0 %v97
    %v99 = vpop.xlane.xlu0 %98
    %v100 = vsel %vm90, %v89, 0.0
    %101 = vadd.xlane.f32.xlu0 %v100
    %v102 = vpop.xlane.xlu0 %101
    %v103 = vrcp.pop 32.0
    %v104 = vmul.f32 %v93, %v103
    %v105 = vmul.f32 %v96, %v103
    %v106 = vmul.f32 %v99, %v103
    %v107 = vmul.f32 %v102, %v103
    %v108 = vsub.f32 %v86, %v104
    %v109 = vsub.f32 %v87, %v105
    %v110 = vsub.f32 %v88, %v106
    %v111 = vsub.f32 %v89, %v107
    %v112 = vmul.f32 %v108, %v108
    %v113 = vmul.f32 %v109, %v109
    %v114 = vmul.f32 %v110, %v110
    %v115 = vmul.f32 %v111, %v111
    %v116 = vsel %vm90, %v112, 0.0
    %117 = vadd.xlane.f32.xlu0 %v116
    %v118 = vpop.xlane.xlu0 %117
    %v119 = vsel %vm90, %v113, 0.0
    %120 = vadd.xlane.f32.xlu0 %v119
    %v121 = vpop.xlane.xlu0 %120
    %v122 = vsel %vm90, %v114, 0.0
    %123 = vadd.xlane.f32.xlu0 %v122
    %v124 = vpop.xlane.xlu0 %123
    %v125 = vsel %vm90, %v115, 0.0
    %126 = vadd.xlane.f32.xlu0 %v125
    %v127 = vpop.xlane.xlu0 %126
    %v128 = vmul.f32 %v118, %v103
    %v129 = vmul.f32 %v121, %v103
    %v130 = vmul.f32 %v124, %v103
    %v131 = vmul.f32 %v127, %v103
    %v132 = vadd.f32 %v128, 1e-05
    %v133 = vadd.f32 %v129, 1e-05
    %v134 = vadd.f32 %v130, 1e-05
    %v135 = vadd.f32 %v131, 1e-05
    %v136 = vrsqrt.pop %v132
    %v137 = vrsqrt.pop %v133
    %v138 = vrsqrt.pop %v134
    %v139 = vrsqrt.pop %v135
    %v140 = vmul.f32 %v108, %v136
    %v141 = vmul.f32 %v109, %v137
    %v142 = vmul.f32 %v110, %v138
    %v143 = vmul.f32 %v111, %v139
    %v144 = vld [vmem:[#allocation2] sm:$0x1]
    %v146 = vlaneseq
    %v147 = vshrl.u32 %v146, 7
    %v148 = vsub.s32 0, %v147
    %v149 = vrot.slane %v144, %v148
    %v151 = vmul.f32 %v140, %v149
    %v152 = vmul.f32 %v141, %v149
    %v153 = vmul.f32 %v142, %v149
    %v154 = vmul.f32 %v143, %v149
    %v155 = vld [vmem:[#allocation4] sm:$0x1]
    %v157 = vlaneseq
    %v158 = vshrl.u32 %v157, 7
    %v159 = vsub.s32 0, %v158
    %v160 = vrot.slane %v155, %v159
    %v162 = vadd.f32 %v151, %v160
    %v163 = vadd.f32 %v152, %v160
    %v164 = vadd.f32 %v153, %v160
    %v165 = vadd.f32 %v154, %v160
    %v166 = vld [vmem:[#allocation6] sm:$0xff]
    %v167 = vld [vmem:[#allocation6 + $0x8] sm:$0xff]
    %v168 = vld [vmem:[#allocation6 + $0x10] sm:$0xff]
    %v169 = vld [vmem:[#allocation6 + $0x18] sm:$0xff]
    %v170 = vld [vmem:[#allocation7] sm:$0x1]
    %v172 = vlaneseq
    %v173 = vshrl.u32 %v172, 7
    %v174 = vsub.s32 0, %v173
    %v175 = vrot.slane %v170, %v174
    %v178 = vsel %vm90, %v162, 0
    %v181 = vsel %vm90, %v163, 0
    %v184 = vsel %vm90, %v164, 0
    %v187 = vsel %vm90, %v165, 0
    %189 = vmatprep.subr.mxu0 0.0
    %190 = vmatpush1.msra.mxu0 0.0
    %191 = vmatprep.subr.mxu0 0.0
    %192 = vmatpush1.msra.mxu0 0.0
    %193 = vmatprep.subr.mxu0 0.0
    %194 = vmatpush1.msra.mxu0 0.0
    %195 = vmatprep.subr.mxu0 0.0
    %196 = vmatpush1.msra.mxu0 0.0
    %197 = vmatprep.subr.mxu0 0.0
    %198 = vmatpush1.msra.mxu0 0.0
    %199 = vmatprep.subr.mxu0 0.0
    %200 = vmatpush1.msra.mxu0 0.0
    %201 = vmatprep.subr.mxu0 0.0
    %202 = vmatpush1.msra.mxu0 0.0
    %203 = vmatprep.subr.mxu0 0.0
    %204 = vmatpush1.msra.mxu0 0.0
    %205 = vmatprep.subr.mxu0 0.0
    %206 = vmatpush1.msra.mxu0 0.0
    %207 = vmatprep.subr.mxu0 0.0
    %208 = vmatpush1.msra.mxu0 0.0
    %209 = vmatprep.subr.mxu0 0.0
    %210 = vmatpush1.msra.mxu0 0.0
    %211 = vmatprep.subr.mxu0 0.0
    %212 = vmatpush1.msra.mxu0 0.0
    %213 = vmatprep.subr.mxu0 0.0
    %214 = vmatpush1.msra.mxu0 %v169
    %215 = vmatprep.subr.mxu0 0.0
    %216 = vmatpush1.msra.mxu0 %v168
    %217 = vmatprep.subr.mxu0 0.0
    %218 = vmatpush1.msra.mxu0 %v167
    %219 = vmatprep.subr.mxu0 0.0
    %220 = vmatpush1.msra.mxu0 %v166
    %221 = vmatprep.subr.mxu0 0.0
    %222 = vmatpush2.msra.mxu0 0.0
    %223 = vmatprep.subr.mxu0 0.0
    %224 = vmatpush2.msra.mxu0 0.0
    %225 = vmatprep.subr.mxu0 0.0
    %226 = vmatpush2.msra.mxu0 0.0
    %227 = vmatprep.subr.mxu0 0.0
    %228 = vmatpush2.msra.mxu0 0.0
    %229 = vmatprep.subr.mxu0 0.0
    %230 = vmatpush2.msra.mxu0 0.0
    %231 = vmatprep.subr.mxu0 0.0
    %232 = vmatpush2.msra.mxu0 0.0
    %233 = vmatprep.subr.mxu0 0.0
    %234 = vmatpush2.msra.mxu0 0.0
    %235 = vmatprep.subr.mxu0 0.0
    %236 = vmatpush2.msra.mxu0 0.0
    %237 = vmatprep.subr.mxu0 0.0
    %238 = vmatpush2.msra.mxu0 0.0
    %239 = vmatprep.subr.mxu0 0.0
    %240 = vmatpush2.msra.mxu0 0.0
    %241 = vmatprep.subr.mxu0 0.0
    %242 = vmatpush2.msra.mxu0 0.0
    %243 = vmatprep.subr.mxu0 0.0
    %244 = vmatpush2.msra.mxu0 0.0
    %245 = vmatprep.subr.mxu0 0.0
    %246 = vmatpush2.msra.mxu0 0.0
    %247 = vmatprep.subr.mxu0 0.0
    %248 = vmatpush2.msra.mxu0 0.0
    %249 = vmatprep.subr.mxu0 0.0
    %250 = vmatpush2.msra.mxu0 0.0
    %251 = vmatprep.subr.mxu0 0.0
    %252 = vmatpush2.msra.mxu0 0.0
    %253 = vmatprep.mubr.f32.mxu0 0.0
    %254 = vmatmul.mubr.f32.gmra.mxu0 %v178
    %v255 = vpop.f32.mrf.mxu0
    %v256 = vadd.f32 %v175, %v255
    %v257 = vpop.f32.mrf.mxu0
    %258 = vmatprep.mubr.f32.mxu0 0.0
    %259 = vmatmul.mubr.f32.gmra.mxu0 %v181
    %v260 = vpop.f32.mrf.mxu0
    %v261 = vadd.f32 %v175, %v260
    %v262 = vpop.f32.mrf.mxu0
    %263 = vmatprep.mubr.f32.mxu0 0.0
    %264 = vmatmul.mubr.f32.gmra.mxu0 %v184
    %v265 = vpop.f32.mrf.mxu0
    %v266 = vadd.f32 %v175, %v265
    %v267 = vpop.f32.mrf.mxu0
    %268 = vmatprep.mubr.f32.mxu0 0.0
    %269 = vmatmul.mubr.f32.gmra.mxu0 %v187
    %v270 = vpop.f32.mrf.mxu0
    %v271 = vadd.f32 %v175, %v270
    %v272 = vpop.f32.mrf.mxu0
    %273 = vdwg.mxu0
    %v274 = vmul.f32 %v256, 0.70710677
    %v275 = vmul.f32 %v261, 0.70710677
    %v276 = vmul.f32 %v266, 0.70710677
    %v277 = vmul.f32 %v271, 0.70710677
    %v278 = vand.u32 2147483647, %v274
    %v279 = vand.u32 2147483647, %v275
    %v280 = vand.u32 2147483647, %v276
    %v281 = vand.u32 2147483647, %v277
    %v282 = vmul.f32 %v278, 0.3275911
    %v283 = vmul.f32 %v279, 0.3275911
    %v284 = vmul.f32 %v280, 0.3275911
    %v285 = vmul.f32 %v281, 0.3275911
    %v286 = vadd.f32 %v282, 1.0
    %v287 = vadd.f32 %v283, 1.0
    %v288 = vadd.f32 %v284, 1.0
    %v289 = vadd.f32 %v285, 1.0
    %v290 = vrcp.pop %v286
    %v291 = vmul.f32 1.0, %v290
    %v292 = vrcp.pop %v287
    %v293 = vmul.f32 1.0, %v292
    %v294 = vrcp.pop %v288
    %v295 = vmul.f32 1.0, %v294
    %v296 = vrcp.pop %v289
    %v297 = vmul.f32 1.0, %v296
    %v298 = vmul.f32 %v291, 1.0614054
    %v299 = vmul.f32 %v293, 1.0614054
    %v300 = vmul.f32 %v295, 1.0614054
    %v301 = vmul.f32 %v297, 1.0614054
    %v302 = vsub.f32 %v298, 1.4531521
    %v303 = vsub.f32 %v299, 1.4531521
    %v304 = vsub.f32 %v300, 1.4531521
    %v305 = vsub.f32 %v301, 1.4531521
    %v306 = vmul.f32 %v302, %v291
    %v307 = vmul.f32 %v303, %v293
    %v308 = vmul.f32 %v304, %v295
    %v309 = vmul.f32 %v305, %v297
    %v310 = vadd.f32 %v306, 1.4214138
    %v311 = vadd.f32 %v307, 1.4214138
    %v312 = vadd.f32 %v308, 1.4214138
    %v313 = vadd.f32 %v309, 1.4214138
    %v314 = vmul.f32 %v310, %v291
    %v315 = vmul.f32 %v311, %v293
    %v316 = vmul.f32 %v312, %v295
    %v317 = vmul.f32 %v313, %v297
    %v318 = vsub.f32 %v314, 0.28449672
    %v319 = vsub.f32 %v315, 0.28449672
    %v320 = vsub.f32 %v316, 0.28449672
    %v321 = vsub.f32 %v317, 0.28449672
    %v322 = vmul.f32 %v318, %v291
    %v323 = vmul.f32 %v319, %v293
    %v324 = vmul.f32 %v320, %v295
    %v325 = vmul.f32 %v321, %v297
    %v326 = vadd.f32 %v322, 0.2548296
    %v327 = vadd.f32 %v323, 0.2548296
    %v328 = vadd.f32 %v324, 0.2548296
    %v329 = vadd.f32 %v325, 0.2548296
    %v330 = vmul.f32 %v326, %v291
    %v331 = vmul.f32 %v327, %v293
    %v332 = vmul.f32 %v328, %v295
    %v333 = vmul.f32 %v329, %v297
    %v334 = vsub.f32 0.0, %v278
    %v335 = vsub.f32 0.0, %v279
    %v336 = vsub.f32 0.0, %v280
    %v337 = vsub.f32 0.0, %v281
    %v338 = vmul.f32 %v334, %v278
    %v339 = vmul.f32 %v335, %v279
    %v340 = vmul.f32 %v336, %v280
    %v341 = vmul.f32 %v337, %v281
    %v342 = vmul.f32 %v338, 1.442695
    %v343 = vpow.pop %v342
    %v344 = vmul.f32 %v339, 1.442695
    %v345 = vpow.pop %v344
    %v346 = vmul.f32 %v340, 1.442695
    %v347 = vpow.pop %v346
    %v348 = vmul.f32 %v341, 1.442695
    %v349 = vpow.pop %v348
    %v350 = vmul.f32 %v330, %v343
    %v351 = vmul.f32 %v331, %v345
    %v352 = vmul.f32 %v332, %v347
    %v353 = vmul.f32 %v333, %v349
    %v354 = vsub.f32 1.0, %v350
    %v355 = vsub.f32 1.0, %v351
    %v356 = vsub.f32 1.0, %v352
    %v357 = vsub.f32 1.0, %v353
    %vm358 = vcmp.ge.f32.partialorder %v274, 0.0
    %vm359 = vcmp.ge.f32.partialorder %v275, 0.0
    %vm360 = vcmp.ge.f32.partialorder %v276, 0.0
    %vm361 = vcmp.ge.f32.partialorder %v277, 0.0
    %v362 = vsub.f32 0.0, %v354
    %v363 = vsub.f32 0.0, %v355
    %v364 = vsub.f32 0.0, %v356
    %v365 = vsub.f32 0.0, %v357
    %v366 = vsel %vm358, %v354, %v362
    %v367 = vsel %vm359, %v355, %v363
    %v368 = vsel %vm360, %v356, %v364
    %v369 = vsel %vm361, %v357, %v365
    %v370 = vmul.f32 %v256, 0.5
    %v371 = vmul.f32 %v261, 0.5
    %v372 = vmul.f32 %v266, 0.5
    %v373 = vmul.f32 %v271, 0.5
    %v374 = vadd.f32 %v366, 1.0
    %v375 = vadd.f32 %v367, 1.0
    %v376 = vadd.f32 %v368, 1.0
    %v377 = vadd.f32 %v369, 1.0
    %v378 = vmul.f32 %v370, %v374
    %v379 = vmul.f32 %v371, %v375
    %v380 = vmul.f32 %v372, %v376
    %v381 = vmul.f32 %v373, %v377
    %v382 = vld [vmem:[%s5] sm:$0xff]
    %v383 = vld [vmem:[%s5 + $0x8] sm:$0xff]
    %v384 = vld [vmem:[%s5 + $0x10] sm:$0xff]
    %v385 = vld [vmem:[%s5 + $0x18] sm:$0xff]
    %v386 = vld [vmem:[%s5 + $0x20] sm:$0xff]
    %v387 = vld [vmem:[%s5 + $0x28] sm:$0xff]
    %v388 = vld [vmem:[%s5 + $0x30] sm:$0xff]
    %v389 = vld [vmem:[%s5 + $0x38] sm:$0xff]
    %v390 = vld [vmem:[%s5 + $0x40] sm:$0xff]
    %v391 = vld [vmem:[%s5 + $0x48] sm:$0xff]
    %v392 = vld [vmem:[%s5 + $0x50] sm:$0xff]
    %v393 = vld [vmem:[%s5 + $0x58] sm:$0xff]
    %v394 = vld [vmem:[%s5 + $0x60] sm:$0xff]
    %v395 = vld [vmem:[%s5 + $0x68] sm:$0xff]
    %v396 = vld [vmem:[%s5 + $0x70] sm:$0xff]
    %v397 = vld [vmem:[%s5 + $0x78] sm:$0xff]
    %v398 = vld [vmem:[#allocation9] sm:$0x1]
    %v400 = vlaneseq
    %v401 = vshrl.u32 %v400, 7
    %v402 = vsub.s32 0, %v401
    %v403 = vrot.slane %v398, %v402
    %405 = vmatprep.subr.mxu0 0.0
    %406 = vmatpush1.msra.mxu0 %v397
    %407 = vmatprep.subr.mxu0 0.0
    %408 = vmatpush1.msra.mxu0 %v396
    %409 = vmatprep.subr.mxu0 0.0
    %410 = vmatpush1.msra.mxu0 %v395
    %411 = vmatprep.subr.mxu0 0.0
    %412 = vmatpush1.msra.mxu0 %v394
    %413 = vmatprep.subr.mxu0 0.0
    %414 = vmatpush1.msra.mxu0 %v393
    %415 = vmatprep.subr.mxu0 0.0
    %416 = vmatpush1.msra.mxu0 %v392
    %417 = vmatprep.subr.mxu0 0.0
    %418 = vmatpush1.msra.mxu0 %v391
    %419 = vmatprep.subr.mxu0 0.0
    %420 = vmatpush1.msra.mxu0 %v390
    %421 = vmatprep.subr.mxu0 0.0
    %422 = vmatpush1.msra.mxu0 %v389
    %423 = vmatprep.subr.mxu0 0.0
    %424 = vmatpush1.msra.mxu0 %v388
    %425 = vmatprep.subr.mxu0 0.0
    %426 = vmatpush1.msra.mxu0 %v387
    %427 = vmatprep.subr.mxu0 0.0
    %428 = vmatpush1.msra.mxu0 %v386
    %429 = vmatprep.subr.mxu0 0.0
    %430 = vmatpush1.msra.mxu0 %v385
    %431 = vmatprep.subr.mxu0 0.0
    %432 = vmatpush1.msra.mxu0 %v384
    %433 = vmatprep.subr.mxu0 0.0
    %434 = vmatpush1.msra.mxu0 %v383
    %435 = vmatprep.subr.mxu0 0.0
    %436 = vmatpush1.msra.mxu0 %v382
    %437 = vmatprep.subr.mxu0 0.0
    %438 = vmatpush2.msra.mxu0 0.0
    %439 = vmatprep.subr.mxu0 0.0
    %440 = vmatpush2.msra.mxu0 0.0
    %441 = vmatprep.subr.mxu0 0.0
    %442 = vmatpush2.msra.mxu0 0.0
    %443 = vmatprep.subr.mxu0 0.0
    %444 = vmatpush2.msra.mxu0 0.0
    %445 = vmatprep.subr.mxu0 0.0
    %446 = vmatpush2.msra.mxu0 0.0
    %447 = vmatprep.subr.mxu0 0.0
    %448 = vmatpush2.msra.mxu0 0.0
    %449 = vmatprep.subr.mxu0 0.0
    %450 = vmatpush2.msra.mxu0 0.0
    %451 = vmatprep.subr.mxu0 0.0
    %452 = vmatpush2.msra.mxu0 0.0
    %453 = vmatprep.subr.mxu0 0.0
    %454 = vmatpush2.msra.mxu0 0.0
    %455 = vmatprep.subr.mxu0 0.0
    %456 = vmatpush2.msra.mxu0 0.0
    %457 = vmatprep.subr.mxu0 0.0
    %458 = vmatpush2.msra.mxu0 0.0
    %459 = vmatprep.subr.mxu0 0.0
    %460 = vmatpush2.msra.mxu0 0.0
    %461 = vmatprep.subr.mxu0 0.0
    %462 = vmatpush2.msra.mxu0 0.0
    %463 = vmatprep.subr.mxu0 0.0
    %464 = vmatpush2.msra.mxu0 0.0
    %465 = vmatprep.subr.mxu0 0.0
    %466 = vmatpush2.msra.mxu0 0.0
    %467 = vmatprep.subr.mxu0 0.0
    %468 = vmatpush2.msra.mxu0 0.0
    %469 = vmatprep.mubr.f32.mxu0 0.0
    %470 = vmatmul.mubr.f32.gmra.mxu0 %v378
    %v471 = vpop.f32.mrf.mxu0
    %v472 = vadd.f32 %v403, %v471
    %v473 = vpop.f32.mrf.mxu0
    %474 = vmatprep.mubr.f32.mxu0 0.0
    %475 = vmatmul.mubr.f32.gmra.mxu0 %v379
    %v476 = vpop.f32.mrf.mxu0
    %v477 = vadd.f32 %v403, %v476
    %v478 = vpop.f32.mrf.mxu0
    %479 = vmatprep.mubr.f32.mxu0 0.0
    %480 = vmatmul.mubr.f32.gmra.mxu0 %v380
    %v481 = vpop.f32.mrf.mxu0
    %v482 = vadd.f32 %v403, %v481
    %v483 = vpop.f32.mrf.mxu0
    %484 = vmatprep.mubr.f32.mxu0 0.0
    %485 = vmatmul.mubr.f32.gmra.mxu0 %v381
    %v486 = vpop.f32.mrf.mxu0
    %v487 = vadd.f32 %v403, %v486
    %v488 = vpop.f32.mrf.mxu0
    %489 = vdwg.mxu0
    %v490 = vadd.f32 %v86, %v472
    %v491 = vadd.f32 %v87, %v477
    %v492 = vadd.f32 %v88, %v482
    %v493 = vadd.f32 %v89, %v487
    %494 = vst.msk [vmem:[%s7] sm:$0xff] %vm90, %v490
    %495 = vst.msk [vmem:[%s7 + $0x8] sm:$0xff] %vm90, %v491
    %496 = vst.msk [vmem:[%s7 + $0x10] sm:$0xff] %vm90, %v492
    %497 = vst.msk [vmem:[%s7 + $0x18] sm:$0xff] %vm90, %v493
    // Predicated region
    $region50: #{eegjepa_forward.17} parent=1 // pred_check
      _
    $region51: #{eegjepa_forward.17} parent=1 // pred_check_branch
      %499 = sbr.rel (0) target = $region53
    $region52: #{eegjepa_forward.17} parent=1 // pred_region
      _
    $region53: #{eegjepa_forward.17} parent=1 // pred_fallthru
      _
    // Predicated region
    $region54: #{eegjepa_forward.17} parent=1 // pred_check
      _
    $region55: #{eegjepa_forward.17} parent=1 // pred_check_branch
      %501 = sbr.rel (0) target = $region57
    $region56: #{eegjepa_forward.17} parent=1 // pred_region
      _
    $region57: #{eegjepa_forward.17} parent=1 // pred_fallthru
      _
    %502 = vsyncpa [#allocation3], 1
    %503 = vsyncpa [#allocation5], 1
    %504 = vsyncpa [#allocation8], 1

// kernel: eegjepa_forward.16
$region0: #{eegjepa_forward.16}
  #allocation0 [shape = 'u32[]', space=smem, size = 0x4, offset = 0x4, fixed_abs, tag = 'smem constant byte address 0x4 - core index']
  #allocation1 [shape = 'u32[144,128]{1,0:T(1,128)}', space=vmem, size = 0x12000, scoped, tag = 'internal scratch']
  %s0 = inlined_call_operand.vmem [shape: f32[2,16,32], index: 0, kind: input, shape index: {}]
  %s1 = inlined_call_operand.vmem [shape: f32[2,4,16,8], index: 1, kind: input, shape index: {}]
  %s2 = inlined_call_operand.vmem [shape: f32[2,2,4,16,8], index: 2, kind: input, shape index: {}]
  %s3 = inlined_call_operand.hbm [shape: f32[4,8,32], index: 3, kind: input, shape index: {}]
  %s4 = inlined_call_operand.hbm [shape: f32[1,32], index: 4, kind: input, shape index: {}]
  %s5 = inlined_call_operand.vmem [shape: f32[2,16,32], index: 5, kind: output, shape index: {}]
  %s6 = sld [smem:[#allocation0]]
  $region61: #{eegjepa_forward.16} parent=0
    _
  %s8 = ssub.s32 1, %s6
  %s9 = scalar_select 0, %s8, %s6
  $region1: #{eegjepa_forward.16} parent=0
    #allocation2 [shape = 'u8[16384]{0}', space=vmem, size = 0x4000, scoped, tag = 'input window, operand 3, single buffered']
    #allocation3 [shape = 's32[2]{0}', space=sflag, size = 0x8, scoped, tag = 'scoped memory for eegjepa_forward.16']
    #allocation4 [shape = 'u8[512]{0}', space=vmem, size = 0x400, scoped, tag = 'input window, operand 4, single buffered']
    #allocation5 [shape = 's32[1]{0}', space=sflag, size = 0x4, scoped, tag = 'scoped memory for eegjepa_forward.16']
    %10 = vsyncpa [#allocation3], 0
    %11 = vsyncpa [#allocation5], 0
    loop: start=0, step=1, limit=4
    $region2: #{eegjepa_forward.16} parent=1 // loop_pre_header
      _
    $region3: #{eegjepa_forward.16} parent=1 // loop_header
      %s13 = sphi 0, %s17
      %p14 = scmp.ge.s32.totalorder %s13, 4
      %s20 = sphi 0, %s32
      %s21 = sphi 0, %s28
      %s22 = sphi 0, %s20
      %s23 = sphi 0, %s21
      %s24 = sphi 0, %s22
      %s25 = sphi 0, %s23
      %s37 = sphi 0, %s39
      %s40 = sphi 0, %s37
      %s41 = sphi 0, %s40
      %s57 = sphi 0, %s41
      %s65 = sphi 0, %s67
      %s68 = sphi 0, %s65
      %s69 = sphi 0, %s68
      %s85 = sphi 0, %s69
      %s91 = sphi 0, %s93
      %s94 = sphi 0, %s91
      %s95 = sphi 0, %s94
      %s111 = sphi 0, %s95
      %s115 = sphi 0, %s115
      %s117 = sphi 0, %s115
      %s118 = sphi 0, %s117
      %s132 = sphi 0, %s118
      %s136 = sphi 0, %s136
      %s138 = sphi 0, %s136
      %s139 = sphi 0, %s138
      %s153 = sphi 0, %s139
      %s161 = sphi 0, %s163
      %s164 = sphi 0, %s161
      %s165 = sphi 0, %s164
      %s181 = sphi 0, %s165
    $region4: #{eegjepa_forward.16} parent=1 // loop_header_branch
      %16 = sbr.rel (%p14) target = $region8
    $region5: #{eegjepa_forward.16} parent=1 // loop_body
      %s18 = ssub.s32 %s13, 1
      %s19 = ssub.s32 %s13, 2
      %s26 = sadd.s32 1, %s21
      %p27 = scmp.ge.s32.totalorder %s26, 1
      %s28 = scalar_select %p27, 0, %s26
      %s29 = sadd.s32 1, %s20
      %s30 = scalar_select %p27, %s29, %s20
      %p31 = scmp.ge.s32.totalorder %s30, 2
      %s32 = scalar_select %p31, 0, %s30
      %s33 = ssub.s32 %s20, %s32
      %s34 = ssub.s32 %s21, %s28
      %s35 = sor.u32 %s33, %s34
      %p36 = scmp.eq.s32.totalorder %s35, 0
      %s38 = sadd.s32 %s37, 1
      %s39 = scalar_select %p36, %s37, %s38
      %p42 = pneg %p36
      %p43 = scmp.eq.s32.totalorder %s13, 1
      %p44 = por %p42, %p43
      %p45 = scmp.ne.s32.totalorder %s37, %s40
      %p46 = scmp.eq.s32.totalorder %s13, 0
      %p47 = por %p45, %p46
      %p48 = scmp.ne.s32.totalorder %s37, %s40
      %p49 = scmp.eq.s32.totalorder %s18, 1
      %p50 = por %p48, %p49
      %p51 = scmp.ne.s32.totalorder %s40, %s41
      %p52 = scmp.eq.s32.totalorder %s18, 0
      %p53 = por %p51, %p52
      %p54 = scmp.ne.s32.totalorder %s40, %s41
      %p55 = scmp.eq.s32.totalorder %s19, 1
      %p56 = por %p54, %p55
      %p58 = scmp.ne.s32.totalorder %s41, %s57
      %p59 = scmp.eq.s32.totalorder %s19, 0
      %p60 = por %p58, %p59
      %s61 = ssub.s32 %s20, %s32
      %s62 = ssub.s32 %s21, %s28
      %s63 = sor.u32 %s61, %s62
      %p64 = scmp.eq.s32.totalorder %s63, 0
      %s66 = sadd.s32 %s65, 1
      %s67 = scalar_select %p64, %s65, %s66
      %p70 = pneg %p64
      %p71 = scmp.eq.s32.totalorder %s13, 1
      %p72 = por %p70, %p71
      %p73 = scmp.ne.s32.totalorder %s65, %s68
      %p74 = scmp.eq.s32.totalorder %s13, 0
      %p75 = por %p73, %p74
      %p76 = scmp.ne.s32.totalorder %s65, %s68
      %p77 = scmp.eq.s32.totalorder %s18, 1
      %p78 = por %p76, %p77
      %p79 = scmp.ne.s32.totalorder %s68, %s69
      %p80 = scmp.eq.s32.totalorder %s18, 0
      %p81 = por %p79, %p80
      %p82 = scmp.ne.s32.totalorder %s68, %s69
      %p83 = scmp.eq.s32.totalorder %s19, 1
      %p84 = por %p82, %p83
      %p86 = scmp.ne.s32.totalorder %s69, %s85
      %p87 = scmp.eq.s32.totalorder %s19, 0
      %p88 = por %p86, %p87
      %s89 = ssub.s32 %s20, %s32
      %p90 = scmp.eq.s32.totalorder %s89, 0
      %s92 = sadd.s32 %s91, 1
      %s93 = scalar_select %p90, %s91, %s92
      %p96 = pneg %p90
      %p97 = scmp.eq.s32.totalorder %s13, 1
      %p98 = por %p96, %p97
      %p99 = scmp.ne.s32.totalorder %s91, %s94
      %p100 = scmp.eq.s32.totalorder %s13, 0
      %p101 = por %p99, %p100
      %p102 = scmp.ne.s32.totalorder %s91, %s94
      %p103 = scmp.eq.s32.totalorder %s18, 1
      %p104 = por %p102, %p103
      %p105 = scmp.ne.s32.totalorder %s94, %s95
      %p106 = scmp.eq.s32.totalorder %s18, 0
      %p107 = por %p105, %p106
      %p108 = scmp.ne.s32.totalorder %s94, %s95
      %p109 = scmp.eq.s32.totalorder %s19, 1
      %p110 = por %p108, %p109
      %p112 = scmp.ne.s32.totalorder %s95, %s111
      %p113 = scmp.eq.s32.totalorder %s19, 0
      %p114 = por %p112, %p113
      %s116 = sadd.s32 %s115, 1
      %p119 = scmp.eq.s32.totalorder %s13, 1
      %p120 = scmp.ne.s32.totalorder %s115, %s117
      %p121 = scmp.eq.s32.totalorder %s13, 0
      %p122 = por %p120, %p121
      %p123 = scmp.ne.s32.totalorder %s115, %s117
      %p124 = scmp.eq.s32.totalorder %s18, 1
      %p125 = por %p123, %p124
      %p126 = scmp.ne.s32.totalorder %s117, %s118
      %p127 = scmp.eq.s32.totalorder %s18, 0
      %p128 = por %p126, %p127
      %p129 = scmp.ne.s32.totalorder %s117, %s118
      %p130 = scmp.eq.s32.totalorder %s19, 1
      %p131 = por %p129, %p130
      %p133 = scmp.ne.s32.totalorder %s118, %s132
      %p134 = scmp.eq.s32.totalorder %s19, 0
      %p135 = por %p133, %p134
      %s137 = sadd.s32 %s136, 1
      %p140 = scmp.eq.s32.totalorder %s13, 1
      %p141 = scmp.ne.s32.totalorder %s136, %s138
      %p142 = scmp.eq.s32.totalorder %s13, 0
      %p143 = por %p141, %p142
      %p144 = scmp.ne.s32.totalorder %s136, %s138
      %p145 = scmp.eq.s32.totalorder %s18, 1
      %p146 = por %p144, %p145
      %p147 = scmp.ne.s32.totalorder %s138, %s139
      %p148 = scmp.eq.s32.totalorder %s18, 0
      %p149 = por %p147, %p148
      %p150 = scmp.ne.s32.totalorder %s138, %s139
      %p151 = scmp.eq.s32.totalorder %s19, 1
      %p152 = por %p150, %p151
      %p154 = scmp.ne.s32.totalorder %s139, %s153
      %p155 = scmp.eq.s32.totalorder %s19, 0
      %p156 = por %p154, %p155
      %s157 = ssub.s32 %s20, %s32
      %s158 = ssub.s32 %s21, %s28
      %s159 = sor.u32 %s157, %s158
      %p160 = scmp.eq.s32.totalorder %s159, 0
      %s162 = sadd.s32 %s161, 1
      %s163 = scalar_select %p160, %s161, %s162
      %p166 = pneg %p160
      %p167 = scmp.eq.s32.totalorder %s13, 1
      %p168 = por %p166, %p167
      %p169 = scmp.ne.s32.totalorder %s161, %s164
      %p170 = scmp.eq.s32.totalorder %s13, 0
      %p171 = por %p169, %p170
      %p172 = scmp.ne.s32.totalorder %s161, %s164
      %p173 = scmp.eq.s32.totalorder %s18, 1
      %p174 = por %p172, %p173
      %p175 = scmp.ne.s32.totalorder %s164, %s165
      %p176 = scmp.eq.s32.totalorder %s18, 0
      %p177 = por %p175, %p176
      %p178 = scmp.ne.s32.totalorder %s164, %s165
      %p179 = scmp.eq.s32.totalorder %s19, 1
      %p180 = por %p178, %p179
      %p182 = scmp.ne.s32.totalorder %s165, %s181
      %p183 = scmp.eq.s32.totalorder %s19, 0
      %p184 = por %p182, %p183
      %p185 = scmp.le.s32.totalorder 1, %s13
      %p186 = scmp.lt.s32.totalorder %s13, 3
      %p187 = pnand %p185, %p186
      %p188 = pneg %p187
      // Predicated region
      $region9: #{eegjepa_forward.16} parent=5 // pred_check
        _
      $region10: #{eegjepa_forward.16} parent=5 // pred_check_branch
        %190 = sbr.rel (%p187) target = $region12
      $region11: #{eegjepa_forward.16} parent=5 // pred_region
        %s191 = ssub.s32 %s13, 1
        // Predicated region
        $region13: #{eegjepa_forward.16} parent=11 // pred_check
          %p192 = pneg %p128
        $region14: #{eegjepa_forward.16} parent=11 // pred_check_branch
          %194 = sbr.rel (%p192) target = $region16
        $region15: #{eegjepa_forward.16} parent=11 // pred_region
          %s196 = ssub.s32 512, 512
          %197 = vsyncadd [#allocation3], %s196
          %s198 = sshll.u32 [#allocation2], 4
          %s199 = int_to_ptr.vmem [resolvable:$true] %s198
          %204 = dma.hbm_to_vmem [thread:$0]  %s3, 512, %s199, [#allocation3], 128, 128, 8
        $region16: #{eegjepa_forward.16} parent=11 // pred_fallthru
          _
        // Predicated region
        $region17: #{eegjepa_forward.16} parent=11 // pred_check
          %p205 = pneg %p149
        $region18: #{eegjepa_forward.16} parent=11 // pred_check_branch
          %207 = sbr.rel (%p205) target = $region20
        $region19: #{eegjepa_forward.16} parent=11 // pred_region
          %s209 = ssub.s32 16, 16
          %210 = vsyncadd [#allocation5], %s209
          %s212 = sshll.u32 [#allocation4], 4
          %s213 = int_to_ptr.vmem [resolvable:$true] %s212
          %215 = dma.hbm_to_vmem [thread:$0]  %s4, 16, %s213, [#allocation5]
        $region20: #{eegjepa_forward.16} parent=11 // pred_fallthru
          _
      $region12: #{eegjepa_forward.16} parent=5 // pred_fallthru
        _
      %p216 = scmp.lt.s32.totalorder %s13, 2
      // Predicated region
      $region21: #{eegjepa_forward.16} parent=5 // pred_check
        %p217 = pneg %p216
      $region22: #{eegjepa_forward.16} parent=5 // pred_check_branch
        %219 = sbr.rel (%p217) target = $region24
      $region23: #{eegjepa_forward.16} parent=5 // pred_region
        // Predicated region
        $region25: #{eegjepa_forward.16} parent=23 // pred_check
          %p220 = pneg %p47
        $region26: #{eegjepa_forward.16} parent=23 // pred_check_branch
          %222 = sbr.rel (%p220) target = $region28
        $region27: #{eegjepa_forward.16} parent=23 // pred_region
          %s223 = smul.u32 2, %s21
          %p224 = scmp.lt.s32.totalorder %s20, 1
          %s225 = scalar_select %p224, %s20, 1
          %p226 = scmp.lt.s32.totalorder %s223, 1
          %s227 = scalar_select %p226, %s223, 1
          %s228 = smul.addr %s225, 2
          %s229 = sadd.s32 %s227, %s228
          %s230 = smul.addr %s229, 8
          %s231 = scalar_lea.vmem %s0, %s230
          %s232 = smul.u32 2, %s21
        $region28: #{eegjepa_forward.16} parent=23 // pred_fallthru
          _
        // Predicated region
        $region29: #{eegjepa_forward.16} parent=23 // pred_check
          %p233 = pneg %p75
        $region30: #{eegjepa_forward.16} parent=23 // pred_check_branch
          %235 = sbr.rel (%p233) target = $region32
        $region31: #{eegjepa_forward.16} parent=23 // pred_region
          %s236 = smul.u32 2, %s21
          %p237 = scmp.lt.s32.totalorder %s20, 1
          %s238 = scalar_select %p237, %s20, 1
          %p239 = scmp.lt.s32.totalorder %s236, 1
          %s240 = scalar_select %p239, %s236, 1
          %s241 = smul.addr %s238, 8
          %s242 = sadd.s32 %s240, %s241
          %s243 = smul.addr %s242, 8
          %s244 = scalar_lea.vmem %s1, %s243
          %s245 = smul.u32 2, %s21
        $region32: #{eegjepa_forward.16} parent=23 // pred_fallthru
          _
        // Predicated region
        $region33: #{eegjepa_forward.16} parent=23 // pred_check
          %p246 = pneg %p101
        $region34: #{eegjepa_forward.16} parent=23 // pred_check_branch
          %248 = sbr.rel (%p246) target = $region36
        $region35: #{eegjepa_forward.16} parent=23 // pred_region
          %p249 = scmp.lt.s32.totalorder %s20, 1
          %s250 = scalar_select %p249, %s20, 1
          %s251 = smul.addr %s250, 16
          %s252 = smul.addr %s251, 8
          %s253 = scalar_lea.vmem %s2, %s252
        $region36: #{eegjepa_forward.16} parent=23 // pred_fallthru
          _
      $region24: #{eegjepa_forward.16} parent=5 // pred_fallthru
        _
      %p254 = scmp.le.s32.totalorder 1, %s13
      %p255 = scmp.lt.s32.totalorder %s13, 3
      %p256 = pnand %p254, %p255
      %p257 = pneg %p256
      // Predicated region
      $region37: #{eegjepa_forward.16} parent=5 // pred_check
        _
      $region38: #{eegjepa_forward.16} parent=5 // pred_check_branch
        %259 = sbr.rel (%p256) target = $region40
      $region39: #{eegjepa_forward.16} parent=5 // pred_region
        %s260 = ssub.s32 %s13, 1
        // Predicated region
        $region41: #{eegjepa_forward.16} parent=39 // pred_check
          %p261 = pneg %p128
        $region42: #{eegjepa_forward.16} parent=39 // pred_check_branch
          %263 = sbr.rel (%p261) target = $region44
        $region43: #{eegjepa_forward.16} parent=39 // pred_region
          %264 = dma.done [#allocation3], 512
        $region44: #{eegjepa_forward.16} parent=39 // pred_fallthru
          _
        // Predicated region
        $region45: #{eegjepa_forward.16} parent=39 // pred_check
          %p265 = pneg %p149
        $region46: #{eegjepa_forward.16} parent=39 // pred_check_branch
          %267 = sbr.rel (%p265) target = $region48
        $region47: #{eegjepa_forward.16} parent=39 // pred_region
          %268 = dma.done [#allocation5], 16
        $region48: #{eegjepa_forward.16} parent=39 // pred_fallthru
          _
        %s269 = smul.u32 2, %s23
        %p270 = scmp.lt.s32.totalorder %s22, 1
        %s271 = scalar_select %p270, %s22, 1
        %p272 = scmp.lt.s32.totalorder %s269, 1
        %s273 = scalar_select %p272, %s269, 1
        %s274 = smul.addr %s271, 2
        %s275 = sadd.s32 %s273, %s274
        %s276 = smul.addr %s275, 8
        %s277 = scalar_lea.vmem %s0, %s276
        %p278 = pneg %p53
        %p279 = pneg %p50
        %s280 = smul.u32 2, %s23
        %p281 = scmp.lt.s32.totalorder %s22, 1
        %s282 = scalar_select %p281, %s22, 1
        %p283 = scmp.lt.s32.totalorder %s280, 1
        %s284 = scalar_select %p283, %s280, 1
        %s285 = smul.addr %s282, 8
        %s286 = sadd.s32 %s284, %s285
        %s287 = smul.addr %s286, 8
        %s288 = scalar_lea.vmem %s1, %s287
        %p289 = pneg %p81
        %p290 = pneg %p78
        %p291 = scmp.lt.s32.totalorder %s22, 1
        %s292 = scalar_select %p291, %s22, 1
        %s293 = smul.addr %s292, 16
        %s294 = smul.addr %s293, 8
        %s295 = scalar_lea.vmem %s2, %s294
        %p296 = pneg %p107
        %p297 = pneg %p104
        %p298 = pneg %p128
        %p299 = pneg %p125
        %p300 = pneg %p149
        %p301 = pneg %p146
        %p302 = pneg %p177
        %p303 = pneg %p174
        %s304 = smul.u32 2, %s23
        %p305 = scmp.lt.s32.totalorder %s22, 1
        %s306 = scalar_select %p305, %s22, 1
        %p307 = scmp.lt.s32.totalorder %s304, 1
        %s308 = scalar_select %p307, %s304, 1
        %s309 = smul.addr %s306, 2
        %s310 = sadd.s32 %s308, %s309
        %s311 = smul.addr %s310, 8
        %s312 = scalar_lea.vmem %s5, %s311
        %s313 = smul.u32 2, %s23
        %p314 = scmp.lt.s32.totalorder %s22, 1
        %s315 = scalar_select %p314, %s22, 1
        %p316 = scmp.lt.s32.totalorder %s313, 1
        %s317 = scalar_select %p316, %s313, 1
        %s318 = smul.addr %s315, 2
        %s319 = sadd.s32 %s317, %s318
        %s320 = smul.addr %s319, 8
        %s321 = scalar_lea.vmem %s0, %s320
        %s322 = smul.u32 2, %s23
        %s323 = smul.u32 2, %s23
        %p324 = scmp.lt.s32.totalorder %s22, 1
        %s325 = scalar_select %p324, %s22, 1
        %p326 = scmp.lt.s32.totalorder %s323, 1
        %s327 = scalar_select %p326, %s323, 1
        %s328 = smul.addr %s325, 8
        %s329 = sadd.s32 %s327, %s328
        %s330 = smul.addr %s329, 8
        %s331 = scalar_lea.vmem %s1, %s330
        %s332 = smul.u32 2, %s23
        %p333 = scmp.lt.s32.totalorder %s22, 1
        %s334 = scalar_select %p333, %s22, 1
        %s335 = smul.addr %s334, 16
        %s336 = smul.addr %s335, 8
        %s337 = scalar_lea.vmem %s2, %s336
        %s338 = smul.u32 2, %s23
        %p339 = scmp.lt.s32.totalorder %s22, 1
        %s340 = scalar_select %p339, %s22, 1
        %p341 = scmp.lt.s32.totalorder %s338, 1
        %s342 = scalar_select %p341, %s338, 1
        %s343 = smul.addr %s340, 2
        %s344 = sadd.s32 %s342, %s343
        %s345 = smul.addr %s344, 8
        %s346 = scalar_lea.vmem %s5, %s345
        %s347 = smul.u32 2, %s23
        %v348 = vld [vmem:[%s321] sm:$0xff]
        %v349 = vld [vmem:[%s321 + $0x8] sm:$0xff]
        %v350 = vld [vmem:[%s331] sm:$0xff]
        %v351 = vld [vmem:[%s331 + $0x8] sm:$0xff]
        %v352 = vld [vmem:[%s331 + $0x10] sm:$0xff]
        %v353 = vld [vmem:[%s331 + $0x18] sm:$0xff]
        %v354 = vld [vmem:[%s331 + $0x20] sm:$0xff]
        %v355 = vld [vmem:[%s331 + $0x28] sm:$0xff]
        %v356 = vld [vmem:[%s331 + $0x30] sm:$0xff]
        %v357 = vld [vmem:[%s331 + $0x38] sm:$0xff]
        %v358 = vld [vmem:[%s337] sm:$0xff]
        %v359 = vld [vmem:[%s337 + $0x8] sm:$0xff]
        %v360 = vld [vmem:[%s337 + $0x10] sm:$0xff]
        %v361 = vld [vmem:[%s337 + $0x18] sm:$0xff]
        %v362 = vld [vmem:[%s337 + $0x20] sm:$0xff]
        %v363 = vld [vmem:[%s337 + $0x28] sm:$0xff]
        %v364 = vld [vmem:[%s337 + $0x30] sm:$0xff]
        %v365 = vld [vmem:[%s337 + $0x38] sm:$0xff]
        %s366 = scalar_lea.vmem %s337, 64
        %v367 = vld [vmem:[%s366] sm:$0xff]
        %v368 = vld [vmem:[%s366 + $0x8] sm:$0xff]
        %v369 = vld [vmem:[%s366 + $0x10] sm:$0xff]
        %v370 = vld [vmem:[%s366 + $0x18] sm:$0xff]
        %v371 = vld [vmem:[%s366 + $0x20] sm:$0xff]
        %v372 = vld [vmem:[%s366 + $0x28] sm:$0xff]
        %v373 = vld [vmem:[%s366 + $0x30] sm:$0xff]
        %v374 = vld [vmem:[%s366 + $0x38] sm:$0xff]
        %vm375 = vcmask 64512
        %v377 = vsel %vm375, %v350, 0
        %v380 = vsel %vm375, %v351, 0
        %v383 = vsel %vm375, %v358, 0
        %v386 = vsel %vm375, %v359, 0
        %388 = vmatprep.subr.mxu0 0.0
        %389 = vmatpush1.xpose.msra.mxu0 0.0
        %390 = vmatprep.subr.mxu0 0.0
        %391 = vmatpush1.xpose.msra.mxu0 0.0
        %392 = vmatprep.subr.mxu0 0.0
        %393 = vmatpush1.xpose.msra.mxu0 0.0
        %394 = vmatprep.subr.mxu0 0.0
        %395 = vmatpush1.xpose.msra.mxu0 0.0
        %396 = vmatprep.subr.mxu0 0.0
        %397 = vmatpush1.xpose.msra.mxu0 0.0
        %398 = vmatprep.subr.mxu0 0.0
        %399 = vmatpush1.xpose.msra.mxu0 0.0
        %400 = vmatprep.subr.mxu0 0.0
        %401 = vmatpush1.xpose.msra.mxu0 0.0
        %402 = vmatprep.subr.mxu0 0.0
        %403 = vmatpush1.xpose.msra.mxu0 0.0
        %404 = vmatprep.subr.mxu0 0.0
        %405 = vmatpush1.xpose.msra.mxu0 0.0
        %406 = vmatprep.subr.mxu0 0.0
        %407 = vmatpush1.xpose.msra.mxu0 0.0
        %408 = vmatprep.subr.mxu0 0.0
        %409 = vmatpush1.xpose.msra.mxu0 0.0
        %410 = vmatprep.subr.mxu0 0.0
        %411 = vmatpush1.xpose.msra.mxu0 0.0
        %412 = vmatprep.subr.mxu0 0.0
        %413 = vmatpush1.xpose.msra.mxu0 0.0
        %414 = vmatprep.subr.mxu0 0.0
        %415 = vmatpush1.xpose.msra.mxu0 0.0
        %416 = vmatprep.subr.mxu0 0.0
        %417 = vmatpush1.xpose.msra.mxu0 %v386
        %418 = vmatprep.subr.mxu0 0.0
        %419 = vmatpush1.xpose.msra.mxu0 %v383
        %420 = vmatprep.subr.mxu0 0.0
        %421 = vmatpush2.xpose.msra.mxu0 0.0
        %422 = vmatprep.subr.mxu0 0.0
        %423 = vmatpush2.xpose.msra.mxu0 0.0
        %424 = vmatprep.subr.mxu0 0.0
        %425 = vmatpush2.xpose.msra.mxu0 0.0
        %426 = vmatprep.subr.mxu0 0.0
        %427 = vmatpush2.xpose.msra.mxu0 0.0
        %428 = vmatprep.subr.mxu0 0.0
        %429 = vmatpush2.xpose.msra.mxu0 0.0
        %430 = vmatprep.subr.mxu0 0.0
        %431 = vmatpush2.xpose.msra.mxu0 0.0
        %432 = vmatprep.subr.mxu0 0.0
        %433 = vmatpush2.xpose.msra.mxu0 0.0
        %434 = vmatprep.subr.mxu0 0.0
        %435 = vmatpush2.xpose.msra.mxu0 0.0
        %436 = vmatprep.subr.mxu0 0.0
        %437 = vmatpush2.xpose.msra.mxu0 0.0
        %438 = vmatprep.subr.mxu0 0.0
        %439 = vmatpush2.xpose.msra.mxu0 0.0
        %440 = vmatprep.subr.mxu0 0.0
        %441 = vmatpush2.xpose.msra.mxu0 0.0
        %442 = vmatprep.subr.mxu0 0.0
        %443 = vmatpush2.xpose.msra.mxu0 0.0
        %444 = vmatprep.subr.mxu0 0.0
        %445 = vmatpush2.xpose.msra.mxu0 0.0
        %446 = vmatprep.subr.mxu0 0.0
        %447 = vmatpush2.xpose.msra.mxu0 0.0
        %448 = vmatprep.subr.mxu0 0.0
        %449 = vmatpush2.xpose.msra.mxu0 0.0
        %450 = vmatprep.subr.mxu0 0.0
        %451 = vmatpush2.xpose.msra.mxu0 0.0
        %452 = vmatprep.mubr.f32.mxu0 0.0
        %453 = vmatmul.mubr.f32.gmra.mxu0 %v377
        %v454 = vpop.f32.mrf.mxu0
        %v455 = vadd.f32 0.0, %v454
        %v456 = vpop.f32.mrf.mxu0
        %457 = vmatprep.mubr.f32.mxu0 0.0
        %458 = vmatmul.mubr.f32.gmra.mxu0 %v380
        %v459 = vpop.f32.mrf.mxu0
        %v460 = vadd.f32 0.0, %v459
        %v461 = vpop.f32.mrf.mxu0
        %462 = vdwg.mxu0
        %v464 = vsel %vm375, %v352, 0
        %v467 = vsel %vm375, %v353, 0
        %v470 = vsel %vm375, %v360, 0
        %v473 = vsel %vm375, %v361, 0
        %475 = vmatprep.subr.mxu0 0.0
        %476 = vmatpush1.xpose.msra.mxu0 0.0
        %477 = vmatprep.subr.mxu0 0.0
        %478 = vmatpush1.xpose.msra.mxu0 0.0
        %479 = vmatprep.subr.mxu0 0.0
        %480 = vmatpush1.xpose.msra.mxu0 0.0
        %481 = vmatprep.subr.mxu0 0.0
        %482 = vmatpush1.xpose.msra.mxu0 0.0
        %483 = vmatprep.subr.mxu0 0.0
        %484 = vmatpush1.xpose.msra.mxu0 0.0
        %485 = vmatprep.subr.mxu0 0.0
        %486 = vmatpush1.xpose.msra.mxu0 0.0
        %487 = vmatprep.subr.mxu0 0.0
        %488 = vmatpush1.xpose.msra.mxu0 0.0
        %489 = vmatprep.subr.mxu0 0.0
        %490 = vmatpush1.xpose.msra.mxu0 0.0
        %491 = vmatprep.subr.mxu0 0.0
        %492 = vmatpush1.xpose.msra.mxu0 0.0
        %493 = vmatprep.subr.mxu0 0.0
        %494 = vmatpush1.xpose.msra.mxu0 0.0
        %495 = vmatprep.subr.mxu0 0.0
        %496 = vmatpush1.xpose.msra.mxu0 0.0
        %497 = vmatprep.subr.mxu0 0.0
        %498 = vmatpush1.xpose.msra.mxu0 0.0
        %499 = vmatprep.subr.mxu0 0.0
        %500 = vmatpush1.xpose.msra.mxu0 0.0
        %501 = vmatprep.subr.mxu0 0.0
        %502 = vmatpush1.xpose.msra.mxu0 0.0
        %503 = vmatprep.subr.mxu0 0.0
        %504 = vmatpush1.xpose.msra.mxu0 %v473
        %505 = vmatprep.subr.mxu0 0.0
        %506 = vmatpush1.xpose.msra.mxu0 %v470
        %507 = vmatprep.subr.mxu0 0.0
        %508 = vmatpush2.xpose.msra.mxu0 0.0
        %509 = vmatprep.subr.mxu0 0.0
        %510 = vmatpush2.xpose.msra.mxu0 0.0
        %511 = vmatprep.subr.mxu0 0.0
        %512 = vmatpush2.xpose.msra.mxu0 0.0
        %513 = vmatprep.subr.mxu0 0.0
        %514 = vmatpush2.xpose.msra.mxu0 0.0
        %515 = vmatprep.subr.mxu0 0.0
        %516 = vmatpush2.xpose.msra.mxu0 0.0
        %517 = vmatprep.subr.mxu0 0.0
        %518 = vmatpush2.xpose.msra.mxu0 0.0
        %519 = vmatprep.subr.mxu0 0.0
        %520 = vmatpush2.xpose.msra.mxu0 0.0
        %521 = vmatprep.subr.mxu0 0.0
        %522 = vmatpush2.xpose.msra.mxu0 0.0
        %523 = vmatprep.subr.mxu0 0.0
        %524 = vmatpush2.xpose.msra.mxu0 0.0
        %525 = vmatprep.subr.mxu0 0.0
        %526 = vmatpush2.xpose.msra.mxu0 0.0
        %527 = vmatprep.subr.mxu0 0.0
        %528 = vmatpush2.xpose.msra.mxu0 0.0
        %529 = vmatprep.subr.mxu0 0.0
        %530 = vmatpush2.xpose.msra.mxu0 0.0
        %531 = vmatprep.subr.mxu0 0.0
        %532 = vmatpush2.xpose.msra.mxu0 0.0
        %533 = vmatprep.subr.mxu0 0.0
        %534 = vmatpush2.xpose.msra.mxu0 0.0
        %535 = vmatprep.subr.mxu0 0.0
        %536 = vmatpush2.xpose.msra.mxu0 0.0
        %537 = vmatprep.subr.mxu0 0.0
        %538 = vmatpush2.xpose.msra.mxu0 0.0
        %539 = vmatprep.mubr.f32.mxu0 0.0
        %540 = vmatmul.mubr.f32.gmra.mxu0 %v464
        %v541 = vpop.f32.mrf.mxu0
        %v542 = vadd.f32 0.0, %v541
        %v543 = vpop.f32.mrf.mxu0
        %544 = vmatprep.mubr.f32.mxu0 0.0
        %545 = vmatmul.mubr.f32.gmra.mxu0 %v467
        %v546 = vpop.f32.mrf.mxu0
        %v547 = vadd.f32 0.0, %v546
        %v548 = vpop.f32.mrf.mxu0
        %549 = vdwg.mxu0
        %v551 = vsel %vm375, %v354, 0
        %v554 = vsel %vm375, %v355, 0
        %v557 = vsel %vm375, %v362, 0
        %v560 = vsel %vm375, %v363, 0
        %562 = vmatprep.subr.mxu0 0.0
        %563 = vmatpush1.xpose.msra.mxu0 0.0
        %564 = vmatprep.subr.mxu0 0.0
        %565 = vmatpush1.xpose.msra.mxu0 0.0
        %566 = vmatprep.subr.mxu0 0.0
        %567 = vmatpush1.xpose.msra.mxu0 0.0
        %568 = vmatprep.subr.mxu0 0.0
        %569 = vmatpush1.xpose.msra.mxu0 0.0
        %570 = vmatprep.subr.mxu0 0.0
        %571 = vmatpush1.xpose.msra.mxu0 0.0
        %572 = vmatprep.subr.mxu0 0.0
        %573 = vmatpush1.xpose.msra.mxu0 0.0
        %574 = vmatprep.subr.mxu0 0.0
        %575 = vmatpush1.xpose.msra.mxu0 0.0
        %576 = vmatprep.subr.mxu0 0.0
        %577 = vmatpush1.xpose.msra.mxu0 0.0
        %578 = vmatprep.subr.mxu0 0.0
        %579 = vmatpush1.xpose.msra.mxu0 0.0
        %580 = vmatprep.subr.mxu0 0.0
        %581 = vmatpush1.xpose.msra.mxu0 0.0
        %582 = vmatprep.subr.mxu0 0.0
        %583 = vmatpush1.xpose.msra.mxu0 0.0
        %584 = vmatprep.subr.mxu0 0.0
        %585 = vmatpush1.xpose.msra.mxu0 0.0
        %586 = vmatprep.subr.mxu0 0.0
        %587 = vmatpush1.xpose.msra.mxu0 0.0
        %588 = vmatprep.subr.mxu0 0.0
        %589 = vmatpush1.xpose.msra.mxu0 0.0
        %590 = vmatprep.subr.mxu0 0.0
        %591 = vmatpush1.xpose.msra.mxu0 %v560
        %592 = vmatprep.subr.mxu0 0.0
        %593 = vmatpush1.xpose.msra.mxu0 %v557
        %594 = vmatprep.subr.mxu0 0.0
        %595 = vmatpush2.xpose.msra.mxu0 0.0
        %596 = vmatprep.subr.mxu0 0.0
        %597 = vmatpush2.xpose.msra.mxu0 0.0
        %598 = vmatprep.subr.mxu0 0.0
        %599 = vmatpush2.xpose.msra.mxu0 0.0
        %600 = vmatprep.subr.mxu0 0.0
        %601 = vmatpush2.xpose.msra.mxu0 0.0
        %602 = vmatprep.subr.mxu0 0.0
        %603 = vmatpush2.xpose.msra.mxu0 0.0
        %604 = vmatprep.subr.mxu0 0.0
        %605 = vmatpush2.xpose.msra.mxu0 0.0
        %606 = vmatprep.subr.mxu0 0.0
        %607 = vmatpush2.xpose.msra.mxu0 0.0
        %608 = vmatprep.subr.mxu0 0.0
        %609 = vmatpush2.xpose.msra.mxu0 0.0
        %610 = vmatprep.subr.mxu0 0.0
        %611 = vmatpush2.xpose.msra.mxu0 0.0
        %612 = vmatprep.subr.mxu0 0.0
        %613 = vmatpush2.xpose.msra.mxu0 0.0
        %614 = vmatprep.subr.mxu0 0.0
        %615 = vmatpush2.xpose.msra.mxu0 0.0
        %616 = vmatprep.subr.mxu0 0.0
        %617 = vmatpush2.xpose.msra.mxu0 0.0
        %618 = vmatprep.subr.mxu0 0.0
        %619 = vmatpush2.xpose.msra.mxu0 0.0
        %620 = vmatprep.subr.mxu0 0.0
        %621 = vmatpush2.xpose.msra.mxu0 0.0
        %622 = vmatprep.subr.mxu0 0.0
        %623 = vmatpush2.xpose.msra.mxu0 0.0
        %624 = vmatprep.subr.mxu0 0.0
        %625 = vmatpush2.xpose.msra.mxu0 0.0
        %626 = vmatprep.mubr.f32.mxu0 0.0
        %627 = vmatmul.mubr.f32.gmra.mxu0 %v551
        %v628 = vpop.f32.mrf.mxu0
        %v629 = vadd.f32 0.0, %v628
        %v630 = vpop.f32.mrf.mxu0
        %631 = vmatprep.mubr.f32.mxu0 0.0
        %632 = vmatmul.mubr.f32.gmra.mxu0 %v554
        %v633 = vpop.f32.mrf.mxu0
        %v634 = vadd.f32 0.0, %v633
        %v635 = vpop.f32.mrf.mxu0
        %636 = vdwg.mxu0
        %v638 = vsel %vm375, %v356, 0
        %v641 = vsel %vm375, %v357, 0
        %v644 = vsel %vm375, %v364, 0
        %v647 = vsel %vm375, %v365, 0
        %649 = vmatprep.subr.mxu0 0.0
        %650 = vmatpush1.xpose.msra.mxu0 0.0
        %651 = vmatprep.subr.mxu0 0.0
        %652 = vmatpush1.xpose.msra.mxu0 0.0
        %653 = vmatprep.subr.mxu0 0.0
        %654 = vmatpush1.xpose.msra.mxu0 0.0
        %655 = vmatprep.subr.mxu0 0.0
        %656 = vmatpush1.xpose.msra.mxu0 0.0
        %657 = vmatprep.subr.mxu0 0.0
        %658 = vmatpush1.xpose.msra.mxu0 0.0
        %659 = vmatprep.subr.mxu0 0.0
        %660 = vmatpush1.xpose.msra.mxu0 0.0
        %661 = vmatprep.subr.mxu0 0.0
        %662 = vmatpush1.xpose.msra.mxu0 0.0
        %663 = vmatprep.subr.mxu0 0.0
        %664 = vmatpush1.xpose.msra.mxu0 0.0
        %665 = vmatprep.subr.mxu0 0.0
        %666 = vmatpush1.xpose.msra.mxu0 0.0
        %667 = vmatprep.subr.mxu0 0.0
        %668 = vmatpush1.xpose.msra.mxu0 0.0
        %669 = vmatprep.subr.mxu0 0.0
        %670 = vmatpush1.xpose.msra.mxu0 0.0
        %671 = vmatprep.subr.mxu0 0.0
        %672 = vmatpush1.xpose.msra.mxu0 0.0
        %673 = vmatprep.subr.mxu0 0.0
        %674 = vmatpush1.xpose.msra.mxu0 0.0
        %675 = vmatprep.subr.mxu0 0.0
        %676 = vmatpush1.xpose.msra.mxu0 0.0
        %677 = vmatprep.subr.mxu0 0.0
        %678 = vmatpush1.xpose.msra.mxu0 %v647
        %679 = vmatprep.subr.mxu0 0.0
        %680 = vmatpush1.xpose.msra.mxu0 %v644
        %681 = vmatprep.subr.mxu0 0.0
        %682 = vmatpush2.xpose.msra.mxu0 0.0
        %683 = vmatprep.subr.mxu0 0.0
        %684 = vmatpush2.xpose.msra.mxu0 0.0
        %685 = vmatprep.subr.mxu0 0.0
        %686 = vmatpush2.xpose.msra.mxu0 0.0
        %687 = vmatprep.subr.mxu0 0.0
        %688 = vmatpush2.xpose.msra.mxu0 0.0
        %689 = vmatprep.subr.mxu0 0.0
        %690 = vmatpush2.xpose.msra.mxu0 0.0
        %691 = vmatprep.subr.mxu0 0.0
        %692 = vmatpush2.xpose.msra.mxu0 0.0
        %693 = vmatprep.subr.mxu0 0.0
        %694 = vmatpush2.xpose.msra.mxu0 0.0
        %695 = vmatprep.subr.mxu0 0.0
        %696 = vmatpush2.xpose.msra.mxu0 0.0
        %697 = vmatprep.subr.mxu0 0.0
        %698 = vmatpush2.xpose.msra.mxu0 0.0
        %699 = vmatprep.subr.mxu0 0.0
        %700 = vmatpush2.xpose.msra.mxu0 0.0
        %701 = vmatprep.subr.mxu0 0.0
        %702 = vmatpush2.xpose.msra.mxu0 0.0
        %703 = vmatprep.subr.mxu0 0.0
        %704 = vmatpush2.xpose.msra.mxu0 0.0
        %705 = vmatprep.subr.mxu0 0.0
        %706 = vmatpush2.xpose.msra.mxu0 0.0
        %707 = vmatprep.subr.mxu0 0.0
        %708 = vmatpush2.xpose.msra.mxu0 0.0
        %709 = vmatprep.subr.mxu0 0.0
        %710 = vmatpush2.xpose.msra.mxu0 0.0
        %711 = vmatprep.subr.mxu0 0.0
        %712 = vmatpush2.xpose.msra.mxu0 0.0
        %713 = vmatprep.mubr.f32.mxu0 0.0
        %714 = vmatmul.mubr.f32.gmra.mxu0 %v638
        %v715 = vpop.f32.mrf.mxu0
        %v716 = vadd.f32 0.0, %v715
        %v717 = vpop.f32.mrf.mxu0
        %718 = vmatprep.mubr.f32.mxu0 0.0
        %719 = vmatmul.mubr.f32.gmra.mxu0 %v641
        %v720 = vpop.f32.mrf.mxu0
        %v721 = vadd.f32 0.0, %v720
        %v722 = vpop.f32.mrf.mxu0
        %723 = vdwg.mxu0
        %vm724 = vcmask 130048
        %v725 = vsel %vm724, %v455, -inf
        %726 = vmax.xlane.f32.xlu0 %v725
        %v727 = vpop.xlane.xlu0 %726
        %v728 = vsel %vm724, %v460, -inf
        %729 = vmax.xlane.f32.xlu0 %v728
        %v730 = vpop.xlane.xlu0 %729
        %v731 = vsel %vm724, %v542, -inf
        %732 = vmax.xlane.f32.xlu0 %v731
        %v733 = vpop.xlane.xlu0 %732
        %v734 = vsel %vm724, %v547, -inf
        %735 = vmax.xlane.f32.xlu0 %v734
        %v736 = vpop.xlane.xlu0 %735
        %v737 = vsel %vm724, %v629, -inf
        %738 = vmax.xlane.f32.xlu0 %v737
        %v739 = vpop.xlane.xlu0 %738
        %v740 = vsel %vm724, %v634, -inf
        %741 = vmax.xlane.f32.xlu0 %v740
        %v742 = vpop.xlane.xlu0 %741
        %v743 = vsel %vm724, %v716, -inf
        %744 = vmax.xlane.f32.xlu0 %v743
        %v745 = vpop.xlane.xlu0 %744
        %v746 = vsel %vm724, %v721, -inf
        %747 = vmax.xlane.f32.xlu0 %v746
        %v748 = vpop.xlane.xlu0 %747
        %v749 = vsub.f32 %v455, %v727
        %v750 = vsub.f32 %v460, %v730
        %v751 = vsub.f32 %v542, %v733
        %v752 = vsub.f32 %v547, %v736
        %v753 = vsub.f32 %v629, %v739
        %v754 = vsub.f32 %v634, %v742
        %v755 = vsub.f32 %v716, %v745
        %v756 = vsub.f32 %v721, %v748
        %v757 = vmul.f32 %v749, 1.442695
        %v758 = vpow.pop %v757
        %v759 = vmul.f32 %v750, 1.442695
        %v760 = vpow.pop %v759
        %v761 = vmul.f32 %v751, 1.442695
        %v762 = vpow.pop %v761
        %v763 = vmul.f32 %v752, 1.442695
        %v764 = vpow.pop %v763
        %v765 = vmul.f32 %v753, 1.442695
        %v766 = vpow.pop %v765
        %v767 = vmul.f32 %v754, 1.442695
        %v768 = vpow.pop %v767
        %v769 = vmul.f32 %v755, 1.442695
        %v770 = vpow.pop %v769
        %v771 = vmul.f32 %v756, 1.442695
        %v772 = vpow.pop %v771
        %v773 = vsel %vm724, %v758, 0.0
        %774 = vadd.xlane.f32.xlu0 %v773
        %v775 = vpop.xlane.xlu0 %774
        %v776 = vsel %vm724, %v760, 0.0
        %777 = vadd.xlane.f32.xlu0 %v776
        %v778 = vpop.xlane.xlu0 %777
        %v779 = vsel %vm724, %v762, 0.0
        %780 = vadd.xlane.f32.xlu0 %v779
        %v781 = vpop.xlane.xlu0 %780
        %v782 = vsel %vm724, %v764, 0.0
        %783 = vadd.xlane.f32.xlu0 %v782
        %v784 = vpop.xlane.xlu0 %783
        %v785 = vsel %vm724, %v766, 0.0
        %786 = vadd.xlane.f32.xlu0 %v785
        %v787 = vpop.xlane.xlu0 %786
        %v788 = vsel %vm724, %v768, 0.0
        %789 = vadd.xlane.f32.xlu0 %v788
        %v790 = vpop.xlane.xlu0 %789
        %v791 = vsel %vm724, %v770, 0.0
        %792 = vadd.xlane.f32.xlu0 %v791
        %v793 = vpop.xlane.xlu0 %792
        %v794 = vsel %vm724, %v772, 0.0
        %795 = vadd.xlane.f32.xlu0 %v794
        %v796 = vpop.xlane.xlu0 %795
        %v797 = vrcp.pop %v775
        %v798 = vrcp.pop %v778
        %v799 = vrcp.pop %v781
        %v800 = vrcp.pop %v784
        %v801 = vrcp.pop %v787
        %v802 = vrcp.pop %v790
        %v803 = vrcp.pop %v793
        %v804 = vrcp.pop %v796
        %v805 = vmul.f32 %v758, %v797
        %v806 = vmul.f32 %v760, %v798
        %v807 = vmul.f32 %v762, %v799
        %v808 = vmul.f32 %v764, %v800
        %v809 = vmul.f32 %v766, %v801
        %v810 = vmul.f32 %v768, %v802
        %v811 = vmul.f32 %v770, %v803
        %v812 = vmul.f32 %v772, %v804
        %v814 = vsel %vm724, %v805, 0
        %v817 = vsel %vm724, %v806, 0
        %819 = vmatprep.subr.mxu0 0.0
        %820 = vmatpush1.msra.mxu0 0.0
        %821 = vmatprep.subr.mxu0 0.0
        %822 = vmatpush1.msra.mxu0 0.0
        %823 = vmatprep.subr.mxu0 0.0
        %824 = vmatpush1.msra.mxu0 0.0
        %825 = vmatprep.subr.mxu0 0.0
        %826 = vmatpush1.msra.mxu0 0.0
        %827 = vmatprep.subr.mxu0 0.0
        %828 = vmatpush1.msra.mxu0 0.0
        %829 = vmatprep.subr.mxu0 0.0
        %830 = vmatpush1.msra.mxu0 0.0
        %831 = vmatprep.subr.mxu0 0.0
        %832 = vmatpush1.msra.mxu0 0.0
        %833 = vmatprep.subr.mxu0 0.0
        %834 = vmatpush1.msra.mxu0 0.0
        %835 = vmatprep.subr.mxu0 0.0
        %836 = vmatpush1.msra.mxu0 0.0
        %837 = vmatprep.subr.mxu0 0.0
        %838 = vmatpush1.msra.mxu0 0.0
        %839 = vmatprep.subr.mxu0 0.0
        %840 = vmatpush1.msra.mxu0 0.0
        %841 = vmatprep.subr.mxu0 0.0
        %842 = vmatpush1.msra.mxu0 0.0
        %843 = vmatprep.subr.mxu0 0.0
        %844 = vmatpush1.msra.mxu0 0.0
        %845 = vmatprep.subr.mxu0 0.0
        %846 = vmatpush1.msra.mxu0 0.0
        %847 = vmatprep.subr.mxu0 0.0
        %848 = vmatpush1.msra.mxu0 %v368
        %849 = vmatprep.subr.mxu0 0.0
        %850 = vmatpush1.msra.mxu0 %v367
        %851 = vmatprep.subr.mxu0 0.0
        %852 = vmatpush2.msra.mxu0 0.0
        %853 = vmatprep.subr.mxu0 0.0
        %854 = vmatpush2.msra.mxu0 0.0
        %855 = vmatprep.subr.mxu0 0.0
        %856 = vmatpush2.msra.mxu0 0.0
        %857 = vmatprep.subr.mxu0 0.0
        %858 = vmatpush2.msra.mxu0 0.0
        %859 = vmatprep.subr.mxu0 0.0
        %860 = vmatpush2.msra.mxu0 0.0
        %861 = vmatprep.subr.mxu0 0.0
        %862 = vmatpush2.msra.mxu0 0.0
        %863 = vmatprep.subr.mxu0 0.0
        %864 = vmatpush2.msra.mxu0 0.0
        %865 = vmatprep.subr.mxu0 0.0
        %866 = vmatpush2.msra.mxu0 0.0
        %867 = vmatprep.subr.mxu0 0.0
        %868 = vmatpush2.msra.mxu0 0.0
        %869 = vmatprep.subr.mxu0 0.0
        %870 = vmatpush2.msra.mxu0 0.0
        %871 = vmatprep.subr.mxu0 0.0
        %872 = vmatpush2.msra.mxu0 0.0
        %873 = vmatprep.subr.mxu0 0.0
        %874 = vmatpush2.msra.mxu0 0.0
        %875 = vmatprep.subr.mxu0 0.0
        %876 = vmatpush2.msra.mxu0 0.0
        %877 = vmatprep.subr.mxu0 0.0
        %878 = vmatpush2.msra.mxu0 0.0
        %879 = vmatprep.subr.mxu0 0.0
        %880 = vmatpush2.msra.mxu0 0.0
        %881 = vmatprep.subr.mxu0 0.0
        %882 = vmatpush2.msra.mxu0 0.0
        %883 = vmatprep.mubr.f32.mxu0 0.0
        %884 = vmatmul.mubr.f32.gmra.mxu0 %v814
        %v885 = vpop.f32.mrf.mxu0
        %v886 = vadd.f32 0.0, %v885
        %v887 = vpop.f32.mrf.mxu0
        %888 = vmatprep.mubr.f32.mxu0 0.0
        %889 = vmatmul.mubr.f32.gmra.mxu0 %v817
        %v890 = vpop.f32.mrf.mxu0
        %v891 = vadd.f32 0.0, %v890
        %v892 = vpop.f32.mrf.mxu0
        %893 = vdwg.mxu0
        %v895 = vsel %vm724, %v807, 0
        %v898 = vsel %vm724, %v808, 0
        %900 = vmatprep.subr.mxu0 0.0
        %901 = vmatpush1.msra.mxu0 0.0
        %902 = vmatprep.subr.mxu0 0.0
        %903 = vmatpush1.msra.mxu0 0.0
        %904 = vmatprep.subr.mxu0 0.0
        %905 = vmatpush1.msra.mxu0 0.0
        %906 = vmatprep.subr.mxu0 0.0
        %907 = vmatpush1.msra.mxu0 0.0
        %908 = vmatprep.subr.mxu0 0.0
        %909 = vmatpush1.msra.mxu0 0.0
        %910 = vmatprep.subr.mxu0 0.0
        %911 = vmatpush1.msra.mxu0 0.0
        %912 = vmatprep.subr.mxu0 0.0
        %913 = vmatpush1.msra.mxu0 0.0
        %914 = vmatprep.subr.mxu0 0.0
        %915 = vmatpush1.msra.mxu0 0.0
        %916 = vmatprep.subr.mxu0 0.0
        %917 = vmatpush1.msra.mxu0 0.0
        %918 = vmatprep.subr.mxu0 0.0
        %919 = vmatpush1.msra.mxu0 0.0
        %920 = vmatprep.subr.mxu0 0.0
        %921 = vmatpush1.msra.mxu0 0.0
        %922 = vmatprep.subr.mxu0 0.0
        %923 = vmatpush1.msra.mxu0 0.0
        %924 = vmatprep.subr.mxu0 0.0
        %925 = vmatpush1.msra.mxu0 0.0
        %926 = vmatprep.subr.mxu0 0.0
        %927 = vmatpush1.msra.mxu0 0.0
        %928 = vmatprep.subr.mxu0 0.0
        %929 = vmatpush1.msra.mxu0 %v370
        %930 = vmatprep.subr.mxu0 0.0
        %931 = vmatpush1.msra.mxu0 %v369
        %932 = vmatprep.subr.mxu0 0.0
        %933 = vmatpush2.msra.mxu0 0.0
        %934 = vmatprep.subr.mxu0 0.0
        %935 = vmatpush2.msra.mxu0 0.0
        %936 = vmatprep.subr.mxu0 0.0
        %937 = vmatpush2.msra.mxu0 0.0
        %938 = vmatprep.subr.mxu0 0.0
        %939 = vmatpush2.msra.mxu0 0.0
        %940 = vmatprep.subr.mxu0 0.0
        %941 = vmatpush2.msra.mxu0 0.0
        %942 = vmatprep.subr.mxu0 0.0
        %943 = vmatpush2.msra.mxu0 0.0
        %944 = vmatprep.subr.mxu0 0.0
        %945 = vmatpush2.msra.mxu0 0.0
        %946 = vmatprep.subr.mxu0 0.0
        %947 = vmatpush2.msra.mxu0 0.0
        %948 = vmatprep.subr.mxu0 0.0
        %949 = vmatpush2.msra.mxu0 0.0
        %950 = vmatprep.subr.mxu0 0.0
        %951 = vmatpush2.msra.mxu0 0.0
        %952 = vmatprep.subr.mxu0 0.0
        %953 = vmatpush2.msra.mxu0 0.0
        %954 = vmatprep.subr.mxu0 0.0
        %955 = vmatpush2.msra.mxu0 0.0
        %956 = vmatprep.subr.mxu0 0.0
        %957 = vmatpush2.msra.mxu0 0.0
        %958 = vmatprep.subr.mxu0 0.0
        %959 = vmatpush2.msra.mxu0 0.0
        %960 = vmatprep.subr.mxu0 0.0
        %961 = vmatpush2.msra.mxu0 0.0
        %962 = vmatprep.subr.mxu0 0.0
        %963 = vmatpush2.msra.mxu0 0.0
        %964 = vmatprep.mubr.f32.mxu0 0.0
        %965 = vmatmul.mubr.f32.gmra.mxu0 %v895
        %v966 = vpop.f32.mrf.mxu0
        %v967 = vadd.f32 0.0, %v966
        %v968 = vpop.f32.mrf.mxu0
        %969 = vmatprep.mubr.f32.mxu0 0.0
        %970 = vmatmul.mubr.f32.gmra.mxu0 %v898
        %v971 = vpop.f32.mrf.mxu0
        %v972 = vadd.f32 0.0, %v971
        %v973 = vpop.f32.mrf.mxu0
        %974 = vdwg.mxu0
        %v976 = vsel %vm724, %v809, 0
        %v979 = vsel %vm724, %v810, 0
        %981 = vmatprep.subr.mxu0 0.0
        %982 = vmatpush1.msra.mxu0 0.0
        %983 = vmatprep.subr.mxu0 0.0
        %984 = vmatpush1.msra.mxu0 0.0
        %985 = vmatprep.subr.mxu0 0.0
        %986 = vmatpush1.msra.mxu0 0.0
        %987 = vmatprep.subr.mxu0 0.0
        %988 = vmatpush1.msra.mxu0 0.0
        %989 = vmatprep.subr.mxu0 0.0
        %990 = vmatpush1.msra.mxu0 0.0
        %991 = vmatprep.subr.mxu0 0.0
        %992 = vmatpush1.msra.mxu0 0.0
        %993 = vmatprep.subr.mxu0 0.0
        %994 = vmatpush1.msra.mxu0 0.0
        %995 = vmatprep.subr.mxu0 0.0
        %996 = vmatpush1.msra.mxu0 0.0
        %997 = vmatprep.subr.mxu0 0.0
        %998 = vmatpush1.msra.mxu0 0.0
        %999 = vmatprep.subr.mxu0 0.0
        %1000 = vmatpush1.msra.mxu0 0.0
        %1001 = vmatprep.subr.mxu0 0.0
        %1002 = vmatpush1.msra.mxu0 0.0
        %1003 = vmatprep.subr.mxu0 0.0
        %1004 = vmatpush1.msra.mxu0 0.0
        %1005 = vmatprep.subr.mxu0 0.0
        %1006 = vmatpush1.msra.mxu0 0.0
        %1007 = vmatprep.subr.mxu0 0.0
        %1008 = vmatpush1.msra.mxu0 0.0
        %1009 = vmatprep.subr.mxu0 0.0
        %1010 = vmatpush1.msra.mxu0 %v372
        %1011 = vmatprep.subr.mxu0 0.0
        %1012 = vmatpush1.msra.mxu0 %v371
        %1013 = vmatprep.subr.mxu0 0.0
        %1014 = vmatpush2.msra.mxu0 0.0
        %1015 = vmatprep.subr.mxu0 0.0
        %1016 = vmatpush2.msra.mxu0 0.0
        %1017 = vmatprep.subr.mxu0 0.0
        %1018 = vmatpush2.msra.mxu0 0.0
        %1019 = vmatprep.subr.mxu0 0.0
        %1020 = vmatpush2.msra.mxu0 0.0
        %1021 = vmatprep.subr.mxu0 0.0
        %1022 = vmatpush2.msra.mxu0 0.0
        %1023 = vmatprep.subr.mxu0 0.0
        %1024 = vmatpush2.msra.mxu0 0.0
        %1025 = vmatprep.subr.mxu0 0.0
        %1026 = vmatpush2.msra.mxu0 0.0
        %1027 = vmatprep.subr.mxu0 0.0
        %1028 = vmatpush2.msra.mxu0 0.0
        %1029 = vmatprep.subr.mxu0 0.0
        %1030 = vmatpush2.msra.mxu0 0.0
        %1031 = vmatprep.subr.mxu0 0.0
        %1032 = vmatpush2.msra.mxu0 0.0
        %1033 = vmatprep.subr.mxu0 0.0
        %1034 = vmatpush2.msra.mxu0 0.0
        %1035 = vmatprep.subr.mxu0 0.0
        %1036 = vmatpush2.msra.mxu0 0.0
        %1037 = vmatprep.subr.mxu0 0.0
        %1038 = vmatpush2.msra.mxu0 0.0
        %1039 = vmatprep.subr.mxu0 0.0
        %1040 = vmatpush2.msra.mxu0 0.0
        %1041 = vmatprep.subr.mxu0 0.0
        %1042 = vmatpush2.msra.mxu0 0.0
        %1043 = vmatprep.subr.mxu0 0.0
        %1044 = vmatpush2.msra.mxu0 0.0
        %1045 = vmatprep.mubr.f32.mxu0 0.0
        %1046 = vmatmul.mubr.f32.gmra.mxu0 %v976
        %v1047 = vpop.f32.mrf.mxu0
        %v1048 = vadd.f32 0.0, %v1047
        %v1049 = vpop.f32.mrf.mxu0
        %1050 = vmatprep.mubr.f32.mxu0 0.0
        %1051 = vmatmul.mubr.f32.gmra.mxu0 %v979
        %v1052 = vpop.f32.mrf.mxu0
        %v1053 = vadd.f32 0.0, %v1052
        %v1054 = vpop.f32.mrf.mxu0
        %1055 = vdwg.mxu0
        %v1057 = vsel %vm724, %v811, 0
        %v1060 = vsel %vm724, %v812, 0
        %1062 = vmatprep.subr.mxu0 0.0
        %1063 = vmatpush1.msra.mxu0 0.0
        %1064 = vmatprep.subr.mxu0 0.0
        %1065 = vmatpush1.msra.mxu0 0.0
        %1066 = vmatprep.subr.mxu0 0.0
        %1067 = vmatpush1.msra.mxu0 0.0
        %1068 = vmatprep.subr.mxu0 0.0
        %1069 = vmatpush1.msra.mxu0 0.0
        %1070 = vmatprep.subr.mxu0 0.0
        %1071 = vmatpush1.msra.mxu0 0.0
        %1072 = vmatprep.subr.mxu0 0.0
        %1073 = vmatpush1.msra.mxu0 0.0
        %1074 = vmatprep.subr.mxu0 0.0
        %1075 = vmatpush1.msra.mxu0 0.0
        %1076 = vmatprep.subr.mxu0 0.0
        %1077 = vmatpush1.msra.mxu0 0.0
        %1078 = vmatprep.subr.mxu0 0.0
        %1079 = vmatpush1.msra.mxu0 0.0
        %1080 = vmatprep.subr.mxu0 0.0
        %1081 = vmatpush1.msra.mxu0 0.0
        %1082 = vmatprep.subr.mxu0 0.0
        %1083 = vmatpush1.msra.mxu0 0.0
        %1084 = vmatprep.subr.mxu0 0.0
        %1085 = vmatpush1.msra.mxu0 0.0
        %1086 = vmatprep.subr.mxu0 0.0
        %1087 = vmatpush1.msra.mxu0 0.0
        %1088 = vmatprep.subr.mxu0 0.0
        %1089 = vmatpush1.msra.mxu0 0.0
        %1090 = vmatprep.subr.mxu0 0.0
        %1091 = vmatpush1.msra.mxu0 %v374
        %1092 = vmatprep.subr.mxu0 0.0
        %1093 = vmatpush1.msra.mxu0 %v373
        %1094 = vmatprep.subr.mxu0 0.0
        %1095 = vmatpush2.msra.mxu0 0.0
        %1096 = vmatprep.subr.mxu0 0.0
        %1097 = vmatpush2.msra.mxu0 0.0
        %1098 = vmatprep.subr.mxu0 0.0
        %1099 = vmatpush2.msra.mxu0 0.0
        %1100 = vmatprep.subr.mxu0 0.0
        %1101 = vmatpush2.msra.mxu0 0.0
        %1102 = vmatprep.subr.mxu0 0.0
        %1103 = vmatpush2.msra.mxu0 0.0
        %1104 = vmatprep.subr.mxu0 0.0
        %1105 = vmatpush2.msra.mxu0 0.0
        %1106 = vmatprep.subr.mxu0 0.0
        %1107 = vmatpush2.msra.mxu0 0.0
        %1108 = vmatprep.subr.mxu0 0.0
        %1109 = vmatpush2.msra.mxu0 0.0
        %1110 = vmatprep.subr.mxu0 0.0
        %1111 = vmatpush2.msra.mxu0 0.0
        %1112 = vmatprep.subr.mxu0 0.0
        %1113 = vmatpush2.msra.mxu0 0.0
        %1114 = vmatprep.subr.mxu0 0.0
        %1115 = vmatpush2.msra.mxu0 0.0
        %1116 = vmatprep.subr.mxu0 0.0
        %1117 = vmatpush2.msra.mxu0 0.0
        %1118 = vmatprep.subr.mxu0 0.0
        %1119 = vmatpush2.msra.mxu0 0.0
        %1120 = vmatprep.subr.mxu0 0.0
        %1121 = vmatpush2.msra.mxu0 0.0
        %1122 = vmatprep.subr.mxu0 0.0
        %1123 = vmatpush2.msra.mxu0 0.0
        %1124 = vmatprep.subr.mxu0 0.0
        %1125 = vmatpush2.msra.mxu0 0.0
        %1126 = vmatprep.mubr.f32.mxu0 0.0
        %1127 = vmatmul.mubr.f32.gmra.mxu0 %v1057
        %v1128 = vpop.f32.mrf.mxu0
        %v1129 = vadd.f32 0.0, %v1128
        %v1130 = vpop.f32.mrf.mxu0
        %1131 = vmatprep.mubr.f32.mxu0 0.0
        %1132 = vmatmul.mubr.f32.gmra.mxu0 %v1060
        %v1133 = vpop.f32.mrf.mxu0
        %v1134 = vadd.f32 0.0, %v1133
        %v1135 = vpop.f32.mrf.mxu0
        %1136 = vdwg.mxu0
        %v1137 = vld [vmem:[#allocation2] sm:$0xff]
        %v1138 = vld [vmem:[#allocation2 + $0x8] sm:$0xff]
        %v1139 = vld [vmem:[#allocation2 + $0x10] sm:$0xff]
        %v1140 = vld [vmem:[#allocation2 + $0x18] sm:$0xff]
        %v1142 = vsel %vm375, %v886, 0
        %v1145 = vsel %vm375, %v891, 0
        %1147 = vmatprep.subr.mxu0 0.0
        %1148 = vmatpush1.msra.mxu0 0.0
        %1149 = vmatprep.subr.mxu0 0.0
        %1150 = vmatpush1.msra.mxu0 0.0
        %1151 = vmatprep.subr.mxu0 0.0
        %1152 = vmatpush1.msra.mxu0 0.0
        %1153 = vmatprep.subr.mxu0 0.0
        %1154 = vmatpush1.msra.mxu0 0.0
        %1155 = vmatprep.subr.mxu0 0.0
        %1156 = vmatpush1.msra.mxu0 0.0
        %1157 = vmatprep.subr.mxu0 0.0
        %1158 = vmatpush1.msra.mxu0 0.0
        %1159 = vmatprep.subr.mxu0 0.0
        %1160 = vmatpush1.msra.mxu0 0.0
        %1161 = vmatprep.subr.mxu0 0.0
        %1162 = vmatpush1.msra.mxu0 0.0
        %1163 = vmatprep.subr.mxu0 0.0
        %1164 = vmatpush1.msra.mxu0 0.0
        %1165 = vmatprep.subr.mxu0 0.0
        %1166 = vmatpush1.msra.mxu0 0.0
        %1167 = vmatprep.subr.mxu0 0.0
        %1168 = vmatpush1.msra.mxu0 0.0
        %1169 = vmatprep.subr.mxu0 0.0
        %1170 = vmatpush1.msra.mxu0 0.0
        %1171 = vmatprep.subr.mxu0 0.0
        %1172 = vmatpush1.msra.mxu0 0.0
        %1173 = vmatprep.subr.mxu0 0.0
        %1174 = vmatpush1.msra.mxu0 0.0
        %1175 = vmatprep.subr.mxu0 0.0
        %1176 = vmatpush1.msra.mxu0 0.0
        %1177 = vmatprep.subr.mxu0 0.0
        %1178 = vmatpush1.msra.mxu0 %v1137
        %1179 = vmatprep.subr.mxu0 0.0
        %1180 = vmatpush2.msra.mxu0 0.0
        %1181 = vmatprep.subr.mxu0 0.0
        %1182 = vmatpush2.msra.mxu0 0.0
        %1183 = vmatprep.subr.mxu0 0.0
        %1184 = vmatpush2.msra.mxu0 0.0
        %1185 = vmatprep.subr.mxu0 0.0
        %1186 = vmatpush2.msra.mxu0 0.0
        %1187 = vmatprep.subr.mxu0 0.0
        %1188 = vmatpush2.msra.mxu0 0.0
        %1189 = vmatprep.subr.mxu0 0.0
        %1190 = vmatpush2.msra.mxu0 0.0
        %1191 = vmatprep.subr.mxu0 0.0
        %1192 = vmatpush2.msra.mxu0 0.0
        %1193 = vmatprep.subr.mxu0 0.0
        %1194 = vmatpush2.msra.mxu0 0.0
        %1195 = vmatprep.subr.mxu0 0.0
        %1196 = vmatpush2.msra.mxu0 0.0
        %1197 = vmatprep.subr.mxu0 0.0
        %1198 = vmatpush2.msra.mxu0 0.0
        %1199 = vmatprep.subr.mxu0 0.0
        %1200 = vmatpush2.msra.mxu0 0.0
        %1201 = vmatprep.subr.mxu0 0.0
        %1202 = vmatpush2.msra.mxu0 0.0
        %1203 = vmatprep.subr.mxu0 0.0
        %1204 = vmatpush2.msra.mxu0 0.0
        %1205 = vmatprep.subr.mxu0 0.0
        %1206 = vmatpush2.msra.mxu0 0.0
        %1207 = vmatprep.subr.mxu0 0.0
        %1208 = vmatpush2.msra.mxu0 0.0
        %1209 = vmatprep.subr.mxu0 0.0
        %1210 = vmatpush2.msra.mxu0 0.0
        %1211 = vmatprep.mubr.f32.mxu0 0.0
        %1212 = vmatmul.mubr.f32.gmra.mxu0 %v1142
        %v1213 = vpop.f32.mrf.mxu0
        %v1214 = vadd.f32 0.0, %v1213
        %v1215 = vpop.f32.mrf.mxu0
        %1216 = vmatprep.mubr.f32.mxu0 0.0
        %1217 = vmatmul.mubr.f32.gmra.mxu0 %v1145
        %v1218 = vpop.f32.mrf.mxu0
        %v1219 = vadd.f32 0.0, %v1218
        %v1220 = vpop.f32.mrf.mxu0
        %1221 = vdwg.mxu0
        %v1223 = vsel %vm375, %v967, 0
        %v1226 = vsel %vm375, %v972, 0
        %1228 = vmatprep.subr.mxu0 0.0
        %1229 = vmatpush1.msra.mxu0 0.0
        %1230 = vmatprep.subr.mxu0 0.0
        %1231 = vmatpush1.msra.mxu0 0.0
        %1232 = vmatprep.subr.mxu0 0.0
        %1233 = vmatpush1.msra.mxu0 0.0
        %1234 = vmatprep.subr.mxu0 0.0
        %1235 = vmatpush1.msra.mxu0 0.0
        %1236 = vmatprep.subr.mxu0 0.0
        %1237 = vmatpush1.msra.mxu0 0.0
        %1238 = vmatprep.subr.mxu0 0.0
        %1239 = vmatpush1.msra.mxu0 0.0
        %1240 = vmatprep.subr.mxu0 0.0
        %1241 = vmatpush1.msra.mxu0 0.0
        %1242 = vmatprep.subr.mxu0 0.0
        %1243 = vmatpush1.msra.mxu0 0.0
        %1244 = vmatprep.subr.mxu0 0.0
        %1245 = vmatpush1.msra.mxu0 0.0
        %1246 = vmatprep.subr.mxu0 0.0
        %1247 = vmatpush1.msra.mxu0 0.0
        %1248 = vmatprep.subr.mxu0 0.0
        %1249 = vmatpush1.msra.mxu0 0.0
        %1250 = vmatprep.subr.mxu0 0.0
        %1251 = vmatpush1.msra.mxu0 0.0
        %1252 = vmatprep.subr.mxu0 0.0
        %1253 = vmatpush1.msra.mxu0 0.0
        %1254 = vmatprep.subr.mxu0 0.0
        %1255 = vmatpush1.msra.mxu0 0.0
        %1256 = vmatprep.subr.mxu0 0.0
        %1257 = vmatpush1.msra.mxu0 0.0
        %1258 = vmatprep.subr.mxu0 0.0
        %1259 = vmatpush1.msra.mxu0 %v1138
        %1260 = vmatprep.subr.mxu0 0.0
        %1261 = vmatpush2.msra.mxu0 0.0
        %1262 = vmatprep.subr.mxu0 0.0
        %1263 = vmatpush2.msra.mxu0 0.0
        %1264 = vmatprep.subr.mxu0 0.0
        %1265 = vmatpush2.msra.mxu0 0.0
        %1266 = vmatprep.subr.mxu0 0.0
        %1267 = vmatpush2.msra.mxu0 0.0
        %1268 = vmatprep.subr.mxu0 0.0
        %1269 = vmatpush2.msra.mxu0 0.0
        %1270 = vmatprep.subr.mxu0 0.0
        %1271 = vmatpush2.msra.mxu0 0.0
        %1272 = vmatprep.subr.mxu0 0.0
        %1273 = vmatpush2.msra.mxu0 0.0
        %1274 = vmatprep.subr.mxu0 0.0
        %1275 = vmatpush2.msra.mxu0 0.0
        %1276 = vmatprep.subr.mxu0 0.0
        %1277 = vmatpush2.msra.mxu0 0.0
        %1278 = vmatprep.subr.mxu0 0.0
        %1279 = vmatpush2.msra.mxu0 0.0
        %1280 = vmatprep.subr.mxu0 0.0
        %1281 = vmatpush2.msra.mxu0 0.0
        %1282 = vmatprep.subr.mxu0 0.0
        %1283 = vmatpush2.msra.mxu0 0.0
        %1284 = vmatprep.subr.mxu0 0.0
        %1285 = vmatpush2.msra.mxu0 0.0
        %1286 = vmatprep.subr.mxu0 0.0
        %1287 = vmatpush2.msra.mxu0 0.0
        %1288 = vmatprep.subr.mxu0 0.0
        %1289 = vmatpush2.msra.mxu0 0.0
        %1290 = vmatprep.subr.mxu0 0.0
        %1291 = vmatpush2.msra.mxu0 0.0
        %1292 = vmatprep.mubr.f32.mxu0 0.0
        %1293 = vmatmul.mubr.f32.gmra.mxu0 %v1223
        %v1294 = vpop.f32.mrf.mxu0
        %v1295 = vadd.f32 0.0, %v1294
        %v1296 = vpop.f32.mrf.mxu0
        %1297 = vmatprep.mubr.f32.mxu0 0.0
        %1298 = vmatmul.mubr.f32.gmra.mxu0 %v1226
        %v1299 = vpop.f32.mrf.mxu0
        %v1300 = vadd.f32 0.0, %v1299
        %v1301 = vpop.f32.mrf.mxu0
        %1302 = vdwg.mxu0
        %v1304 = vsel %vm375, %v1048, 0
        %v1307 = vsel %vm375, %v1053, 0
        %1309 = vmatprep.subr.mxu0 0.0
        %1310 = vmatpush1.msra.mxu0 0.0
        %1311 = vmatprep.subr.mxu0 0.0
        %1312 = vmatpush1.msra.mxu0 0.0
        %1313 = vmatprep.subr.mxu0 0.0
        %1314 = vmatpush1.msra.mxu0 0.0
        %1315 = vmatprep.subr.mxu0 0.0
        %1316 = vmatpush1.msra.mxu0 0.0
        %1317 = vmatprep.subr.mxu0 0.0
        %1318 = vmatpush1.msra.mxu0 0.0
        %1319 = vmatprep.subr.mxu0 0.0
        %1320 = vmatpush1.msra.mxu0 0.0
        %1321 = vmatprep.subr.mxu0 0.0
        %1322 = vmatpush1.msra.mxu0 0.0
        %1323 = vmatprep.subr.mxu0 0.0
        %1324 = vmatpush1.msra.mxu0 0.0
        %1325 = vmatprep.subr.mxu0 0.0
        %1326 = vmatpush1.msra.mxu0 0.0
        %1327 = vmatprep.subr.mxu0 0.0
        %1328 = vmatpush1.msra.mxu0 0.0
        %1329 = vmatprep.subr.mxu0 0.0
        %1330 = vmatpush1.msra.mxu0 0.0
        %1331 = vmatprep.subr.mxu0 0.0
        %1332 = vmatpush1.msra.mxu0 0.0
        %1333 = vmatprep.subr.mxu0 0.0
        %1334 = vmatpush1.msra.mxu0 0.0
        %1335 = vmatprep.subr.mxu0 0.0
        %1336 = vmatpush1.msra.mxu0 0.0
        %1337 = vmatprep.subr.mxu0 0.0
        %1338 = vmatpush1.msra.mxu0 0.0
        %1339 = vmatprep.subr.mxu0 0.0
        %1340 = vmatpush1.msra.mxu0 %v1139
        %1341 = vmatprep.subr.mxu0 0.0
        %1342 = vmatpush2.msra.mxu0 0.0
        %1343 = vmatprep.subr.mxu0 0.0
        %1344 = vmatpush2.msra.mxu0 0.0
        %1345 = vmatprep.subr.mxu0 0.0
        %1346 = vmatpush2.msra.mxu0 0.0
        %1347 = vmatprep.subr.mxu0 0.0
        %1348 = vmatpush2.msra.mxu0 0.0
        %1349 = vmatprep.subr.mxu0 0.0
        %1350 = vmatpush2.msra.mxu0 0.0
        %1351 = vmatprep.subr.mxu0 0.0
        %1352 = vmatpush2.msra.mxu0 0.0
        %1353 = vmatprep.subr.mxu0 0.0
        %1354 = vmatpush2.msra.mxu0 0.0
        %1355 = vmatprep.subr.mxu0 0.0
        %1356 = vmatpush2.msra.mxu0 0.0
        %1357 = vmatprep.subr.mxu0 0.0
        %1358 = vmatpush2.msra.mxu0 0.0
        %1359 = vmatprep.subr.mxu0 0.0
        %1360 = vmatpush2.msra.mxu0 0.0
        %1361 = vmatprep.subr.mxu0 0.0
        %1362 = vmatpush2.msra.mxu0 0.0
        %1363 = vmatprep.subr.mxu0 0.0
        %1364 = vmatpush2.msra.mxu0 0.0
        %1365 = vmatprep.subr.mxu0 0.0
        %1366 = vmatpush2.msra.mxu0 0.0
        %1367 = vmatprep.subr.mxu0 0.0
        %1368 = vmatpush2.msra.mxu0 0.0
        %1369 = vmatprep.subr.mxu0 0.0
        %1370 = vmatpush2.msra.mxu0 0.0
        %1371 = vmatprep.subr.mxu0 0.0
        %1372 = vmatpush2.msra.mxu0 0.0
        %1373 = vmatprep.mubr.f32.mxu0 0.0
        %1374 = vmatmul.mubr.f32.gmra.mxu0 %v1304
        %v1375 = vpop.f32.mrf.mxu0
        %v1376 = vadd.f32 0.0, %v1375
        %v1377 = vpop.f32.mrf.mxu0
        %1378 = vmatprep.mubr.f32.mxu0 0.0
        %1379 = vmatmul.mubr.f32.gmra.mxu0 %v1307
        %v1380 = vpop.f32.mrf.mxu0
        %v1381 = vadd.f32 0.0, %v1380
        %v1382 = vpop.f32.mrf.mxu0
        %1383 = vdwg.mxu0
        %v1385 = vsel %vm375, %v1129, 0
        %v1388 = vsel %vm375, %v1134, 0
        %1390 = vmatprep.subr.mxu0 0.0
        %1391 = vmatpush1.msra.mxu0 0.0
        %1392 = vmatprep.subr.mxu0 0.0
        %1393 = vmatpush1.msra.mxu0 0.0
        %1394 = vmatprep.subr.mxu0 0.0
        %1395 = vmatpush1.msra.mxu0 0.0
        %1396 = vmatprep.subr.mxu0 0.0
        %1397 = vmatpush1.msra.mxu0 0.0
        %1398 = vmatprep.subr.mxu0 0.0
        %1399 = vmatpush1.msra.mxu0 0.0
        %1400 = vmatprep.subr.mxu0 0.0
        %1401 = vmatpush1.msra.mxu0 0.0
        %1402 = vmatprep.subr.mxu0 0.0
        %1403 = vmatpush1.msra.mxu0 0.0
        %1404 = vmatprep.subr.mxu0 0.0
        %1405 = vmatpush1.msra.mxu0 0.0
        %1406 = vmatprep.subr.mxu0 0.0
        %1407 = vmatpush1.msra.mxu0 0.0
        %1408 = vmatprep.subr.mxu0 0.0
        %1409 = vmatpush1.msra.mxu0 0.0
        %1410 = vmatprep.subr.mxu0 0.0
        %1411 = vmatpush1.msra.mxu0 0.0
        %1412 = vmatprep.subr.mxu0 0.0
        %1413 = vmatpush1.msra.mxu0 0.0
        %1414 = vmatprep.subr.mxu0 0.0
        %1415 = vmatpush1.msra.mxu0 0.0
        %1416 = vmatprep.subr.mxu0 0.0
        %1417 = vmatpush1.msra.mxu0 0.0
        %1418 = vmatprep.subr.mxu0 0.0
        %1419 = vmatpush1.msra.mxu0 0.0
        %1420 = vmatprep.subr.mxu0 0.0
        %1421 = vmatpush1.msra.mxu0 %v1140
        %1422 = vmatprep.subr.mxu0 0.0
        %1423 = vmatpush2.msra.mxu0 0.0
        %1424 = vmatprep.subr.mxu0 0.0
        %1425 = vmatpush2.msra.mxu0 0.0
        %1426 = vmatprep.subr.mxu0 0.0
        %1427 = vmatpush2.msra.mxu0 0.0
        %1428 = vmatprep.subr.mxu0 0.0
        %1429 = vmatpush2.msra.mxu0 0.0
        %1430 = vmatprep.subr.mxu0 0.0
        %1431 = vmatpush2.msra.mxu0 0.0
        %1432 = vmatprep.subr.mxu0 0.0
        %1433 = vmatpush2.msra.mxu0 0.0
        %1434 = vmatprep.subr.mxu0 0.0
        %1435 = vmatpush2.msra.mxu0 0.0
        %1436 = vmatprep.subr.mxu0 0.0
        %1437 = vmatpush2.msra.mxu0 0.0
        %1438 = vmatprep.subr.mxu0 0.0
        %1439 = vmatpush2.msra.mxu0 0.0
        %1440 = vmatprep.subr.mxu0 0.0
        %1441 = vmatpush2.msra.mxu0 0.0
        %1442 = vmatprep.subr.mxu0 0.0
        %1443 = vmatpush2.msra.mxu0 0.0
        %1444 = vmatprep.subr.mxu0 0.0
        %1445 = vmatpush2.msra.mxu0 0.0
        %1446 = vmatprep.subr.mxu0 0.0
        %1447 = vmatpush2.msra.mxu0 0.0
        %1448 = vmatprep.subr.mxu0 0.0
        %1449 = vmatpush2.msra.mxu0 0.0
        %1450 = vmatprep.subr.mxu0 0.0
        %1451 = vmatpush2.msra.mxu0 0.0
        %1452 = vmatprep.subr.mxu0 0.0
        %1453 = vmatpush2.msra.mxu0 0.0
        %1454 = vmatprep.mubr.f32.mxu0 0.0
        %1455 = vmatmul.mubr.f32.gmra.mxu0 %v1385
        %v1456 = vpop.f32.mrf.mxu0
        %v1457 = vadd.f32 0.0, %v1456
        %v1458 = vpop.f32.mrf.mxu0
        %1459 = vmatprep.mubr.f32.mxu0 0.0
        %1460 = vmatmul.mubr.f32.gmra.mxu0 %v1388
        %v1461 = vpop.f32.mrf.mxu0
        %v1462 = vadd.f32 0.0, %v1461
        %v1463 = vpop.f32.mrf.mxu0
        %1464 = vdwg.mxu0
        %vm1465 = vcmask 261120
        %v1466 = vsel %vm1465, %v1214, 0.0
        %v1467 = vsel %vm1465, %v1295, 0.0
        %v1468 = vadd.f32 %v1466, %v1467
        %v1469 = vsel %vm1465, %v1376, 0.0
        %v1470 = vadd.f32 %v1468, %v1469
        %v1471 = vsel %vm1465, %v1457, 0.0
        %v1472 = vadd.f32 %v1470, %v1471
        %v1473 = vsel %vm1465, %v1219, 0.0
        %v1474 = vsel %vm1465, %v1300, 0.0
        %v1475 = vadd.f32 %v1473, %v1474
        %v1476 = vsel %vm1465, %v1381, 0.0
        %v1477 = vadd.f32 %v1475, %v1476
        %v1478 = vsel %vm1465, %v1462, 0.0
        %v1479 = vadd.f32 %v1477, %v1478
        %v1480 = vadd.f32 %v348, %v1472
        %v1481 = vadd.f32 %v349, %v1479
        %v1482 = vld [vmem:[#allocation4] sm:$0x1]
        %v1484 = vlaneseq
        %v1485 = vshrl.u32 %v1484, 7
        %v1486 = vsub.s32 0, %v1485
        %v1487 = vrot.slane %v1482, %v1486
        %v1489 = vadd.f32 %v1480, %v1487
        %v1490 = vadd.f32 %v1481, %v1487
        %1491 = vst.msk [vmem:[%s346] sm:$0xff] %vm1465, %v1489
        %1492 = vst.msk [vmem:[%s346 + $0x8] sm:$0xff] %vm1465, %v1490
        %s1493 = smul.u32 2, %s23
        %p1494 = scmp.lt.s32.totalorder %s22, 1
        %s1495 = scalar_select %p1494, %s22, 1
        %p1496 = scmp.lt.s32.totalorder %s1493, 1
        %s1497 = scalar_select %p1496, %s1493, 1
        %s1498 = smul.addr %s1495, 2
        %s1499 = sadd.s32 %s1497, %s1498
        %s1500 = smul.addr %s1499, 8
        %s1501 = scalar_lea.vmem %s5, %s1500
        // Predicated region
        $region49: #{eegjepa_forward.16} parent=39 // pred_check
          %p1502 = pneg %p174
        $region50: #{eegjepa_forward.16} parent=39 // pred_check_branch
          %1504 = sbr.rel (%p1502) target = $region52
        $region51: #{eegjepa_forward.16} parent=39 // pred_region
          %s1505 = smul.u32 2, %s23
        $region52: #{eegjepa_forward.16} parent=39 // pred_fallthru
          _
      $region40: #{eegjepa_forward.16} parent=5 // pred_fallthru
        _
      %p1506 = scmp.le.s32.totalorder 2, %s13
      // Predicated region
      $region53: #{eegjepa_forward.16} parent=5 // pred_check
        %p1507 = pneg %p1506
      $region54: #{eegjepa_forward.16} parent=5 // pred_check_branch
        %1509 = sbr.rel (%p1507) target = $region56
      $region55: #{eegjepa_forward.16} parent=5 // pred_region
        %s1510 = ssub.s32 %s13, 2
        // Predicated region
        $region57: #{eegjepa_forward.16} parent=55 // pred_check
          %p1511 = pneg %p180
        $region58: #{eegjepa_forward.16} parent=55 // pred_check_branch
          %1513 = sbr.rel (%p1511) target = $region60
        $region59: #{eegjepa_forward.16} parent=55 // pred_region
          %s1514 = smul.u32 2, %s25
          %p1515 = scmp.lt.s32.totalorder %s24, 1
          %s1516 = scalar_select %p1515, %s24, 1
          %p1517 = scmp.lt.s32.totalorder %s1514, 1
          %s1518 = scalar_select %p1517, %s1514, 1
          %s1519 = smul.addr %s1516, 2
          %s1520 = sadd.s32 %s1518, %s1519
          %s1521 = smul.addr %s1520, 8
          %s1522 = scalar_lea.vmem %s5, %s1521
        $region60: #{eegjepa_forward.16} parent=55 // pred_fallthru
          _
      $region56: #{eegjepa_forward.16} parent=5 // pred_fallthru
        _
    $region6: #{eegjepa_forward.16} parent=1 // loop_footer
      %s17 = sadd.s32 1, %s13
    $region7: #{eegjepa_forward.16} parent=1 // loop_footer_branch
      %12 = sbr.rel target = $region3
    $region8: #{eegjepa_forward.16} parent=1 // loop_exit
      _
    %1523 = vsyncpa [#allocation3], 1
    %s1524 = scalar_lea.sflag [#allocation3], 1
    %1525 = vsyncpa %s1524, 1
    %1526 = vsyncpa [#allocation5], 1

// kernel: eegjepa_forward.19
$region0: #{eegjepa_forward.19}
  #allocation0 [shape = 'u32[]', space=smem, size = 0x4, offset = 0x4, fixed_abs, tag = 'smem constant byte address 0x4 - core index']
  #allocation1 [shape = 'u32[144,128]{1,0:T(1,128)}', space=vmem, size = 0x12000, scoped, tag = 'internal scratch']
  %s0 = inlined_call_operand.vmem [shape: f32[2,16,32], index: 0, kind: input, shape index: {}]
  %s1 = inlined_call_operand.vmem [shape: f32[2,4,16,8], index: 1, kind: input, shape index: {}]
  %s2 = inlined_call_operand.vmem [shape: f32[2,2,4,16,8], index: 2, kind: input, shape index: {}]
  %s3 = inlined_call_operand.vmem [shape: f32[4,8,32], index: 3, kind: input, shape index: {}]
  %s4 = inlined_call_operand.vmem [shape: f32[1,32], index: 4, kind: input, shape index: {}]
  %s5 = inlined_call_operand.vmem [shape: f32[2,16,32], index: 5, kind: output, shape index: {}]
  %s6 = sld [smem:[#allocation0]]
  $region53: #{eegjepa_forward.19} parent=0
    _
  %s8 = ssub.s32 1, %s6
  %s9 = scalar_select 0, %s8, %s6
  loop: start=0, step=1, limit=4
  $region2: #{eegjepa_forward.19} parent=0 // loop_pre_header
    _
  $region3: #{eegjepa_forward.19} parent=0 // loop_header
    %s11 = sphi 0, %s15
    %p12 = scmp.ge.s32.totalorder %s11, 4
    %s18 = sphi 0, %s30
    %s19 = sphi 0, %s26
    %s20 = sphi 0, %s18
    %s21 = sphi 0, %s19
    %s22 = sphi 0, %s20
    %s23 = sphi 0, %s21
    %s35 = sphi 0, %s37
    %s38 = sphi 0, %s35
    %s39 = sphi 0, %s38
    %s55 = sphi 0, %s39
    %s63 = sphi 0, %s65
    %s66 = sphi 0, %s63
    %s67 = sphi 0, %s66
    %s83 = sphi 0, %s67
    %s89 = sphi 0, %s91
    %s92 = sphi 0, %s89
    %s93 = sphi 0, %s92
    %s109 = sphi 0, %s93
    %s113 = sphi 0, %s113
    %s115 = sphi 0, %s113
    %s116 = sphi 0, %s115
    %s130 = sphi 0, %s116
    %s134 = sphi 0, %s134
    %s136 = sphi 0, %s134
    %s137 = sphi 0, %s136
    %s151 = sphi 0, %s137
    %s159 = sphi 0, %s161
    %s162 = sphi 0, %s159
    %s163 = sphi 0, %s162
    %s179 = sphi 0, %s163
  $region4: #{eegjepa_forward.19} parent=0 // loop_header_branch
    %14 = sbr.rel (%p12) target = $region8
  $region5: #{eegjepa_forward.19} parent=0 // loop_body
    %s16 = ssub.s32 %s11, 1
    %s17 = ssub.s32 %s11, 2
    %s24 = sadd.s32 1, %s19
    %p25 = scmp.ge.s32.totalorder %s24, 1
    %s26 = scalar_select %p25, 0, %s24
    %s27 = sadd.s32 1, %s18
    %s28 = scalar_select %p25, %s27, %s18
    %p29 = scmp.ge.s32.totalorder %s28, 2
    %s30 = scalar_select %p29, 0, %s28
    %s31 = ssub.s32 %s18, %s30
    %s32 = ssub.s32 %s19, %s26
    %s33 = sor.u32 %s31, %s32
    %p34 = scmp.eq.s32.totalorder %s33, 0
    %s36 = sadd.s32 %s35, 1
    %s37 = scalar_select %p34, %s35, %s36
    %p40 = pneg %p34
    %p41 = scmp.eq.s32.totalorder %s11, 1
    %p42 = por %p40, %p41
    %p43 = scmp.ne.s32.totalorder %s35, %s38
    %p44 = scmp.eq.s32.totalorder %s11, 0
    %p45 = por %p43, %p44
    %p46 = scmp.ne.s32.totalorder %s35, %s38
    %p47 = scmp.eq.s32.totalorder %s16, 1
    %p48 = por %p46, %p47
    %p49 = scmp.ne.s32.totalorder %s38, %s39
    %p50 = scmp.eq.s32.totalorder %s16, 0
    %p51 = por %p49, %p50
    %p52 = scmp.ne.s32.totalorder %s38, %s39
    %p53 = scmp.eq.s32.totalorder %s17, 1
    %p54 = por %p52, %p53
    %p56 = scmp.ne.s32.totalorder %s39, %s55
    %p57 = scmp.eq.s32.totalorder %s17, 0
    %p58 = por %p56, %p57
    %s59 = ssub.s32 %s18, %s30
    %s60 = ssub.s32 %s19, %s26
    %s61 = sor.u32 %s59, %s60
    %p62 = scmp.eq.s32.totalorder %s61, 0
    %s64 = sadd.s32 %s63, 1
    %s65 = scalar_select %p62, %s63, %s64
    %p68 = pneg %p62
    %p69 = scmp.eq.s32.totalorder %s11, 1
    %p70 = por %p68, %p69
    %p71 = scmp.ne.s32.totalorder %s63, %s66
    %p72 = scmp.eq.s32.totalorder %s11, 0
    %p73 = por %p71, %p72
    %p74 = scmp.ne.s32.totalorder %s63, %s66
    %p75 = scmp.eq.s32.totalorder %s16, 1
    %p76 = por %p74, %p75
    %p77 = scmp.ne.s32.totalorder %s66, %s67
    %p78 = scmp.eq.s32.totalorder %s16, 0
    %p79 = por %p77, %p78
    %p80 = scmp.ne.s32.totalorder %s66, %s67
    %p81 = scmp.eq.s32.totalorder %s17, 1
    %p82 = por %p80, %p81
    %p84 = scmp.ne.s32.totalorder %s67, %s83
    %p85 = scmp.eq.s32.totalorder %s17, 0
    %p86 = por %p84, %p85
    %s87 = ssub.s32 %s18, %s30
    %p88 = scmp.eq.s32.totalorder %s87, 0
    %s90 = sadd.s32 %s89, 1
    %s91 = scalar_select %p88, %s89, %s90
    %p94 = pneg %p88
    %p95 = scmp.eq.s32.totalorder %s11, 1
    %p96 = por %p94, %p95
    %p97 = scmp.ne.s32.totalorder %s89, %s92
    %p98 = scmp.eq.s32.totalorder %s11, 0
    %p99 = por %p97, %p98
    %p100 = scmp.ne.s32.totalorder %s89, %s92
    %p101 = scmp.eq.s32.totalorder %s16, 1
    %p102 = por %p100, %p101
    %p103 = scmp.ne.s32.totalorder %s92, %s93
    %p104 = scmp.eq.s32.totalorder %s16, 0
    %p105 = por %p103, %p104
    %p106 = scmp.ne.s32.totalorder %s92, %s93
    %p107 = scmp.eq.s32.totalorder %s17, 1
    %p108 = por %p106, %p107
    %p110 = scmp.ne.s32.totalorder %s93, %s109
    %p111 = scmp.eq.s32.totalorder %s17, 0
    %p112 = por %p110, %p111
    %s114 = sadd.s32 %s113, 1
    %p117 = scmp.eq.s32.totalorder %s11, 1
    %p118 = scmp.ne.s32.totalorder %s113, %s115
    %p119 = scmp.eq.s32.totalorder %s11, 0
    %p120 = por %p118, %p119
    %p121 = scmp.ne.s32.totalorder %s113, %s115
    %p122 = scmp.eq.s32.totalorder %s16, 1
    %p123 = por %p121, %p122
    %p124 = scmp.ne.s32.totalorder %s115, %s116
    %p125 = scmp.eq.s32.totalorder %s16, 0
    %p126 = por %p124, %p125
    %p127 = scmp.ne.s32.totalorder %s115, %s116
    %p128 = scmp.eq.s32.totalorder %s17, 1
    %p129 = por %p127, %p128
    %p131 = scmp.ne.s32.totalorder %s116, %s130
    %p132 = scmp.eq.s32.totalorder %s17, 0
    %p133 = por %p131, %p132
    %s135 = sadd.s32 %s134, 1
    %p138 = scmp.eq.s32.totalorder %s11, 1
    %p139 = scmp.ne.s32.totalorder %s134, %s136
    %p140 = scmp.eq.s32.totalorder %s11, 0
    %p141 = por %p139, %p140
    %p142 = scmp.ne.s32.totalorder %s134, %s136
    %p143 = scmp.eq.s32.totalorder %s16, 1
    %p144 = por %p142, %p143
    %p145 = scmp.ne.s32.totalorder %s136, %s137
    %p146 = scmp.eq.s32.totalorder %s16, 0
    %p147 = por %p145, %p146
    %p148 = scmp.ne.s32.totalorder %s136, %s137
    %p149 = scmp.eq.s32.totalorder %s17, 1
    %p150 = por %p148, %p149
    %p152 = scmp.ne.s32.totalorder %s137, %s151
    %p153 = scmp.eq.s32.totalorder %s17, 0
    %p154 = por %p152, %p153
    %s155 = ssub.s32 %s18, %s30
    %s156 = ssub.s32 %s19, %s26
    %s157 = sor.u32 %s155, %s156
    %p158 = scmp.eq.s32.totalorder %s157, 0
    %s160 = sadd.s32 %s159, 1
    %s161 = scalar_select %p158, %s159, %s160
    %p164 = pneg %p158
    %p165 = scmp.eq.s32.totalorder %s11, 1
    %p166 = por %p164, %p165
    %p167 = scmp.ne.s32.totalorder %s159, %s162
    %p168 = scmp.eq.s32.totalorder %s11, 0
    %p169 = por %p167, %p168
    %p170 = scmp.ne.s32.totalorder %s159, %s162
    %p171 = scmp.eq.s32.totalorder %s16, 1
    %p172 = por %p170, %p171
    %p173 = scmp.ne.s32.totalorder %s162, %s163
    %p174 = scmp.eq.s32.totalorder %s16, 0
    %p175 = por %p173, %p174
    %p176 = scmp.ne.s32.totalorder %s162, %s163
    %p177 = scmp.eq.s32.totalorder %s17, 1
    %p178 = por %p176, %p177
    %p180 = scmp.ne.s32.totalorder %s163, %s179
    %p181 = scmp.eq.s32.totalorder %s17, 0
    %p182 = por %p180, %p181
    %p183 = scmp.le.s32.totalorder 1, %s11
    %p184 = scmp.lt.s32.totalorder %s11, 3
    %p185 = pnand %p183, %p184
    %p186 = pneg %p185
    // Predicated region
    $region9: #{eegjepa_forward.19} parent=5 // pred_check
      _
    $region10: #{eegjepa_forward.19} parent=5 // pred_check_branch
      %188 = sbr.rel (%p185) target = $region12
    $region11: #{eegjepa_forward.19} parent=5 // pred_region
      %s189 = ssub.s32 %s11, 1
      // Predicated region
      $region13: #{eegjepa_forward.19} parent=11 // pred_check
        %p190 = pneg %p126
      $region14: #{eegjepa_forward.19} parent=11 // pred_check_branch
        %192 = sbr.rel (%p190) target = $region16
      $region15: #{eegjepa_forward.19} parent=11 // pred_region
        _
      $region16: #{eegjepa_forward.19} parent=11 // pred_fallthru
        _
      // Predicated region
      $region17: #{eegjepa_forward.19} parent=11 // pred_check
        %p193 = pneg %p147
      $region18: #{eegjepa_forward.19} parent=11 // pred_check_branch
        %195 = sbr.rel (%p193) target = $region20
      $region19: #{eegjepa_forward.19} parent=11 // pred_region
        _
      $region20: #{eegjepa_forward.19} parent=11 // pred_fallthru
        _
    $region12: #{eegjepa_forward.19} parent=5 // pred_fallthru
      _
    %p196 = scmp.lt.s32.totalorder %s11, 2
    // Predicated region
    $region21: #{eegjepa_forward.19} parent=5 // pred_check
      %p197 = pneg %p196
    $region22: #{eegjepa_forward.19} parent=5 // pred_check_branch
      %199 = sbr.rel (%p197) target = $region24
    $region23: #{eegjepa_forward.19} parent=5 // pred_region
      // Predicated region
      $region25: #{eegjepa_forward.19} parent=23 // pred_check
        %p200 = pneg %p45
      $region26: #{eegjepa_forward.19} parent=23 // pred_check_branch
        %202 = sbr.rel (%p200) target = $region28
      $region27: #{eegjepa_forward.19} parent=23 // pred_region
        %s203 = smul.u32 2, %s19
        %p204 = scmp.lt.s32.totalorder %s18, 1
        %s205 = scalar_select %p204, %s18, 1
        %p206 = scmp.lt.s32.totalorder %s203, 1
        %s207 = scalar_select %p206, %s203, 1
        %s208 = smul.addr %s205, 2
        %s209 = sadd.s32 %s207, %s208
        %s210 = smul.addr %s209, 8
        %s211 = scalar_lea.vmem %s0, %s210
        %s212 = smul.u32 2, %s19
      $region28: #{eegjepa_forward.19} parent=23 // pred_fallthru
        _
      // Predicated region
      $region29: #{eegjepa_forward.19} parent=23 // pred_check
        %p213 = pneg %p73
      $region30: #{eegjepa_forward.19} parent=23 // pred_check_branch
        %215 = sbr.rel (%p213) target = $region32
      $region31: #{eegjepa_forward.19} parent=23 // pred_region
        %s216 = smul.u32 2, %s19
        %p217 = scmp.lt.s32.totalorder %s18, 1
        %s218 = scalar_select %p217, %s18, 1
        %p219 = scmp.lt.s32.totalorder %s216, 1
        %s220 = scalar_select %p219, %s216, 1
        %s221 = smul.addr %s218, 8
        %s222 = sadd.s32 %s220, %s221
        %s223 = smul.addr %s222, 8
        %s224 = scalar_lea.vmem %s1, %s223
        %s225 = smul.u32 2, %s19
      $region32: #{eegjepa_forward.19} parent=23 // pred_fallthru
        _
      // Predicated region
      $region33: #{eegjepa_forward.19} parent=23 // pred_check
        %p226 = pneg %p99
      $region34: #{eegjepa_forward.19} parent=23 // pred_check_branch
        %228 = sbr.rel (%p226) target = $region36
      $region35: #{eegjepa_forward.19} parent=23 // pred_region
        %p229 = scmp.lt.s32.totalorder %s18, 1
        %s230 = scalar_select %p229, %s18, 1
        %s231 = smul.addr %s230, 16
        %s232 = smul.addr %s231, 8
        %s233 = scalar_lea.vmem %s2, %s232
      $region36: #{eegjepa_forward.19} parent=23 // pred_fallthru
        _
    $region24: #{eegjepa_forward.19} parent=5 // pred_fallthru
      _
    %p234 = scmp.le.s32.totalorder 1, %s11
    %p235 = scmp.lt.s32.totalorder %s11, 3
    %p236 = pnand %p234, %p235
    %p237 = pneg %p236
    // Predicated region
    $region37: #{eegjepa_forward.19} parent=5 // pred_check
      _
    $region38: #{eegjepa_forward.19} parent=5 // pred_check_branch
      %239 = sbr.rel (%p236) target = $region40
    $region39: #{eegjepa_forward.19} parent=5 // pred_region
      %s240 = ssub.s32 %s11, 1
      %s241 = smul.u32 2, %s21
      %p242 = scmp.lt.s32.totalorder %s20, 1
      %s243 = scalar_select %p242, %s20, 1
      %p244 = scmp.lt.s32.totalorder %s241, 1
      %s245 = scalar_select %p244, %s241, 1
      %s246 = smul.addr %s243, 2
      %s247 = sadd.s32 %s245, %s246
      %s248 = smul.addr %s247, 8
      %s249 = scalar_lea.vmem %s0, %s248
      %p250 = pneg %p51
      %p251 = pneg %p48
      %s252 = smul.u32 2, %s21
      %p253 = scmp.lt.s32.totalorder %s20, 1
      %s254 = scalar_select %p253, %s20, 1
      %p255 = scmp.lt.s32.totalorder %s252, 1
      %s256 = scalar_select %p255, %s252, 1
      %s257 = smul.addr %s254, 8
      %s258 = sadd.s32 %s256, %s257
      %s259 = smul.addr %s258, 8
      %s260 = scalar_lea.vmem %s1, %s259
      %p261 = pneg %p79
      %p262 = pneg %p76
      %p263 = scmp.lt.s32.totalorder %s20, 1
      %s264 = scalar_select %p263, %s20, 1
      %s265 = smul.addr %s264, 16
      %s266 = smul.addr %s265, 8
      %s267 = scalar_lea.vmem %s2, %s266
      %p268 = pneg %p105
      %p269 = pneg %p102
      %p270 = pneg %p126
      %p271 = pneg %p123
      %p272 = pneg %p147
      %p273 = pneg %p144
      %p274 = pneg %p175
      %p275 = pneg %p172
      %s276 = smul.u32 2, %s21
      %p277 = scmp.lt.s32.totalorder %s20, 1
      %s278 = scalar_select %p277, %s20, 1
      %p279 = scmp.lt.s32.totalorder %s276, 1
      %s280 = scalar_select %p279, %s276, 1
      %s281 = smul.addr %s278, 2
      %s282 = sadd.s32 %s280, %s281
      %s283 = smul.addr %s282, 8
      %s284 = scalar_lea.vmem %s5, %s283
      %s285 = smul.u32 2, %s21
      %p286 = scmp.lt.s32.totalorder %s20, 1
      %s287 = scalar_select %p286, %s20, 1
      %p288 = scmp.lt.s32.totalorder %s285, 1
      %s289 = scalar_select %p288, %s285, 1
      %s290 = smul.addr %s287, 2
      %s291 = sadd.s32 %s289, %s290
      %s292 = smul.addr %s291, 8
      %s293 = scalar_lea.vmem %s0, %s292
      %s294 = smul.u32 2, %s21
      %s295 = smul.u32 2, %s21
      %p296 = scmp.lt.s32.totalorder %s20, 1
      %s297 = scalar_select %p296, %s20, 1
      %p298 = scmp.lt.s32.totalorder %s295, 1
      %s299 = scalar_select %p298, %s295, 1
      %s300 = smul.addr %s297, 8
      %s301 = sadd.s32 %s299, %s300
      %s302 = smul.addr %s301, 8
      %s303 = scalar_lea.vmem %s1, %s302
      %s304 = smul.u32 2, %s21
      %p305 = scmp.lt.s32.totalorder %s20, 1
      %s306 = scalar_select %p305, %s20, 1
      %s307 = smul.addr %s306, 16
      %s308 = smul.addr %s307, 8
      %s309 = scalar_lea.vmem %s2, %s308
      %s310 = smul.u32 2, %s21
      %p311 = scmp.lt.s32.totalorder %s20, 1
      %s312 = scalar_select %p311, %s20, 1
      %p313 = scmp.lt.s32.totalorder %s310, 1
      %s314 = scalar_select %p313, %s310, 1
      %s315 = smul.addr %s312, 2
      %s316 = sadd.s32 %s314, %s315
      %s317 = smul.addr %s316, 8
      %s318 = scalar_lea.vmem %s5, %s317
      %s319 = smul.u32 2, %s21
      %v320 = vld [vmem:[%s293] sm:$0xff]
      %v321 = vld [vmem:[%s293 + $0x8] sm:$0xff]
      %v322 = vld [vmem:[%s303] sm:$0xff]
      %v323 = vld [vmem:[%s303 + $0x8] sm:$0xff]
      %v324 = vld [vmem:[%s303 + $0x10] sm:$0xff]
      %v325 = vld [vmem:[%s303 + $0x18] sm:$0xff]
      %v326 = vld [vmem:[%s303 + $0x20] sm:$0xff]
      %v327 = vld [vmem:[%s303 + $0x28] sm:$0xff]
      %v328 = vld [vmem:[%s303 + $0x30] sm:$0xff]
      %v329 = vld [vmem:[%s303 + $0x38] sm:$0xff]
      %v330 = vld [vmem:[%s309] sm:$0xff]
      %v331 = vld [vmem:[%s309 + $0x8] sm:$0xff]
      %v332 = vld [vmem:[%s309 + $0x10] sm:$0xff]
      %v333 = vld [vmem:[%s309 + $0x18] sm:$0xff]
      %v334 = vld [vmem:[%s309 + $0x20] sm:$0xff]
      %v335 = vld [vmem:[%s309 + $0x28] sm:$0xff]
      %v336 = vld [vmem:[%s309 + $0x30] sm:$0xff]
      %v337 = vld [vmem:[%s309 + $0x38] sm:$0xff]
      %s338 = scalar_lea.vmem %s309, 64
      %v339 = vld [vmem:[%s338] sm:$0xff]
      %v340 = vld [vmem:[%s338 + $0x8] sm:$0xff]
      %v341 = vld [vmem:[%s338 + $0x10] sm:$0xff]
      %v342 = vld [vmem:[%s338 + $0x18] sm:$0xff]
      %v343 = vld [vmem:[%s338 + $0x20] sm:$0xff]
      %v344 = vld [vmem:[%s338 + $0x28] sm:$0xff]
      %v345 = vld [vmem:[%s338 + $0x30] sm:$0xff]
      %v346 = vld [vmem:[%s338 + $0x38] sm:$0xff]
      %vm347 = vcmask 64512
      %v349 = vsel %vm347, %v322, 0
      %v352 = vsel %vm347, %v323, 0
      %v355 = vsel %vm347, %v330, 0
      %v358 = vsel %vm347, %v331, 0
      %360 = vmatprep.subr.mxu0 0.0
      %361 = vmatpush1.xpose.msra.mxu0 0.0
      %362 = vmatprep.subr.mxu0 0.0
      %363 = vmatpush1.xpose.msra.mxu0 0.0
      %364 = vmatprep.subr.mxu0 0.0
      %365 = vmatpush1.xpose.msra.mxu0 0.0
      %366 = vmatprep.subr.mxu0 0.0
      %367 = vmatpush1.xpose.msra.mxu0 0.0
      %368 = vmatprep.subr.mxu0 0.0
      %369 = vmatpush1.xpose.msra.mxu0 0.0
      %370 = vmatprep.subr.mxu0 0.0
      %371 = vmatpush1.xpose.msra.mxu0 0.0
      %372 = vmatprep.subr.mxu0 0.0
      %373 = vmatpush1.xpose.msra.mxu0 0.0
      %374 = vmatprep.subr.mxu0 0.0
      %375 = vmatpush1.xpose.msra.mxu0 0.0
      %376 = vmatprep.subr.mxu0 0.0
      %377 = vmatpush1.xpose.msra.mxu0 0.0
      %378 = vmatprep.subr.mxu0 0.0
      %379 = vmatpush1.xpose.msra.mxu0 0.0
      %380 = vmatprep.subr.mxu0 0.0
      %381 = vmatpush1.xpose.msra.mxu0 0.0
      %382 = vmatprep.subr.mxu0 0.0
      %383 = vmatpush1.xpose.msra.mxu0 0.0
      %384 = vmatprep.subr.mxu0 0.0
      %385 = vmatpush1.xpose.msra.mxu0 0.0
      %386 = vmatprep.subr.mxu0 0.0
      %387 = vmatpush1.xpose.msra.mxu0 0.0
      %388 = vmatprep.subr.mxu0 0.0
      %389 = vmatpush1.xpose.msra.mxu0 %v358
      %390 = vmatprep.subr.mxu0 0.0
      %391 = vmatpush1.xpose.msra.mxu0 %v355
      %392 = vmatprep.subr.mxu0 0.0
      %393 = vmatpush2.xpose.msra.mxu0 0.0
      %394 = vmatprep.subr.mxu0 0.0
      %395 = vmatpush2.xpose.msra.mxu0 0.0
      %396 = vmatprep.subr.mxu0 0.0
      %397 = vmatpush2.xpose.msra.mxu0 0.0
      %398 = vmatprep.subr.mxu0 0.0
      %399 = vmatpush2.xpose.msra.mxu0 0.0
      %400 = vmatprep.subr.mxu0 0.0
      %401 = vmatpush2.xpose.msra.mxu0 0.0
      %402 = vmatprep.subr.mxu0 0.0
      %403 = vmatpush2.xpose.msra.mxu0 0.0
      %404 = vmatprep.subr.mxu0 0.0
      %405 = vmatpush2.xpose.msra.mxu0 0.0
      %406 = vmatprep.subr.mxu0 0.0
      %407 = vmatpush2.xpose.msra.mxu0 0.0
      %408 = vmatprep.subr.mxu0 0.0
      %409 = vmatpush2.xpose.msra.mxu0 0.0
      %410 = vmatprep.subr.mxu0 0.0
      %411 = vmatpush2.xpose.msra.mxu0 0.0
      %412 = vmatprep.subr.mxu0 0.0
      %413 = vmatpush2.xpose.msra.mxu0 0.0
      %414 = vmatprep.subr.mxu0 0.0
      %415 = vmatpush2.xpose.msra.mxu0 0.0
      %416 = vmatprep.subr.mxu0 0.0
      %417 = vmatpush2.xpose.msra.mxu0 0.0
      %418 = vmatprep.subr.mxu0 0.0
      %419 = vmatpush2.xpose.msra.mxu0 0.0
      %420 = vmatprep.subr.mxu0 0.0
      %421 = vmatpush2.xpose.msra.mxu0 0.0
      %422 = vmatprep.subr.mxu0 0.0
      %423 = vmatpush2.xpose.msra.mxu0 0.0
      %424 = vmatprep.mubr.f32.mxu0 0.0
      %425 = vmatmul.mubr.f32.gmra.mxu0 %v349
      %v426 = vpop.f32.mrf.mxu0
      %v427 = vadd.f32 0.0, %v426
      %v428 = vpop.f32.mrf.mxu0
      %429 = vmatprep.mubr.f32.mxu0 0.0
      %430 = vmatmul.mubr.f32.gmra.mxu0 %v352
      %v431 = vpop.f32.mrf.mxu0
      %v432 = vadd.f32 0.0, %v431
      %v433 = vpop.f32.mrf.mxu0
      %434 = vdwg.mxu0
      %v436 = vsel %vm347, %v324, 0
      %v439 = vsel %vm347, %v325, 0
      %v442 = vsel %vm347, %v332, 0
      %v445 = vsel %vm347, %v333, 0
      %447 = vmatprep.subr.mxu0 0.0
      %448 = vmatpush1.xpose.msra.mxu0 0.0
      %449 = vmatprep.subr.mxu0 0.0
      %450 = vmatpush1.xpose.msra.mxu0 0.0
      %451 = vmatprep.subr.mxu0 0.0
      %452 = vmatpush1.xpose.msra.mxu0 0.0
      %453 = vmatprep.subr.mxu0 0.0
      %454 = vmatpush1.xpose.msra.mxu0 0.0
      %455 = vmatprep.subr.mxu0 0.0
      %456 = vmatpush1.xpose.msra.mxu0 0.0
      %457 = vmatprep.subr.mxu0 0.0
      %458 = vmatpush1.xpose.msra.mxu0 0.0
      %459 = vmatprep.subr.mxu0 0.0
      %460 = vmatpush1.xpose.msra.mxu0 0.0
      %461 = vmatprep.subr.mxu0 0.0
      %462 = vmatpush1.xpose.msra.mxu0 0.0
      %463 = vmatprep.subr.mxu0 0.0
      %464 = vmatpush1.xpose.msra.mxu0 0.0
      %465 = vmatprep.subr.mxu0 0.0
      %466 = vmatpush1.xpose.msra.mxu0 0.0
      %467 = vmatprep.subr.mxu0 0.0
      %468 = vmatpush1.xpose.msra.mxu0 0.0
      %469 = vmatprep.subr.mxu0 0.0
      %470 = vmatpush1.xpose.msra.mxu0 0.0
      %471 = vmatprep.subr.mxu0 0.0
      %472 = vmatpush1.xpose.msra.mxu0 0.0
      %473 = vmatprep.subr.mxu0 0.0
      %474 = vmatpush1.xpose.msra.mxu0 0.0
      %475 = vmatprep.subr.mxu0 0.0
      %476 = vmatpush1.xpose.msra.mxu0 %v445
      %477 = vmatprep.subr.mxu0 0.0
      %478 = vmatpush1.xpose.msra.mxu0 %v442
      %479 = vmatprep.subr.mxu0 0.0
      %480 = vmatpush2.xpose.msra.mxu0 0.0
      %481 = vmatprep.subr.mxu0 0.0
      %482 = vmatpush2.xpose.msra.mxu0 0.0
      %483 = vmatprep.subr.mxu0 0.0
      %484 = vmatpush2.xpose.msra.mxu0 0.0
      %485 = vmatprep.subr.mxu0 0.0
      %486 = vmatpush2.xpose.msra.mxu0 0.0
      %487 = vmatprep.subr.mxu0 0.0
      %488 = vmatpush2.xpose.msra.mxu0 0.0
      %489 = vmatprep.subr.mxu0 0.0
      %490 = vmatpush2.xpose.msra.mxu0 0.0
      %491 = vmatprep.subr.mxu0 0.0
      %492 = vmatpush2.xpose.msra.mxu0 0.0
      %493 = vmatprep.subr.mxu0 0.0
      %494 = vmatpush2.xpose.msra.mxu0 0.0
      %495 = vmatprep.subr.mxu0 0.0
      %496 = vmatpush2.xpose.msra.mxu0 0.0
      %497 = vmatprep.subr.mxu0 0.0
      %498 = vmatpush2.xpose.msra.mxu0 0.0
      %499 = vmatprep.subr.mxu0 0.0
      %500 = vmatpush2.xpose.msra.mxu0 0.0
      %501 = vmatprep.subr.mxu0 0.0
      %502 = vmatpush2.xpose.msra.mxu0 0.0
      %503 = vmatprep.subr.mxu0 0.0
      %504 = vmatpush2.xpose.msra.mxu0 0.0
      %505 = vmatprep.subr.mxu0 0.0
      %506 = vmatpush2.xpose.msra.mxu0 0.0
      %507 = vmatprep.subr.mxu0 0.0
      %508 = vmatpush2.xpose.msra.mxu0 0.0
      %509 = vmatprep.subr.mxu0 0.0
      %510 = vmatpush2.xpose.msra.mxu0 0.0
      %511 = vmatprep.mubr.f32.mxu0 0.0
      %512 = vmatmul.mubr.f32.gmra.mxu0 %v436
      %v513 = vpop.f32.mrf.mxu0
      %v514 = vadd.f32 0.0, %v513
      %v515 = vpop.f32.mrf.mxu0
      %516 = vmatprep.mubr.f32.mxu0 0.0
      %517 = vmatmul.mubr.f32.gmra.mxu0 %v439
      %v518 = vpop.f32.mrf.mxu0
      %v519 = vadd.f32 0.0, %v518
      %v520 = vpop.f32.mrf.mxu0
      %521 = vdwg.mxu0
      %v523 = vsel %vm347, %v326, 0
      %v526 = vsel %vm347, %v327, 0
      %v529 = vsel %vm347, %v334, 0
      %v532 = vsel %vm347, %v335, 0
      %534 = vmatprep.subr.mxu0 0.0
      %535 = vmatpush1.xpose.msra.mxu0 0.0
      %536 = vmatprep.subr.mxu0 0.0
      %537 = vmatpush1.xpose.msra.mxu0 0.0
      %538 = vmatprep.subr.mxu0 0.0
      %539 = vmatpush1.xpose.msra.mxu0 0.0
      %540 = vmatprep.subr.mxu0 0.0
      %541 = vmatpush1.xpose.msra.mxu0 0.0
      %542 = vmatprep.subr.mxu0 0.0
      %543 = vmatpush1.xpose.msra.mxu0 0.0
      %544 = vmatprep.subr.mxu0 0.0
      %545 = vmatpush1.xpose.msra.mxu0 0.0
      %546 = vmatprep.subr.mxu0 0.0
      %547 = vmatpush1.xpose.msra.mxu0 0.0
      %548 = vmatprep.subr.mxu0 0.0
      %549 = vmatpush1.xpose.msra.mxu0 0.0
      %550 = vmatprep.subr.mxu0 0.0
      %551 = vmatpush1.xpose.msra.mxu0 0.0
      %552 = vmatprep.subr.mxu0 0.0
      %553 = vmatpush1.xpose.msra.mxu0 0.0
      %554 = vmatprep.subr.mxu0 0.0
      %555 = vmatpush1.xpose.msra.mxu0 0.0
      %556 = vmatprep.subr.mxu0 0.0
      %557 = vmatpush1.xpose.msra.mxu0 0.0
      %558 = vmatprep.subr.mxu0 0.0
      %559 = vmatpush1.xpose.msra.mxu0 0.0
      %560 = vmatprep.subr.mxu0 0.0
      %561 = vmatpush1.xpose.msra.mxu0 0.0
      %562 = vmatprep.subr.mxu0 0.0
      %563 = vmatpush1.xpose.msra.mxu0 %v532
      %564 = vmatprep.subr.mxu0 0.0
      %565 = vmatpush1.xpose.msra.mxu0 %v529
      %566 = vmatprep.subr.mxu0 0.0
      %567 = vmatpush2.xpose.msra.mxu0 0.0
      %568 = vmatprep.subr.mxu0 0.0
      %569 = vmatpush2.xpose.msra.mxu0 0.0
      %570 = vmatprep.subr.mxu0 0.0
      %571 = vmatpush2.xpose.msra.mxu0 0.0
      %572 = vmatprep.subr.mxu0 0.0
      %573 = vmatpush2.xpose.msra.mxu0 0.0
      %574 = vmatprep.subr.mxu0 0.0
      %575 = vmatpush2.xpose.msra.mxu0 0.0
      %576 = vmatprep.subr.mxu0 0.0
      %577 = vmatpush2.xpose.msra.mxu0 0.0
      %578 = vmatprep.subr.mxu0 0.0
      %579 = vmatpush2.xpose.msra.mxu0 0.0
      %580 = vmatprep.subr.mxu0 0.0
      %581 = vmatpush2.xpose.msra.mxu0 0.0
      %582 = vmatprep.subr.mxu0 0.0
      %583 = vmatpush2.xpose.msra.mxu0 0.0
      %584 = vmatprep.subr.mxu0 0.0
      %585 = vmatpush2.xpose.msra.mxu0 0.0
      %586 = vmatprep.subr.mxu0 0.0
      %587 = vmatpush2.xpose.msra.mxu0 0.0
      %588 = vmatprep.subr.mxu0 0.0
      %589 = vmatpush2.xpose.msra.mxu0 0.0
      %590 = vmatprep.subr.mxu0 0.0
      %591 = vmatpush2.xpose.msra.mxu0 0.0
      %592 = vmatprep.subr.mxu0 0.0
      %593 = vmatpush2.xpose.msra.mxu0 0.0
      %594 = vmatprep.subr.mxu0 0.0
      %595 = vmatpush2.xpose.msra.mxu0 0.0
      %596 = vmatprep.subr.mxu0 0.0
      %597 = vmatpush2.xpose.msra.mxu0 0.0
      %598 = vmatprep.mubr.f32.mxu0 0.0
      %599 = vmatmul.mubr.f32.gmra.mxu0 %v523
      %v600 = vpop.f32.mrf.mxu0
      %v601 = vadd.f32 0.0, %v600
      %v602 = vpop.f32.mrf.mxu0
      %603 = vmatprep.mubr.f32.mxu0 0.0
      %604 = vmatmul.mubr.f32.gmra.mxu0 %v526
      %v605 = vpop.f32.mrf.mxu0
      %v606 = vadd.f32 0.0, %v605
      %v607 = vpop.f32.mrf.mxu0
      %608 = vdwg.mxu0
      %v610 = vsel %vm347, %v328, 0
      %v613 = vsel %vm347, %v329, 0
      %v616 = vsel %vm347, %v336, 0
      %v619 = vsel %vm347, %v337, 0
      %621 = vmatprep.subr.mxu0 0.0
      %622 = vmatpush1.xpose.msra.mxu0 0.0
      %623 = vmatprep.subr.mxu0 0.0
      %624 = vmatpush1.xpose.msra.mxu0 0.0
      %625 = vmatprep.subr.mxu0 0.0
      %626 = vmatpush1.xpose.msra.mxu0 0.0
      %627 = vmatprep.subr.mxu0 0.0
      %628 = vmatpush1.xpose.msra.mxu0 0.0
      %629 = vmatprep.subr.mxu0 0.0
      %630 = vmatpush1.xpose.msra.mxu0 0.0
      %631 = vmatprep.subr.mxu0 0.0
      %632 = vmatpush1.xpose.msra.mxu0 0.0
      %633 = vmatprep.subr.mxu0 0.0
      %634 = vmatpush1.xpose.msra.mxu0 0.0
      %635 = vmatprep.subr.mxu0 0.0
      %636 = vmatpush1.xpose.msra.mxu0 0.0
      %637 = vmatprep.subr.mxu0 0.0
      %638 = vmatpush1.xpose.msra.mxu0 0.0
      %639 = vmatprep.subr.mxu0 0.0
      %640 = vmatpush1.xpose.msra.mxu0 0.0
      %641 = vmatprep.subr.mxu0 0.0
      %642 = vmatpush1.xpose.msra.mxu0 0.0
      %643 = vmatprep.subr.mxu0 0.0
      %644 = vmatpush1.xpose.msra.mxu0 0.0
      %645 = vmatprep.subr.mxu0 0.0
      %646 = vmatpush1.xpose.msra.mxu0 0.0
      %647 = vmatprep.subr.mxu0 0.0
      %648 = vmatpush1.xpose.msra.mxu0 0.0
      %649 = vmatprep.subr.mxu0 0.0
      %650 = vmatpush1.xpose.msra.mxu0 %v619
      %651 = vmatprep.subr.mxu0 0.0
      %652 = vmatpush1.xpose.msra.mxu0 %v616
      %653 = vmatprep.subr.mxu0 0.0
      %654 = vmatpush2.xpose.msra.mxu0 0.0
      %655 = vmatprep.subr.mxu0 0.0
      %656 = vmatpush2.xpose.msra.mxu0 0.0
      %657 = vmatprep.subr.mxu0 0.0
      %658 = vmatpush2.xpose.msra.mxu0 0.0
      %659 = vmatprep.subr.mxu0 0.0
      %660 = vmatpush2.xpose.msra.mxu0 0.0
      %661 = vmatprep.subr.mxu0 0.0
      %662 = vmatpush2.xpose.msra.mxu0 0.0
      %663 = vmatprep.subr.mxu0 0.0
      %664 = vmatpush2.xpose.msra.mxu0 0.0
      %665 = vmatprep.subr.mxu0 0.0
      %666 = vmatpush2.xpose.msra.mxu0 0.0
      %667 = vmatprep.subr.mxu0 0.0
      %668 = vmatpush2.xpose.msra.mxu0 0.0
      %669 = vmatprep.subr.mxu0 0.0
      %670 = vmatpush2.xpose.msra.mxu0 0.0
      %671 = vmatprep.subr.mxu0 0.0
      %672 = vmatpush2.xpose.msra.mxu0 0.0
      %673 = vmatprep.subr.mxu0 0.0
      %674 = vmatpush2.xpose.msra.mxu0 0.0
      %675 = vmatprep.subr.mxu0 0.0
      %676 = vmatpush2.xpose.msra.mxu0 0.0
      %677 = vmatprep.subr.mxu0 0.0
      %678 = vmatpush2.xpose.msra.mxu0 0.0
      %679 = vmatprep.subr.mxu0 0.0
      %680 = vmatpush2.xpose.msra.mxu0 0.0
      %681 = vmatprep.subr.mxu0 0.0
      %682 = vmatpush2.xpose.msra.mxu0 0.0
      %683 = vmatprep.subr.mxu0 0.0
      %684 = vmatpush2.xpose.msra.mxu0 0.0
      %685 = vmatprep.mubr.f32.mxu0 0.0
      %686 = vmatmul.mubr.f32.gmra.mxu0 %v610
      %v687 = vpop.f32.mrf.mxu0
      %v688 = vadd.f32 0.0, %v687
      %v689 = vpop.f32.mrf.mxu0
      %690 = vmatprep.mubr.f32.mxu0 0.0
      %691 = vmatmul.mubr.f32.gmra.mxu0 %v613
      %v692 = vpop.f32.mrf.mxu0
      %v693 = vadd.f32 0.0, %v692
      %v694 = vpop.f32.mrf.mxu0
      %695 = vdwg.mxu0
      %vm696 = vcmask 130048
      %v697 = vsel %vm696, %v427, -inf
      %698 = vmax.xlane.f32.xlu0 %v697
      %v699 = vpop.xlane.xlu0 %698
      %v700 = vsel %vm696, %v432, -inf
      %701 = vmax.xlane.f32.xlu0 %v700
      %v702 = vpop.xlane.xlu0 %701
      %v703 = vsel %vm696, %v514, -inf
      %704 = vmax.xlane.f32.xlu0 %v703
      %v705 = vpop.xlane.xlu0 %704
      %v706 = vsel %vm696, %v519, -inf
      %707 = vmax.xlane.f32.xlu0 %v706
      %v708 = vpop.xlane.xlu0 %707
      %v709 = vsel %vm696, %v601, -inf
      %710 = vmax.xlane.f32.xlu0 %v709
      %v711 = vpop.xlane.xlu0 %710
      %v712 = vsel %vm696, %v606, -inf
      %713 = vmax.xlane.f32.xlu0 %v712
      %v714 = vpop.xlane.xlu0 %713
      %v715 = vsel %vm696, %v688, -inf
      %716 = vmax.xlane.f32.xlu0 %v715
      %v717 = vpop.xlane.xlu0 %716
      %v718 = vsel %vm696, %v693, -inf
      %719 = vmax.xlane.f32.xlu0 %v718
      %v720 = vpop.xlane.xlu0 %719
      %v721 = vsub.f32 %v427, %v699
      %v722 = vsub.f32 %v432, %v702
      %v723 = vsub.f32 %v514, %v705
      %v724 = vsub.f32 %v519, %v708
      %v725 = vsub.f32 %v601, %v711
      %v726 = vsub.f32 %v606, %v714
      %v727 = vsub.f32 %v688, %v717
      %v728 = vsub.f32 %v693, %v720
      %v729 = vmul.f32 %v721, 1.442695
      %v730 = vpow.pop %v729
      %v731 = vmul.f32 %v722, 1.442695
      %v732 = vpow.pop %v731
      %v733 = vmul.f32 %v723, 1.442695
      %v734 = vpow.pop %v733
      %v735 = vmul.f32 %v724, 1.442695
      %v736 = vpow.pop %v735
      %v737 = vmul.f32 %v725, 1.442695
      %v738 = vpow.pop %v737
      %v739 = vmul.f32 %v726, 1.442695
      %v740 = vpow.pop %v739
      %v741 = vmul.f32 %v727, 1.442695
      %v742 = vpow.pop %v741
      %v743 = vmul.f32 %v728, 1.442695
      %v744 = vpow.pop %v743
      %v745 = vsel %vm696, %v730, 0.0
      %746 = vadd.xlane.f32.xlu0 %v745
      %v747 = vpop.xlane.xlu0 %746
      %v748 = vsel %vm696, %v732, 0.0
      %749 = vadd.xlane.f32.xlu0 %v748
      %v750 = vpop.xlane.xlu0 %749
      %v751 = vsel %vm696, %v734, 0.0
      %752 = vadd.xlane.f32.xlu0 %v751
      %v753 = vpop.xlane.xlu0 %752
      %v754 = vsel %vm696, %v736, 0.0
      %755 = vadd.xlane.f32.xlu0 %v754
      %v756 = vpop.xlane.xlu0 %755
      %v757 = vsel %vm696, %v738, 0.0
      %758 = vadd.xlane.f32.xlu0 %v757
      %v759 = vpop.xlane.xlu0 %758
      %v760 = vsel %vm696, %v740, 0.0
      %761 = vadd.xlane.f32.xlu0 %v760
      %v762 = vpop.xlane.xlu0 %761
      %v763 = vsel %vm696, %v742, 0.0
      %764 = vadd.xlane.f32.xlu0 %v763
      %v765 = vpop.xlane.xlu0 %764
      %v766 = vsel %vm696, %v744, 0.0
      %767 = vadd.xlane.f32.xlu0 %v766
      %v768 = vpop.xlane.xlu0 %767
      %v769 = vrcp.pop %v747
      %v770 = vrcp.pop %v750
      %v771 = vrcp.pop %v753
      %v772 = vrcp.pop %v756
      %v773 = vrcp.pop %v759
      %v774 = vrcp.pop %v762
      %v775 = vrcp.pop %v765
      %v776 = vrcp.pop %v768
      %v777 = vmul.f32 %v730, %v769
      %v778 = vmul.f32 %v732, %v770
      %v779 = vmul.f32 %v734, %v771
      %v780 = vmul.f32 %v736, %v772
      %v781 = vmul.f32 %v738, %v773
      %v782 = vmul.f32 %v740, %v774
      %v783 = vmul.f32 %v742, %v775
      %v784 = vmul.f32 %v744, %v776
      %v786 = vsel %vm696, %v777, 0
      %v789 = vsel %vm696, %v778, 0
      %791 = vmatprep.subr.mxu0 0.0
      %792 = vmatpush1.msra.mxu0 0.0
      %793 = vmatprep.subr.mxu0 0.0
      %794 = vmatpush1.msra.mxu0 0.0
      %795 = vmatprep.subr.mxu0 0.0
      %796 = vmatpush1.msra.mxu0 0.0
      %797 = vmatprep.subr.mxu0 0.0
      %798 = vmatpush1.msra.mxu0 0.0
      %799 = vmatprep.subr.mxu0 0.0
      %800 = vmatpush1.msra.mxu0 0.0
      %801 = vmatprep.subr.mxu0 0.0
      %802 = vmatpush1.msra.mxu0 0.0
      %803 = vmatprep.subr.mxu0 0.0
      %804 = vmatpush1.msra.mxu0 0.0
      %805 = vmatprep.subr.mxu0 0.0
      %806 = vmatpush1.msra.mxu0 0.0
      %807 = vmatprep.subr.mxu0 0.0
      %808 = vmatpush1.msra.mxu0 0.0
      %809 = vmatprep.subr.mxu0 0.0
      %810 = vmatpush1.msra.mxu0 0.0
      %811 = vmatprep.subr.mxu0 0.0
      %812 = vmatpush1.msra.mxu0 0.0
      %813 = vmatprep.subr.mxu0 0.0
      %814 = vmatpush1.msra.mxu0 0.0
      %815 = vmatprep.subr.mxu0 0.0
      %816 = vmatpush1.msra.mxu0 0.0
      %817 = vmatprep.subr.mxu0 0.0
      %818 = vmatpush1.msra.mxu0 0.0
      %819 = vmatprep.subr.mxu0 0.0
      %820 = vmatpush1.msra.mxu0 %v340
      %821 = vmatprep.subr.mxu0 0.0
      %822 = vmatpush1.msra.mxu0 %v339
      %823 = vmatprep.subr.mxu0 0.0
      %824 = vmatpush2.msra.mxu0 0.0
      %825 = vmatprep.subr.mxu0 0.0
      %826 = vmatpush2.msra.mxu0 0.0
      %827 = vmatprep.subr.mxu0 0.0
      %828 = vmatpush2.msra.mxu0 0.0
      %829 = vmatprep.subr.mxu0 0.0
      %830 = vmatpush2.msra.mxu0 0.0
      %831 = vmatprep.subr.mxu0 0.0
      %832 = vmatpush2.msra.mxu0 0.0
      %833 = vmatprep.subr.mxu0 0.0
      %834 = vmatpush2.msra.mxu0 0.0
      %835 = vmatprep.subr.mxu0 0.0
      %836 = vmatpush2.msra.mxu0 0.0
      %837 = vmatprep.subr.mxu0 0.0
      %838 = vmatpush2.msra.mxu0 0.0
      %839 = vmatprep.subr.mxu0 0.0
      %840 = vmatpush2.msra.mxu0 0.0
      %841 = vmatprep.subr.mxu0 0.0
      %842 = vmatpush2.msra.mxu0 0.0
      %843 = vmatprep.subr.mxu0 0.0
      %844 = vmatpush2.msra.mxu0 0.0
      %845 = vmatprep.subr.mxu0 0.0
      %846 = vmatpush2.msra.mxu0 0.0
      %847 = vmatprep.subr.mxu0 0.0
      %848 = vmatpush2.msra.mxu0 0.0
      %849 = vmatprep.subr.mxu0 0.0
      %850 = vmatpush2.msra.mxu0 0.0
      %851 = vmatprep.subr.mxu0 0.0
      %852 = vmatpush2.msra.mxu0 0.0
      %853 = vmatprep.subr.mxu0 0.0
      %854 = vmatpush2.msra.mxu0 0.0
      %855 = vmatprep.mubr.f32.mxu0 0.0
      %856 = vmatmul.mubr.f32.gmra.mxu0 %v786
      %v857 = vpop.f32.mrf.mxu0
      %v858 = vadd.f32 0.0, %v857
      %v859 = vpop.f32.mrf.mxu0
      %860 = vmatprep.mubr.f32.mxu0 0.0
      %861 = vmatmul.mubr.f32.gmra.mxu0 %v789
      %v862 = vpop.f32.mrf.mxu0
      %v863 = vadd.f32 0.0, %v862
      %v864 = vpop.f32.mrf.mxu0
      %865 = vdwg.mxu0
      %v867 = vsel %vm696, %v779, 0
      %v870 = vsel %vm696, %v780, 0
      %872 = vmatprep.subr.mxu0 0.0
      %873 = vmatpush1.msra.mxu0 0.0
      %874 = vmatprep.subr.mxu0 0.0
      %875 = vmatpush1.msra.mxu0 0.0
      %876 = vmatprep.subr.mxu0 0.0
      %877 = vmatpush1.msra.mxu0 0.0
      %878 = vmatprep.subr.mxu0 0.0
      %879 = vmatpush1.msra.mxu0 0.0
      %880 = vmatprep.subr.mxu0 0.0
      %881 = vmatpush1.msra.mxu0 0.0
      %882 = vmatprep.subr.mxu0 0.0
      %883 = vmatpush1.msra.mxu0 0.0
      %884 = vmatprep.subr.mxu0 0.0
      %885 = vmatpush1.msra.mxu0 0.0
      %886 = vmatprep.subr.mxu0 0.0
      %887 = vmatpush1.msra.mxu0 0.0
      %888 = vmatprep.subr.mxu0 0.0
      %889 = vmatpush1.msra.mxu0 0.0
      %890 = vmatprep.subr.mxu0 0.0
      %891 = vmatpush1.msra.mxu0 0.0
      %892 = vmatprep.subr.mxu0 0.0
      %893 = vmatpush1.msra.mxu0 0.0
      %894 = vmatprep.subr.mxu0 0.0
      %895 = vmatpush1.msra.mxu0 0.0
      %896 = vmatprep.subr.mxu0 0.0
      %897 = vmatpush1.msra.mxu0 0.0
      %898 = vmatprep.subr.mxu0 0.0
      %899 = vmatpush1.msra.mxu0 0.0
      %900 = vmatprep.subr.mxu0 0.0
      %901 = vmatpush1.msra.mxu0 %v342
      %902 = vmatprep.subr.mxu0 0.0
      %903 = vmatpush1.msra.mxu0 %v341
      %904 = vmatprep.subr.mxu0 0.0
      %905 = vmatpush2.msra.mxu0 0.0
      %906 = vmatprep.subr.mxu0 0.0
      %907 = vmatpush2.msra.mxu0 0.0
      %908 = vmatprep.subr.mxu0 0.0
      %909 = vmatpush2.msra.mxu0 0.0
      %910 = vmatprep.subr.mxu0 0.0
      %911 = vmatpush2.msra.mxu0 0.0
      %912 = vmatprep.subr.mxu0 0.0
      %913 = vmatpush2.msra.mxu0 0.0
      %914 = vmatprep.subr.mxu0 0.0
      %915 = vmatpush2.msra.mxu0 0.0
      %916 = vmatprep.subr.mxu0 0.0
      %917 = vmatpush2.msra.mxu0 0.0
      %918 = vmatprep.subr.mxu0 0.0
      %919 = vmatpush2.msra.mxu0 0.0
      %920 = vmatprep.subr.mxu0 0.0
      %921 = vmatpush2.msra.mxu0 0.0
      %922 = vmatprep.subr.mxu0 0.0
      %923 = vmatpush2.msra.mxu0 0.0
      %924 = vmatprep.subr.mxu0 0.0
      %925 = vmatpush2.msra.mxu0 0.0
      %926 = vmatprep.subr.mxu0 0.0
      %927 = vmatpush2.msra.mxu0 0.0
      %928 = vmatprep.subr.mxu0 0.0
      %929 = vmatpush2.msra.mxu0 0.0
      %930 = vmatprep.subr.mxu0 0.0
      %931 = vmatpush2.msra.mxu0 0.0
      %932 = vmatprep.subr.mxu0 0.0
      %933 = vmatpush2.msra.mxu0 0.0
      %934 = vmatprep.subr.mxu0 0.0
      %935 = vmatpush2.msra.mxu0 0.0
      %936 = vmatprep.mubr.f32.mxu0 0.0
      %937 = vmatmul.mubr.f32.gmra.mxu0 %v867
      %v938 = vpop.f32.mrf.mxu0
      %v939 = vadd.f32 0.0, %v938
      %v940 = vpop.f32.mrf.mxu0
      %941 = vmatprep.mubr.f32.mxu0 0.0
      %942 = vmatmul.mubr.f32.gmra.mxu0 %v870
      %v943 = vpop.f32.mrf.mxu0
      %v944 = vadd.f32 0.0, %v943
      %v945 = vpop.f32.mrf.mxu0
      %946 = vdwg.mxu0
      %v948 = vsel %vm696, %v781, 0
      %v951 = vsel %vm696, %v782, 0
      %953 = vmatprep.subr.mxu0 0.0
      %954 = vmatpush1.msra.mxu0 0.0
      %955 = vmatprep.subr.mxu0 0.0
      %956 = vmatpush1.msra.mxu0 0.0
      %957 = vmatprep.subr.mxu0 0.0
      %958 = vmatpush1.msra.mxu0 0.0
      %959 = vmatprep.subr.mxu0 0.0
      %960 = vmatpush1.msra.mxu0 0.0
      %961 = vmatprep.subr.mxu0 0.0
      %962 = vmatpush1.msra.mxu0 0.0
      %963 = vmatprep.subr.mxu0 0.0
      %964 = vmatpush1.msra.mxu0 0.0
      %965 = vmatprep.subr.mxu0 0.0
      %966 = vmatpush1.msra.mxu0 0.0
      %967 = vmatprep.subr.mxu0 0.0
      %968 = vmatpush1.msra.mxu0 0.0
      %969 = vmatprep.subr.mxu0 0.0
      %970 = vmatpush1.msra.mxu0 0.0
      %971 = vmatprep.subr.mxu0 0.0
      %972 = vmatpush1.msra.mxu0 0.0
      %973 = vmatprep.subr.mxu0 0.0
      %974 = vmatpush1.msra.mxu0 0.0
      %975 = vmatprep.subr.mxu0 0.0
      %976 = vmatpush1.msra.mxu0 0.0
      %977 = vmatprep.subr.mxu0 0.0
      %978 = vmatpush1.msra.mxu0 0.0
      %979 = vmatprep.subr.mxu0 0.0
      %980 = vmatpush1.msra.mxu0 0.0
      %981 = vmatprep.subr.mxu0 0.0
      %982 = vmatpush1.msra.mxu0 %v344
      %983 = vmatprep.subr.mxu0 0.0
      %984 = vmatpush1.msra.mxu0 %v343
      %985 = vmatprep.subr.mxu0 0.0
      %986 = vmatpush2.msra.mxu0 0.0
      %987 = vmatprep.subr.mxu0 0.0
      %988 = vmatpush2.msra.mxu0 0.0
      %989 = vmatprep.subr.mxu0 0.0
      %990 = vmatpush2.msra.mxu0 0.0
      %991 = vmatprep.subr.mxu0 0.0
      %992 = vmatpush2.msra.mxu0 0.0
      %993 = vmatprep.subr.mxu0 0.0
      %994 = vmatpush2.msra.mxu0 0.0
      %995 = vmatprep.subr.mxu0 0.0
      %996 = vmatpush2.msra.mxu0 0.0
      %997 = vmatprep.subr.mxu0 0.0
      %998 = vmatpush2.msra.mxu0 0.0
      %999 = vmatprep.subr.mxu0 0.0
      %1000 = vmatpush2.msra.mxu0 0.0
      %1001 = vmatprep.subr.mxu0 0.0
      %1002 = vmatpush2.msra.mxu0 0.0
      %1003 = vmatprep.subr.mxu0 0.0
      %1004 = vmatpush2.msra.mxu0 0.0
      %1005 = vmatprep.subr.mxu0 0.0
      %1006 = vmatpush2.msra.mxu0 0.0
      %1007 = vmatprep.subr.mxu0 0.0
      %1008 = vmatpush2.msra.mxu0 0.0
      %1009 = vmatprep.subr.mxu0 0.0
      %1010 = vmatpush2.msra.mxu0 0.0
      %1011 = vmatprep.subr.mxu0 0.0
      %1012 = vmatpush2.msra.mxu0 0.0
      %1013 = vmatprep.subr.mxu0 0.0
      %1014 = vmatpush2.msra.mxu0 0.0
      %1015 = vmatprep.subr.mxu0 0.0
      %1016 = vmatpush2.msra.mxu0 0.0
      %1017 = vmatprep.mubr.f32.mxu0 0.0
      %1018 = vmatmul.mubr.f32.gmra.mxu0 %v948
      %v1019 = vpop.f32.mrf.mxu0
      %v1020 = vadd.f32 0.0, %v1019
      %v1021 = vpop.f32.mrf.mxu0
      %1022 = vmatprep.mubr.f32.mxu0 0.0
      %1023 = vmatmul.mubr.f32.gmra.mxu0 %v951
      %v1024 = vpop.f32.mrf.mxu0
      %v1025 = vadd.f32 0.0, %v1024
      %v1026 = vpop.f32.mrf.mxu0
      %1027 = vdwg.mxu0
      %v1029 = vsel %vm696, %v783, 0
      %v1032 = vsel %vm696, %v784, 0
      %1034 = vmatprep.subr.mxu0 0.0
      %1035 = vmatpush1.msra.mxu0 0.0
      %1036 = vmatprep.subr.mxu0 0.0
      %1037 = vmatpush1.msra.mxu0 0.0
      %1038 = vmatprep.subr.mxu0 0.0
      %1039 = vmatpush1.msra.mxu0 0.0
      %1040 = vmatprep.subr.mxu0 0.0
      %1041 = vmatpush1.msra.mxu0 0.0
      %1042 = vmatprep.subr.mxu0 0.0
      %1043 = vmatpush1.msra.mxu0 0.0
      %1044 = vmatprep.subr.mxu0 0.0
      %1045 = vmatpush1.msra.mxu0 0.0
      %1046 = vmatprep.subr.mxu0 0.0
      %1047 = vmatpush1.msra.mxu0 0.0
      %1048 = vmatprep.subr.mxu0 0.0
      %1049 = vmatpush1.msra.mxu0 0.0
      %1050 = vmatprep.subr.mxu0 0.0
      %1051 = vmatpush1.msra.mxu0 0.0
      %1052 = vmatprep.subr.mxu0 0.0
      %1053 = vmatpush1.msra.mxu0 0.0
      %1054 = vmatprep.subr.mxu0 0.0
      %1055 = vmatpush1.msra.mxu0 0.0
      %1056 = vmatprep.subr.mxu0 0.0
      %1057 = vmatpush1.msra.mxu0 0.0
      %1058 = vmatprep.subr.mxu0 0.0
      %1059 = vmatpush1.msra.mxu0 0.0
      %1060 = vmatprep.subr.mxu0 0.0
      %1061 = vmatpush1.msra.mxu0 0.0
      %1062 = vmatprep.subr.mxu0 0.0
      %1063 = vmatpush1.msra.mxu0 %v346
      %1064 = vmatprep.subr.mxu0 0.0
      %1065 = vmatpush1.msra.mxu0 %v345
      %1066 = vmatprep.subr.mxu0 0.0
      %1067 = vmatpush2.msra.mxu0 0.0
      %1068 = vmatprep.subr.mxu0 0.0
      %1069 = vmatpush2.msra.mxu0 0.0
      %1070 = vmatprep.subr.mxu0 0.0
      %1071 = vmatpush2.msra.mxu0 0.0
      %1072 = vmatprep.subr.mxu0 0.0
      %1073 = vmatpush2.msra.mxu0 0.0
      %1074 = vmatprep.subr.mxu0 0.0
      %1075 = vmatpush2.msra.mxu0 0.0
      %1076 = vmatprep.subr.mxu0 0.0
      %1077 = vmatpush2.msra.mxu0 0.0
      %1078 = vmatprep.subr.mxu0 0.0
      %1079 = vmatpush2.msra.mxu0 0.0
      %1080 = vmatprep.subr.mxu0 0.0
      %1081 = vmatpush2.msra.mxu0 0.0
      %1082 = vmatprep.subr.mxu0 0.0
      %1083 = vmatpush2.msra.mxu0 0.0
      %1084 = vmatprep.subr.mxu0 0.0
      %1085 = vmatpush2.msra.mxu0 0.0
      %1086 = vmatprep.subr.mxu0 0.0
      %1087 = vmatpush2.msra.mxu0 0.0
      %1088 = vmatprep.subr.mxu0 0.0
      %1089 = vmatpush2.msra.mxu0 0.0
      %1090 = vmatprep.subr.mxu0 0.0
      %1091 = vmatpush2.msra.mxu0 0.0
      %1092 = vmatprep.subr.mxu0 0.0
      %1093 = vmatpush2.msra.mxu0 0.0
      %1094 = vmatprep.subr.mxu0 0.0
      %1095 = vmatpush2.msra.mxu0 0.0
      %1096 = vmatprep.subr.mxu0 0.0
      %1097 = vmatpush2.msra.mxu0 0.0
      %1098 = vmatprep.mubr.f32.mxu0 0.0
      %1099 = vmatmul.mubr.f32.gmra.mxu0 %v1029
      %v1100 = vpop.f32.mrf.mxu0
      %v1101 = vadd.f32 0.0, %v1100
      %v1102 = vpop.f32.mrf.mxu0
      %1103 = vmatprep.mubr.f32.mxu0 0.0
      %1104 = vmatmul.mubr.f32.gmra.mxu0 %v1032
      %v1105 = vpop.f32.mrf.mxu0
      %v1106 = vadd.f32 0.0, %v1105
      %v1107 = vpop.f32.mrf.mxu0
      %1108 = vdwg.mxu0
      %v1109 = vld [vmem:[%s3] sm:$0xff]
      %v1110 = vld [vmem:[%s3 + $0x8] sm:$0xff]
      %v1111 = vld [vmem:[%s3 + $0x10] sm:$0xff]
      %v1112 = vld [vmem:[%s3 + $0x18] sm:$0xff]
      %v1114 = vsel %vm347, %v858, 0
      %v1117 = vsel %vm347, %v863, 0
      %1119 = vmatprep.subr.mxu0 0.0
      %1120 = vmatpush1.msra.mxu0 0.0
      %1121 = vmatprep.subr.mxu0 0.0
      %1122 = vmatpush1.msra.mxu0 0.0
      %1123 = vmatprep.subr.mxu0 0.0
      %1124 = vmatpush1.msra.mxu0 0.0
      %1125 = vmatprep.subr.mxu0 0.0
      %1126 = vmatpush1.msra.mxu0 0.0
      %1127 = vmatprep.subr.mxu0 0.0
      %1128 = vmatpush1.msra.mxu0 0.0
      %1129 = vmatprep.subr.mxu0 0.0
      %1130 = vmatpush1.msra.mxu0 0.0
      %1131 = vmatprep.subr.mxu0 0.0
      %1132 = vmatpush1.msra.mxu0 0.0
      %1133 = vmatprep.subr.mxu0 0.0
      %1134 = vmatpush1.msra.mxu0 0.0
      %1135 = vmatprep.subr.mxu0 0.0
      %1136 = vmatpush1.msra.mxu0 0.0
      %1137 = vmatprep.subr.mxu0 0.0
      %1138 = vmatpush1.msra.mxu0 0.0
      %1139 = vmatprep.subr.mxu0 0.0
      %1140 = vmatpush1.msra.mxu0 0.0
      %1141 = vmatprep.subr.mxu0 0.0
      %1142 = vmatpush1.msra.mxu0 0.0
      %1143 = vmatprep.subr.mxu0 0.0
      %1144 = vmatpush1.msra.mxu0 0.0
      %1145 = vmatprep.subr.mxu0 0.0
      %1146 = vmatpush1.msra.mxu0 0.0
      %1147 = vmatprep.subr.mxu0 0.0
      %1148 = vmatpush1.msra.mxu0 0.0
      %1149 = vmatprep.subr.mxu0 0.0
      %1150 = vmatpush1.msra.mxu0 %v1109
      %1151 = vmatprep.subr.mxu0 0.0
      %1152 = vmatpush2.msra.mxu0 0.0
      %1153 = vmatprep.subr.mxu0 0.0
      %1154 = vmatpush2.msra.mxu0 0.0
      %1155 = vmatprep.subr.mxu0 0.0
      %1156 = vmatpush2.msra.mxu0 0.0
      %1157 = vmatprep.subr.mxu0 0.0
      %1158 = vmatpush2.msra.mxu0 0.0
      %1159 = vmatprep.subr.mxu0 0.0
      %1160 = vmatpush2.msra.mxu0 0.0
      %1161 = vmatprep.subr.mxu0 0.0
      %1162 = vmatpush2.msra.mxu0 0.0
      %1163 = vmatprep.subr.mxu0 0.0
      %1164 = vmatpush2.msra.mxu0 0.0
      %1165 = vmatprep.subr.mxu0 0.0
      %1166 = vmatpush2.msra.mxu0 0.0
      %1167 = vmatprep.subr.mxu0 0.0
      %1168 = vmatpush2.msra.mxu0 0.0
      %1169 = vmatprep.subr.mxu0 0.0
      %1170 = vmatpush2.msra.mxu0 0.0
      %1171 = vmatprep.subr.mxu0 0.0
      %1172 = vmatpush2.msra.mxu0 0.0
      %1173 = vmatprep.subr.mxu0 0.0
      %1174 = vmatpush2.msra.mxu0 0.0
      %1175 = vmatprep.subr.mxu0 0.0
      %1176 = vmatpush2.msra.mxu0 0.0
      %1177 = vmatprep.subr.mxu0 0.0
      %1178 = vmatpush2.msra.mxu0 0.0
      %1179 = vmatprep.subr.mxu0 0.0
      %1180 = vmatpush2.msra.mxu0 0.0
      %1181 = vmatprep.subr.mxu0 0.0
      %1182 = vmatpush2.msra.mxu0 0.0
      %1183 = vmatprep.mubr.f32.mxu0 0.0
      %1184 = vmatmul.mubr.f32.gmra.mxu0 %v1114
      %v1185 = vpop.f32.mrf.mxu0
      %v1186 = vadd.f32 0.0, %v1185
      %v1187 = vpop.f32.mrf.mxu0
      %1188 = vmatprep.mubr.f32.mxu0 0.0
      %1189 = vmatmul.mubr.f32.gmra.mxu0 %v1117
      %v1190 = vpop.f32.mrf.mxu0
      %v1191 = vadd.f32 0.0, %v1190
      %v1192 = vpop.f32.mrf.mxu0
      %1193 = vdwg.mxu0
      %v1195 = vsel %vm347, %v939, 0
      %v1198 = vsel %vm347, %v944, 0
      %1200 = vmatprep.subr.mxu0 0.0
      %1201 = vmatpush1.msra.mxu0 0.0
      %1202 = vmatprep.subr.mxu0 0.0
      %1203 = vmatpush1.msra.mxu0 0.0
      %1204 = vmatprep.subr.mxu0 0.0
      %1205 = vmatpush1.msra.mxu0 0.0
      %1206 = vmatprep.subr.mxu0 0.0
      %1207 = vmatpush1.msra.mxu0 0.0
      %1208 = vmatprep.subr.mxu0 0.0
      %1209 = vmatpush1.msra.mxu0 0.0
      %1210 = vmatprep.subr.mxu0 0.0
      %1211 = vmatpush1.msra.mxu0 0.0
      %1212 = vmatprep.subr.mxu0 0.0
      %1213 = vmatpush1.msra.mxu0 0.0
      %1214 = vmatprep.subr.mxu0 0.0
      %1215 = vmatpush1.msra.mxu0 0.0
      %1216 = vmatprep.subr.mxu0 0.0
      %1217 = vmatpush1.msra.mxu0 0.0
      %1218 = vmatprep.subr.mxu0 0.0
      %1219 = vmatpush1.msra.mxu0 0.0
      %1220 = vmatprep.subr.mxu0 0.0
      %1221 = vmatpush1.msra.mxu0 0.0
      %1222 = vmatprep.subr.mxu0 0.0
      %1223 = vmatpush1.msra.mxu0 0.0
      %1224 = vmatprep.subr.mxu0 0.0
      %1225 = vmatpush1.msra.mxu0 0.0
      %1226 = vmatprep.subr.mxu0 0.0
      %1227 = vmatpush1.msra.mxu0 0.0
      %1228 = vmatprep.subr.mxu0 0.0
      %1229 = vmatpush1.msra.mxu0 0.0
      %1230 = vmatprep.subr.mxu0 0.0
      %1231 = vmatpush1.msra.mxu0 %v1110
      %1232 = vmatprep.subr.mxu0 0.0
      %1233 = vmatpush2.msra.mxu0 0.0
      %1234 = vmatprep.subr.mxu0 0.0
      %1235 = vmatpush2.msra.mxu0 0.0
      %1236 = vmatprep.subr.mxu0 0.0
      %1237 = vmatpush2.msra.mxu0 0.0
      %1238 = vmatprep.subr.mxu0 0.0
      %1239 = vmatpush2.msra.mxu0 0.0
      %1240 = vmatprep.subr.mxu0 0.0
      %1241 = vmatpush2.msra.mxu0 0.0
      %1242 = vmatprep.subr.mxu0 0.0
      %1243 = vmatpush2.msra.mxu0 0.0
      %1244 = vmatprep.subr.mxu0 0.0
      %1245 = vmatpush2.msra.mxu0 0.0
      %1246 = vmatprep.subr.mxu0 0.0
      %1247 = vmatpush2.msra.mxu0 0.0
      %1248 = vmatprep.subr.mxu0 0.0
      %1249 = vmatpush2.msra.mxu0 0.0
      %1250 = vmatprep.subr.mxu0 0.0
      %1251 = vmatpush2.msra.mxu0 0.0
      %1252 = vmatprep.subr.mxu0 0.0
      %1253 = vmatpush2.msra.mxu0 0.0
      %1254 = vmatprep.subr.mxu0 0.0
      %1255 = vmatpush2.msra.mxu0 0.0
      %1256 = vmatprep.subr.mxu0 0.0
      %1257 = vmatpush2.msra.mxu0 0.0
      %1258 = vmatprep.subr.mxu0 0.0
      %1259 = vmatpush2.msra.mxu0 0.0
      %1260 = vmatprep.subr.mxu0 0.0
      %1261 = vmatpush2.msra.mxu0 0.0
      %1262 = vmatprep.subr.mxu0 0.0
      %1263 = vmatpush2.msra.mxu0 0.0
      %1264 = vmatprep.mubr.f32.mxu0 0.0
      %1265 = vmatmul.mubr.f32.gmra.mxu0 %v1195
      %v1266 = vpop.f32.mrf.mxu0
      %v1267 = vadd.f32 0.0, %v1266
      %v1268 = vpop.f32.mrf.mxu0
      %1269 = vmatprep.mubr.f32.mxu0 0.0
      %1270 = vmatmul.mubr.f32.gmra.mxu0 %v1198
      %v1271 = vpop.f32.mrf.mxu0
      %v1272 = vadd.f32 0.0, %v1271
      %v1273 = vpop.f32.mrf.mxu0
      %1274 = vdwg.mxu0
      %v1276 = vsel %vm347, %v1020, 0
      %v1279 = vsel %vm347, %v1025, 0
      %1281 = vmatprep.subr.mxu0 0.0
      %1282 = vmatpush1.msra.mxu0 0.0
      %1283 = vmatprep.subr.mxu0 0.0
      %1284 = vmatpush1.msra.mxu0 0.0
      %1285 = vmatprep.subr.mxu0 0.0
      %1286 = vmatpush1.msra.mxu0 0.0
      %1287 = vmatprep.subr.mxu0 0.0
      %1288 = vmatpush1.msra.mxu0 0.0
      %1289 = vmatprep.subr.mxu0 0.0
      %1290 = vmatpush1.msra.mxu0 0.0
      %1291 = vmatprep.subr.mxu0 0.0
      %1292 = vmatpush1.msra.mxu0 0.0
      %1293 = vmatprep.subr.mxu0 0.0
      %1294 = vmatpush1.msra.mxu0 0.0
      %1295 = vmatprep.subr.mxu0 0.0
      %1296 = vmatpush1.msra.mxu0 0.0
      %1297 = vmatprep.subr.mxu0 0.0
      %1298 = vmatpush1.msra.mxu0 0.0
      %1299 = vmatprep.subr.mxu0 0.0
      %1300 = vmatpush1.msra.mxu0 0.0
      %1301 = vmatprep.subr.mxu0 0.0
      %1302 = vmatpush1.msra.mxu0 0.0
      %1303 = vmatprep.subr.mxu0 0.0
      %1304 = vmatpush1.msra.mxu0 0.0
      %1305 = vmatprep.subr.mxu0 0.0
      %1306 = vmatpush1.msra.mxu0 0.0
      %1307 = vmatprep.subr.mxu0 0.0
      %1308 = vmatpush1.msra.mxu0 0.0
      %1309 = vmatprep.subr.mxu0 0.0
      %1310 = vmatpush1.msra.mxu0 0.0
      %1311 = vmatprep.subr.mxu0 0.0
      %1312 = vmatpush1.msra.mxu0 %v1111
      %1313 = vmatprep.subr.mxu0 0.0
      %1314 = vmatpush2.msra.mxu0 0.0
      %1315 = vmatprep.subr.mxu0 0.0
      %1316 = vmatpush2.msra.mxu0 0.0
      %1317 = vmatprep.subr.mxu0 0.0
      %1318 = vmatpush2.msra.mxu0 0.0
      %1319 = vmatprep.subr.mxu0 0.0
      %1320 = vmatpush2.msra.mxu0 0.0
      %1321 = vmatprep.subr.mxu0 0.0
      %1322 = vmatpush2.msra.mxu0 0.0
      %1323 = vmatprep.subr.mxu0 0.0
      %1324 = vmatpush2.msra.mxu0 0.0
      %1325 = vmatprep.subr.mxu0 0.0
      %1326 = vmatpush2.msra.mxu0 0.0
      %1327 = vmatprep.subr.mxu0 0.0
      %1328 = vmatpush2.msra.mxu0 0.0
      %1329 = vmatprep.subr.mxu0 0.0
      %1330 = vmatpush2.msra.mxu0 0.0
      %1331 = vmatprep.subr.mxu0 0.0
      %1332 = vmatpush2.msra.mxu0 0.0
      %1333 = vmatprep.subr.mxu0 0.0
      %1334 = vmatpush2.msra.mxu0 0.0
      %1335 = vmatprep.subr.mxu0 0.0
      %1336 = vmatpush2.msra.mxu0 0.0
      %1337 = vmatprep.subr.mxu0 0.0
      %1338 = vmatpush2.msra.mxu0 0.0
      %1339 = vmatprep.subr.mxu0 0.0
      %1340 = vmatpush2.msra.mxu0 0.0
      %1341 = vmatprep.subr.mxu0 0.0
      %1342 = vmatpush2.msra.mxu0 0.0
      %1343 = vmatprep.subr.mxu0 0.0
      %1344 = vmatpush2.msra.mxu0 0.0
      %1345 = vmatprep.mubr.f32.mxu0 0.0
      %1346 = vmatmul.mubr.f32.gmra.mxu0 %v1276
      %v1347 = vpop.f32.mrf.mxu0
      %v1348 = vadd.f32 0.0, %v1347
      %v1349 = vpop.f32.mrf.mxu0
      %1350 = vmatprep.mubr.f32.mxu0 0.0
      %1351 = vmatmul.mubr.f32.gmra.mxu0 %v1279
      %v1352 = vpop.f32.mrf.mxu0
      %v1353 = vadd.f32 0.0, %v1352
      %v1354 = vpop.f32.mrf.mxu0
      %1355 = vdwg.mxu0
      %v1357 = vsel %vm347, %v1101, 0
      %v1360 = vsel %vm347, %v1106, 0
      %1362 = vmatprep.subr.mxu0 0.0
      %1363 = vmatpush1.msra.mxu0 0.0
      %1364 = vmatprep.subr.mxu0 0.0
      %1365 = vmatpush1.msra.mxu0 0.0
      %1366 = vmatprep.subr.mxu0 0.0
      %1367 = vmatpush1.msra.mxu0 0.0
      %1368 = vmatprep.subr.mxu0 0.0
      %1369 = vmatpush1.msra.mxu0 0.0
      %1370 = vmatprep.subr.mxu0 0.0
      %1371 = vmatpush1.msra.mxu0 0.0
      %1372 = vmatprep.subr.mxu0 0.0
      %1373 = vmatpush1.msra.mxu0 0.0
      %1374 = vmatprep.subr.mxu0 0.0
      %1375 = vmatpush1.msra.mxu0 0.0
      %1376 = vmatprep.subr.mxu0 0.0
      %1377 = vmatpush1.msra.mxu0 0.0
      %1378 = vmatprep.subr.mxu0 0.0
      %1379 = vmatpush1.msra.mxu0 0.0
      %1380 = vmatprep.subr.mxu0 0.0
      %1381 = vmatpush1.msra.mxu0 0.0
      %1382 = vmatprep.subr.mxu0 0.0
      %1383 = vmatpush1.msra.mxu0 0.0
      %1384 = vmatprep.subr.mxu0 0.0
      %1385 = vmatpush1.msra.mxu0 0.0
      %1386 = vmatprep.subr.mxu0 0.0
      %1387 = vmatpush1.msra.mxu0 0.0
      %1388 = vmatprep.subr.mxu0 0.0
      %1389 = vmatpush1.msra.mxu0 0.0
      %1390 = vmatprep.subr.mxu0 0.0
      %1391 = vmatpush1.msra.mxu0 0.0
      %1392 = vmatprep.subr.mxu0 0.0
      %1393 = vmatpush1.msra.mxu0 %v1112
      %1394 = vmatprep.subr.mxu0 0.0
      %1395 = vmatpush2.msra.mxu0 0.0
      %1396 = vmatprep.subr.mxu0 0.0
      %1397 = vmatpush2.msra.mxu0 0.0
      %1398 = vmatprep.subr.mxu0 0.0
      %1399 = vmatpush2.msra.mxu0 0.0
      %1400 = vmatprep.subr.mxu0 0.0
      %1401 = vmatpush2.msra.mxu0 0.0
      %1402 = vmatprep.subr.mxu0 0.0
      %1403 = vmatpush2.msra.mxu0 0.0
      %1404 = vmatprep.subr.mxu0 0.0
      %1405 = vmatpush2.msra.mxu0 0.0
      %1406 = vmatprep.subr.mxu0 0.0
      %1407 = vmatpush2.msra.mxu0 0.0
      %1408 = vmatprep.subr.mxu0 0.0
      %1409 = vmatpush2.msra.mxu0 0.0
      %1410 = vmatprep.subr.mxu0 0.0
      %1411 = vmatpush2.msra.mxu0 0.0
      %1412 = vmatprep.subr.mxu0 0.0
      %1413 = vmatpush2.msra.mxu0 0.0
      %1414 = vmatprep.subr.mxu0 0.0
      %1415 = vmatpush2.msra.mxu0 0.0
      %1416 = vmatprep.subr.mxu0 0.0
      %1417 = vmatpush2.msra.mxu0 0.0
      %1418 = vmatprep.subr.mxu0 0.0
      %1419 = vmatpush2.msra.mxu0 0.0
      %1420 = vmatprep.subr.mxu0 0.0
      %1421 = vmatpush2.msra.mxu0 0.0
      %1422 = vmatprep.subr.mxu0 0.0
      %1423 = vmatpush2.msra.mxu0 0.0
      %1424 = vmatprep.subr.mxu0 0.0
      %1425 = vmatpush2.msra.mxu0 0.0
      %1426 = vmatprep.mubr.f32.mxu0 0.0
      %1427 = vmatmul.mubr.f32.gmra.mxu0 %v1357
      %v1428 = vpop.f32.mrf.mxu0
      %v1429 = vadd.f32 0.0, %v1428
      %v1430 = vpop.f32.mrf.mxu0
      %1431 = vmatprep.mubr.f32.mxu0 0.0
      %1432 = vmatmul.mubr.f32.gmra.mxu0 %v1360
      %v1433 = vpop.f32.mrf.mxu0
      %v1434 = vadd.f32 0.0, %v1433
      %v1435 = vpop.f32.mrf.mxu0
      %1436 = vdwg.mxu0
      %vm1437 = vcmask 261120
      %v1438 = vsel %vm1437, %v1186, 0.0
      %v1439 = vsel %vm1437, %v1267, 0.0
      %v1440 = vadd.f32 %v1438, %v1439
      %v1441 = vsel %vm1437, %v1348, 0.0
      %v1442 = vadd.f32 %v1440, %v1441
      %v1443 = vsel %vm1437, %v1429, 0.0
      %v1444 = vadd.f32 %v1442, %v1443
      %v1445 = vsel %vm1437, %v1191, 0.0
      %v1446 = vsel %vm1437, %v1272, 0.0
      %v1447 = vadd.f32 %v1445, %v1446
      %v1448 = vsel %vm1437, %v1353, 0.0
      %v1449 = vadd.f32 %v1447, %v1448
      %v1450 = vsel %vm1437, %v1434, 0.0
      %v1451 = vadd.f32 %v1449, %v1450
      %v1452 = vadd.f32 %v320, %v1444
      %v1453 = vadd.f32 %v321, %v1451
      %v1454 = vld [vmem:[%s4] sm:$0x1]
      %v1456 = vlaneseq
      %v1457 = vshrl.u32 %v1456, 7
      %v1458 = vsub.s32 0, %v1457
      %v1459 = vrot.slane %v1454, %v1458
      %v1461 = vadd.f32 %v1452, %v1459
      %v1462 = vadd.f32 %v1453, %v1459
      %1463 = vst.msk [vmem:[%s318] sm:$0xff] %vm1437, %v1461
      %1464 = vst.msk [vmem:[%s318 + $0x8] sm:$0xff] %vm1437, %v1462
      %s1465 = smul.u32 2, %s21
      %p1466 = scmp.lt.s32.totalorder %s20, 1
      %s1467 = scalar_select %p1466, %s20, 1
      %p1468 = scmp.lt.s32.totalorder %s1465, 1
      %s1469 = scalar_select %p1468, %s1465, 1
      %s1470 = smul.addr %s1467, 2
      %s1471 = sadd.s32 %s1469, %s1470
      %s1472 = smul.addr %s1471, 8
      %s1473 = scalar_lea.vmem %s5, %s1472
      // Predicated region
      $region41: #{eegjepa_forward.19} parent=39 // pred_check
        %p1474 = pneg %p172
      $region42: #{eegjepa_forward.19} parent=39 // pred_check_branch
        %1476 = sbr.rel (%p1474) target = $region44
      $region43: #{eegjepa_forward.19} parent=39 // pred_region
        %s1477 = smul.u32 2, %s21
      $region44: #{eegjepa_forward.19} parent=39 // pred_fallthru
        _
    $region40: #{eegjepa_forward.19} parent=5 // pred_fallthru
      _
    %p1478 = scmp.le.s32.totalorder 2, %s11
    // Predicated region
    $region45: #{eegjepa_forward.19} parent=5 // pred_check
      %p1479 = pneg %p1478
    $region46: #{eegjepa_forward.19} parent=5 // pred_check_branch
      %1481 = sbr.rel (%p1479) target = $region48
    $region47: #{eegjepa_forward.19} parent=5 // pred_region
      %s1482 = ssub.s32 %s11, 2
      // Predicated region
      $region49: #{eegjepa_forward.19} parent=47 // pred_check
        %p1483 = pneg %p178
      $region50: #{eegjepa_forward.19} parent=47 // pred_check_branch
        %1485 = sbr.rel (%p1483) target = $region52
      $region51: #{eegjepa_forward.19} parent=47 // pred_region
        %s1486 = smul.u32 2, %s23
        %p1487 = scmp.lt.s32.totalorder %s22, 1
        %s1488 = scalar_select %p1487, %s22, 1
        %p1489 = scmp.lt.s32.totalorder %s1486, 1
        %s1490 = scalar_select %p1489, %s1486, 1
        %s1491 = smul.addr %s1488, 2
        %s1492 = sadd.s32 %s1490, %s1491
        %s1493 = smul.addr %s1492, 8
        %s1494 = scalar_lea.vmem %s5, %s1493
      $region52: #{eegjepa_forward.19} parent=47 // pred_fallthru
        _
    $region48: #{eegjepa_forward.19} parent=5 // pred_fallthru
      _
  $region6: #{eegjepa_forward.19} parent=0 // loop_footer
    %s15 = sadd.s32 1, %s11
  $region7: #{eegjepa_forward.19} parent=0 // loop_footer_branch
    %10 = sbr.rel target = $region3
  $region8: #{eegjepa_forward.19} parent=0 // loop_exit
    _

// kernel: eegjepa_forward.21
$region0: #{eegjepa_forward.21}
  #allocation0 [shape = 'u32[]', space=smem, size = 0x4, offset = 0x4, fixed_abs, tag = 'smem constant byte address 0x4 - core index']
  #allocation1 [shape = 'u32[144,128]{1,0:T(1,128)}', space=vmem, size = 0x12000, scoped, tag = 'internal scratch']
  %s0 = inlined_call_operand.vmem [shape: f32[32,32], index: 0, kind: input, shape index: {}]
  %s1 = inlined_call_operand.vmem [shape: f32[1,32], index: 1, kind: input, shape index: {}]
  %s2 = inlined_call_operand.vmem [shape: f32[1,32], index: 2, kind: input, shape index: {}]
  %s3 = inlined_call_operand.vmem [shape: f32[32,32], index: 3, kind: output, shape index: {}]
  %s4 = sld [smem:[#allocation0]]
  $region22: #{eegjepa_forward.21} parent=0
    _
  %s6 = ssub.s32 1, %s4
  %s7 = scalar_select 0, %s6, %s4
  // Predicated region
  $region2: #{eegjepa_forward.21} parent=0 // pred_check
    _
  $region3: #{eegjepa_forward.21} parent=0 // pred_check_branch
    %9 = sbr.rel (0) target = $region5
  $region4: #{eegjepa_forward.21} parent=0 // pred_region
    _
  $region5: #{eegjepa_forward.21} parent=0 // pred_fallthru
    _
  // Predicated region
  $region6: #{eegjepa_forward.21} parent=0 // pred_check
    _
  $region7: #{eegjepa_forward.21} parent=0 // pred_check_branch
    %11 = sbr.rel (0) target = $region9
  $region8: #{eegjepa_forward.21} parent=0 // pred_region
    _
  $region9: #{eegjepa_forward.21} parent=0 // pred_fallthru
    _
  // Predicated region
  $region10: #{eegjepa_forward.21} parent=0 // pred_check
    _
  $region11: #{eegjepa_forward.21} parent=0 // pred_check_branch
    %13 = sbr.rel (0) target = $region13
  $region12: #{eegjepa_forward.21} parent=0 // pred_region
    _
  $region13: #{eegjepa_forward.21} parent=0 // pred_fallthru
    _
  %v14 = vld [vmem:[%s0] sm:$0xff]
  %v15 = vld [vmem:[%s0 + $0x8] sm:$0xff]
  %v16 = vld [vmem:[%s0 + $0x10] sm:$0xff]
  %v17 = vld [vmem:[%s0 + $0x18] sm:$0xff]
  %vm18 = vcmask 261120
  %v19 = vsel %vm18, %v14, 0.0
  %20 = vadd.xlane.f32.xlu0 %v19
  %v21 = vpop.xlane.xlu0 %20
  %v22 = vsel %vm18, %v15, 0.0
  %23 = vadd.xlane.f32.xlu0 %v22
  %v24 = vpop.xlane.xlu0 %23
  %v25 = vsel %vm18, %v16, 0.0
  %26 = vadd.xlane.f32.xlu0 %v25
  %v27 = vpop.xlane.xlu0 %26
  %v28 = vsel %vm18, %v17, 0.0
  %29 = vadd.xlane.f32.xlu0 %v28
  %v30 = vpop.xlane.xlu0 %29
  %v31 = vrcp.pop 32.0
  %v32 = vmul.f32 %v21, %v31
  %v33 = vmul.f32 %v24, %v31
  %v34 = vmul.f32 %v27, %v31
  %v35 = vmul.f32 %v30, %v31
  %v36 = vsub.f32 %v14, %v32
  %v37 = vsub.f32 %v15, %v33
  %v38 = vsub.f32 %v16, %v34
  %v39 = vsub.f32 %v17, %v35
  %v40 = vmul.f32 %v36, %v36
  %v41 = vmul.f32 %v37, %v37
  %v42 = vmul.f32 %v38, %v38
  %v43 = vmul.f32 %v39, %v39
  %v44 = vsel %vm18, %v40, 0.0
  %45 = vadd.xlane.f32.xlu0 %v44
  %v46 = vpop.xlane.xlu0 %45
  %v47 = vsel %vm18, %v41, 0.0
  %48 = vadd.xlane.f32.xlu0 %v47
  %v49 = vpop.xlane.xlu0 %48
  %v50 = vsel %vm18, %v42, 0.0
  %51 = vadd.xlane.f32.xlu0 %v50
  %v52 = vpop.xlane.xlu0 %51
  %v53 = vsel %vm18, %v43, 0.0
  %54 = vadd.xlane.f32.xlu0 %v53
  %v55 = vpop.xlane.xlu0 %54
  %v56 = vmul.f32 %v46, %v31
  %v57 = vmul.f32 %v49, %v31
  %v58 = vmul.f32 %v52, %v31
  %v59 = vmul.f32 %v55, %v31
  %v60 = vadd.f32 %v56, 1e-05
  %v61 = vadd.f32 %v57, 1e-05
  %v62 = vadd.f32 %v58, 1e-05
  %v63 = vadd.f32 %v59, 1e-05
  %v64 = vrsqrt.pop %v60
  %v65 = vrsqrt.pop %v61
  %v66 = vrsqrt.pop %v62
  %v67 = vrsqrt.pop %v63
  %v68 = vmul.f32 %v36, %v64
  %v69 = vmul.f32 %v37, %v65
  %v70 = vmul.f32 %v38, %v66
  %v71 = vmul.f32 %v39, %v67
  %v72 = vld [vmem:[%s1] sm:$0x1]
  %v74 = vlaneseq
  %v75 = vshrl.u32 %v74, 7
  %v76 = vsub.s32 0, %v75
  %v77 = vrot.slane %v72, %v76
  %v79 = vmul.f32 %v68, %v77
  %v80 = vmul.f32 %v69, %v77
  %v81 = vmul.f32 %v70, %v77
  %v82 = vmul.f32 %v71, %v77
  %v83 = vld [vmem:[%s2] sm:$0x1]
  %v85 = vlaneseq
  %v86 = vshrl.u32 %v85, 7
  %v87 = vsub.s32 0, %v86
  %v88 = vrot.slane %v83, %v87
  %v90 = vadd.f32 %v79, %v88
  %v91 = vadd.f32 %v80, %v88
  %v92 = vadd.f32 %v81, %v88
  %v93 = vadd.f32 %v82, %v88
  %94 = vst.msk [vmem:[%s3] sm:$0xff] %vm18, %v90
  %95 = vst.msk [vmem:[%s3 + $0x8] sm:$0xff] %vm18, %v91
  %96 = vst.msk [vmem:[%s3 + $0x10] sm:$0xff] %vm18, %v92
  %97 = vst.msk [vmem:[%s3 + $0x18] sm:$0xff] %vm18, %v93
  // Predicated region
  $region14: #{eegjepa_forward.21} parent=0 // pred_check
    _
  $region15: #{eegjepa_forward.21} parent=0 // pred_check_branch
    %99 = sbr.rel (0) target = $region17
  $region16: #{eegjepa_forward.21} parent=0 // pred_region
    _
  $region17: #{eegjepa_forward.21} parent=0 // pred_fallthru
    _
  // Predicated region
  $region18: #{eegjepa_forward.21} parent=0 // pred_check
    _
  $region19: #{eegjepa_forward.21} parent=0 // pred_check_branch
    %101 = sbr.rel (0) target = $region21
  $region20: #{eegjepa_forward.21} parent=0 // pred_region
    _
  $region21: #{eegjepa_forward.21} parent=0 // pred_fallthru
    _

// kernel: eegjepa_forward.20
$region0: #{eegjepa_forward.20}
  #allocation0 [shape = 'u32[]', space=smem, size = 0x4, offset = 0x4, fixed_abs, tag = 'smem constant byte address 0x4 - core index']
  #allocation1 [shape = 'u32[144,128]{1,0:T(1,128)}', space=vmem, size = 0x12000, scoped, tag = 'internal scratch']
  %s0 = inlined_call_operand.vmem [shape: f32[32,32], index: 0, kind: input, shape index: {}]
  %s1 = inlined_call_operand.vmem [shape: f32[1,32], index: 1, kind: input, shape index: {}]
  %s2 = inlined_call_operand.vmem [shape: f32[1,32], index: 2, kind: input, shape index: {}]
  %s3 = inlined_call_operand.vmem [shape: f32[32,128], index: 3, kind: input, shape index: {}]
  %s4 = inlined_call_operand.vmem [shape: f32[1,128], index: 4, kind: input, shape index: {}]
  %s5 = inlined_call_operand.vmem [shape: f32[128,32], index: 5, kind: input, shape index: {}]
  %s6 = inlined_call_operand.vmem [shape: f32[1,32], index: 6, kind: input, shape index: {}]
  %s7 = inlined_call_operand.vmem [shape: f32[32,32], index: 7, kind: output, shape index: {}]
  %s8 = sld [smem:[#allocation0]]
  $region38: #{eegjepa_forward.20} parent=0
    _
  %s10 = ssub.s32 1, %s8
  %s11 = scalar_select 0, %s10, %s8
  // Predicated region
  $region2: #{eegjepa_forward.20} parent=0 // pred_check
    _
  $region3: #{eegjepa_forward.20} parent=0 // pred_check_branch
    %13 = sbr.rel (0) target = $region5
  $region4: #{eegjepa_forward.20} parent=0 // pred_region
    _
  $region5: #{eegjepa_forward.20} parent=0 // pred_fallthru
    _
  // Predicated region
  $region6: #{eegjepa_forward.20} parent=0 // pred_check
    _
  $region7: #{eegjepa_forward.20} parent=0 // pred_check_branch
    %15 = sbr.rel (0) target = $region9
  $region8: #{eegjepa_forward.20} parent=0 // pred_region
    _
  $region9: #{eegjepa_forward.20} parent=0 // pred_fallthru
    _
  // Predicated region
  $region10: #{eegjepa_forward.20} parent=0 // pred_check
    _
  $region11: #{eegjepa_forward.20} parent=0 // pred_check_branch
    %17 = sbr.rel (0) target = $region13
  $region12: #{eegjepa_forward.20} parent=0 // pred_region
    _
  $region13: #{eegjepa_forward.20} parent=0 // pred_fallthru
    _
  // Predicated region
  $region14: #{eegjepa_forward.20} parent=0 // pred_check
    _
  $region15: #{eegjepa_forward.20} parent=0 // pred_check_branch
    %19 = sbr.rel (0) target = $region17
  $region16: #{eegjepa_forward.20} parent=0 // pred_region
    _
  $region17: #{eegjepa_forward.20} parent=0 // pred_fallthru
    _
  // Predicated region
  $region18: #{eegjepa_forward.20} parent=0 // pred_check
    _
  $region19: #{eegjepa_forward.20} parent=0 // pred_check_branch
    %21 = sbr.rel (0) target = $region21
  $region20: #{eegjepa_forward.20} parent=0 // pred_region
    _
  $region21: #{eegjepa_forward.20} parent=0 // pred_fallthru
    _
  // Predicated region
  $region22: #{eegjepa_forward.20} parent=0 // pred_check
    _
  $region23: #{eegjepa_forward.20} parent=0 // pred_check_branch
    %23 = sbr.rel (0) target = $region25
  $region24: #{eegjepa_forward.20} parent=0 // pred_region
    _
  $region25: #{eegjepa_forward.20} parent=0 // pred_fallthru
    _
  // Predicated region
  $region26: #{eegjepa_forward.20} parent=0 // pred_check
    _
  $region27: #{eegjepa_forward.20} parent=0 // pred_check_branch
    %25 = sbr.rel (0) target = $region29
  $region28: #{eegjepa_forward.20} parent=0 // pred_region
    _
  $region29: #{eegjepa_forward.20} parent=0 // pred_fallthru
    _
  %v26 = vld [vmem:[%s0] sm:$0xff]
  %v27 = vld [vmem:[%s0 + $0x8] sm:$0xff]
  %v28 = vld [vmem:[%s0 + $0x10] sm:$0xff]
  %v29 = vld [vmem:[%s0 + $0x18] sm:$0xff]
  %vm30 = vcmask 261120
  %v31 = vsel %vm30, %v26, 0.0
  %32 = vadd.xlane.f32.xlu0 %v31
  %v33 = vpop.xlane.xlu0 %32
  %v34 = vsel %vm30, %v27, 0.0
  %35 = vadd.xlane.f32.xlu0 %v34
  %v36 = vpop.xlane.xlu0 %35
  %v37 = vsel %vm30, %v28, 0.0
  %38 = vadd.xlane.f32.xlu0 %v37
  %v39 = vpop.xlane.xlu0 %38
  %v40 = vsel %vm30, %v29, 0.0
  %41 = vadd.xlane.f32.xlu0 %v40
  %v42 = vpop.xlane.xlu0 %41
  %v43 = vrcp.pop 32.0
  %v44 = vmul.f32 %v33, %v43
  %v45 = vmul.f32 %v36, %v43
  %v46 = vmul.f32 %v39, %v43
  %v47 = vmul.f32 %v42, %v43
  %v48 = vsub.f32 %v26, %v44
  %v49 = vsub.f32 %v27, %v45
  %v50 = vsub.f32 %v28, %v46
  %v51 = vsub.f32 %v29, %v47
  %v52 = vmul.f32 %v48, %v48
  %v53 = vmul.f32 %v49, %v49
  %v54 = vmul.f32 %v50, %v50
  %v55 = vmul.f32 %v51, %v51
  %v56 = vsel %vm30, %v52, 0.0
  %57 = vadd.xlane.f32.xlu0 %v56
  %v58 = vpop.xlane.xlu0 %57
  %v59 = vsel %vm30, %v53, 0.0
  %60 = vadd.xlane.f32.xlu0 %v59
  %v61 = vpop.xlane.xlu0 %60
  %v62 = vsel %vm30, %v54, 0.0
  %63 = vadd.xlane.f32.xlu0 %v62
  %v64 = vpop.xlane.xlu0 %63
  %v65 = vsel %vm30, %v55, 0.0
  %66 = vadd.xlane.f32.xlu0 %v65
  %v67 = vpop.xlane.xlu0 %66
  %v68 = vmul.f32 %v58, %v43
  %v69 = vmul.f32 %v61, %v43
  %v70 = vmul.f32 %v64, %v43
  %v71 = vmul.f32 %v67, %v43
  %v72 = vadd.f32 %v68, 1e-05
  %v73 = vadd.f32 %v69, 1e-05
  %v74 = vadd.f32 %v70, 1e-05
  %v75 = vadd.f32 %v71, 1e-05
  %v76 = vrsqrt.pop %v72
  %v77 = vrsqrt.pop %v73
  %v78 = vrsqrt.pop %v74
  %v79 = vrsqrt.pop %v75
  %v80 = vmul.f32 %v48, %v76
  %v81 = vmul.f32 %v49, %v77
  %v82 = vmul.f32 %v50, %v78
  %v83 = vmul.f32 %v51, %v79
  %v84 = vld [vmem:[%s1] sm:$0x1]
  %v86 = vlaneseq
  %v87 = vshrl.u32 %v86, 7
  %v88 = vsub.s32 0, %v87
  %v89 = vrot.slane %v84, %v88
  %v91 = vmul.f32 %v80, %v89
  %v92 = vmul.f32 %v81, %v89
  %v93 = vmul.f32 %v82, %v89
  %v94 = vmul.f32 %v83, %v89
  %v95 = vld [vmem:[%s2] sm:$0x1]
  %v97 = vlaneseq
  %v98 = vshrl.u32 %v97, 7
  %v99 = vsub.s32 0, %v98
  %v100 = vrot.slane %v95, %v99
  %v102 = vadd.f32 %v91, %v100
  %v103 = vadd.f32 %v92, %v100
  %v104 = vadd.f32 %v93, %v100
  %v105 = vadd.f32 %v94, %v100
  %v106 = vld [vmem:[%s3] sm:$0xff]
  %v107 = vld [vmem:[%s3 + $0x8] sm:$0xff]
  %v108 = vld [vmem:[%s3 + $0x10] sm:$0xff]
  %v109 = vld [vmem:[%s3 + $0x18] sm:$0xff]
  %v110 = vld [vmem:[%s4] sm:$0x1]
  %v112 = vlaneseq
  %v113 = vshrl.u32 %v112, 7
  %v114 = vsub.s32 0, %v113
  %v115 = vrot.slane %v110, %v114
  %v118 = vsel %vm30, %v102, 0
  %v121 = vsel %vm30, %v103, 0
  %v124 = vsel %vm30, %v104, 0
  %v127 = vsel %vm30, %v105, 0
  %129 = vmatprep.subr.mxu0 0.0
  %130 = vmatpush1.msra.mxu0 0.0
  %131 = vmatprep.subr.mxu0 0.0
  %132 = vmatpush1.msra.mxu0 0.0
  %133 = vmatprep.subr.mxu0 0.0
  %134 = vmatpush1.msra.mxu0 0.0
  %135 = vmatprep.subr.mxu0 0.0
  %136 = vmatpush1.msra.mxu0 0.0
  %137 = vmatprep.subr.mxu0 0.0
  %138 = vmatpush1.msra.mxu0 0.0
  %139 = vmatprep.subr.mxu0 0.0
  %140 = vmatpush1.msra.mxu0 0.0
  %141 = vmatprep.subr.mxu0 0.0
  %142 = vmatpush1.msra.mxu0 0.0
  %143 = vmatprep.subr.mxu0 0.0
  %144 = vmatpush1.msra.mxu0 0.0
  %145 = vmatprep.subr.mxu0 0.0
  %146 = vmatpush1.msra.mxu0 0.0
  %147 = vmatprep.subr.mxu0 0.0
  %148 = vmatpush1.msra.mxu0 0.0
  %149 = vmatprep.subr.mxu0 0.0
  %150 = vmatpush1.msra.mxu0 0.0
  %151 = vmatprep.subr.mxu0 0.0
  %152 = vmatpush1.msra.mxu0 0.0
  %153 = vmatprep.subr.mxu0 0.0
  %154 = vmatpush1.msra.mxu0 %v109
  %155 = vmatprep.subr.mxu0 0.0
  %156 = vmatpush1.msra.mxu0 %v108
  %157 = vmatprep.subr.mxu0 0.0
  %158 = vmatpush1.msra.mxu0 %v107
  %159 = vmatprep.subr.mxu0 0.0
  %160 = vmatpush1.msra.mxu0 %v106
  %161 = vmatprep.subr.mxu0 0.0
  %162 = vmatpush2.msra.mxu0 0.0
  %163 = vmatprep.subr.mxu0 0.0
  %164 = vmatpush2.msra.mxu0 0.0
  %165 = vmatprep.subr.mxu0 0.0
  %166 = vmatpush2.msra.mxu0 0.0
  %167 = vmatprep.subr.mxu0 0.0
  %168 = vmatpush2.msra.mxu0 0.0
  %169 = vmatprep.subr.mxu0 0.0
  %170 = vmatpush2.msra.mxu0 0.0
  %171 = vmatprep.subr.mxu0 0.0
  %172 = vmatpush2.msra.mxu0 0.0
  %173 = vmatprep.subr.mxu0 0.0
  %174 = vmatpush2.msra.mxu0 0.0
  %175 = vmatprep.subr.mxu0 0.0
  %176 = vmatpush2.msra.mxu0 0.0
  %177 = vmatprep.subr.mxu0 0.0
  %178 = vmatpush2.msra.mxu0 0.0
  %179 = vmatprep.subr.mxu0 0.0
  %180 = vmatpush2.msra.mxu0 0.0
  %181 = vmatprep.subr.mxu0 0.0
  %182 = vmatpush2.msra.mxu0 0.0
  %183 = vmatprep.subr.mxu0 0.0
  %184 = vmatpush2.msra.mxu0 0.0
  %185 = vmatprep.subr.mxu0 0.0
  %186 = vmatpush2.msra.mxu0 0.0
  %187 = vmatprep.subr.mxu0 0.0
  %188 = vmatpush2.msra.mxu0 0.0
  %189 = vmatprep.subr.mxu0 0.0
  %190 = vmatpush2.msra.mxu0 0.0
  %191 = vmatprep.subr.mxu0 0.0
  %192 = vmatpush2.msra.mxu0 0.0
  %193 = vmatprep.mubr.f32.mxu0 0.0
  %194 = vmatmul.mubr.f32.gmra.mxu0 %v118
  %v195 = vpop.f32.mrf.mxu0
  %v196 = vadd.f32 %v115, %v195
  %v197 = vpop.f32.mrf.mxu0
  %198 = vmatprep.mubr.f32.mxu0 0.0
  %199 = vmatmul.mubr.f32.gmra.mxu0 %v121
  %v200 = vpop.f32.mrf.mxu0
  %v201 = vadd.f32 %v115, %v200
  %v202 = vpop.f32.mrf.mxu0
  %203 = vmatprep.mubr.f32.mxu0 0.0
  %204 = vmatmul.mubr.f32.gmra.mxu0 %v124
  %v205 = vpop.f32.mrf.mxu0
  %v206 = vadd.f32 %v115, %v205
  %v207 = vpop.f32.mrf.mxu0
  %208 = vmatprep.mubr.f32.mxu0 0.0
  %209 = vmatmul.mubr.f32.gmra.mxu0 %v127
  %v210 = vpop.f32.mrf.mxu0
  %v211 = vadd.f32 %v115, %v210
  %v212 = vpop.f32.mrf.mxu0
  %213 = vdwg.mxu0
  %v214 = vmul.f32 %v196, 0.70710677
  %v215 = vmul.f32 %v201, 0.70710677
  %v216 = vmul.f32 %v206, 0.70710677
  %v217 = vmul.f32 %v211, 0.70710677
  %v218 = vand.u32 2147483647, %v214
  %v219 = vand.u32 2147483647, %v215
  %v220 = vand.u32 2147483647, %v216
  %v221 = vand.u32 2147483647, %v217
  %v222 = vmul.f32 %v218, 0.3275911
  %v223 = vmul.f32 %v219, 0.3275911
  %v224 = vmul.f32 %v220, 0.3275911
  %v225 = vmul.f32 %v221, 0.3275911
  %v226 = vadd.f32 %v222, 1.0
  %v227 = vadd.f32 %v223, 1.0
  %v228 = vadd.f32 %v224, 1.0
  %v229 = vadd.f32 %v225, 1.0
  %v230 = vrcp.pop %v226
  %v231 = vmul.f32 1.0, %v230
  %v232 = vrcp.pop %v227
  %v233 = vmul.f32 1.0, %v232
  %v234 = vrcp.pop %v228
  %v235 = vmul.f32 1.0, %v234
  %v236 = vrcp.pop %v229
  %v237 = vmul.f32 1.0, %v236
  %v238 = vmul.f32 %v231, 1.0614054
  %v239 = vmul.f32 %v233, 1.0614054
  %v240 = vmul.f32 %v235, 1.0614054
  %v241 = vmul.f32 %v237, 1.0614054
  %v242 = vsub.f32 %v238, 1.4531521
  %v243 = vsub.f32 %v239, 1.4531521
  %v244 = vsub.f32 %v240, 1.4531521
  %v245 = vsub.f32 %v241, 1.4531521
  %v246 = vmul.f32 %v242, %v231
  %v247 = vmul.f32 %v243, %v233
  %v248 = vmul.f32 %v244, %v235
  %v249 = vmul.f32 %v245, %v237
  %v250 = vadd.f32 %v246, 1.4214138
  %v251 = vadd.f32 %v247, 1.4214138
  %v252 = vadd.f32 %v248, 1.4214138
  %v253 = vadd.f32 %v249, 1.4214138
  %v254 = vmul.f32 %v250, %v231
  %v255 = vmul.f32 %v251, %v233
  %v256 = vmul.f32 %v252, %v235
  %v257 = vmul.f32 %v253, %v237
  %v258 = vsub.f32 %v254, 0.28449672
  %v259 = vsub.f32 %v255, 0.28449672
  %v260 = vsub.f32 %v256, 0.28449672
  %v261 = vsub.f32 %v257, 0.28449672
  %v262 = vmul.f32 %v258, %v231
  %v263 = vmul.f32 %v259, %v233
  %v264 = vmul.f32 %v260, %v235
  %v265 = vmul.f32 %v261, %v237
  %v266 = vadd.f32 %v262, 0.2548296
  %v267 = vadd.f32 %v263, 0.2548296
  %v268 = vadd.f32 %v264, 0.2548296
  %v269 = vadd.f32 %v265, 0.2548296
  %v270 = vmul.f32 %v266, %v231
  %v271 = vmul.f32 %v267, %v233
  %v272 = vmul.f32 %v268, %v235
  %v273 = vmul.f32 %v269, %v237
  %v274 = vsub.f32 0.0, %v218
  %v275 = vsub.f32 0.0, %v219
  %v276 = vsub.f32 0.0, %v220
  %v277 = vsub.f32 0.0, %v221
  %v278 = vmul.f32 %v274, %v218
  %v279 = vmul.f32 %v275, %v219
  %v280 = vmul.f32 %v276, %v220
  %v281 = vmul.f32 %v277, %v221
  %v282 = vmul.f32 %v278, 1.442695
  %v283 = vpow.pop %v282
  %v284 = vmul.f32 %v279, 1.442695
  %v285 = vpow.pop %v284
  %v286 = vmul.f32 %v280, 1.442695
  %v287 = vpow.pop %v286
  %v288 = vmul.f32 %v281, 1.442695
  %v289 = vpow.pop %v288
  %v290 = vmul.f32 %v270, %v283
  %v291 = vmul.f32 %v271, %v285
  %v292 = vmul.f32 %v272, %v287
  %v293 = vmul.f32 %v273, %v289
  %v294 = vsub.f32 1.0, %v290
  %v295 = vsub.f32 1.0, %v291
  %v296 = vsub.f32 1.0, %v292
  %v297 = vsub.f32 1.0, %v293
  %vm298 = vcmp.ge.f32.partialorder %v214, 0.0
  %vm299 = vcmp.ge.f32.partialorder %v215, 0.0
  %vm300 = vcmp.ge.f32.partialorder %v216, 0.0
  %vm301 = vcmp.ge.f32.partialorder %v217, 0.0
  %v302 = vsub.f32 0.0, %v294
  %v303 = vsub.f32 0.0, %v295
  %v304 = vsub.f32 0.0, %v296
  %v305 = vsub.f32 0.0, %v297
  %v306 = vsel %vm298, %v294, %v302
  %v307 = vsel %vm299, %v295, %v303
  %v308 = vsel %vm300, %v296, %v304
  %v309 = vsel %vm301, %v297, %v305
  %v310 = vmul.f32 %v196, 0.5
  %v311 = vmul.f32 %v201, 0.5
  %v312 = vmul.f32 %v206, 0.5
  %v313 = vmul.f32 %v211, 0.5
  %v314 = vadd.f32 %v306, 1.0
  %v315 = vadd.f32 %v307, 1.0
  %v316 = vadd.f32 %v308, 1.0
  %v317 = vadd.f32 %v309, 1.0
  %v318 = vmul.f32 %v310, %v314
  %v319 = vmul.f32 %v311, %v315
  %v320 = vmul.f32 %v312, %v316
  %v321 = vmul.f32 %v313, %v317
  %v322 = vld [vmem:[%s5] sm:$0xff]
  %v323 = vld [vmem:[%s5 + $0x8] sm:$0xff]
  %v324 = vld [vmem:[%s5 + $0x10] sm:$0xff]
  %v325 = vld [vmem:[%s5 + $0x18] sm:$0xff]
  %v326 = vld [vmem:[%s5 + $0x20] sm:$0xff]
  %v327 = vld [vmem:[%s5 + $0x28] sm:$0xff]
  %v328 = vld [vmem:[%s5 + $0x30] sm:$0xff]
  %v329 = vld [vmem:[%s5 + $0x38] sm:$0xff]
  %v330 = vld [vmem:[%s5 + $0x40] sm:$0xff]
  %v331 = vld [vmem:[%s5 + $0x48] sm:$0xff]
  %v332 = vld [vmem:[%s5 + $0x50] sm:$0xff]
  %v333 = vld [vmem:[%s5 + $0x58] sm:$0xff]
  %v334 = vld [vmem:[%s5 + $0x60] sm:$0xff]
  %v335 = vld [vmem:[%s5 + $0x68] sm:$0xff]
  %v336 = vld [vmem:[%s5 + $0x70] sm:$0xff]
  %v337 = vld [vmem:[%s5 + $0x78] sm:$0xff]
  %v338 = vld [vmem:[%s6] sm:$0x1]
  %v340 = vlaneseq
  %v341 = vshrl.u32 %v340, 7
  %v342 = vsub.s32 0, %v341
  %v343 = vrot.slane %v338, %v342
  %345 = vmatprep.subr.mxu0 0.0
  %346 = vmatpush1.msra.mxu0 %v337
  %347 = vmatprep.subr.mxu0 0.0
  %348 = vmatpush1.msra.mxu0 %v336
  %349 = vmatprep.subr.mxu0 0.0
  %350 = vmatpush1.msra.mxu0 %v335
  %351 = vmatprep.subr.mxu0 0.0
  %352 = vmatpush1.msra.mxu0 %v334
  %353 = vmatprep.subr.mxu0 0.0
  %354 = vmatpush1.msra.mxu0 %v333
  %355 = vmatprep.subr.mxu0 0.0
  %356 = vmatpush1.msra.mxu0 %v332
  %357 = vmatprep.subr.mxu0 0.0
  %358 = vmatpush1.msra.mxu0 %v331
  %359 = vmatprep.subr.mxu0 0.0
  %360 = vmatpush1.msra.mxu0 %v330
  %361 = vmatprep.subr.mxu0 0.0
  %362 = vmatpush1.msra.mxu0 %v329
  %363 = vmatprep.subr.mxu0 0.0
  %364 = vmatpush1.msra.mxu0 %v328
  %365 = vmatprep.subr.mxu0 0.0
  %366 = vmatpush1.msra.mxu0 %v327
  %367 = vmatprep.subr.mxu0 0.0
  %368 = vmatpush1.msra.mxu0 %v326
  %369 = vmatprep.subr.mxu0 0.0
  %370 = vmatpush1.msra.mxu0 %v325
  %371 = vmatprep.subr.mxu0 0.0
  %372 = vmatpush1.msra.mxu0 %v324
  %373 = vmatprep.subr.mxu0 0.0
  %374 = vmatpush1.msra.mxu0 %v323
  %375 = vmatprep.subr.mxu0 0.0
  %376 = vmatpush1.msra.mxu0 %v322
  %377 = vmatprep.subr.mxu0 0.0
  %378 = vmatpush2.msra.mxu0 0.0
  %379 = vmatprep.subr.mxu0 0.0
  %380 = vmatpush2.msra.mxu0 0.0
  %381 = vmatprep.subr.mxu0 0.0
  %382 = vmatpush2.msra.mxu0 0.0
  %383 = vmatprep.subr.mxu0 0.0
  %384 = vmatpush2.msra.mxu0 0.0
  %385 = vmatprep.subr.mxu0 0.0
  %386 = vmatpush2.msra.mxu0 0.0
  %387 = vmatprep.subr.mxu0 0.0
  %388 = vmatpush2.msra.mxu0 0.0
  %389 = vmatprep.subr.mxu0 0.0
  %390 = vmatpush2.msra.mxu0 0.0
  %391 = vmatprep.subr.mxu0 0.0
  %392 = vmatpush2.msra.mxu0 0.0
  %393 = vmatprep.subr.mxu0 0.0
  %394 = vmatpush2.msra.mxu0 0.0
  %395 = vmatprep.subr.mxu0 0.0
  %396 = vmatpush2.msra.mxu0 0.0
  %397 = vmatprep.subr.mxu0 0.0
  %398 = vmatpush2.msra.mxu0 0.0
  %399 = vmatprep.subr.mxu0 0.0
  %400 = vmatpush2.msra.mxu0 0.0
  %401 = vmatprep.subr.mxu0 0.0
  %402 = vmatpush2.msra.mxu0 0.0
  %403 = vmatprep.subr.mxu0 0.0
  %404 = vmatpush2.msra.mxu0 0.0
  %405 = vmatprep.subr.mxu0 0.0
  %406 = vmatpush2.msra.mxu0 0.0
  %407 = vmatprep.subr.mxu0 0.0
  %408 = vmatpush2.msra.mxu0 0.0
  %409 = vmatprep.mubr.f32.mxu0 0.0
  %410 = vmatmul.mubr.f32.gmra.mxu0 %v318
  %v411 = vpop.f32.mrf.mxu0
  %v412 = vadd.f32 %v343, %v411
  %v413 = vpop.f32.mrf.mxu0
  %414 = vmatprep.mubr.f32.mxu0 0.0
  %415 = vmatmul.mubr.f32.gmra.mxu0 %v319
  %v416 = vpop.f32.mrf.mxu0
  %v417 = vadd.f32 %v343, %v416
  %v418 = vpop.f32.mrf.mxu0
  %419 = vmatprep.mubr.f32.mxu0 0.0
  %420 = vmatmul.mubr.f32.gmra.mxu0 %v320
  %v421 = vpop.f32.mrf.mxu0
  %v422 = vadd.f32 %v343, %v421
  %v423 = vpop.f32.mrf.mxu0
  %424 = vmatprep.mubr.f32.mxu0 0.0
  %425 = vmatmul.mubr.f32.gmra.mxu0 %v321
  %v426 = vpop.f32.mrf.mxu0
  %v427 = vadd.f32 %v343, %v426
  %v428 = vpop.f32.mrf.mxu0
  %429 = vdwg.mxu0
  %v430 = vadd.f32 %v26, %v412
  %v431 = vadd.f32 %v27, %v417
  %v432 = vadd.f32 %v28, %v422
  %v433 = vadd.f32 %v29, %v427
  %434 = vst.msk [vmem:[%s7] sm:$0xff] %vm30, %v430
  %435 = vst.msk [vmem:[%s7 + $0x8] sm:$0xff] %vm30, %v431
  %436 = vst.msk [vmem:[%s7 + $0x10] sm:$0xff] %vm30, %v432
  %437 = vst.msk [vmem:[%s7 + $0x18] sm:$0xff] %vm30, %v433
  // Predicated region
  $region30: #{eegjepa_forward.20} parent=0 // pred_check
    _
  $region31: #{eegjepa_forward.20} parent=0 // pred_check_branch
    %439 = sbr.rel (0) target = $region33
  $region32: #{eegjepa_forward.20} parent=0 // pred_region
    _
  $region33: #{eegjepa_forward.20} parent=0 // pred_fallthru
    _
  // Predicated region
  $region34: #{eegjepa_forward.20} parent=0 // pred_check
    _
  $region35: #{eegjepa_forward.20} parent=0 // pred_check_branch
    %441 = sbr.rel (0) target = $region37
  $region36: #{eegjepa_forward.20} parent=0 // pred_region
    _
  $region37: #{eegjepa_forward.20} parent=0 // pred_fallthru
    _

// kernel: eegjepa_forward.22
$region0: #{eegjepa_forward.22}
  #allocation0 [shape = 'u32[]', space=smem, size = 0x4, offset = 0x4, fixed_abs, tag = 'smem constant byte address 0x4 - core index']
  #allocation1 [shape = 'u32[144,128]{1,0:T(1,128)}', space=vmem, size = 0x12000, scoped, tag = 'internal scratch']
  %s0 = inlined_call_operand.vmem [shape: f32[32,32], index: 0, kind: input, shape index: {}]
  %s1 = inlined_call_operand.vmem [shape: f32[32,16], index: 1, kind: input, shape index: {}]
  %s2 = inlined_call_operand.vmem [shape: f32[1,16], index: 2, kind: input, shape index: {}]
  %s3 = inlined_call_operand.vmem [shape: f32[32,16], index: 3, kind: output, shape index: {}]
  %s4 = sld [smem:[#allocation0]]
  $region22: #{eegjepa_forward.22} parent=0
    _
  %s6 = ssub.s32 1, %s4
  %s7 = scalar_select 0, %s6, %s4
  // Predicated region
  $region2: #{eegjepa_forward.22} parent=0 // pred_check
    _
  $region3: #{eegjepa_forward.22} parent=0 // pred_check_branch
    %9 = sbr.rel (0) target = $region5
  $region4: #{eegjepa_forward.22} parent=0 // pred_region
    _
  $region5: #{eegjepa_forward.22} parent=0 // pred_fallthru
    _
  // Predicated region
  $region6: #{eegjepa_forward.22} parent=0 // pred_check
    _
  $region7: #{eegjepa_forward.22} parent=0 // pred_check_branch
    %11 = sbr.rel (0) target = $region9
  $region8: #{eegjepa_forward.22} parent=0 // pred_region
    _
  $region9: #{eegjepa_forward.22} parent=0 // pred_fallthru
    _
  // Predicated region
  $region10: #{eegjepa_forward.22} parent=0 // pred_check
    _
  $region11: #{eegjepa_forward.22} parent=0 // pred_check_branch
    %13 = sbr.rel (0) target = $region13
  $region12: #{eegjepa_forward.22} parent=0 // pred_region
    _
  $region13: #{eegjepa_forward.22} parent=0 // pred_fallthru
    _
  %v14 = vld [vmem:[%s0] sm:$0xff]
  %v15 = vld [vmem:[%s0 + $0x8] sm:$0xff]
  %v16 = vld [vmem:[%s0 + $0x10] sm:$0xff]
  %v17 = vld [vmem:[%s0 + $0x18] sm:$0xff]
  %v18 = vld [vmem:[%s1] sm:$0xff]
  %v19 = vld [vmem:[%s1 + $0x8] sm:$0xff]
  %v20 = vld [vmem:[%s1 + $0x10] sm:$0xff]
  %v21 = vld [vmem:[%s1 + $0x18] sm:$0xff]
  %v22 = vld [vmem:[%s2] sm:$0x1]
  %v24 = vlaneseq
  %v25 = vshrl.u32 %v24, 7
  %v26 = vsub.s32 0, %v25
  %v27 = vrot.slane %v22, %v26
  %vm29 = vcmask 261120
  %v31 = vsel %vm29, %v14, 0
  %v34 = vsel %vm29, %v15, 0
  %v37 = vsel %vm29, %v16, 0
  %v40 = vsel %vm29, %v17, 0
  %42 = vmatprep.subr.mxu0 0.0
  %43 = vmatpush1.msra.mxu0 0.0
  %44 = vmatprep.subr.mxu0 0.0
  %45 = vmatpush1.msra.mxu0 0.0
  %46 = vmatprep.subr.mxu0 0.0
  %47 = vmatpush1.msra.mxu0 0.0
  %48 = vmatprep.subr.mxu0 0.0
  %49 = vmatpush1.msra.mxu0 0.0
  %50 = vmatprep.subr.mxu0 0.0
  %51 = vmatpush1.msra.mxu0 0.0
  %52 = vmatprep.subr.mxu0 0.0
  %53 = vmatpush1.msra.mxu0 0.0
  %54 = vmatprep.subr.mxu0 0.0
  %55 = vmatpush1.msra.mxu0 0.0
  %56 = vmatprep.subr.mxu0 0.0
  %57 = vmatpush1.msra.mxu0 0.0
  %58 = vmatprep.subr.mxu0 0.0
  %59 = vmatpush1.msra.mxu0 0.0
  %60 = vmatprep.subr.mxu0 0.0
  %61 = vmatpush1.msra.mxu0 0.0
  %62 = vmatprep.subr.mxu0 0.0
  %63 = vmatpush1.msra.mxu0 0.0
  %64 = vmatprep.subr.mxu0 0.0
  %65 = vmatpush1.msra.mxu0 0.0
  %66 = vmatprep.subr.mxu0 0.0
  %67 = vmatpush1.msra.mxu0 %v21
  %68 = vmatprep.subr.mxu0 0.0
  %69 = vmatpush1.msra.mxu0 %v20
  %70 = vmatprep.subr.mxu0 0.0
  %71 = vmatpush1.msra.mxu0 %v19
  %72 = vmatprep.subr.mxu0 0.0
  %73 = vmatpush1.msra.mxu0 %v18
  %74 = vmatprep.subr.mxu0 0.0
  %75 = vmatpush2.msra.mxu0 0.0
  %76 = vmatprep.subr.mxu0 0.0
  %77 = vmatpush2.msra.mxu0 0.0
  %78 = vmatprep.subr.mxu0 0.0
  %79 = vmatpush2.msra.mxu0 0.0
  %80 = vmatprep.subr.mxu0 0.0
  %81 = vmatpush2.msra.mxu0 0.0
  %82 = vmatprep.subr.mxu0 0.0
  %83 = vmatpush2.msra.mxu0 0.0
  %84 = vmatprep.subr.mxu0 0.0
  %85 = vmatpush2.msra.mxu0 0.0
  %86 = vmatprep.subr.mxu0 0.0
  %87 = vmatpush2.msra.mxu0 0.0
  %88 = vmatprep.subr.mxu0 0.0
  %89 = vmatpush2.msra.mxu0 0.0
  %90 = vmatprep.subr.mxu0 0.0
  %91 = vmatpush2.msra.mxu0 0.0
  %92 = vmatprep.subr.mxu0 0.0
  %93 = vmatpush2.msra.mxu0 0.0
  %94 = vmatprep.subr.mxu0 0.0
  %95 = vmatpush2.msra.mxu0 0.0
  %96 = vmatprep.subr.mxu0 0.0
  %97 = vmatpush2.msra.mxu0 0.0
  %98 = vmatprep.subr.mxu0 0.0
  %99 = vmatpush2.msra.mxu0 0.0
  %100 = vmatprep.subr.mxu0 0.0
  %101 = vmatpush2.msra.mxu0 0.0
  %102 = vmatprep.subr.mxu0 0.0
  %103 = vmatpush2.msra.mxu0 0.0
  %104 = vmatprep.subr.mxu0 0.0
  %105 = vmatpush2.msra.mxu0 0.0
  %106 = vmatprep.mubr.f32.mxu0 0.0
  %107 = vmatmul.mubr.f32.gmra.mxu0 %v31
  %v108 = vpop.f32.mrf.mxu0
  %v109 = vadd.f32 %v27, %v108
  %v110 = vpop.f32.mrf.mxu0
  %111 = vmatprep.mubr.f32.mxu0 0.0
  %112 = vmatmul.mubr.f32.gmra.mxu0 %v34
  %v113 = vpop.f32.mrf.mxu0
  %v114 = vadd.f32 %v27, %v113
  %v115 = vpop.f32.mrf.mxu0
  %116 = vmatprep.mubr.f32.mxu0 0.0
  %117 = vmatmul.mubr.f32.gmra.mxu0 %v37
  %v118 = vpop.f32.mrf.mxu0
  %v119 = vadd.f32 %v27, %v118
  %v120 = vpop.f32.mrf.mxu0
  %121 = vmatprep.mubr.f32.mxu0 0.0
  %122 = vmatmul.mubr.f32.gmra.mxu0 %v40
  %v123 = vpop.f32.mrf.mxu0
  %v124 = vadd.f32 %v27, %v123
  %v125 = vpop.f32.mrf.mxu0
  %126 = vdwg.mxu0
  %vm127 = vcmask 130048
  %128 = vst.msk [vmem:[%s3] sm:$0xff] %vm127, %v109
  %129 = vst.msk [vmem:[%s3 + $0x8] sm:$0xff] %vm127, %v114
  %130 = vst.msk [vmem:[%s3 + $0x10] sm:$0xff] %vm127, %v119
  %131 = vst.msk [vmem:[%s3 + $0x18] sm:$0xff] %vm127, %v124
  // Predicated region
  $region14: #{eegjepa_forward.22} parent=0 // pred_check
    _
  $region15: #{eegjepa_forward.22} parent=0 // pred_check_branch
    %133 = sbr.rel (0) target = $region17
  $region16: #{eegjepa_forward.22} parent=0 // pred_region
    _
  $region17: #{eegjepa_forward.22} parent=0 // pred_fallthru
    _
  // Predicated region
  $region18: #{eegjepa_forward.22} parent=0 // pred_check
    _
  $region19: #{eegjepa_forward.22} parent=0 // pred_check_branch
    %135 = sbr.rel (0) target = $region21
  $region20: #{eegjepa_forward.22} parent=0 // pred_region
    _
  $region21: #{eegjepa_forward.22} parent=0 // pred_fallthru
    _

// kernel: eegjepa_forward.23
$region0: #{eegjepa_forward.23}
  #allocation0 [shape = 'u32[]', space=smem, size = 0x4, offset = 0x4, fixed_abs, tag = 'smem constant byte address 0x4 - core index']
  #allocation1 [shape = 'u32[144,128]{1,0:T(1,128)}', space=vmem, size = 0x12000, scoped, tag = 'internal scratch']
  %s0 = inlined_call_operand.vmem [shape: f32[64,16], index: 0, kind: input, shape index: {}]
  %s1 = inlined_call_operand.vmem [shape: f32[1,16], index: 1, kind: input, shape index: {}]
  %s2 = inlined_call_operand.vmem [shape: f32[1,16], index: 2, kind: input, shape index: {}]
  %s3 = inlined_call_operand.vmem [shape: f32[16,48], index: 3, kind: input, shape index: {}]
  %s4 = inlined_call_operand.vmem [shape: f32[1,48], index: 4, kind: input, shape index: {}]
  %s5 = inlined_call_operand.vmem [shape: f32[64,48], index: 5, kind: output, shape index: {}]
  %s6 = sld [smem:[#allocation0]]
  $region30: #{eegjepa_forward.23} parent=0
    _
  %s8 = ssub.s32 1, %s6
  %s9 = scalar_select 0, %s8, %s6
  // Predicated region
  $region2: #{eegjepa_forward.23} parent=0 // pred_check
    _
  $region3: #{eegjepa_forward.23} parent=0 // pred_check_branch
    %11 = sbr.rel (0) target = $region5
  $region4: #{eegjepa_forward.23} parent=0 // pred_region
    _
  $region5: #{eegjepa_forward.23} parent=0 // pred_fallthru
    _
  // Predicated region
  $region6: #{eegjepa_forward.23} parent=0 // pred_check
    _
  $region7: #{eegjepa_forward.23} parent=0 // pred_check_branch
    %13 = sbr.rel (0) target = $region9
  $region8: #{eegjepa_forward.23} parent=0 // pred_region
    _
  $region9: #{eegjepa_forward.23} parent=0 // pred_fallthru
    _
  // Predicated region
  $region10: #{eegjepa_forward.23} parent=0 // pred_check
    _
  $region11: #{eegjepa_forward.23} parent=0 // pred_check_branch
    %15 = sbr.rel (0) target = $region13
  $region12: #{eegjepa_forward.23} parent=0 // pred_region
    _
  $region13: #{eegjepa_forward.23} parent=0 // pred_fallthru
    _
  // Predicated region
  $region14: #{eegjepa_forward.23} parent=0 // pred_check
    _
  $region15: #{eegjepa_forward.23} parent=0 // pred_check_branch
    %17 = sbr.rel (0) target = $region17
  $region16: #{eegjepa_forward.23} parent=0 // pred_region
    _
  $region17: #{eegjepa_forward.23} parent=0 // pred_fallthru
    _
  // Predicated region
  $region18: #{eegjepa_forward.23} parent=0 // pred_check
    _
  $region19: #{eegjepa_forward.23} parent=0 // pred_check_branch
    %19 = sbr.rel (0) target = $region21
  $region20: #{eegjepa_forward.23} parent=0 // pred_region
    _
  $region21: #{eegjepa_forward.23} parent=0 // pred_fallthru
    _
  %v20 = vld [vmem:[%s0] sm:$0xff]
  %v21 = vld [vmem:[%s0 + $0x8] sm:$0xff]
  %v22 = vld [vmem:[%s0 + $0x10] sm:$0xff]
  %v23 = vld [vmem:[%s0 + $0x18] sm:$0xff]
  %v24 = vld [vmem:[%s0 + $0x20] sm:$0xff]
  %v25 = vld [vmem:[%s0 + $0x28] sm:$0xff]
  %v26 = vld [vmem:[%s0 + $0x30] sm:$0xff]
  %v27 = vld [vmem:[%s0 + $0x38] sm:$0xff]
  %vm28 = vcmask 130048
  %v29 = vsel %vm28, %v20, 0.0
  %30 = vadd.xlane.f32.xlu0 %v29
  %v31 = vpop.xlane.xlu0 %30
  %v32 = vsel %vm28, %v21, 0.0
  %33 = vadd.xlane.f32.xlu0 %v32
  %v34 = vpop.xlane.xlu0 %33
  %v35 = vsel %vm28, %v22, 0.0
  %36 = vadd.xlane.f32.xlu0 %v35
  %v37 = vpop.xlane.xlu0 %36
  %v38 = vsel %vm28, %v23, 0.0
  %39 = vadd.xlane.f32.xlu0 %v38
  %v40 = vpop.xlane.xlu0 %39
  %v41 = vsel %vm28, %v24, 0.0
  %42 = vadd.xlane.f32.xlu0 %v41
  %v43 = vpop.xlane.xlu0 %42
  %v44 = vsel %vm28, %v25, 0.0
  %45 = vadd.xlane.f32.xlu0 %v44
  %v46 = vpop.xlane.xlu0 %45
  %v47 = vsel %vm28, %v26, 0.0
  %48 = vadd.xlane.f32.xlu0 %v47
  %v49 = vpop.xlane.xlu0 %48
  %v50 = vsel %vm28, %v27, 0.0
  %51 = vadd.xlane.f32.xlu0 %v50
  %v52 = vpop.xlane.xlu0 %51
  %v53 = vrcp.pop 16.0
  %v54 = vmul.f32 %v31, %v53
  %v55 = vmul.f32 %v34, %v53
  %v56 = vmul.f32 %v37, %v53
  %v57 = vmul.f32 %v40, %v53
  %v58 = vmul.f32 %v43, %v53
  %v59 = vmul.f32 %v46, %v53
  %v60 = vmul.f32 %v49, %v53
  %v61 = vmul.f32 %v52, %v53
  %v62 = vsub.f32 %v20, %v54
  %v63 = vsub.f32 %v21, %v55
  %v64 = vsub.f32 %v22, %v56
  %v65 = vsub.f32 %v23, %v57
  %v66 = vsub.f32 %v24, %v58
  %v67 = vsub.f32 %v25, %v59
  %v68 = vsub.f32 %v26, %v60
  %v69 = vsub.f32 %v27, %v61
  %v70 = vmul.f32 %v62, %v62
  %v71 = vmul.f32 %v63, %v63
  %v72 = vmul.f32 %v64, %v64
  %v73 = vmul.f32 %v65, %v65
  %v74 = vmul.f32 %v66, %v66
  %v75 = vmul.f32 %v67, %v67
  %v76 = vmul.f32 %v68, %v68
  %v77 = vmul.f32 %v69, %v69
  %v78 = vsel %vm28, %v70, 0.0
  %79 = vadd.xlane.f32.xlu0 %v78
  %v80 = vpop.xlane.xlu0 %79
  %v81 = vsel %vm28, %v71, 0.0
  %82 = vadd.xlane.f32.xlu0 %v81
  %v83 = vpop.xlane.xlu0 %82
  %v84 = vsel %vm28, %v72, 0.0
  %85 = vadd.xlane.f32.xlu0 %v84
  %v86 = vpop.xlane.xlu0 %85
  %v87 = vsel %vm28, %v73, 0.0
  %88 = vadd.xlane.f32.xlu0 %v87
  %v89 = vpop.xlane.xlu0 %88
  %v90 = vsel %vm28, %v74, 0.0
  %91 = vadd.xlane.f32.xlu0 %v90
  %v92 = vpop.xlane.xlu0 %91
  %v93 = vsel %vm28, %v75, 0.0
  %94 = vadd.xlane.f32.xlu0 %v93
  %v95 = vpop.xlane.xlu0 %94
  %v96 = vsel %vm28, %v76, 0.0
  %97 = vadd.xlane.f32.xlu0 %v96
  %v98 = vpop.xlane.xlu0 %97
  %v99 = vsel %vm28, %v77, 0.0
  %100 = vadd.xlane.f32.xlu0 %v99
  %v101 = vpop.xlane.xlu0 %100
  %v102 = vmul.f32 %v80, %v53
  %v103 = vmul.f32 %v83, %v53
  %v104 = vmul.f32 %v86, %v53
  %v105 = vmul.f32 %v89, %v53
  %v106 = vmul.f32 %v92, %v53
  %v107 = vmul.f32 %v95, %v53
  %v108 = vmul.f32 %v98, %v53
  %v109 = vmul.f32 %v101, %v53
  %v110 = vadd.f32 %v102, 1e-05
  %v111 = vadd.f32 %v103, 1e-05
  %v112 = vadd.f32 %v104, 1e-05
  %v113 = vadd.f32 %v105, 1e-05
  %v114 = vadd.f32 %v106, 1e-05
  %v115 = vadd.f32 %v107, 1e-05
  %v116 = vadd.f32 %v108, 1e-05
  %v117 = vadd.f32 %v109, 1e-05
  %v118 = vrsqrt.pop %v110
  %v119 = vrsqrt.pop %v111
  %v120 = vrsqrt.pop %v112
  %v121 = vrsqrt.pop %v113
  %v122 = vrsqrt.pop %v114
  %v123 = vrsqrt.pop %v115
  %v124 = vrsqrt.pop %v116
  %v125 = vrsqrt.pop %v117
  %v126 = vmul.f32 %v62, %v118
  %v127 = vmul.f32 %v63, %v119
  %v128 = vmul.f32 %v64, %v120
  %v129 = vmul.f32 %v65, %v121
  %v130 = vmul.f32 %v66, %v122
  %v131 = vmul.f32 %v67, %v123
  %v132 = vmul.f32 %v68, %v124
  %v133 = vmul.f32 %v69, %v125
  %v134 = vld [vmem:[%s1] sm:$0x1]
  %v136 = vlaneseq
  %v137 = vshrl.u32 %v136, 7
  %v138 = vsub.s32 0, %v137
  %v139 = vrot.slane %v134, %v138
  %v141 = vmul.f32 %v126, %v139
  %v142 = vmul.f32 %v127, %v139
  %v143 = vmul.f32 %v128, %v139
  %v144 = vmul.f32 %v129, %v139
  %v145 = vmul.f32 %v130, %v139
  %v146 = vmul.f32 %v131, %v139
  %v147 = vmul.f32 %v132, %v139
  %v148 = vmul.f32 %v133, %v139
  %v149 = vld [vmem:[%s2] sm:$0x1]
  %v151 = vlaneseq
  %v152 = vshrl.u32 %v151, 7
  %v153 = vsub.s32 0, %v152
  %v154 = vrot.slane %v149, %v153
  %v156 = vadd.f32 %v141, %v154
  %v157 = vadd.f32 %v142, %v154
  %v158 = vadd.f32 %v143, %v154
  %v159 = vadd.f32 %v144, %v154
  %v160 = vadd.f32 %v145, %v154
  %v161 = vadd.f32 %v146, %v154
  %v162 = vadd.f32 %v147, %v154
  %v163 = vadd.f32 %v148, %v154
  %v164 = vld [vmem:[%s3] sm:$0xff]
  %v165 = vld [vmem:[%s3 + $0x8] sm:$0xff]
  %v166 = vld [vmem:[%s4] sm:$0x1]
  %v168 = vlaneseq
  %v169 = vshrl.u32 %v168, 7
  %v170 = vsub.s32 0, %v169
  %v171 = vrot.slane %v166, %v170
  %v174 = vsel %vm28, %v156, 0
  %v177 = vsel %vm28, %v157, 0
  %v180 = vsel %vm28, %v158, 0
  %v183 = vsel %vm28, %v159, 0
  %v186 = vsel %vm28, %v160, 0
  %v189 = vsel %vm28, %v161, 0
  %v192 = vsel %vm28, %v162, 0
  %v195 = vsel %vm28, %v163, 0
  %197 = vmatprep.subr.mxu0 0.0
  %198 = vmatpush1.msra.mxu0 0.0
  %199 = vmatprep.subr.mxu0 0.0
  %200 = vmatpush1.msra.mxu0 0.0
  %201 = vmatprep.subr.mxu0 0.0
  %202 = vmatpush1.msra.mxu0 0.0
  %203 = vmatprep.subr.mxu0 0.0
  %204 = vmatpush1.msra.mxu0 0.0
  %205 = vmatprep.subr.mxu0 0.0
  %206 = vmatpush1.msra.mxu0 0.0
  %207 = vmatprep.subr.mxu0 0.0
  %208 = vmatpush1.msra.mxu0 0.0
  %209 = vmatprep.subr.mxu0 0.0
  %210 = vmatpush1.msra.mxu0 0.0
  %211 = vmatprep.subr.mxu0 0.0
  %212 = vmatpush1.msra.mxu0 0.0
  %213 = vmatprep.subr.mxu0 0.0
  %214 = vmatpush1.msra.mxu0 0.0
  %215 = vmatprep.subr.mxu0 0.0
  %216 = vmatpush1.msra.mxu0 0.0
  %217 = vmatprep.subr.mxu0 0.0
  %218 = vmatpush1.msra.mxu0 0.0
  %219 = vmatprep.subr.mxu0 0.0
  %220 = vmatpush1.msra.mxu0 0.0
  %221 = vmatprep.subr.mxu0 0.0
  %222 = vmatpush1.msra.mxu0 0.0
  %223 = vmatprep.subr.mxu0 0.0
  %224 = vmatpush1.msra.mxu0 0.0
  %225 = vmatprep.subr.mxu0 0.0
  %226 = vmatpush1.msra.mxu0 %v165
  %227 = vmatprep.subr.mxu0 0.0
  %228 = vmatpush1.msra.mxu0 %v164
  %229 = vmatprep.subr.mxu0 0.0
  %230 = vmatpush2.msra.mxu0 0.0
  %231 = vmatprep.subr.mxu0 0.0
  %232 = vmatpush2.msra.mxu0 0.0
  %233 = vmatprep.subr.mxu0 0.0
  %234 = vmatpush2.msra.mxu0 0.0
  %235 = vmatprep.subr.mxu0 0.0
  %236 = vmatpush2.msra.mxu0 0.0
  %237 = vmatprep.subr.mxu0 0.0
  %238 = vmatpush2.msra.mxu0 0.0
  %239 = vmatprep.subr.mxu0 0.0
  %240 = vmatpush2.msra.mxu0 0.0
  %241 = vmatprep.subr.mxu0 0.0
  %242 = vmatpush2.msra.mxu0 0.0
  %243 = vmatprep.subr.mxu0 0.0
  %244 = vmatpush2.msra.mxu0 0.0
  %245 = vmatprep.subr.mxu0 0.0
  %246 = vmatpush2.msra.mxu0 0.0
  %247 = vmatprep.subr.mxu0 0.0
  %248 = vmatpush2.msra.mxu0 0.0
  %249 = vmatprep.subr.mxu0 0.0
  %250 = vmatpush2.msra.mxu0 0.0
  %251 = vmatprep.subr.mxu0 0.0
  %252 = vmatpush2.msra.mxu0 0.0
  %253 = vmatprep.subr.mxu0 0.0
  %254 = vmatpush2.msra.mxu0 0.0
  %255 = vmatprep.subr.mxu0 0.0
  %256 = vmatpush2.msra.mxu0 0.0
  %257 = vmatprep.subr.mxu0 0.0
  %258 = vmatpush2.msra.mxu0 0.0
  %259 = vmatprep.subr.mxu0 0.0
  %260 = vmatpush2.msra.mxu0 0.0
  %261 = vmatprep.mubr.f32.mxu0 0.0
  %262 = vmatmul.mubr.f32.gmra.mxu0 %v174
  %v263 = vpop.f32.mrf.mxu0
  %v264 = vadd.f32 %v171, %v263
  %v265 = vpop.f32.mrf.mxu0
  %266 = vmatprep.mubr.f32.mxu0 0.0
  %267 = vmatmul.mubr.f32.gmra.mxu0 %v177
  %v268 = vpop.f32.mrf.mxu0
  %v269 = vadd.f32 %v171, %v268
  %v270 = vpop.f32.mrf.mxu0
  %271 = vmatprep.mubr.f32.mxu0 0.0
  %272 = vmatmul.mubr.f32.gmra.mxu0 %v180
  %v273 = vpop.f32.mrf.mxu0
  %v274 = vadd.f32 %v171, %v273
  %v275 = vpop.f32.mrf.mxu0
  %276 = vmatprep.mubr.f32.mxu0 0.0
  %277 = vmatmul.mubr.f32.gmra.mxu0 %v183
  %v278 = vpop.f32.mrf.mxu0
  %v279 = vadd.f32 %v171, %v278
  %v280 = vpop.f32.mrf.mxu0
  %281 = vmatprep.mubr.f32.mxu0 0.0
  %282 = vmatmul.mubr.f32.gmra.mxu0 %v186
  %v283 = vpop.f32.mrf.mxu0
  %v284 = vadd.f32 %v171, %v283
  %v285 = vpop.f32.mrf.mxu0
  %286 = vmatprep.mubr.f32.mxu0 0.0
  %287 = vmatmul.mubr.f32.gmra.mxu0 %v189
  %v288 = vpop.f32.mrf.mxu0
  %v289 = vadd.f32 %v171, %v288
  %v290 = vpop.f32.mrf.mxu0
  %291 = vmatprep.mubr.f32.mxu0 0.0
  %292 = vmatmul.mubr.f32.gmra.mxu0 %v192
  %v293 = vpop.f32.mrf.mxu0
  %v294 = vadd.f32 %v171, %v293
  %v295 = vpop.f32.mrf.mxu0
  %296 = vmatprep.mubr.f32.mxu0 0.0
  %297 = vmatmul.mubr.f32.gmra.mxu0 %v195
  %v298 = vpop.f32.mrf.mxu0
  %v299 = vadd.f32 %v171, %v298
  %v300 = vpop.f32.mrf.mxu0
  %301 = vdwg.mxu0
  %vm302 = vcmask 392192
  %303 = vst.msk [vmem:[%s5] sm:$0xff] %vm302, %v264
  %304 = vst.msk [vmem:[%s5 + $0x8] sm:$0xff] %vm302, %v269
  %305 = vst.msk [vmem:[%s5 + $0x10] sm:$0xff] %vm302, %v274
  %306 = vst.msk [vmem:[%s5 + $0x18] sm:$0xff] %vm302, %v279
  %307 = vst.msk [vmem:[%s5 + $0x20] sm:$0xff] %vm302, %v284
  %308 = vst.msk [vmem:[%s5 + $0x28] sm:$0xff] %vm302, %v289
  %309 = vst.msk [vmem:[%s5 + $0x30] sm:$0xff] %vm302, %v294
  %310 = vst.msk [vmem:[%s5 + $0x38] sm:$0xff] %vm302, %v299
  // Predicated region
  $region22: #{eegjepa_forward.23} parent=0 // pred_check
    _
  $region23: #{eegjepa_forward.23} parent=0 // pred_check_branch
    %312 = sbr.rel (0) target = $region25
  $region24: #{eegjepa_forward.23} parent=0 // pred_region
    _
  $region25: #{eegjepa_forward.23} parent=0 // pred_fallthru
    _
  // Predicated region
  $region26: #{eegjepa_forward.23} parent=0 // pred_check
    _
  $region27: #{eegjepa_forward.23} parent=0 // pred_check_branch
    %314 = sbr.rel (0) target = $region29
  $region28: #{eegjepa_forward.23} parent=0 // pred_region
    _
  $region29: #{eegjepa_forward.23} parent=0 // pred_fallthru
    _

// kernel: eegjepa_forward.26
$region0: #{eegjepa_forward.26}
  #allocation0 [shape = 'u32[]', space=smem, size = 0x4, offset = 0x4, fixed_abs, tag = 'smem constant byte address 0x4 - core index']
  #allocation1 [shape = 'u32[144,128]{1,0:T(1,128)}', space=vmem, size = 0x12000, scoped, tag = 'internal scratch']
  %s0 = inlined_call_operand.vmem [shape: f32[64,16], index: 0, kind: input, shape index: {}]
  %s1 = inlined_call_operand.vmem [shape: f32[1,16], index: 1, kind: input, shape index: {}]
  %s2 = inlined_call_operand.vmem [shape: f32[1,16], index: 2, kind: input, shape index: {}]
  %s3 = inlined_call_operand.vmem [shape: f32[64,16], index: 3, kind: output, shape index: {}]
  %s4 = sld [smem:[#allocation0]]
  $region22: #{eegjepa_forward.26} parent=0
    _
  %s6 = ssub.s32 1, %s4
  %s7 = scalar_select 0, %s6, %s4
  // Predicated region
  $region2: #{eegjepa_forward.26} parent=0 // pred_check
    _
  $region3: #{eegjepa_forward.26} parent=0 // pred_check_branch
    %9 = sbr.rel (0) target = $region5
  $region4: #{eegjepa_forward.26} parent=0 // pred_region
    _
  $region5: #{eegjepa_forward.26} parent=0 // pred_fallthru
    _
  // Predicated region
  $region6: #{eegjepa_forward.26} parent=0 // pred_check
    _
  $region7: #{eegjepa_forward.26} parent=0 // pred_check_branch
    %11 = sbr.rel (0) target = $region9
  $region8: #{eegjepa_forward.26} parent=0 // pred_region
    _
  $region9: #{eegjepa_forward.26} parent=0 // pred_fallthru
    _
  // Predicated region
  $region10: #{eegjepa_forward.26} parent=0 // pred_check
    _
  $region11: #{eegjepa_forward.26} parent=0 // pred_check_branch
    %13 = sbr.rel (0) target = $region13
  $region12: #{eegjepa_forward.26} parent=0 // pred_region
    _
  $region13: #{eegjepa_forward.26} parent=0 // pred_fallthru
    _
  %v14 = vld [vmem:[%s0] sm:$0xff]
  %v15 = vld [vmem:[%s0 + $0x8] sm:$0xff]
  %v16 = vld [vmem:[%s0 + $0x10] sm:$0xff]
  %v17 = vld [vmem:[%s0 + $0x18] sm:$0xff]
  %v18 = vld [vmem:[%s0 + $0x20] sm:$0xff]
  %v19 = vld [vmem:[%s0 + $0x28] sm:$0xff]
  %v20 = vld [vmem:[%s0 + $0x30] sm:$0xff]
  %v21 = vld [vmem:[%s0 + $0x38] sm:$0xff]
  %vm22 = vcmask 130048
  %v23 = vsel %vm22, %v14, 0.0
  %24 = vadd.xlane.f32.xlu0 %v23
  %v25 = vpop.xlane.xlu0 %24
  %v26 = vsel %vm22, %v15, 0.0
  %27 = vadd.xlane.f32.xlu0 %v26
  %v28 = vpop.xlane.xlu0 %27
  %v29 = vsel %vm22, %v16, 0.0
  %30 = vadd.xlane.f32.xlu0 %v29
  %v31 = vpop.xlane.xlu0 %30
  %v32 = vsel %vm22, %v17, 0.0
  %33 = vadd.xlane.f32.xlu0 %v32
  %v34 = vpop.xlane.xlu0 %33
  %v35 = vsel %vm22, %v18, 0.0
  %36 = vadd.xlane.f32.xlu0 %v35
  %v37 = vpop.xlane.xlu0 %36
  %v38 = vsel %vm22, %v19, 0.0
  %39 = vadd.xlane.f32.xlu0 %v38
  %v40 = vpop.xlane.xlu0 %39
  %v41 = vsel %vm22, %v20, 0.0
  %42 = vadd.xlane.f32.xlu0 %v41
  %v43 = vpop.xlane.xlu0 %42
  %v44 = vsel %vm22, %v21, 0.0
  %45 = vadd.xlane.f32.xlu0 %v44
  %v46 = vpop.xlane.xlu0 %45
  %v47 = vrcp.pop 16.0
  %v48 = vmul.f32 %v25, %v47
  %v49 = vmul.f32 %v28, %v47
  %v50 = vmul.f32 %v31, %v47
  %v51 = vmul.f32 %v34, %v47
  %v52 = vmul.f32 %v37, %v47
  %v53 = vmul.f32 %v40, %v47
  %v54 = vmul.f32 %v43, %v47
  %v55 = vmul.f32 %v46, %v47
  %v56 = vsub.f32 %v14, %v48
  %v57 = vsub.f32 %v15, %v49
  %v58 = vsub.f32 %v16, %v50
  %v59 = vsub.f32 %v17, %v51
  %v60 = vsub.f32 %v18, %v52
  %v61 = vsub.f32 %v19, %v53
  %v62 = vsub.f32 %v20, %v54
  %v63 = vsub.f32 %v21, %v55
  %v64 = vmul.f32 %v56, %v56
  %v65 = vmul.f32 %v57, %v57
  %v66 = vmul.f32 %v58, %v58
  %v67 = vmul.f32 %v59, %v59
  %v68 = vmul.f32 %v60, %v60
  %v69 = vmul.f32 %v61, %v61
  %v70 = vmul.f32 %v62, %v62
  %v71 = vmul.f32 %v63, %v63
  %v72 = vsel %vm22, %v64, 0.0
  %73 = vadd.xlane.f32.xlu0 %v72
  %v74 = vpop.xlane.xlu0 %73
  %v75 = vsel %vm22, %v65, 0.0
  %76 = vadd.xlane.f32.xlu0 %v75
  %v77 = vpop.xlane.xlu0 %76
  %v78 = vsel %vm22, %v66, 0.0
  %79 = vadd.xlane.f32.xlu0 %v78
  %v80 = vpop.xlane.xlu0 %79
  %v81 = vsel %vm22, %v67, 0.0
  %82 = vadd.xlane.f32.xlu0 %v81
  %v83 = vpop.xlane.xlu0 %82
  %v84 = vsel %vm22, %v68, 0.0
  %85 = vadd.xlane.f32.xlu0 %v84
  %v86 = vpop.xlane.xlu0 %85
  %v87 = vsel %vm22, %v69, 0.0
  %88 = vadd.xlane.f32.xlu0 %v87
  %v89 = vpop.xlane.xlu0 %88
  %v90 = vsel %vm22, %v70, 0.0
  %91 = vadd.xlane.f32.xlu0 %v90
  %v92 = vpop.xlane.xlu0 %91
  %v93 = vsel %vm22, %v71, 0.0
  %94 = vadd.xlane.f32.xlu0 %v93
  %v95 = vpop.xlane.xlu0 %94
  %v96 = vmul.f32 %v74, %v47
  %v97 = vmul.f32 %v77, %v47
  %v98 = vmul.f32 %v80, %v47
  %v99 = vmul.f32 %v83, %v47
  %v100 = vmul.f32 %v86, %v47
  %v101 = vmul.f32 %v89, %v47
  %v102 = vmul.f32 %v92, %v47
  %v103 = vmul.f32 %v95, %v47
  %v104 = vadd.f32 %v96, 1e-05
  %v105 = vadd.f32 %v97, 1e-05
  %v106 = vadd.f32 %v98, 1e-05
  %v107 = vadd.f32 %v99, 1e-05
  %v108 = vadd.f32 %v100, 1e-05
  %v109 = vadd.f32 %v101, 1e-05
  %v110 = vadd.f32 %v102, 1e-05
  %v111 = vadd.f32 %v103, 1e-05
  %v112 = vrsqrt.pop %v104
  %v113 = vrsqrt.pop %v105
  %v114 = vrsqrt.pop %v106
  %v115 = vrsqrt.pop %v107
  %v116 = vrsqrt.pop %v108
  %v117 = vrsqrt.pop %v109
  %v118 = vrsqrt.pop %v110
  %v119 = vrsqrt.pop %v111
  %v120 = vmul.f32 %v56, %v112
  %v121 = vmul.f32 %v57, %v113
  %v122 = vmul.f32 %v58, %v114
  %v123 = vmul.f32 %v59, %v115
  %v124 = vmul.f32 %v60, %v116
  %v125 = vmul.f32 %v61, %v117
  %v126 = vmul.f32 %v62, %v118
  %v127 = vmul.f32 %v63, %v119
  %v128 = vld [vmem:[%s1] sm:$0x1]
  %v130 = vlaneseq
  %v131 = vshrl.u32 %v130, 7
  %v132 = vsub.s32 0, %v131
  %v133 = vrot.slane %v128, %v132
  %v135 = vmul.f32 %v120, %v133
  %v136 = vmul.f32 %v121, %v133
  %v137 = vmul.f32 %v122, %v133
  %v138 = vmul.f32 %v123, %v133
  %v139 = vmul.f32 %v124, %v133
  %v140 = vmul.f32 %v125, %v133
  %v141 = vmul.f32 %v126, %v133
  %v142 = vmul.f32 %v127, %v133
  %v143 = vld [vmem:[%s2] sm:$0x1]
  %v145 = vlaneseq
  %v146 = vshrl.u32 %v145, 7
  %v147 = vsub.s32 0, %v146
  %v148 = vrot.slane %v143, %v147
  %v150 = vadd.f32 %v135, %v148
  %v151 = vadd.f32 %v136, %v148
  %v152 = vadd.f32 %v137, %v148
  %v153 = vadd.f32 %v138, %v148
  %v154 = vadd.f32 %v139, %v148
  %v155 = vadd.f32 %v140, %v148
  %v156 = vadd.f32 %v141, %v148
  %v157 = vadd.f32 %v142, %v148
  %158 = vst.msk [vmem:[%s3] sm:$0xff] %vm22, %v150
  %159 = vst.msk [vmem:[%s3 + $0x8] sm:$0xff] %vm22, %v151
  %160 = vst.msk [vmem:[%s3 + $0x10] sm:$0xff] %vm22, %v152
  %161 = vst.msk [vmem:[%s3 + $0x18] sm:$0xff] %vm22, %v153
  %162 = vst.msk [vmem:[%s3 + $0x20] sm:$0xff] %vm22, %v154
  %163 = vst.msk [vmem:[%s3 + $0x28] sm:$0xff] %vm22, %v155
  %164 = vst.msk [vmem:[%s3 + $0x30] sm:$0xff] %vm22, %v156
  %165 = vst.msk [vmem:[%s3 + $0x38] sm:$0xff] %vm22, %v157
  // Predicated region
  $region14: #{eegjepa_forward.26} parent=0 // pred_check
    _
  $region15: #{eegjepa_forward.26} parent=0 // pred_check_branch
    %167 = sbr.rel (0) target = $region17
  $region16: #{eegjepa_forward.26} parent=0 // pred_region
    _
  $region17: #{eegjepa_forward.26} parent=0 // pred_fallthru
    _
  // Predicated region
  $region18: #{eegjepa_forward.26} parent=0 // pred_check
    _
  $region19: #{eegjepa_forward.26} parent=0 // pred_check_branch
    %169 = sbr.rel (0) target = $region21
  $region20: #{eegjepa_forward.26} parent=0 // pred_region
    _
  $region21: #{eegjepa_forward.26} parent=0 // pred_fallthru
    _

// kernel: eegjepa_forward.27
$region0: #{eegjepa_forward.27}
  #allocation0 [shape = 'u32[]', space=smem, size = 0x4, offset = 0x4, fixed_abs, tag = 'smem constant byte address 0x4 - core index']
  #allocation1 [shape = 'u32[144,128]{1,0:T(1,128)}', space=vmem, size = 0x12000, scoped, tag = 'internal scratch']
  %s0 = inlined_call_operand.vmem [shape: f32[32,16], index: 0, kind: input, shape index: {}]
  %s1 = inlined_call_operand.vmem [shape: f32[16,32], index: 1, kind: input, shape index: {}]
  %s2 = inlined_call_operand.vmem [shape: f32[1,32], index: 2, kind: input, shape index: {}]
  %s3 = inlined_call_operand.vmem [shape: f32[32,32], index: 3, kind: output, shape index: {}]
  %s4 = sld [smem:[#allocation0]]
  $region22: #{eegjepa_forward.27} parent=0
    _
  %s6 = ssub.s32 1, %s4
  %s7 = scalar_select 0, %s6, %s4
  // Predicated region
  $region2: #{eegjepa_forward.27} parent=0 // pred_check
    _
  $region3: #{eegjepa_forward.27} parent=0 // pred_check_branch
    %9 = sbr.rel (0) target = $region5
  $region4: #{eegjepa_forward.27} parent=0 // pred_region
    _
  $region5: #{eegjepa_forward.27} parent=0 // pred_fallthru
    _
  // Predicated region
  $region6: #{eegjepa_forward.27} parent=0 // pred_check
    _
  $region7: #{eegjepa_forward.27} parent=0 // pred_check_branch
    %11 = sbr.rel (0) target = $region9
  $region8: #{eegjepa_forward.27} parent=0 // pred_region
    _
  $region9: #{eegjepa_forward.27} parent=0 // pred_fallthru
    _
  // Predicated region
  $region10: #{eegjepa_forward.27} parent=0 // pred_check
    _
  $region11: #{eegjepa_forward.27} parent=0 // pred_check_branch
    %13 = sbr.rel (0) target = $region13
  $region12: #{eegjepa_forward.27} parent=0 // pred_region
    _
  $region13: #{eegjepa_forward.27} parent=0 // pred_fallthru
    _
  %v14 = vld [vmem:[%s0] sm:$0xff]
  %v15 = vld [vmem:[%s0 + $0x8] sm:$0xff]
  %v16 = vld [vmem:[%s0 + $0x10] sm:$0xff]
  %v17 = vld [vmem:[%s0 + $0x18] sm:$0xff]
  %v18 = vld [vmem:[%s1] sm:$0xff]
  %v19 = vld [vmem:[%s1 + $0x8] sm:$0xff]
  %v20 = vld [vmem:[%s2] sm:$0x1]
  %v22 = vlaneseq
  %v23 = vshrl.u32 %v22, 7
  %v24 = vsub.s32 0, %v23
  %v25 = vrot.slane %v20, %v24
  %vm27 = vcmask 130048
  %v29 = vsel %vm27, %v14, 0
  %v32 = vsel %vm27, %v15, 0
  %v35 = vsel %vm27, %v16, 0
  %v38 = vsel %vm27, %v17, 0
  %40 = vmatprep.subr.mxu0 0.0
  %41 = vmatpush1.msra.mxu0 0.0
  %42 = vmatprep.subr.mxu0 0.0
  %43 = vmatpush1.msra.mxu0 0.0
  %44 = vmatprep.subr.mxu0 0.0
  %45 = vmatpush1.msra.mxu0 0.0
  %46 = vmatprep.subr.mxu0 0.0
  %47 = vmatpush1.msra.mxu0 0.0
  %48 = vmatprep.subr.mxu0 0.0
  %49 = vmatpush1.msra.mxu0 0.0
  %50 = vmatprep.subr.mxu0 0.0
  %51 = vmatpush1.msra.mxu0 0.0
  %52 = vmatprep.subr.mxu0 0.0
  %53 = vmatpush1.msra.mxu0 0.0
  %54 = vmatprep.subr.mxu0 0.0
  %55 = vmatpush1.msra.mxu0 0.0
  %56 = vmatprep.subr.mxu0 0.0
  %57 = vmatpush1.msra.mxu0 0.0
  %58 = vmatprep.subr.mxu0 0.0
  %59 = vmatpush1.msra.mxu0 0.0
  %60 = vmatprep.subr.mxu0 0.0
  %61 = vmatpush1.msra.mxu0 0.0
  %62 = vmatprep.subr.mxu0 0.0
  %63 = vmatpush1.msra.mxu0 0.0
  %64 = vmatprep.subr.mxu0 0.0
  %65 = vmatpush1.msra.mxu0 0.0
  %66 = vmatprep.subr.mxu0 0.0
  %67 = vmatpush1.msra.mxu0 0.0
  %68 = vmatprep.subr.mxu0 0.0
  %69 = vmatpush1.msra.mxu0 %v19
  %70 = vmatprep.subr.mxu0 0.0
  %71 = vmatpush1.msra.mxu0 %v18
  %72 = vmatprep.subr.mxu0 0.0
  %73 = vmatpush2.msra.mxu0 0.0
  %74 = vmatprep.subr.mxu0 0.0
  %75 = vmatpush2.msra.mxu0 0.0
  %76 = vmatprep.subr.mxu0 0.0
  %77 = vmatpush2.msra.mxu0 0.0
  %78 = vmatprep.subr.mxu0 0.0
  %79 = vmatpush2.msra.mxu0 0.0
  %80 = vmatprep.subr.mxu0 0.0
  %81 = vmatpush2.msra.mxu0 0.0
  %82 = vmatprep.subr.mxu0 0.0
  %83 = vmatpush2.msra.mxu0 0.0
  %84 = vmatprep.subr.mxu0 0.0
  %85 = vmatpush2.msra.mxu0 0.0
  %86 = vmatprep.subr.mxu0 0.0
  %87 = vmatpush2.msra.mxu0 0.0
  %88 = vmatprep.subr.mxu0 0.0
  %89 = vmatpush2.msra.mxu0 0.0
  %90 = vmatprep.subr.mxu0 0.0
  %91 = vmatpush2.msra.mxu0 0.0
  %92 = vmatprep.subr.mxu0 0.0
  %93 = vmatpush2.msra.mxu0 0.0
  %94 = vmatprep.subr.mxu0 0.0
  %95 = vmatpush2.msra.mxu0 0.0
  %96 = vmatprep.subr.mxu0 0.0
  %97 = vmatpush2.msra.mxu0 0.0
  %98 = vmatprep.subr.mxu0 0.0
  %99 = vmatpush2.msra.mxu0 0.0
  %100 = vmatprep.subr.mxu0 0.0
  %101 = vmatpush2.msra.mxu0 0.0
  %102 = vmatprep.subr.mxu0 0.0
  %103 = vmatpush2.msra.mxu0 0.0
  %104 = vmatprep.mubr.f32.mxu0 0.0
  %105 = vmatmul.mubr.f32.gmra.mxu0 %v29
  %v106 = vpop.f32.mrf.mxu0
  %v107 = vadd.f32 %v25, %v106
  %v108 = vpop.f32.mrf.mxu0
  %109 = vmatprep.mubr.f32.mxu0 0.0
  %110 = vmatmul.mubr.f32.gmra.mxu0 %v32
  %v111 = vpop.f32.mrf.mxu0
  %v112 = vadd.f32 %v25, %v111
  %v113 = vpop.f32.mrf.mxu0
  %114 = vmatprep.mubr.f32.mxu0 0.0
  %115 = vmatmul.mubr.f32.gmra.mxu0 %v35
  %v116 = vpop.f32.mrf.mxu0
  %v117 = vadd.f32 %v25, %v116
  %v118 = vpop.f32.mrf.mxu0
  %119 = vmatprep.mubr.f32.mxu0 0.0
  %120 = vmatmul.mubr.f32.gmra.mxu0 %v38
  %v121 = vpop.f32.mrf.mxu0
  %v122 = vadd.f32 %v25, %v121
  %v123 = vpop.f32.mrf.mxu0
  %124 = vdwg.mxu0
  %vm125 = vcmask 261120
  %126 = vst.msk [vmem:[%s3] sm:$0xff] %vm125, %v107
  %127 = vst.msk [vmem:[%s3 + $0x8] sm:$0xff] %vm125, %v112
  %128 = vst.msk [vmem:[%s3 + $0x10] sm:$0xff] %vm125, %v117
  %129 = vst.msk [vmem:[%s3 + $0x18] sm:$0xff] %vm125, %v122
  // Predicated region
  $region14: #{eegjepa_forward.27} parent=0 // pred_check
    _
  $region15: #{eegjepa_forward.27} parent=0 // pred_check_branch
    %131 = sbr.rel (0) target = $region17
  $region16: #{eegjepa_forward.27} parent=0 // pred_region
    _
  $region17: #{eegjepa_forward.27} parent=0 // pred_fallthru
    _
  // Predicated region
  $region18: #{eegjepa_forward.27} parent=0 // pred_check
    _
  $region19: #{eegjepa_forward.27} parent=0 // pred_check_branch
    %133 = sbr.rel (0) target = $region21
  $region20: #{eegjepa_forward.27} parent=0 // pred_region
    _
  $region21: #{eegjepa_forward.27} parent=0 // pred_fallthru
    _

// kernel: eegjepa_forward.24
$region0: #{eegjepa_forward.24}
  #allocation0 [shape = 'u32[]', space=smem, size = 0x4, offset = 0x4, fixed_abs, tag = 'smem constant byte address 0x4 - core index']
  #allocation1 [shape = 'u32[144,128]{1,0:T(1,128)}', space=vmem, size = 0x12000, scoped, tag = 'internal scratch']
  %s0 = inlined_call_operand.vmem [shape: f32[4,16,16], index: 0, kind: input, shape index: {}]
  %s1 = inlined_call_operand.vmem [shape: f32[4,4,16,4], index: 1, kind: input, shape index: {}]
  %s2 = inlined_call_operand.vmem [shape: f32[4,2,4,16,4], index: 2, kind: input, shape index: {}]
  %s3 = inlined_call_operand.vmem [shape: f32[4,4,16], index: 3, kind: input, shape index: {}]
  %s4 = inlined_call_operand.vmem [shape: f32[1,16], index: 4, kind: input, shape index: {}]
  %s5 = inlined_call_operand.vmem [shape: f32[4,16,16], index: 5, kind: output, shape index: {}]
  %s6 = sld [smem:[#allocation0]]
  $region53: #{eegjepa_forward.24} parent=0
    _
  %s8 = ssub.s32 1, %s6
  %s9 = scalar_select 0, %s8, %s6
  loop: start=0, step=1, limit=6
  $region2: #{eegjepa_forward.24} parent=0 // loop_pre_header
    _
  $region3: #{eegjepa_forward.24} parent=0 // loop_header
    %s11 = sphi 0, %s15
    %p12 = scmp.ge.s32.totalorder %s11, 6
    %s18 = sphi 0, %s30
    %s19 = sphi 0, %s26
    %s20 = sphi 0, %s18
    %s21 = sphi 0, %s19
    %s22 = sphi 0, %s20
    %s23 = sphi 0, %s21
    %s35 = sphi 0, %s37
    %s38 = sphi 0, %s35
    %s39 = sphi 0, %s38
    %s55 = sphi 0, %s39
    %s63 = sphi 0, %s65
    %s66 = sphi 0, %s63
    %s67 = sphi 0, %s66
    %s83 = sphi 0, %s67
    %s89 = sphi 0, %s91
    %s92 = sphi 0, %s89
    %s93 = sphi 0, %s92
    %s109 = sphi 0, %s93
    %s113 = sphi 0, %s113
    %s115 = sphi 0, %s113
    %s116 = sphi 0, %s115
    %s130 = sphi 0, %s116
    %s134 = sphi 0, %s134
    %s136 = sphi 0, %s134
    %s137 = sphi 0, %s136
    %s151 = sphi 0, %s137
    %s159 = sphi 0, %s161
    %s162 = sphi 0, %s159
    %s163 = sphi 0, %s162
    %s179 = sphi 0, %s163
  $region4: #{eegjepa_forward.24} parent=0 // loop_header_branch
    %14 = sbr.rel (%p12) target = $region8
  $region5: #{eegjepa_forward.24} parent=0 // loop_body
    %s16 = ssub.s32 %s11, 1
    %s17 = ssub.s32 %s11, 2
    %s24 = sadd.s32 1, %s19
    %p25 = scmp.ge.s32.totalorder %s24, 1
    %s26 = scalar_select %p25, 0, %s24
    %s27 = sadd.s32 1, %s18
    %s28 = scalar_select %p25, %s27, %s18
    %p29 = scmp.ge.s32.totalorder %s28, 4
    %s30 = scalar_select %p29, 0, %s28
    %s31 = ssub.s32 %s18, %s30
    %s32 = ssub.s32 %s19, %s26
    %s33 = sor.u32 %s31, %s32
    %p34 = scmp.eq.s32.totalorder %s33, 0
    %s36 = sadd.s32 %s35, 1
    %s37 = scalar_select %p34, %s35, %s36
    %p40 = pneg %p34
    %p41 = scmp.eq.s32.totalorder %s11, 3
    %p42 = por %p40, %p41
    %p43 = scmp.ne.s32.totalorder %s35, %s38
    %p44 = scmp.eq.s32.totalorder %s11, 0
    %p45 = por %p43, %p44
    %p46 = scmp.ne.s32.totalorder %s35, %s38
    %p47 = scmp.eq.s32.totalorder %s16, 3
    %p48 = por %p46, %p47
    %p49 = scmp.ne.s32.totalorder %s38, %s39
    %p50 = scmp.eq.s32.totalorder %s16, 0
    %p51 = por %p49, %p50
    %p52 = scmp.ne.s32.totalorder %s38, %s39
    %p53 = scmp.eq.s32.totalorder %s17, 3
    %p54 = por %p52, %p53
    %p56 = scmp.ne.s32.totalorder %s39, %s55
    %p57 = scmp.eq.s32.totalorder %s17, 0
    %p58 = por %p56, %p57
    %s59 = ssub.s32 %s18, %s30
    %s60 = ssub.s32 %s19, %s26
    %s61 = sor.u32 %s59, %s60
    %p62 = scmp.eq.s32.totalorder %s61, 0
    %s64 = sadd.s32 %s63, 1
    %s65 = scalar_select %p62, %s63, %s64
    %p68 = pneg %p62
    %p69 = scmp.eq.s32.totalorder %s11, 3
    %p70 = por %p68, %p69
    %p71 = scmp.ne.s32.totalorder %s63, %s66
    %p72 = scmp.eq.s32.totalorder %s11, 0
    %p73 = por %p71, %p72
    %p74 = scmp.ne.s32.totalorder %s63, %s66
    %p75 = scmp.eq.s32.totalorder %s16, 3
    %p76 = por %p74, %p75
    %p77 = scmp.ne.s32.totalorder %s66, %s67
    %p78 = scmp.eq.s32.totalorder %s16, 0
    %p79 = por %p77, %p78
    %p80 = scmp.ne.s32.totalorder %s66, %s67
    %p81 = scmp.eq.s32.totalorder %s17, 3
    %p82 = por %p80, %p81
    %p84 = scmp.ne.s32.totalorder %s67, %s83
    %p85 = scmp.eq.s32.totalorder %s17, 0
    %p86 = por %p84, %p85
    %s87 = ssub.s32 %s18, %s30
    %p88 = scmp.eq.s32.totalorder %s87, 0
    %s90 = sadd.s32 %s89, 1
    %s91 = scalar_select %p88, %s89, %s90
    %p94 = pneg %p88
    %p95 = scmp.eq.s32.totalorder %s11, 3
    %p96 = por %p94, %p95
    %p97 = scmp.ne.s32.totalorder %s89, %s92
    %p98 = scmp.eq.s32.totalorder %s11, 0
    %p99 = por %p97, %p98
    %p100 = scmp.ne.s32.totalorder %s89, %s92
    %p101 = scmp.eq.s32.totalorder %s16, 3
    %p102 = por %p100, %p101
    %p103 = scmp.ne.s32.totalorder %s92, %s93
    %p104 = scmp.eq.s32.totalorder %s16, 0
    %p105 = por %p103, %p104
    %p106 = scmp.ne.s32.totalorder %s92, %s93
    %p107 = scmp.eq.s32.totalorder %s17, 3
    %p108 = por %p106, %p107
    %p110 = scmp.ne.s32.totalorder %s93, %s109
    %p111 = scmp.eq.s32.totalorder %s17, 0
    %p112 = por %p110, %p111
    %s114 = sadd.s32 %s113, 1
    %p117 = scmp.eq.s32.totalorder %s11, 3
    %p118 = scmp.ne.s32.totalorder %s113, %s115
    %p119 = scmp.eq.s32.totalorder %s11, 0
    %p120 = por %p118, %p119
    %p121 = scmp.ne.s32.totalorder %s113, %s115
    %p122 = scmp.eq.s32.totalorder %s16, 3
    %p123 = por %p121, %p122
    %p124 = scmp.ne.s32.totalorder %s115, %s116
    %p125 = scmp.eq.s32.totalorder %s16, 0
    %p126 = por %p124, %p125
    %p127 = scmp.ne.s32.totalorder %s115, %s116
    %p128 = scmp.eq.s32.totalorder %s17, 3
    %p129 = por %p127, %p128
    %p131 = scmp.ne.s32.totalorder %s116, %s130
    %p132 = scmp.eq.s32.totalorder %s17, 0
    %p133 = por %p131, %p132
    %s135 = sadd.s32 %s134, 1
    %p138 = scmp.eq.s32.totalorder %s11, 3
    %p139 = scmp.ne.s32.totalorder %s134, %s136
    %p140 = scmp.eq.s32.totalorder %s11, 0
    %p141 = por %p139, %p140
    %p142 = scmp.ne.s32.totalorder %s134, %s136
    %p143 = scmp.eq.s32.totalorder %s16, 3
    %p144 = por %p142, %p143
    %p145 = scmp.ne.s32.totalorder %s136, %s137
    %p146 = scmp.eq.s32.totalorder %s16, 0
    %p147 = por %p145, %p146
    %p148 = scmp.ne.s32.totalorder %s136, %s137
    %p149 = scmp.eq.s32.totalorder %s17, 3
    %p150 = por %p148, %p149
    %p152 = scmp.ne.s32.totalorder %s137, %s151
    %p153 = scmp.eq.s32.totalorder %s17, 0
    %p154 = por %p152, %p153
    %s155 = ssub.s32 %s18, %s30
    %s156 = ssub.s32 %s19, %s26
    %s157 = sor.u32 %s155, %s156
    %p158 = scmp.eq.s32.totalorder %s157, 0
    %s160 = sadd.s32 %s159, 1
    %s161 = scalar_select %p158, %s159, %s160
    %p164 = pneg %p158
    %p165 = scmp.eq.s32.totalorder %s11, 3
    %p166 = por %p164, %p165
    %p167 = scmp.ne.s32.totalorder %s159, %s162
    %p168 = scmp.eq.s32.totalorder %s11, 0
    %p169 = por %p167, %p168
    %p170 = scmp.ne.s32.totalorder %s159, %s162
    %p171 = scmp.eq.s32.totalorder %s16, 3
    %p172 = por %p170, %p171
    %p173 = scmp.ne.s32.totalorder %s162, %s163
    %p174 = scmp.eq.s32.totalorder %s16, 0
    %p175 = por %p173, %p174
    %p176 = scmp.ne.s32.totalorder %s162, %s163
    %p177 = scmp.eq.s32.totalorder %s17, 3
    %p178 = por %p176, %p177
    %p180 = scmp.ne.s32.totalorder %s163, %s179
    %p181 = scmp.eq.s32.totalorder %s17, 0
    %p182 = por %p180, %p181
    %p183 = scmp.le.s32.totalorder 1, %s11
    %p184 = scmp.lt.s32.totalorder %s11, 5
    %p185 = pnand %p183, %p184
    %p186 = pneg %p185
    // Predicated region
    $region9: #{eegjepa_forward.24} parent=5 // pred_check
      _
    $region10: #{eegjepa_forward.24} parent=5 // pred_check_branch
      %188 = sbr.rel (%p185) target = $region12
    $region11: #{eegjepa_forward.24} parent=5 // pred_region
      %s189 = ssub.s32 %s11, 1
      // Predicated region
      $region13: #{eegjepa_forward.24} parent=11 // pred_check
        %p190 = pneg %p126
      $region14: #{eegjepa_forward.24} parent=11 // pred_check_branch
        %192 = sbr.rel (%p190) target = $region16
      $region15: #{eegjepa_forward.24} parent=11 // pred_region
        _
      $region16: #{eegjepa_forward.24} parent=11 // pred_fallthru
        _
      // Predicated region
      $region17: #{eegjepa_forward.24} parent=11 // pred_check
        %p193 = pneg %p147
      $region18: #{eegjepa_forward.24} parent=11 // pred_check_branch
        %195 = sbr.rel (%p193) target = $region20
      $region19: #{eegjepa_forward.24} parent=11 // pred_region
        _
      $region20: #{eegjepa_forward.24} parent=11 // pred_fallthru
        _
    $region12: #{eegjepa_forward.24} parent=5 // pred_fallthru
      _
    %p196 = scmp.lt.s32.totalorder %s11, 4
    // Predicated region
    $region21: #{eegjepa_forward.24} parent=5 // pred_check
      %p197 = pneg %p196
    $region22: #{eegjepa_forward.24} parent=5 // pred_check_branch
      %199 = sbr.rel (%p197) target = $region24
    $region23: #{eegjepa_forward.24} parent=5 // pred_region
      // Predicated region
      $region25: #{eegjepa_forward.24} parent=23 // pred_check
        %p200 = pneg %p45
      $region26: #{eegjepa_forward.24} parent=23 // pred_check_branch
        %202 = sbr.rel (%p200) target = $region28
      $region27: #{eegjepa_forward.24} parent=23 // pred_region
        %s203 = smul.u32 2, %s19
        %p204 = scmp.lt.s32.totalorder %s18, 3
        %s205 = scalar_select %p204, %s18, 3
        %p206 = scmp.lt.s32.totalorder %s203, 1
        %s207 = scalar_select %p206, %s203, 1
        %s208 = smul.addr %s205, 2
        %s209 = sadd.s32 %s207, %s208
        %s210 = smul.addr %s209, 8
        %s211 = scalar_lea.vmem %s0, %s210
        %s212 = smul.u32 2, %s19
      $region28: #{eegjepa_forward.24} parent=23 // pred_fallthru
        _
      // Predicated region
      $region29: #{eegjepa_forward.24} parent=23 // pred_check
        %p213 = pneg %p73
      $region30: #{eegjepa_forward.24} parent=23 // pred_check_branch
        %215 = sbr.rel (%p213) target = $region32
      $region31: #{eegjepa_forward.24} parent=23 // pred_region
        %s216 = smul.u32 2, %s19
        %p217 = scmp.lt.s32.totalorder %s18, 3
        %s218 = scalar_select %p217, %s18, 3
        %p219 = scmp.lt.s32.totalorder %s216, 1
        %s220 = scalar_select %p219, %s216, 1
        %s221 = smul.addr %s218, 8
        %s222 = sadd.s32 %s220, %s221
        %s223 = smul.addr %s222, 8
        %s224 = scalar_lea.vmem %s1, %s223
        %s225 = smul.u32 2, %s19
      $region32: #{eegjepa_forward.24} parent=23 // pred_fallthru
        _
      // Predicated region
      $region33: #{eegjepa_forward.24} parent=23 // pred_check
        %p226 = pneg %p99
      $region34: #{eegjepa_forward.24} parent=23 // pred_check_branch
        %228 = sbr.rel (%p226) target = $region36
      $region35: #{eegjepa_forward.24} parent=23 // pred_region
        %p229 = scmp.lt.s32.totalorder %s18, 3
        %s230 = scalar_select %p229, %s18, 3
        %s231 = smul.addr %s230, 16
        %s232 = smul.addr %s231, 8
        %s233 = scalar_lea.vmem %s2, %s232
      $region36: #{eegjepa_forward.24} parent=23 // pred_fallthru
        _
    $region24: #{eegjepa_forward.24} parent=5 // pred_fallthru
      _
    %p234 = scmp.le.s32.totalorder 1, %s11
    %p235 = scmp.lt.s32.totalorder %s11, 5
    %p236 = pnand %p234, %p235
    %p237 = pneg %p236
    // Predicated region
    $region37: #{eegjepa_forward.24} parent=5 // pred_check
      _
    $region38: #{eegjepa_forward.24} parent=5 // pred_check_branch
      %239 = sbr.rel (%p236) target = $region40
    $region39: #{eegjepa_forward.24} parent=5 // pred_region
      %s240 = ssub.s32 %s11, 1
      %s241 = smul.u32 2, %s21
      %p242 = scmp.lt.s32.totalorder %s20, 3
      %s243 = scalar_select %p242, %s20, 3
      %p244 = scmp.lt.s32.totalorder %s241, 1
      %s245 = scalar_select %p244, %s241, 1
      %s246 = smul.addr %s243, 2
      %s247 = sadd.s32 %s245, %s246
      %s248 = smul.addr %s247, 8
      %s249 = scalar_lea.vmem %s0, %s248
      %p250 = pneg %p51
      %p251 = pneg %p48
      %s252 = smul.u32 2, %s21
      %p253 = scmp.lt.s32.totalorder %s20, 3
      %s254 = scalar_select %p253, %s20, 3
      %p255 = scmp.lt.s32.totalorder %s252, 1
      %s256 = scalar_select %p255, %s252, 1
      %s257 = smul.addr %s254, 8
      %s258 = sadd.s32 %s256, %s257
      %s259 = smul.addr %s258, 8
      %s260 = scalar_lea.vmem %s1, %s259
      %p261 = pneg %p79
      %p262 = pneg %p76
      %p263 = scmp.lt.s32.totalorder %s20, 3
      %s264 = scalar_select %p263, %s20, 3
      %s265 = smul.addr %s264, 16
      %s266 = smul.addr %s265, 8
      %s267 = scalar_lea.vmem %s2, %s266
      %p268 = pneg %p105
      %p269 = pneg %p102
      %p270 = pneg %p126
      %p271 = pneg %p123
      %p272 = pneg %p147
      %p273 = pneg %p144
      %p274 = pneg %p175
      %p275 = pneg %p172
      %s276 = smul.u32 2, %s21
      %p277 = scmp.lt.s32.totalorder %s20, 3
      %s278 = scalar_select %p277, %s20, 3
      %p279 = scmp.lt.s32.totalorder %s276, 1
      %s280 = scalar_select %p279, %s276, 1
      %s281 = smul.addr %s278, 2
      %s282 = sadd.s32 %s280, %s281
      %s283 = smul.addr %s282, 8
      %s284 = scalar_lea.vmem %s5, %s283
      %s285 = smul.u32 2, %s21
      %p286 = scmp.lt.s32.totalorder %s20, 3
      %s287 = scalar_select %p286, %s20, 3
      %p288 = scmp.lt.s32.totalorder %s285, 1
      %s289 = scalar_select %p288, %s285, 1
      %s290 = smul.addr %s287, 2
      %s291 = sadd.s32 %s289, %s290
      %s292 = smul.addr %s291, 8
      %s293 = scalar_lea.vmem %s0, %s292
      %s294 = smul.u32 2, %s21
      %s295 = smul.u32 2, %s21
      %p296 = scmp.lt.s32.totalorder %s20, 3
      %s297 = scalar_select %p296, %s20, 3
      %p298 = scmp.lt.s32.totalorder %s295, 1
      %s299 = scalar_select %p298, %s295, 1
      %s300 = smul.addr %s297, 8
      %s301 = sadd.s32 %s299, %s300
      %s302 = smul.addr %s301, 8
      %s303 = scalar_lea.vmem %s1, %s302
      %s304 = smul.u32 2, %s21
      %p305 = scmp.lt.s32.totalorder %s20, 3
      %s306 = scalar_select %p305, %s20, 3
      %s307 = smul.addr %s306, 16
      %s308 = smul.addr %s307, 8
      %s309 = scalar_lea.vmem %s2, %s308
      %s310 = smul.u32 2, %s21
      %p311 = scmp.lt.s32.totalorder %s20, 3
      %s312 = scalar_select %p311, %s20, 3
      %p313 = scmp.lt.s32.totalorder %s310, 1
      %s314 = scalar_select %p313, %s310, 1
      %s315 = smul.addr %s312, 2
      %s316 = sadd.s32 %s314, %s315
      %s317 = smul.addr %s316, 8
      %s318 = scalar_lea.vmem %s5, %s317
      %s319 = smul.u32 2, %s21
      %v320 = vld [vmem:[%s293] sm:$0xff]
      %v321 = vld [vmem:[%s293 + $0x8] sm:$0xff]
      %v322 = vld [vmem:[%s303] sm:$0xff]
      %v323 = vld [vmem:[%s303 + $0x8] sm:$0xff]
      %v324 = vld [vmem:[%s303 + $0x10] sm:$0xff]
      %v325 = vld [vmem:[%s303 + $0x18] sm:$0xff]
      %v326 = vld [vmem:[%s303 + $0x20] sm:$0xff]
      %v327 = vld [vmem:[%s303 + $0x28] sm:$0xff]
      %v328 = vld [vmem:[%s303 + $0x30] sm:$0xff]
      %v329 = vld [vmem:[%s303 + $0x38] sm:$0xff]
      %v330 = vld [vmem:[%s309] sm:$0xff]
      %v331 = vld [vmem:[%s309 + $0x8] sm:$0xff]
      %v332 = vld [vmem:[%s309 + $0x10] sm:$0xff]
      %v333 = vld [vmem:[%s309 + $0x18] sm:$0xff]
      %v334 = vld [vmem:[%s309 + $0x20] sm:$0xff]
      %v335 = vld [vmem:[%s309 + $0x28] sm:$0xff]
      %v336 = vld [vmem:[%s309 + $0x30] sm:$0xff]
      %v337 = vld [vmem:[%s309 + $0x38] sm:$0xff]
      %s338 = scalar_lea.vmem %s309, 64
      %v339 = vld [vmem:[%s338] sm:$0xff]
      %v340 = vld [vmem:[%s338 + $0x8] sm:$0xff]
      %v341 = vld [vmem:[%s338 + $0x10] sm:$0xff]
      %v342 = vld [vmem:[%s338 + $0x18] sm:$0xff]
      %v343 = vld [vmem:[%s338 + $0x20] sm:$0xff]
      %v344 = vld [vmem:[%s338 + $0x28] sm:$0xff]
      %v345 = vld [vmem:[%s338 + $0x30] sm:$0xff]
      %v346 = vld [vmem:[%s338 + $0x38] sm:$0xff]
      %vm347 = vcmask 31744
      %v349 = vsel %vm347, %v322, 0
      %v352 = vsel %vm347, %v323, 0
      %v355 = vsel %vm347, %v330, 0
      %v358 = vsel %vm347, %v331, 0
      %360 = vmatprep.subr.mxu0 0.0
      %361 = vmatpush1.xpose.msra.mxu0 0.0
      %362 = vmatprep.subr.mxu0 0.0
      %363 = vmatpush1.xpose.msra.mxu0 0.0
      %364 = vmatprep.subr.mxu0 0.0
      %365 = vmatpush1.xpose.msra.mxu0 0.0
      %366 = vmatprep.subr.mxu0 0.0
      %367 = vmatpush1.xpose.msra.mxu0 0.0
      %368 = vmatprep.subr.mxu0 0.0
      %369 = vmatpush1.xpose.msra.mxu0 0.0
      %370 = vmatprep.subr.mxu0 0.0
      %371 = vmatpush1.xpose.msra.mxu0 0.0
      %372 = vmatprep.subr.mxu0 0.0
      %373 = vmatpush1.xpose.msra.mxu0 0.0
      %374 = vmatprep.subr.mxu0 0.0
      %375 = vmatpush1.xpose.msra.mxu0 0.0
      %376 = vmatprep.subr.mxu0 0.0
      %377 = vmatpush1.xpose.msra.mxu0 0.0
      %378 = vmatprep.subr.mxu0 0.0
      %379 = vmatpush1.xpose.msra.mxu0 0.0
      %380 = vmatprep.subr.mxu0 0.0
      %381 = vmatpush1.xpose.msra.mxu0 0.0
      %382 = vmatprep.subr.mxu0 0.0
      %383 = vmatpush1.xpose.msra.mxu0 0.0
      %384 = vmatprep.subr.mxu0 0.0
      %385 = vmatpush1.xpose.msra.mxu0 0.0
      %386 = vmatprep.subr.mxu0 0.0
      %387 = vmatpush1.xpose.msra.mxu0 0.0
      %388 = vmatprep.subr.mxu0 0.0
      %389 = vmatpush1.xpose.msra.mxu0 %v358
      %390 = vmatprep.subr.mxu0 0.0
      %391 = vmatpush1.xpose.msra.mxu0 %v355
      %392 = vmatprep.subr.mxu0 0.0
      %393 = vmatpush2.xpose.msra.mxu0 0.0
      %394 = vmatprep.subr.mxu0 0.0
      %395 = vmatpush2.xpose.msra.mxu0 0.0
      %396 = vmatprep.subr.mxu0 0.0
      %397 = vmatpush2.xpose.msra.mxu0 0.0
      %398 = vmatprep.subr.mxu0 0.0
      %399 = vmatpush2.xpose.msra.mxu0 0.0
      %400 = vmatprep.subr.mxu0 0.0
      %401 = vmatpush2.xpose.msra.mxu0 0.0
      %402 = vmatprep.subr.mxu0 0.0
      %403 = vmatpush2.xpose.msra.mxu0 0.0
      %404 = vmatprep.subr.mxu0 0.0
      %405 = vmatpush2.xpose.msra.mxu0 0.0
      %406 = vmatprep.subr.mxu0 0.0
      %407 = vmatpush2.xpose.msra.mxu0 0.0
      %408 = vmatprep.subr.mxu0 0.0
      %409 = vmatpush2.xpose.msra.mxu0 0.0
      %410 = vmatprep.subr.mxu0 0.0
      %411 = vmatpush2.xpose.msra.mxu0 0.0
      %412 = vmatprep.subr.mxu0 0.0
      %413 = vmatpush2.xpose.msra.mxu0 0.0
      %414 = vmatprep.subr.mxu0 0.0
      %415 = vmatpush2.xpose.msra.mxu0 0.0
      %416 = vmatprep.subr.mxu0 0.0
      %417 = vmatpush2.xpose.msra.mxu0 0.0
      %418 = vmatprep.subr.mxu0 0.0
      %419 = vmatpush2.xpose.msra.mxu0 0.0
      %420 = vmatprep.subr.mxu0 0.0
      %421 = vmatpush2.xpose.msra.mxu0 0.0
      %422 = vmatprep.subr.mxu0 0.0
      %423 = vmatpush2.xpose.msra.mxu0 0.0
      %424 = vmatprep.mubr.f32.mxu0 0.0
      %425 = vmatmul.mubr.f32.gmra.mxu0 %v349
      %v426 = vpop.f32.mrf.mxu0
      %v427 = vadd.f32 0.0, %v426
      %v428 = vpop.f32.mrf.mxu0
      %429 = vmatprep.mubr.f32.mxu0 0.0
      %430 = vmatmul.mubr.f32.gmra.mxu0 %v352
      %v431 = vpop.f32.mrf.mxu0
      %v432 = vadd.f32 0.0, %v431
      %v433 = vpop.f32.mrf.mxu0
      %434 = vdwg.mxu0
      %v436 = vsel %vm347, %v324, 0
      %v439 = vsel %vm347, %v325, 0
      %v442 = vsel %vm347, %v332, 0
      %v445 = vsel %vm347, %v333, 0
      %447 = vmatprep.subr.mxu0 0.0
      %448 = vmatpush1.xpose.msra.mxu0 0.0
      %449 = vmatprep.subr.mxu0 0.0
      %450 = vmatpush1.xpose.msra.mxu0 0.0
      %451 = vmatprep.subr.mxu0 0.0
      %452 = vmatpush1.xpose.msra.mxu0 0.0
      %453 = vmatprep.subr.mxu0 0.0
      %454 = vmatpush1.xpose.msra.mxu0 0.0
      %455 = vmatprep.subr.mxu0 0.0
      %456 = vmatpush1.xpose.msra.mxu0 0.0
      %457 = vmatprep.subr.mxu0 0.0
      %458 = vmatpush1.xpose.msra.mxu0 0.0
      %459 = vmatprep.subr.mxu0 0.0
      %460 = vmatpush1.xpose.msra.mxu0 0.0
      %461 = vmatprep.subr.mxu0 0.0
      %462 = vmatpush1.xpose.msra.mxu0 0.0
      %463 = vmatprep.subr.mxu0 0.0
      %464 = vmatpush1.xpose.msra.mxu0 0.0
      %465 = vmatprep.subr.mxu0 0.0
      %466 = vmatpush1.xpose.msra.mxu0 0.0
      %467 = vmatprep.subr.mxu0 0.0
      %468 = vmatpush1.xpose.msra.mxu0 0.0
      %469 = vmatprep.subr.mxu0 0.0
      %470 = vmatpush1.xpose.msra.mxu0 0.0
      %471 = vmatprep.subr.mxu0 0.0
      %472 = vmatpush1.xpose.msra.mxu0 0.0
      %473 = vmatprep.subr.mxu0 0.0
      %474 = vmatpush1.xpose.msra.mxu0 0.0
      %475 = vmatprep.subr.mxu0 0.0
      %476 = vmatpush1.xpose.msra.mxu0 %v445
      %477 = vmatprep.subr.mxu0 0.0
      %478 = vmatpush1.xpose.msra.mxu0 %v442
      %479 = vmatprep.subr.mxu0 0.0
      %480 = vmatpush2.xpose.msra.mxu0 0.0
      %481 = vmatprep.subr.mxu0 0.0
      %482 = vmatpush2.xpose.msra.mxu0 0.0
      %483 = vmatprep.subr.mxu0 0.0
      %484 = vmatpush2.xpose.msra.mxu0 0.0
      %485 = vmatprep.subr.mxu0 0.0
      %486 = vmatpush2.xpose.msra.mxu0 0.0
      %487 = vmatprep.subr.mxu0 0.0
      %488 = vmatpush2.xpose.msra.mxu0 0.0
      %489 = vmatprep.subr.mxu0 0.0
      %490 = vmatpush2.xpose.msra.mxu0 0.0
      %491 = vmatprep.subr.mxu0 0.0
      %492 = vmatpush2.xpose.msra.mxu0 0.0
      %493 = vmatprep.subr.mxu0 0.0
      %494 = vmatpush2.xpose.msra.mxu0 0.0
      %495 = vmatprep.subr.mxu0 0.0
      %496 = vmatpush2.xpose.msra.mxu0 0.0
      %497 = vmatprep.subr.mxu0 0.0
      %498 = vmatpush2.xpose.msra.mxu0 0.0
      %499 = vmatprep.subr.mxu0 0.0
      %500 = vmatpush2.xpose.msra.mxu0 0.0
      %501 = vmatprep.subr.mxu0 0.0
      %502 = vmatpush2.xpose.msra.mxu0 0.0
      %503 = vmatprep.subr.mxu0 0.0
      %504 = vmatpush2.xpose.msra.mxu0 0.0
      %505 = vmatprep.subr.mxu0 0.0
      %506 = vmatpush2.xpose.msra.mxu0 0.0
      %507 = vmatprep.subr.mxu0 0.0
      %508 = vmatpush2.xpose.msra.mxu0 0.0
      %509 = vmatprep.subr.mxu0 0.0
      %510 = vmatpush2.xpose.msra.mxu0 0.0
      %511 = vmatprep.mubr.f32.mxu0 0.0
      %512 = vmatmul.mubr.f32.gmra.mxu0 %v436
      %v513 = vpop.f32.mrf.mxu0
      %v514 = vadd.f32 0.0, %v513
      %v515 = vpop.f32.mrf.mxu0
      %516 = vmatprep.mubr.f32.mxu0 0.0
      %517 = vmatmul.mubr.f32.gmra.mxu0 %v439
      %v518 = vpop.f32.mrf.mxu0
      %v519 = vadd.f32 0.0, %v518
      %v520 = vpop.f32.mrf.mxu0
      %521 = vdwg.mxu0
      %v523 = vsel %vm347, %v326, 0
      %v526 = vsel %vm347, %v327, 0
      %v529 = vsel %vm347, %v334, 0
      %v532 = vsel %vm347, %v335, 0
      %534 = vmatprep.subr.mxu0 0.0
      %535 = vmatpush1.xpose.msra.mxu0 0.0
      %536 = vmatprep.subr.mxu0 0.0
      %537 = vmatpush1.xpose.msra.mxu0 0.0
      %538 = vmatprep.subr.mxu0 0.0
      %539 = vmatpush1.xpose.msra.mxu0 0.0
      %540 = vmatprep.subr.mxu0 0.0
      %541 = vmatpush1.xpose.msra.mxu0 0.0
      %542 = vmatprep.subr.mxu0 0.0
      %543 = vmatpush1.xpose.msra.mxu0 0.0
      %544 = vmatprep.subr.mxu0 0.0
      %545 = vmatpush1.xpose.msra.mxu0 0.0
      %546 = vmatprep.subr.mxu0 0.0
      %547 = vmatpush1.xpose.msra.mxu0 0.0
      %548 = vmatprep.subr.mxu0 0.0
      %549 = vmatpush1.xpose.msra.mxu0 0.0
      %550 = vmatprep.subr.mxu0 0.0
      %551 = vmatpush1.xpose.msra.mxu0 0.0
      %552 = vmatprep.subr.mxu0 0.0
      %553 = vmatpush1.xpose.msra.mxu0 0.0
      %554 = vmatprep.subr.mxu0 0.0
      %555 = vmatpush1.xpose.msra.mxu0 0.0
      %556 = vmatprep.subr.mxu0 0.0
      %557 = vmatpush1.xpose.msra.mxu0 0.0
      %558 = vmatprep.subr.mxu0 0.0
      %559 = vmatpush1.xpose.msra.mxu0 0.0
      %560 = vmatprep.subr.mxu0 0.0
      %561 = vmatpush1.xpose.msra.mxu0 0.0
      %562 = vmatprep.subr.mxu0 0.0
      %563 = vmatpush1.xpose.msra.mxu0 %v532
      %564 = vmatprep.subr.mxu0 0.0
      %565 = vmatpush1.xpose.msra.mxu0 %v529
      %566 = vmatprep.subr.mxu0 0.0
      %567 = vmatpush2.xpose.msra.mxu0 0.0
      %568 = vmatprep.subr.mxu0 0.0
      %569 = vmatpush2.xpose.msra.mxu0 0.0
      %570 = vmatprep.subr.mxu0 0.0
      %571 = vmatpush2.xpose.msra.mxu0 0.0
      %572 = vmatprep.subr.mxu0 0.0
      %573 = vmatpush2.xpose.msra.mxu0 0.0
      %574 = vmatprep.subr.mxu0 0.0
      %575 = vmatpush2.xpose.msra.mxu0 0.0
      %576 = vmatprep.subr.mxu0 0.0
      %577 = vmatpush2.xpose.msra.mxu0 0.0
      %578 = vmatprep.subr.mxu0 0.0
      %579 = vmatpush2.xpose.msra.mxu0 0.0
      %580 = vmatprep.subr.mxu0 0.0
      %581 = vmatpush2.xpose.msra.mxu0 0.0
      %582 = vmatprep.subr.mxu0 0.0
      %583 = vmatpush2.xpose.msra.mxu0 0.0
      %584 = vmatprep.subr.mxu0 0.0
      %585 = vmatpush2.xpose.msra.mxu0 0.0
      %586 = vmatprep.subr.mxu0 0.0
      %587 = vmatpush2.xpose.msra.mxu0 0.0
      %588 = vmatprep.subr.mxu0 0.0
      %589 = vmatpush2.xpose.msra.mxu0 0.0
      %590 = vmatprep.subr.mxu0 0.0
      %591 = vmatpush2.xpose.msra.mxu0 0.0
      %592 = vmatprep.subr.mxu0 0.0
      %593 = vmatpush2.xpose.msra.mxu0 0.0
      %594 = vmatprep.subr.mxu0 0.0
      %595 = vmatpush2.xpose.msra.mxu0 0.0
      %596 = vmatprep.subr.mxu0 0.0
      %597 = vmatpush2.xpose.msra.mxu0 0.0
      %598 = vmatprep.mubr.f32.mxu0 0.0
      %599 = vmatmul.mubr.f32.gmra.mxu0 %v523
      %v600 = vpop.f32.mrf.mxu0
      %v601 = vadd.f32 0.0, %v600
      %v602 = vpop.f32.mrf.mxu0
      %603 = vmatprep.mubr.f32.mxu0 0.0
      %604 = vmatmul.mubr.f32.gmra.mxu0 %v526
      %v605 = vpop.f32.mrf.mxu0
      %v606 = vadd.f32 0.0, %v605
      %v607 = vpop.f32.mrf.mxu0
      %608 = vdwg.mxu0
      %v610 = vsel %vm347, %v328, 0
      %v613 = vsel %vm347, %v329, 0
      %v616 = vsel %vm347, %v336, 0
      %v619 = vsel %vm347, %v337, 0
      %621 = vmatprep.subr.mxu0 0.0
      %622 = vmatpush1.xpose.msra.mxu0 0.0
      %623 = vmatprep.subr.mxu0 0.0
      %624 = vmatpush1.xpose.msra.mxu0 0.0
      %625 = vmatprep.subr.mxu0 0.0
      %626 = vmatpush1.xpose.msra.mxu0 0.0
      %627 = vmatprep.subr.mxu0 0.0
      %628 = vmatpush1.xpose.msra.mxu0 0.0
      %629 = vmatprep.subr.mxu0 0.0
      %630 = vmatpush1.xpose.msra.mxu0 0.0
      %631 = vmatprep.subr.mxu0 0.0
      %632 = vmatpush1.xpose.msra.mxu0 0.0
      %633 = vmatprep.subr.mxu0 0.0
      %634 = vmatpush1.xpose.msra.mxu0 0.0
      %635 = vmatprep.subr.mxu0 0.0
      %636 = vmatpush1.xpose.msra.mxu0 0.0
      %637 = vmatprep.subr.mxu0 0.0
      %638 = vmatpush1.xpose.msra.mxu0 0.0
      %639 = vmatprep.subr.mxu0 0.0
      %640 = vmatpush1.xpose.msra.mxu0 0.0
      %641 = vmatprep.subr.mxu0 0.0
      %642 = vmatpush1.xpose.msra.mxu0 0.0
      %643 = vmatprep.subr.mxu0 0.0
      %644 = vmatpush1.xpose.msra.mxu0 0.0
      %645 = vmatprep.subr.mxu0 0.0
      %646 = vmatpush1.xpose.msra.mxu0 0.0
      %647 = vmatprep.subr.mxu0 0.0
      %648 = vmatpush1.xpose.msra.mxu0 0.0
      %649 = vmatprep.subr.mxu0 0.0
      %650 = vmatpush1.xpose.msra.mxu0 %v619
      %651 = vmatprep.subr.mxu0 0.0
      %652 = vmatpush1.xpose.msra.mxu0 %v616
      %653 = vmatprep.subr.mxu0 0.0
      %654 = vmatpush2.xpose.msra.mxu0 0.0
      %655 = vmatprep.subr.mxu0 0.0
      %656 = vmatpush2.xpose.msra.mxu0 0.0
      %657 = vmatprep.subr.mxu0 0.0
      %658 = vmatpush2.xpose.msra.mxu0 0.0
      %659 = vmatprep.subr.mxu0 0.0
      %660 = vmatpush2.xpose.msra.mxu0 0.0
      %661 = vmatprep.subr.mxu0 0.0
      %662 = vmatpush2.xpose.msra.mxu0 0.0
      %663 = vmatprep.subr.mxu0 0.0
      %664 = vmatpush2.xpose.msra.mxu0 0.0
      %665 = vmatprep.subr.mxu0 0.0
      %666 = vmatpush2.xpose.msra.mxu0 0.0
      %667 = vmatprep.subr.mxu0 0.0
      %668 = vmatpush2.xpose.msra.mxu0 0.0
      %669 = vmatprep.subr.mxu0 0.0
      %670 = vmatpush2.xpose.msra.mxu0 0.0
      %671 = vmatprep.subr.mxu0 0.0
      %672 = vmatpush2.xpose.msra.mxu0 0.0
      %673 = vmatprep.subr.mxu0 0.0
      %674 = vmatpush2.xpose.msra.mxu0 0.0
      %675 = vmatprep.subr.mxu0 0.0
      %676 = vmatpush2.xpose.msra.mxu0 0.0
      %677 = vmatprep.subr.mxu0 0.0
      %678 = vmatpush2.xpose.msra.mxu0 0.0
      %679 = vmatprep.subr.mxu0 0.0
      %680 = vmatpush2.xpose.msra.mxu0 0.0
      %681 = vmatprep.subr.mxu0 0.0
      %682 = vmatpush2.xpose.msra.mxu0 0.0
      %683 = vmatprep.subr.mxu0 0.0
      %684 = vmatpush2.xpose.msra.mxu0 0.0
      %685 = vmatprep.mubr.f32.mxu0 0.0
      %686 = vmatmul.mubr.f32.gmra.mxu0 %v610
      %v687 = vpop.f32.mrf.mxu0
      %v688 = vadd.f32 0.0, %v687
      %v689 = vpop.f32.mrf.mxu0
      %690 = vmatprep.mubr.f32.mxu0 0.0
      %691 = vmatmul.mubr.f32.gmra.mxu0 %v613
      %v692 = vpop.f32.mrf.mxu0
      %v693 = vadd.f32 0.0, %v692
      %v694 = vpop.f32.mrf.mxu0
      %695 = vdwg.mxu0
      %vm696 = vcmask 130048
      %v697 = vsel %vm696, %v427, -inf
      %698 = vmax.xlane.f32.xlu0 %v697
      %v699 = vpop.xlane.xlu0 %698
      %v700 = vsel %vm696, %v432, -inf
      %701 = vmax.xlane.f32.xlu0 %v700
      %v702 = vpop.xlane.xlu0 %701
      %v703 = vsel %vm696, %v514, -inf
      %704 = vmax.xlane.f32.xlu0 %v703
      %v705 = vpop.xlane.xlu0 %704
      %v706 = vsel %vm696, %v519, -inf
      %707 = vmax.xlane.f32.xlu0 %v706
      %v708 = vpop.xlane.xlu0 %707
      %v709 = vsel %vm696, %v601, -inf
      %710 = vmax.xlane.f32.xlu0 %v709
      %v711 = vpop.xlane.xlu0 %710
      %v712 = vsel %vm696, %v606, -inf
      %713 = vmax.xlane.f32.xlu0 %v712
      %v714 = vpop.xlane.xlu0 %713
      %v715 = vsel %vm696, %v688, -inf
      %716 = vmax.xlane.f32.xlu0 %v715
      %v717 = vpop.xlane.xlu0 %716
      %v718 = vsel %vm696, %v693, -inf
      %719 = vmax.xlane.f32.xlu0 %v718
      %v720 = vpop.xlane.xlu0 %719
      %v721 = vsub.f32 %v427, %v699
      %v722 = vsub.f32 %v432, %v702
      %v723 = vsub.f32 %v514, %v705
      %v724 = vsub.f32 %v519, %v708
      %v725 = vsub.f32 %v601, %v711
      %v726 = vsub.f32 %v606, %v714
      %v727 = vsub.f32 %v688, %v717
      %v728 = vsub.f32 %v693, %v720
      %v729 = vmul.f32 %v721, 1.442695
      %v730 = vpow.pop %v729
      %v731 = vmul.f32 %v722, 1.442695
      %v732 = vpow.pop %v731
      %v733 = vmul.f32 %v723, 1.442695
      %v734 = vpow.pop %v733
      %v735 = vmul.f32 %v724, 1.442695
      %v736 = vpow.pop %v735
      %v737 = vmul.f32 %v725, 1.442695
      %v738 = vpow.pop %v737
      %v739 = vmul.f32 %v726, 1.442695
      %v740 = vpow.pop %v739
      %v741 = vmul.f32 %v727, 1.442695
      %v742 = vpow.pop %v741
      %v743 = vmul.f32 %v728, 1.442695
      %v744 = vpow.pop %v743
      %v745 = vsel %vm696, %v730, 0.0
      %746 = vadd.xlane.f32.xlu0 %v745
      %v747 = vpop.xlane.xlu0 %746
      %v748 = vsel %vm696, %v732, 0.0
      %749 = vadd.xlane.f32.xlu0 %v748
      %v750 = vpop.xlane.xlu0 %749
      %v751 = vsel %vm696, %v734, 0.0
      %752 = vadd.xlane.f32.xlu0 %v751
      %v753 = vpop.xlane.xlu0 %752
      %v754 = vsel %vm696, %v736, 0.0
      %755 = vadd.xlane.f32.xlu0 %v754
      %v756 = vpop.xlane.xlu0 %755
      %v757 = vsel %vm696, %v738, 0.0
      %758 = vadd.xlane.f32.xlu0 %v757
      %v759 = vpop.xlane.xlu0 %758
      %v760 = vsel %vm696, %v740, 0.0
      %761 = vadd.xlane.f32.xlu0 %v760
      %v762 = vpop.xlane.xlu0 %761
      %v763 = vsel %vm696, %v742, 0.0
      %764 = vadd.xlane.f32.xlu0 %v763
      %v765 = vpop.xlane.xlu0 %764
      %v766 = vsel %vm696, %v744, 0.0
      %767 = vadd.xlane.f32.xlu0 %v766
      %v768 = vpop.xlane.xlu0 %767
      %v769 = vrcp.pop %v747
      %v770 = vrcp.pop %v750
      %v771 = vrcp.pop %v753
      %v772 = vrcp.pop %v756
      %v773 = vrcp.pop %v759
      %v774 = vrcp.pop %v762
      %v775 = vrcp.pop %v765
      %v776 = vrcp.pop %v768
      %v777 = vmul.f32 %v730, %v769
      %v778 = vmul.f32 %v732, %v770
      %v779 = vmul.f32 %v734, %v771
      %v780 = vmul.f32 %v736, %v772
      %v781 = vmul.f32 %v738, %v773
      %v782 = vmul.f32 %v740, %v774
      %v783 = vmul.f32 %v742, %v775
      %v784 = vmul.f32 %v744, %v776
      %v786 = vsel %vm696, %v777, 0
      %v789 = vsel %vm696, %v778, 0
      %791 = vmatprep.subr.mxu0 0.0
      %792 = vmatpush1.msra.mxu0 0.0
      %793 = vmatprep.subr.mxu0 0.0
      %794 = vmatpush1.msra.mxu0 0.0
      %795 = vmatprep.subr.mxu0 0.0
      %796 = vmatpush1.msra.mxu0 0.0
      %797 = vmatprep.subr.mxu0 0.0
      %798 = vmatpush1.msra.mxu0 0.0
      %799 = vmatprep.subr.mxu0 0.0
      %800 = vmatpush1.msra.mxu0 0.0
      %801 = vmatprep.subr.mxu0 0.0
      %802 = vmatpush1.msra.mxu0 0.0
      %803 = vmatprep.subr.mxu0 0.0
      %804 = vmatpush1.msra.mxu0 0.0
      %805 = vmatprep.subr.mxu0 0.0
      %806 = vmatpush1.msra.mxu0 0.0
      %807 = vmatprep.subr.mxu0 0.0
      %808 = vmatpush1.msra.mxu0 0.0
      %809 = vmatprep.subr.mxu0 0.0
      %810 = vmatpush1.msra.mxu0 0.0
      %811 = vmatprep.subr.mxu0 0.0
      %812 = vmatpush1.msra.mxu0 0.0
      %813 = vmatprep.subr.mxu0 0.0
      %814 = vmatpush1.msra.mxu0 0.0
      %815 = vmatprep.subr.mxu0 0.0
      %816 = vmatpush1.msra.mxu0 0.0
      %817 = vmatprep.subr.mxu0 0.0
      %818 = vmatpush1.msra.mxu0 0.0
      %819 = vmatprep.subr.mxu0 0.0
      %820 = vmatpush1.msra.mxu0 %v340
      %821 = vmatprep.subr.mxu0 0.0
      %822 = vmatpush1.msra.mxu0 %v339
      %823 = vmatprep.subr.mxu0 0.0
      %824 = vmatpush2.msra.mxu0 0.0
      %825 = vmatprep.subr.mxu0 0.0
      %826 = vmatpush2.msra.mxu0 0.0
      %827 = vmatprep.subr.mxu0 0.0
      %828 = vmatpush2.msra.mxu0 0.0
      %829 = vmatprep.subr.mxu0 0.0
      %830 = vmatpush2.msra.mxu0 0.0
      %831 = vmatprep.subr.mxu0 0.0
      %832 = vmatpush2.msra.mxu0 0.0
      %833 = vmatprep.subr.mxu0 0.0
      %834 = vmatpush2.msra.mxu0 0.0
      %835 = vmatprep.subr.mxu0 0.0
      %836 = vmatpush2.msra.mxu0 0.0
      %837 = vmatprep.subr.mxu0 0.0
      %838 = vmatpush2.msra.mxu0 0.0
      %839 = vmatprep.subr.mxu0 0.0
      %840 = vmatpush2.msra.mxu0 0.0
      %841 = vmatprep.subr.mxu0 0.0
      %842 = vmatpush2.msra.mxu0 0.0
      %843 = vmatprep.subr.mxu0 0.0
      %844 = vmatpush2.msra.mxu0 0.0
      %845 = vmatprep.subr.mxu0 0.0
      %846 = vmatpush2.msra.mxu0 0.0
      %847 = vmatprep.subr.mxu0 0.0
      %848 = vmatpush2.msra.mxu0 0.0
      %849 = vmatprep.subr.mxu0 0.0
      %850 = vmatpush2.msra.mxu0 0.0
      %851 = vmatprep.subr.mxu0 0.0
      %852 = vmatpush2.msra.mxu0 0.0
      %853 = vmatprep.subr.mxu0 0.0
      %854 = vmatpush2.msra.mxu0 0.0
      %855 = vmatprep.mubr.f32.mxu0 0.0
      %856 = vmatmul.mubr.f32.gmra.mxu0 %v786
      %v857 = vpop.f32.mrf.mxu0
      %v858 = vadd.f32 0.0, %v857
      %v859 = vpop.f32.mrf.mxu0
      %860 = vmatprep.mubr.f32.mxu0 0.0
      %861 = vmatmul.mubr.f32.gmra.mxu0 %v789
      %v862 = vpop.f32.mrf.mxu0
      %v863 = vadd.f32 0.0, %v862
      %v864 = vpop.f32.mrf.mxu0
      %865 = vdwg.mxu0
      %v867 = vsel %vm696, %v779, 0
      %v870 = vsel %vm696, %v780, 0
      %872 = vmatprep.subr.mxu0 0.0
      %873 = vmatpush1.msra.mxu0 0.0
      %874 = vmatprep.subr.mxu0 0.0
      %875 = vmatpush1.msra.mxu0 0.0
      %876 = vmatprep.subr.mxu0 0.0
      %877 = vmatpush1.msra.mxu0 0.0
      %878 = vmatprep.subr.mxu0 0.0
      %879 = vmatpush1.msra.mxu0 0.0
      %880 = vmatprep.subr.mxu0 0.0
      %881 = vmatpush1.msra.mxu0 0.0
      %882 = vmatprep.subr.mxu0 0.0
      %883 = vmatpush1.msra.mxu0 0.0
      %884 = vmatprep.subr.mxu0 0.0
      %885 = vmatpush1.msra.mxu0 0.0
      %886 = vmatprep.subr.mxu0 0.0
      %887 = vmatpush1.msra.mxu0 0.0
      %888 = vmatprep.subr.mxu0 0.0
      %889 = vmatpush1.msra.mxu0 0.0
      %890 = vmatprep.subr.mxu0 0.0
      %891 = vmatpush1.msra.mxu0 0.0
      %892 = vmatprep.subr.mxu0 0.0
      %893 = vmatpush1.msra.mxu0 0.0
      %894 = vmatprep.subr.mxu0 0.0
      %895 = vmatpush1.msra.mxu0 0.0
      %896 = vmatprep.subr.mxu0 0.0
      %897 = vmatpush1.msra.mxu0 0.0
      %898 = vmatprep.subr.mxu0 0.0
      %899 = vmatpush1.msra.mxu0 0.0
      %900 = vmatprep.subr.mxu0 0.0
      %901 = vmatpush1.msra.mxu0 %v342
      %902 = vmatprep.subr.mxu0 0.0
      %903 = vmatpush1.msra.mxu0 %v341
      %904 = vmatprep.subr.mxu0 0.0
      %905 = vmatpush2.msra.mxu0 0.0
      %906 = vmatprep.subr.mxu0 0.0
      %907 = vmatpush2.msra.mxu0 0.0
      %908 = vmatprep.subr.mxu0 0.0
      %909 = vmatpush2.msra.mxu0 0.0
      %910 = vmatprep.subr.mxu0 0.0
      %911 = vmatpush2.msra.mxu0 0.0
      %912 = vmatprep.subr.mxu0 0.0
      %913 = vmatpush2.msra.mxu0 0.0
      %914 = vmatprep.subr.mxu0 0.0
      %915 = vmatpush2.msra.mxu0 0.0
      %916 = vmatprep.subr.mxu0 0.0
      %917 = vmatpush2.msra.mxu0 0.0
      %918 = vmatprep.subr.mxu0 0.0
      %919 = vmatpush2.msra.mxu0 0.0
      %920 = vmatprep.subr.mxu0 0.0
      %921 = vmatpush2.msra.mxu0 0.0
      %922 = vmatprep.subr.mxu0 0.0
      %923 = vmatpush2.msra.mxu0 0.0
      %924 = vmatprep.subr.mxu0 0.0
      %925 = vmatpush2.msra.mxu0 0.0
      %926 = vmatprep.subr.mxu0 0.0
      %927 = vmatpush2.msra.mxu0 0.0
      %928 = vmatprep.subr.mxu0 0.0
      %929 = vmatpush2.msra.mxu0 0.0
      %930 = vmatprep.subr.mxu0 0.0
      %931 = vmatpush2.msra.mxu0 0.0
      %932 = vmatprep.subr.mxu0 0.0
      %933 = vmatpush2.msra.mxu0 0.0
      %934 = vmatprep.subr.mxu0 0.0
      %935 = vmatpush2.msra.mxu0 0.0
      %936 = vmatprep.mubr.f32.mxu0 0.0
      %937 = vmatmul.mubr.f32.gmra.mxu0 %v867
      %v938 = vpop.f32.mrf.mxu0
      %v939 = vadd.f32 0.0, %v938
      %v940 = vpop.f32.mrf.mxu0
      %941 = vmatprep.mubr.f32.mxu0 0.0
      %942 = vmatmul.mubr.f32.gmra.mxu0 %v870
      %v943 = vpop.f32.mrf.mxu0
      %v944 = vadd.f32 0.0, %v943
      %v945 = vpop.f32.mrf.mxu0
      %946 = vdwg.mxu0
      %v948 = vsel %vm696, %v781, 0
      %v951 = vsel %vm696, %v782, 0
      %953 = vmatprep.subr.mxu0 0.0
      %954 = vmatpush1.msra.mxu0 0.0
      %955 = vmatprep.subr.mxu0 0.0
      %956 = vmatpush1.msra.mxu0 0.0
      %957 = vmatprep.subr.mxu0 0.0
      %958 = vmatpush1.msra.mxu0 0.0
      %959 = vmatprep.subr.mxu0 0.0
      %960 = vmatpush1.msra.mxu0 0.0
      %961 = vmatprep.subr.mxu0 0.0
      %962 = vmatpush1.msra.mxu0 0.0
      %963 = vmatprep.subr.mxu0 0.0
      %964 = vmatpush1.msra.mxu0 0.0
      %965 = vmatprep.subr.mxu0 0.0
      %966 = vmatpush1.msra.mxu0 0.0
      %967 = vmatprep.subr.mxu0 0.0
      %968 = vmatpush1.msra.mxu0 0.0
      %969 = vmatprep.subr.mxu0 0.0
      %970 = vmatpush1.msra.mxu0 0.0
      %971 = vmatprep.subr.mxu0 0.0
      %972 = vmatpush1.msra.mxu0 0.0
      %973 = vmatprep.subr.mxu0 0.0
      %974 = vmatpush1.msra.mxu0 0.0
      %975 = vmatprep.subr.mxu0 0.0
      %976 = vmatpush1.msra.mxu0 0.0
      %977 = vmatprep.subr.mxu0 0.0
      %978 = vmatpush1.msra.mxu0 0.0
      %979 = vmatprep.subr.mxu0 0.0
      %980 = vmatpush1.msra.mxu0 0.0
      %981 = vmatprep.subr.mxu0 0.0
      %982 = vmatpush1.msra.mxu0 %v344
      %983 = vmatprep.subr.mxu0 0.0
      %984 = vmatpush1.msra.mxu0 %v343
      %985 = vmatprep.subr.mxu0 0.0
      %986 = vmatpush2.msra.mxu0 0.0
      %987 = vmatprep.subr.mxu0 0.0
      %988 = vmatpush2.msra.mxu0 0.0
      %989 = vmatprep.subr.mxu0 0.0
      %990 = vmatpush2.msra.mxu0 0.0
      %991 = vmatprep.subr.mxu0 0.0
      %992 = vmatpush2.msra.mxu0 0.0
      %993 = vmatprep.subr.mxu0 0.0
      %994 = vmatpush2.msra.mxu0 0.0
      %995 = vmatprep.subr.mxu0 0.0
      %996 = vmatpush2.msra.mxu0 0.0
      %997 = vmatprep.subr.mxu0 0.0
      %998 = vmatpush2.msra.mxu0 0.0
      %999 = vmatprep.subr.mxu0 0.0
      %1000 = vmatpush2.msra.mxu0 0.0
      %1001 = vmatprep.subr.mxu0 0.0
      %1002 = vmatpush2.msra.mxu0 0.0
      %1003 = vmatprep.subr.mxu0 0.0
      %1004 = vmatpush2.msra.mxu0 0.0
      %1005 = vmatprep.subr.mxu0 0.0
      %1006 = vmatpush2.msra.mxu0 0.0
      %1007 = vmatprep.subr.mxu0 0.0
      %1008 = vmatpush2.msra.mxu0 0.0
      %1009 = vmatprep.subr.mxu0 0.0
      %1010 = vmatpush2.msra.mxu0 0.0
      %1011 = vmatprep.subr.mxu0 0.0
      %1012 = vmatpush2.msra.mxu0 0.0
      %1013 = vmatprep.subr.mxu0 0.0
      %1014 = vmatpush2.msra.mxu0 0.0
      %1015 = vmatprep.subr.mxu0 0.0
      %1016 = vmatpush2.msra.mxu0 0.0
      %1017 = vmatprep.mubr.f32.mxu0 0.0
      %1018 = vmatmul.mubr.f32.gmra.mxu0 %v948
      %v1019 = vpop.f32.mrf.mxu0
      %v1020 = vadd.f32 0.0, %v1019
      %v1021 = vpop.f32.mrf.mxu0
      %1022 = vmatprep.mubr.f32.mxu0 0.0
      %1023 = vmatmul.mubr.f32.gmra.mxu0 %v951
      %v1024 = vpop.f32.mrf.mxu0
      %v1025 = vadd.f32 0.0, %v1024
      %v1026 = vpop.f32.mrf.mxu0
      %1027 = vdwg.mxu0
      %v1029 = vsel %vm696, %v783, 0
      %v1032 = vsel %vm696, %v784, 0
      %1034 = vmatprep.subr.mxu0 0.0
      %1035 = vmatpush1.msra.mxu0 0.0
      %1036 = vmatprep.subr.mxu0 0.0
      %1037 = vmatpush1.msra.mxu0 0.0
      %1038 = vmatprep.subr.mxu0 0.0
      %1039 = vmatpush1.msra.mxu0 0.0
      %1040 = vmatprep.subr.mxu0 0.0
      %1041 = vmatpush1.msra.mxu0 0.0
      %1042 = vmatprep.subr.mxu0 0.0
      %1043 = vmatpush1.msra.mxu0 0.0
      %1044 = vmatprep.subr.mxu0 0.0
      %1045 = vmatpush1.msra.mxu0 0.0
      %1046 = vmatprep.subr.mxu0 0.0
      %1047 = vmatpush1.msra.mxu0 0.0
      %1048 = vmatprep.subr.mxu0 0.0
      %1049 = vmatpush1.msra.mxu0 0.0
      %1050 = vmatprep.subr.mxu0 0.0
      %1051 = vmatpush1.msra.mxu0 0.0
      %1052 = vmatprep.subr.mxu0 0.0
      %1053 = vmatpush1.msra.mxu0 0.0
      %1054 = vmatprep.subr.mxu0 0.0
      %1055 = vmatpush1.msra.mxu0 0.0
      %1056 = vmatprep.subr.mxu0 0.0
      %1057 = vmatpush1.msra.mxu0 0.0
      %1058 = vmatprep.subr.mxu0 0.0
      %1059 = vmatpush1.msra.mxu0 0.0
      %1060 = vmatprep.subr.mxu0 0.0
      %1061 = vmatpush1.msra.mxu0 0.0
      %1062 = vmatprep.subr.mxu0 0.0
      %1063 = vmatpush1.msra.mxu0 %v346
      %1064 = vmatprep.subr.mxu0 0.0
      %1065 = vmatpush1.msra.mxu0 %v345
      %1066 = vmatprep.subr.mxu0 0.0
      %1067 = vmatpush2.msra.mxu0 0.0
      %1068 = vmatprep.subr.mxu0 0.0
      %1069 = vmatpush2.msra.mxu0 0.0
      %1070 = vmatprep.subr.mxu0 0.0
      %1071 = vmatpush2.msra.mxu0 0.0
      %1072 = vmatprep.subr.mxu0 0.0
      %1073 = vmatpush2.msra.mxu0 0.0
      %1074 = vmatprep.subr.mxu0 0.0
      %1075 = vmatpush2.msra.mxu0 0.0
      %1076 = vmatprep.subr.mxu0 0.0
      %1077 = vmatpush2.msra.mxu0 0.0
      %1078 = vmatprep.subr.mxu0 0.0
      %1079 = vmatpush2.msra.mxu0 0.0
      %1080 = vmatprep.subr.mxu0 0.0
      %1081 = vmatpush2.msra.mxu0 0.0
      %1082 = vmatprep.subr.mxu0 0.0
      %1083 = vmatpush2.msra.mxu0 0.0
      %1084 = vmatprep.subr.mxu0 0.0
      %1085 = vmatpush2.msra.mxu0 0.0
      %1086 = vmatprep.subr.mxu0 0.0
      %1087 = vmatpush2.msra.mxu0 0.0
      %1088 = vmatprep.subr.mxu0 0.0
      %1089 = vmatpush2.msra.mxu0 0.0
      %1090 = vmatprep.subr.mxu0 0.0
      %1091 = vmatpush2.msra.mxu0 0.0
      %1092 = vmatprep.subr.mxu0 0.0
      %1093 = vmatpush2.msra.mxu0 0.0
      %1094 = vmatprep.subr.mxu0 0.0
      %1095 = vmatpush2.msra.mxu0 0.0
      %1096 = vmatprep.subr.mxu0 0.0
      %1097 = vmatpush2.msra.mxu0 0.0
      %1098 = vmatprep.mubr.f32.mxu0 0.0
      %1099 = vmatmul.mubr.f32.gmra.mxu0 %v1029
      %v1100 = vpop.f32.mrf.mxu0
      %v1101 = vadd.f32 0.0, %v1100
      %v1102 = vpop.f32.mrf.mxu0
      %1103 = vmatprep.mubr.f32.mxu0 0.0
      %1104 = vmatmul.mubr.f32.gmra.mxu0 %v1032
      %v1105 = vpop.f32.mrf.mxu0
      %v1106 = vadd.f32 0.0, %v1105
      %v1107 = vpop.f32.mrf.mxu0
      %1108 = vdwg.mxu0
      %v1109 = vld [vmem:[%s3] sm:$0xf]
      %v1110 = vld [vmem:[%s3 + $0x4] sm:$0xf]
      %v1111 = vld [vmem:[%s3 + $0x8] sm:$0xf]
      %v1112 = vld [vmem:[%s3 + $0xc] sm:$0xf]
      %v1114 = vsel %vm347, %v858, 0
      %v1117 = vsel %vm347, %v863, 0
      %vm1119 = vcmask 1043456
      %v1121 = vsel %vm1119, %v1109, 0
      %1123 = vmatprep.subr.mxu0 0.0
      %1124 = vmatpush1.msra.mxu0 0.0
      %1125 = vmatprep.subr.mxu0 0.0
      %1126 = vmatpush1.msra.mxu0 0.0
      %1127 = vmatprep.subr.mxu0 0.0
      %1128 = vmatpush1.msra.mxu0 0.0
      %1129 = vmatprep.subr.mxu0 0.0
      %1130 = vmatpush1.msra.mxu0 0.0
      %1131 = vmatprep.subr.mxu0 0.0
      %1132 = vmatpush1.msra.mxu0 0.0
      %1133 = vmatprep.subr.mxu0 0.0
      %1134 = vmatpush1.msra.mxu0 0.0
      %1135 = vmatprep.subr.mxu0 0.0
      %1136 = vmatpush1.msra.mxu0 0.0
      %1137 = vmatprep.subr.mxu0 0.0
      %1138 = vmatpush1.msra.mxu0 0.0
      %1139 = vmatprep.subr.mxu0 0.0
      %1140 = vmatpush1.msra.mxu0 0.0
      %1141 = vmatprep.subr.mxu0 0.0
      %1142 = vmatpush1.msra.mxu0 0.0
      %1143 = vmatprep.subr.mxu0 0.0
      %1144 = vmatpush1.msra.mxu0 0.0
      %1145 = vmatprep.subr.mxu0 0.0
      %1146 = vmatpush1.msra.mxu0 0.0
      %1147 = vmatprep.subr.mxu0 0.0
      %1148 = vmatpush1.msra.mxu0 0.0
      %1149 = vmatprep.subr.mxu0 0.0
      %1150 = vmatpush1.msra.mxu0 0.0
      %1151 = vmatprep.subr.mxu0 0.0
      %1152 = vmatpush1.msra.mxu0 0.0
      %1153 = vmatprep.subr.mxu0 0.0
      %1154 = vmatpush1.msra.mxu0 %v1121
      %1155 = vmatprep.subr.mxu0 0.0
      %1156 = vmatpush2.msra.mxu0 0.0
      %1157 = vmatprep.subr.mxu0 0.0
      %1158 = vmatpush2.msra.mxu0 0.0
      %1159 = vmatprep.subr.mxu0 0.0
      %1160 = vmatpush2.msra.mxu0 0.0
      %1161 = vmatprep.subr.mxu0 0.0
      %1162 = vmatpush2.msra.mxu0 0.0
      %1163 = vmatprep.subr.mxu0 0.0
      %1164 = vmatpush2.msra.mxu0 0.0
      %1165 = vmatprep.subr.mxu0 0.0
      %1166 = vmatpush2.msra.mxu0 0.0
      %1167 = vmatprep.subr.mxu0 0.0
      %1168 = vmatpush2.msra.mxu0 0.0
      %1169 = vmatprep.subr.mxu0 0.0
      %1170 = vmatpush2.msra.mxu0 0.0
      %1171 = vmatprep.subr.mxu0 0.0
      %1172 = vmatpush2.msra.mxu0 0.0
      %1173 = vmatprep.subr.mxu0 0.0
      %1174 = vmatpush2.msra.mxu0 0.0
      %1175 = vmatprep.subr.mxu0 0.0
      %1176 = vmatpush2.msra.mxu0 0.0
      %1177 = vmatprep.subr.mxu0 0.0
      %1178 = vmatpush2.msra.mxu0 0.0
      %1179 = vmatprep.subr.mxu0 0.0
      %1180 = vmatpush2.msra.mxu0 0.0
      %1181 = vmatprep.subr.mxu0 0.0
      %1182 = vmatpush2.msra.mxu0 0.0
      %1183 = vmatprep.subr.mxu0 0.0
      %1184 = vmatpush2.msra.mxu0 0.0
      %1185 = vmatprep.subr.mxu0 0.0
      %1186 = vmatpush2.msra.mxu0 0.0
      %1187 = vmatprep.mubr.f32.mxu0 0.0
      %1188 = vmatmul.mubr.f32.gmra.mxu0 %v1114
      %v1189 = vpop.f32.mrf.mxu0
      %v1190 = vadd.f32 0.0, %v1189
      %v1191 = vpop.f32.mrf.mxu0
      %1192 = vmatprep.mubr.f32.mxu0 0.0
      %1193 = vmatmul.mubr.f32.gmra.mxu0 %v1117
      %v1194 = vpop.f32.mrf.mxu0
      %v1195 = vadd.f32 0.0, %v1194
      %v1196 = vpop.f32.mrf.mxu0
      %1197 = vdwg.mxu0
      %v1199 = vsel %vm347, %v939, 0
      %v1202 = vsel %vm347, %v944, 0
      %v1205 = vsel %vm1119, %v1110, 0
      %1207 = vmatprep.subr.mxu0 0.0
      %1208 = vmatpush1.msra.mxu0 0.0
      %1209 = vmatprep.subr.mxu0 0.0
      %1210 = vmatpush1.msra.mxu0 0.0
      %1211 = vmatprep.subr.mxu0 0.0
      %1212 = vmatpush1.msra.mxu0 0.0
      %1213 = vmatprep.subr.mxu0 0.0
      %1214 = vmatpush1.msra.mxu0 0.0
      %1215 = vmatprep.subr.mxu0 0.0
      %1216 = vmatpush1.msra.mxu0 0.0
      %1217 = vmatprep.subr.mxu0 0.0
      %1218 = vmatpush1.msra.mxu0 0.0
      %1219 = vmatprep.subr.mxu0 0.0
      %1220 = vmatpush1.msra.mxu0 0.0
      %1221 = vmatprep.subr.mxu0 0.0
      %1222 = vmatpush1.msra.mxu0 0.0
      %1223 = vmatprep.subr.mxu0 0.0
      %1224 = vmatpush1.msra.mxu0 0.0
      %1225 = vmatprep.subr.mxu0 0.0
      %1226 = vmatpush1.msra.mxu0 0.0
      %1227 = vmatprep.subr.mxu0 0.0
      %1228 = vmatpush1.msra.mxu0 0.0
      %1229 = vmatprep.subr.mxu0 0.0
      %1230 = vmatpush1.msra.mxu0 0.0
      %1231 = vmatprep.subr.mxu0 0.0
      %1232 = vmatpush1.msra.mxu0 0.0
      %1233 = vmatprep.subr.mxu0 0.0
      %1234 = vmatpush1.msra.mxu0 0.0
      %1235 = vmatprep.subr.mxu0 0.0
      %1236 = vmatpush1.msra.mxu0 0.0
      %1237 = vmatprep.subr.mxu0 0.0
      %1238 = vmatpush1.msra.mxu0 %v1205
      %1239 = vmatprep.subr.mxu0 0.0
      %1240 = vmatpush2.msra.mxu0 0.0
      %1241 = vmatprep.subr.mxu0 0.0
      %1242 = vmatpush2.msra.mxu0 0.0
      %1243 = vmatprep.subr.mxu0 0.0
      %1244 = vmatpush2.msra.mxu0 0.0
      %1245 = vmatprep.subr.mxu0 0.0
      %1246 = vmatpush2.msra.mxu0 0.0
      %1247 = vmatprep.subr.mxu0 0.0
      %1248 = vmatpush2.msra.mxu0 0.0
      %1249 = vmatprep.subr.mxu0 0.0
      %1250 = vmatpush2.msra.mxu0 0.0
      %1251 = vmatprep.subr.mxu0 0.0
      %1252 = vmatpush2.msra.mxu0 0.0
      %1253 = vmatprep.subr.mxu0 0.0
      %1254 = vmatpush2.msra.mxu0 0.0
      %1255 = vmatprep.subr.mxu0 0.0
      %1256 = vmatpush2.msra.mxu0 0.0
      %1257 = vmatprep.subr.mxu0 0.0
      %1258 = vmatpush2.msra.mxu0 0.0
      %1259 = vmatprep.subr.mxu0 0.0
      %1260 = vmatpush2.msra.mxu0 0.0
      %1261 = vmatprep.subr.mxu0 0.0
      %1262 = vmatpush2.msra.mxu0 0.0
      %1263 = vmatprep.subr.mxu0 0.0
      %1264 = vmatpush2.msra.mxu0 0.0
      %1265 = vmatprep.subr.mxu0 0.0
      %1266 = vmatpush2.msra.mxu0 0.0
      %1267 = vmatprep.subr.mxu0 0.0
      %1268 = vmatpush2.msra.mxu0 0.0
      %1269 = vmatprep.subr.mxu0 0.0
      %1270 = vmatpush2.msra.mxu0 0.0
      %1271 = vmatprep.mubr.f32.mxu0 0.0
      %1272 = vmatmul.mubr.f32.gmra.mxu0 %v1199
      %v1273 = vpop.f32.mrf.mxu0
      %v1274 = vadd.f32 0.0, %v1273
      %v1275 = vpop.f32.mrf.mxu0
      %1276 = vmatprep.mubr.f32.mxu0 0.0
      %1277 = vmatmul.mubr.f32.gmra.mxu0 %v1202
      %v1278 = vpop.f32.mrf.mxu0
      %v1279 = vadd.f32 0.0, %v1278
      %v1280 = vpop.f32.mrf.mxu0
      %1281 = vdwg.mxu0
      %v1283 = vsel %vm347, %v1020, 0
      %v1286 = vsel %vm347, %v1025, 0
      %v1289 = vsel %vm1119, %v1111, 0
      %1291 = vmatprep.subr.mxu0 0.0
      %1292 = vmatpush1.msra.mxu0 0.0
      %1293 = vmatprep.subr.mxu0 0.0
      %1294 = vmatpush1.msra.mxu0 0.0
      %1295 = vmatprep.subr.mxu0 0.0
      %1296 = vmatpush1.msra.mxu0 0.0
      %1297 = vmatprep.subr.mxu0 0.0
      %1298 = vmatpush1.msra.mxu0 0.0
      %1299 = vmatprep.subr.mxu0 0.0
      %1300 = vmatpush1.msra.mxu0 0.0
      %1301 = vmatprep.subr.mxu0 0.0
      %1302 = vmatpush1.msra.mxu0 0.0
      %1303 = vmatprep.subr.mxu0 0.0
      %1304 = vmatpush1.msra.mxu0 0.0
      %1305 = vmatprep.subr.mxu0 0.0
      %1306 = vmatpush1.msra.mxu0 0.0
      %1307 = vmatprep.subr.mxu0 0.0
      %1308 = vmatpush1.msra.mxu0 0.0
      %1309 = vmatprep.subr.mxu0 0.0
      %1310 = vmatpush1.msra.mxu0 0.0
      %1311 = vmatprep.subr.mxu0 0.0
      %1312 = vmatpush1.msra.mxu0 0.0
      %1313 = vmatprep.subr.mxu0 0.0
      %1314 = vmatpush1.msra.mxu0 0.0
      %1315 = vmatprep.subr.mxu0 0.0
      %1316 = vmatpush1.msra.mxu0 0.0
      %1317 = vmatprep.subr.mxu0 0.0
      %1318 = vmatpush1.msra.mxu0 0.0
      %1319 = vmatprep.subr.mxu0 0.0
      %1320 = vmatpush1.msra.mxu0 0.0
      %1321 = vmatprep.subr.mxu0 0.0
      %1322 = vmatpush1.msra.mxu0 %v1289
      %1323 = vmatprep.subr.mxu0 0.0
      %1324 = vmatpush2.msra.mxu0 0.0
      %1325 = vmatprep.subr.mxu0 0.0
      %1326 = vmatpush2.msra.mxu0 0.0
      %1327 = vmatprep.subr.mxu0 0.0
      %1328 = vmatpush2.msra.mxu0 0.0
      %1329 = vmatprep.subr.mxu0 0.0
      %1330 = vmatpush2.msra.mxu0 0.0
      %1331 = vmatprep.subr.mxu0 0.0
      %1332 = vmatpush2.msra.mxu0 0.0
      %1333 = vmatprep.subr.mxu0 0.0
      %1334 = vmatpush2.msra.mxu0 0.0
      %1335 = vmatprep.subr.mxu0 0.0
      %1336 = vmatpush2.msra.mxu0 0.0
      %1337 = vmatprep.subr.mxu0 0.0
      %1338 = vmatpush2.msra.mxu0 0.0
      %1339 = vmatprep.subr.mxu0 0.0
      %1340 = vmatpush2.msra.mxu0 0.0
      %1341 = vmatprep.subr.mxu0 0.0
      %1342 = vmatpush2.msra.mxu0 0.0
      %1343 = vmatprep.subr.mxu0 0.0
      %1344 = vmatpush2.msra.mxu0 0.0
      %1345 = vmatprep.subr.mxu0 0.0
      %1346 = vmatpush2.msra.mxu0 0.0
      %1347 = vmatprep.subr.mxu0 0.0
      %1348 = vmatpush2.msra.mxu0 0.0
      %1349 = vmatprep.subr.mxu0 0.0
      %1350 = vmatpush2.msra.mxu0 0.0
      %1351 = vmatprep.subr.mxu0 0.0
      %1352 = vmatpush2.msra.mxu0 0.0
      %1353 = vmatprep.subr.mxu0 0.0
      %1354 = vmatpush2.msra.mxu0 0.0
      %1355 = vmatprep.mubr.f32.mxu0 0.0
      %1356 = vmatmul.mubr.f32.gmra.mxu0 %v1283
      %v1357 = vpop.f32.mrf.mxu0
      %v1358 = vadd.f32 0.0, %v1357
      %v1359 = vpop.f32.mrf.mxu0
      %1360 = vmatprep.mubr.f32.mxu0 0.0
      %1361 = vmatmul.mubr.f32.gmra.mxu0 %v1286
      %v1362 = vpop.f32.mrf.mxu0
      %v1363 = vadd.f32 0.0, %v1362
      %v1364 = vpop.f32.mrf.mxu0
      %1365 = vdwg.mxu0
      %v1367 = vsel %vm347, %v1101, 0
      %v1370 = vsel %vm347, %v1106, 0
      %v1373 = vsel %vm1119, %v1112, 0
      %1375 = vmatprep.subr.mxu0 0.0
      %1376 = vmatpush1.msra.mxu0 0.0
      %1377 = vmatprep.subr.mxu0 0.0
      %1378 = vmatpush1.msra.mxu0 0.0
      %1379 = vmatprep.subr.mxu0 0.0
      %1380 = vmatpush1.msra.mxu0 0.0
      %1381 = vmatprep.subr.mxu0 0.0
      %1382 = vmatpush1.msra.mxu0 0.0
      %1383 = vmatprep.subr.mxu0 0.0
      %1384 = vmatpush1.msra.mxu0 0.0
      %1385 = vmatprep.subr.mxu0 0.0
      %1386 = vmatpush1.msra.mxu0 0.0
      %1387 = vmatprep.subr.mxu0 0.0
      %1388 = vmatpush1.msra.mxu0 0.0
      %1389 = vmatprep.subr.mxu0 0.0
      %1390 = vmatpush1.msra.mxu0 0.0
      %1391 = vmatprep.subr.mxu0 0.0
      %1392 = vmatpush1.msra.mxu0 0.0
      %1393 = vmatprep.subr.mxu0 0.0
      %1394 = vmatpush1.msra.mxu0 0.0
      %1395 = vmatprep.subr.mxu0 0.0
      %1396 = vmatpush1.msra.mxu0 0.0
      %1397 = vmatprep.subr.mxu0 0.0
      %1398 = vmatpush1.msra.mxu0 0.0
      %1399 = vmatprep.subr.mxu0 0.0
      %1400 = vmatpush1.msra.mxu0 0.0
      %1401 = vmatprep.subr.mxu0 0.0
      %1402 = vmatpush1.msra.mxu0 0.0
      %1403 = vmatprep.subr.mxu0 0.0
      %1404 = vmatpush1.msra.mxu0 0.0
      %1405 = vmatprep.subr.mxu0 0.0
      %1406 = vmatpush1.msra.mxu0 %v1373
      %1407 = vmatprep.subr.mxu0 0.0
      %1408 = vmatpush2.msra.mxu0 0.0
      %1409 = vmatprep.subr.mxu0 0.0
      %1410 = vmatpush2.msra.mxu0 0.0
      %1411 = vmatprep.subr.mxu0 0.0
      %1412 = vmatpush2.msra.mxu0 0.0
      %1413 = vmatprep.subr.mxu0 0.0
      %1414 = vmatpush2.msra.mxu0 0.0
      %1415 = vmatprep.subr.mxu0 0.0
      %1416 = vmatpush2.msra.mxu0 0.0
      %1417 = vmatprep.subr.mxu0 0.0
      %1418 = vmatpush2.msra.mxu0 0.0
      %1419 = vmatprep.subr.mxu0 0.0
      %1420 = vmatpush2.msra.mxu0 0.0
      %1421 = vmatprep.subr.mxu0 0.0
      %1422 = vmatpush2.msra.mxu0 0.0
      %1423 = vmatprep.subr.mxu0 0.0
      %1424 = vmatpush2.msra.mxu0 0.0
      %1425 = vmatprep.subr.mxu0 0.0
      %1426 = vmatpush2.msra.mxu0 0.0
      %1427 = vmatprep.subr.mxu0 0.0
      %1428 = vmatpush2.msra.mxu0 0.0
      %1429 = vmatprep.subr.mxu0 0.0
      %1430 = vmatpush2.msra.mxu0 0.0
      %1431 = vmatprep.subr.mxu0 0.0
      %1432 = vmatpush2.msra.mxu0 0.0
      %1433 = vmatprep.subr.mxu0 0.0
      %1434 = vmatpush2.msra.mxu0 0.0
      %1435 = vmatprep.subr.mxu0 0.0
      %1436 = vmatpush2.msra.mxu0 0.0
      %1437 = vmatprep.subr.mxu0 0.0
      %1438 = vmatpush2.msra.mxu0 0.0
      %1439 = vmatprep.mubr.f32.mxu0 0.0
      %1440 = vmatmul.mubr.f32.gmra.mxu0 %v1367
      %v1441 = vpop.f32.mrf.mxu0
      %v1442 = vadd.f32 0.0, %v1441
      %v1443 = vpop.f32.mrf.mxu0
      %1444 = vmatprep.mubr.f32.mxu0 0.0
      %1445 = vmatmul.mubr.f32.gmra.mxu0 %v1370
      %v1446 = vpop.f32.mrf.mxu0
      %v1447 = vadd.f32 0.0, %v1446
      %v1448 = vpop.f32.mrf.mxu0
      %1449 = vdwg.mxu0
      %v1450 = vsel %vm696, %v1190, 0.0
      %v1451 = vsel %vm696, %v1274, 0.0
      %v1452 = vadd.f32 %v1450, %v1451
      %v1453 = vsel %vm696, %v1358, 0.0
      %v1454 = vadd.f32 %v1452, %v1453
      %v1455 = vsel %vm696, %v1442, 0.0
      %v1456 = vadd.f32 %v1454, %v1455
      %v1457 = vsel %vm696, %v1195, 0.0
      %v1458 = vsel %vm696, %v1279, 0.0
      %v1459 = vadd.f32 %v1457, %v1458
      %v1460 = vsel %vm696, %v1363, 0.0
      %v1461 = vadd.f32 %v1459, %v1460
      %v1462 = vsel %vm696, %v1447, 0.0
      %v1463 = vadd.f32 %v1461, %v1462
      %v1464 = vadd.f32 %v320, %v1456
      %v1465 = vadd.f32 %v321, %v1463
      %v1466 = vld [vmem:[%s4] sm:$0x1]
      %v1468 = vlaneseq
      %v1469 = vshrl.u32 %v1468, 7
      %v1470 = vsub.s32 0, %v1469
      %v1471 = vrot.slane %v1466, %v1470
      %v1473 = vadd.f32 %v1464, %v1471
      %v1474 = vadd.f32 %v1465, %v1471
      %1475 = vst.msk [vmem:[%s318] sm:$0xff] %vm696, %v1473
      %1476 = vst.msk [vmem:[%s318 + $0x8] sm:$0xff] %vm696, %v1474
      %s1477 = smul.u32 2, %s21
      %p1478 = scmp.lt.s32.totalorder %s20, 3
      %s1479 = scalar_select %p1478, %s20, 3
      %p1480 = scmp.lt.s32.totalorder %s1477, 1
      %s1481 = scalar_select %p1480, %s1477, 1
      %s1482 = smul.addr %s1479, 2
      %s1483 = sadd.s32 %s1481, %s1482
      %s1484 = smul.addr %s1483, 8
      %s1485 = scalar_lea.vmem %s5, %s1484
      // Predicated region
      $region41: #{eegjepa_forward.24} parent=39 // pred_check
        %p1486 = pneg %p172
      $region42: #{eegjepa_forward.24} parent=39 // pred_check_branch
        %1488 = sbr.rel (%p1486) target = $region44
      $region43: #{eegjepa_forward.24} parent=39 // pred_region
        %s1489 = smul.u32 2, %s21
      $region44: #{eegjepa_forward.24} parent=39 // pred_fallthru
        _
    $region40: #{eegjepa_forward.24} parent=5 // pred_fallthru
      _
    %p1490 = scmp.le.s32.totalorder 2, %s11
    // Predicated region
    $region45: #{eegjepa_forward.24} parent=5 // pred_check
      %p1491 = pneg %p1490
    $region46: #{eegjepa_forward.24} parent=5 // pred_check_branch
      %1493 = sbr.rel (%p1491) target = $region48
    $region47: #{eegjepa_forward.24} parent=5 // pred_region
      %s1494 = ssub.s32 %s11, 2
      // Predicated region
      $region49: #{eegjepa_forward.24} parent=47 // pred_check
        %p1495 = pneg %p178
      $region50: #{eegjepa_forward.24} parent=47 // pred_check_branch
        %1497 = sbr.rel (%p1495) target = $region52
      $region51: #{eegjepa_forward.24} parent=47 // pred_region
        %s1498 = smul.u32 2, %s23
        %p1499 = scmp.lt.s32.totalorder %s22, 3
        %s1500 = scalar_select %p1499, %s22, 3
        %p1501 = scmp.lt.s32.totalorder %s1498, 1
        %s1502 = scalar_select %p1501, %s1498, 1
        %s1503 = smul.addr %s1500, 2
        %s1504 = sadd.s32 %s1502, %s1503
        %s1505 = smul.addr %s1504, 8
        %s1506 = scalar_lea.vmem %s5, %s1505
      $region52: #{eegjepa_forward.24} parent=47 // pred_fallthru
        _
    $region48: #{eegjepa_forward.24} parent=5 // pred_fallthru
      _
  $region6: #{eegjepa_forward.24} parent=0 // loop_footer
    %s15 = sadd.s32 1, %s11
  $region7: #{eegjepa_forward.24} parent=0 // loop_footer_branch
    %10 = sbr.rel target = $region3
  $region8: #{eegjepa_forward.24} parent=0 // loop_exit
    _

// kernel: eegjepa_forward.25
$region0: #{eegjepa_forward.25}
  #allocation0 [shape = 'u32[]', space=smem, size = 0x4, offset = 0x4, fixed_abs, tag = 'smem constant byte address 0x4 - core index']
  #allocation1 [shape = 'u32[144,128]{1,0:T(1,128)}', space=vmem, size = 0x12000, scoped, tag = 'internal scratch']
  %s0 = inlined_call_operand.vmem [shape: f32[64,16], index: 0, kind: input, shape index: {}]
  %s1 = inlined_call_operand.vmem [shape: f32[1,16], index: 1, kind: input, shape index: {}]
  %s2 = inlined_call_operand.vmem [shape: f32[1,16], index: 2, kind: input, shape index: {}]
  %s3 = inlined_call_operand.vmem [shape: f32[16,64], index: 3, kind: input, shape index: {}]
  %s4 = inlined_call_operand.vmem [shape: f32[1,64], index: 4, kind: input, shape index: {}]
  %s5 = inlined_call_operand.vmem [shape: f32[64,16], index: 5, kind: input, shape index: {}]
  %s6 = inlined_call_operand.vmem [shape: f32[1,16], index: 6, kind: input, shape index: {}]
  %s7 = inlined_call_operand.vmem [shape: f32[64,16], index: 7, kind: output, shape index: {}]
  %s8 = sld [smem:[#allocation0]]
  $region38: #{eegjepa_forward.25} parent=0
    _
  %s10 = ssub.s32 1, %s8
  %s11 = scalar_select 0, %s10, %s8
  // Predicated region
  $region2: #{eegjepa_forward.25} parent=0 // pred_check
    _
  $region3: #{eegjepa_forward.25} parent=0 // pred_check_branch
    %13 = sbr.rel (0) target = $region5
  $region4: #{eegjepa_forward.25} parent=0 // pred_region
    _
  $region5: #{eegjepa_forward.25} parent=0 // pred_fallthru
    _
  // Predicated region
  $region6: #{eegjepa_forward.25} parent=0 // pred_check
    _
  $region7: #{eegjepa_forward.25} parent=0 // pred_check_branch
    %15 = sbr.rel (0) target = $region9
  $region8: #{eegjepa_forward.25} parent=0 // pred_region
    _
  $region9: #{eegjepa_forward.25} parent=0 // pred_fallthru
    _
  // Predicated region
  $region10: #{eegjepa_forward.25} parent=0 // pred_check
    _
  $region11: #{eegjepa_forward.25} parent=0 // pred_check_branch
    %17 = sbr.rel (0) target = $region13
  $region12: #{eegjepa_forward.25} parent=0 // pred_region
    _
  $region13: #{eegjepa_forward.25} parent=0 // pred_fallthru
    _
  // Predicated region
  $region14: #{eegjepa_forward.25} parent=0 // pred_check
    _
  $region15: #{eegjepa_forward.25} parent=0 // pred_check_branch
    %19 = sbr.rel (0) target = $region17
  $region16: #{eegjepa_forward.25} parent=0 // pred_region
    _
  $region17: #{eegjepa_forward.25} parent=0 // pred_fallthru
    _
  // Predicated region
  $region18: #{eegjepa_forward.25} parent=0 // pred_check
    _
  $region19: #{eegjepa_forward.25} parent=0 // pred_check_branch
    %21 = sbr.rel (0) target = $region21
  $region20: #{eegjepa_forward.25} parent=0 // pred_region
    _
  $region21: #{eegjepa_forward.25} parent=0 // pred_fallthru
    _
  // Predicated region
  $region22: #{eegjepa_forward.25} parent=0 // pred_check
    _
  $region23: #{eegjepa_forward.25} parent=0 // pred_check_branch
    %23 = sbr.rel (0) target = $region25
  $region24: #{eegjepa_forward.25} parent=0 // pred_region
    _
  $region25: #{eegjepa_forward.25} parent=0 // pred_fallthru
    _
  // Predicated region
  $region26: #{eegjepa_forward.25} parent=0 // pred_check
    _
  $region27: #{eegjepa_forward.25} parent=0 // pred_check_branch
    %25 = sbr.rel (0) target = $region29
  $region28: #{eegjepa_forward.25} parent=0 // pred_region
    _
  $region29: #{eegjepa_forward.25} parent=0 // pred_fallthru
    _
  %v26 = vld [vmem:[%s0] sm:$0xff]
  %v27 = vld [vmem:[%s0 + $0x8] sm:$0xff]
  %v28 = vld [vmem:[%s0 + $0x10] sm:$0xff]
  %v29 = vld [vmem:[%s0 + $0x18] sm:$0xff]
  %v30 = vld [vmem:[%s0 + $0x20] sm:$0xff]
  %v31 = vld [vmem:[%s0 + $0x28] sm:$0xff]
  %v32 = vld [vmem:[%s0 + $0x30] sm:$0xff]
  %v33 = vld [vmem:[%s0 + $0x38] sm:$0xff]
  %vm34 = vcmask 130048
  %v35 = vsel %vm34, %v26, 0.0
  %36 = vadd.xlane.f32.xlu0 %v35
  %v37 = vpop.xlane.xlu0 %36
  %v38 = vsel %vm34, %v27, 0.0
  %39 = vadd.xlane.f32.xlu0 %v38
  %v40 = vpop.xlane.xlu0 %39
  %v41 = vsel %vm34, %v28, 0.0
  %42 = vadd.xlane.f32.xlu0 %v41
  %v43 = vpop.xlane.xlu0 %42
  %v44 = vsel %vm34, %v29, 0.0
  %45 = vadd.xlane.f32.xlu0 %v44
  %v46 = vpop.xlane.xlu0 %45
  %v47 = vsel %vm34, %v30, 0.0
  %48 = vadd.xlane.f32.xlu0 %v47
  %v49 = vpop.xlane.xlu0 %48
  %v50 = vsel %vm34, %v31, 0.0
  %51 = vadd.xlane.f32.xlu0 %v50
  %v52 = vpop.xlane.xlu0 %51
  %v53 = vsel %vm34, %v32, 0.0
  %54 = vadd.xlane.f32.xlu0 %v53
  %v55 = vpop.xlane.xlu0 %54
  %v56 = vsel %vm34, %v33, 0.0
  %57 = vadd.xlane.f32.xlu0 %v56
  %v58 = vpop.xlane.xlu0 %57
  %v59 = vrcp.pop 16.0
  %v60 = vmul.f32 %v37, %v59
  %v61 = vmul.f32 %v40, %v59
  %v62 = vmul.f32 %v43, %v59
  %v63 = vmul.f32 %v46, %v59
  %v64 = vmul.f32 %v49, %v59
  %v65 = vmul.f32 %v52, %v59
  %v66 = vmul.f32 %v55, %v59
  %v67 = vmul.f32 %v58, %v59
  %v68 = vsub.f32 %v26, %v60
  %v69 = vsub.f32 %v27, %v61
  %v70 = vsub.f32 %v28, %v62
  %v71 = vsub.f32 %v29, %v63
  %v72 = vsub.f32 %v30, %v64
  %v73 = vsub.f32 %v31, %v65
  %v74 = vsub.f32 %v32, %v66
  %v75 = vsub.f32 %v33, %v67
  %v76 = vmul.f32 %v68, %v68
  %v77 = vmul.f32 %v69, %v69
  %v78 = vmul.f32 %v70, %v70
  %v79 = vmul.f32 %v71, %v71
  %v80 = vmul.f32 %v72, %v72
  %v81 = vmul.f32 %v73, %v73
  %v82 = vmul.f32 %v74, %v74
  %v83 = vmul.f32 %v75, %v75
  %v84 = vsel %vm34, %v76, 0.0
  %85 = vadd.xlane.f32.xlu0 %v84
  %v86 = vpop.xlane.xlu0 %85
  %v87 = vsel %vm34, %v77, 0.0
  %88 = vadd.xlane.f32.xlu0 %v87
  %v89 = vpop.xlane.xlu0 %88
  %v90 = vsel %vm34, %v78, 0.0
  %91 = vadd.xlane.f32.xlu0 %v90
  %v92 = vpop.xlane.xlu0 %91
  %v93 = vsel %vm34, %v79, 0.0
  %94 = vadd.xlane.f32.xlu0 %v93
  %v95 = vpop.xlane.xlu0 %94
  %v96 = vsel %vm34, %v80, 0.0
  %97 = vadd.xlane.f32.xlu0 %v96
  %v98 = vpop.xlane.xlu0 %97
  %v99 = vsel %vm34, %v81, 0.0
  %100 = vadd.xlane.f32.xlu0 %v99
  %v101 = vpop.xlane.xlu0 %100
  %v102 = vsel %vm34, %v82, 0.0
  %103 = vadd.xlane.f32.xlu0 %v102
  %v104 = vpop.xlane.xlu0 %103
  %v105 = vsel %vm34, %v83, 0.0
  %106 = vadd.xlane.f32.xlu0 %v105
  %v107 = vpop.xlane.xlu0 %106
  %v108 = vmul.f32 %v86, %v59
  %v109 = vmul.f32 %v89, %v59
  %v110 = vmul.f32 %v92, %v59
  %v111 = vmul.f32 %v95, %v59
  %v112 = vmul.f32 %v98, %v59
  %v113 = vmul.f32 %v101, %v59
  %v114 = vmul.f32 %v104, %v59
  %v115 = vmul.f32 %v107, %v59
  %v116 = vadd.f32 %v108, 1e-05
  %v117 = vadd.f32 %v109, 1e-05
  %v118 = vadd.f32 %v110, 1e-05
  %v119 = vadd.f32 %v111, 1e-05
  %v120 = vadd.f32 %v112, 1e-05
  %v121 = vadd.f32 %v113, 1e-05
  %v122 = vadd.f32 %v114, 1e-05
  %v123 = vadd.f32 %v115, 1e-05
  %v124 = vrsqrt.pop %v116
  %v125 = vrsqrt.pop %v117
  %v126 = vrsqrt.pop %v118
  %v127 = vrsqrt.pop %v119
  %v128 = vrsqrt.pop %v120
  %v129 = vrsqrt.pop %v121
  %v130 = vrsqrt.pop %v122
  %v131 = vrsqrt.pop %v123
  %v132 = vmul.f32 %v68, %v124
  %v133 = vmul.f32 %v69, %v125
  %v134 = vmul.f32 %v70, %v126
  %v135 = vmul.f32 %v71, %v127
  %v136 = vmul.f32 %v72, %v128
  %v137 = vmul.f32 %v73, %v129
  %v138 = vmul.f32 %v74, %v130
  %v139 = vmul.f32 %v75, %v131
  %v140 = vld [vmem:[%s1] sm:$0x1]
  %v142 = vlaneseq
  %v143 = vshrl.u32 %v142, 7
  %v144 = vsub.s32 0, %v143
  %v145 = vrot.slane %v140, %v144
  %v147 = vmul.f32 %v132, %v145
  %v148 = vmul.f32 %v133, %v145
  %v149 = vmul.f32 %v134, %v145
  %v150 = vmul.f32 %v135, %v145
  %v151 = vmul.f32 %v136, %v145
  %v152 = vmul.f32 %v137, %v145
  %v153 = vmul.f32 %v138, %v145
  %v154 = vmul.f32 %v139, %v145
  %v155 = vld [vmem:[%s2] sm:$0x1]
  %v157 = vlaneseq
  %v158 = vshrl.u32 %v157, 7
  %v159 = vsub.s32 0, %v158
  %v160 = vrot.slane %v155, %v159
  %v162 = vadd.f32 %v147, %v160
  %v163 = vadd.f32 %v148, %v160
  %v164 = vadd.f32 %v149, %v160
  %v165 = vadd.f32 %v150, %v160
  %v166 = vadd.f32 %v151, %v160
  %v167 = vadd.f32 %v152, %v160
  %v168 = vadd.f32 %v153, %v160
  %v169 = vadd.f32 %v154, %v160
  %v170 = vld [vmem:[%s3] sm:$0xff]
  %v171 = vld [vmem:[%s3 + $0x8] sm:$0xff]
  %v172 = vld [vmem:[%s4] sm:$0x1]
  %v174 = vlaneseq
  %v175 = vshrl.u32 %v174, 7
  %v176 = vsub.s32 0, %v175
  %v177 = vrot.slane %v172, %v176
  %v180 = vsel %vm34, %v162, 0
  %v183 = vsel %vm34, %v163, 0
  %v186 = vsel %vm34, %v164, 0
  %v189 = vsel %vm34, %v165, 0
  %v192 = vsel %vm34, %v166, 0
  %v195 = vsel %vm34, %v167, 0
  %v198 = vsel %vm34, %v168, 0
  %v201 = vsel %vm34, %v169, 0
  %203 = vmatprep.subr.mxu0 0.0
  %204 = vmatpush1.msra.mxu0 0.0
  %205 = vmatprep.subr.mxu0 0.0
  %206 = vmatpush1.msra.mxu0 0.0
  %207 = vmatprep.subr.mxu0 0.0
  %208 = vmatpush1.msra.mxu0 0.0
  %209 = vmatprep.subr.mxu0 0.0
  %210 = vmatpush1.msra.mxu0 0.0
  %211 = vmatprep.subr.mxu0 0.0
  %212 = vmatpush1.msra.mxu0 0.0
  %213 = vmatprep.subr.mxu0 0.0
  %214 = vmatpush1.msra.mxu0 0.0
  %215 = vmatprep.subr.mxu0 0.0
  %216 = vmatpush1.msra.mxu0 0.0
  %217 = vmatprep.subr.mxu0 0.0
  %218 = vmatpush1.msra.mxu0 0.0
  %219 = vmatprep.subr.mxu0 0.0
  %220 = vmatpush1.msra.mxu0 0.0
  %221 = vmatprep.subr.mxu0 0.0
  %222 = vmatpush1.msra.mxu0 0.0
  %223 = vmatprep.subr.mxu0 0.0
  %224 = vmatpush1.msra.mxu0 0.0
  %225 = vmatprep.subr.mxu0 0.0
  %226 = vmatpush1.msra.mxu0 0.0
  %227 = vmatprep.subr.mxu0 0.0
  %228 = vmatpush1.msra.mxu0 0.0
  %229 = vmatprep.subr.mxu0 0.0
  %230 = vmatpush1.msra.mxu0 0.0
  %231 = vmatprep.subr.mxu0 0.0
  %232 = vmatpush1.msra.mxu0 %v171
  %233 = vmatprep.subr.mxu0 0.0
  %234 = vmatpush1.msra.mxu0 %v170
  %235 = vmatprep.subr.mxu0 0.0
  %236 = vmatpush2.msra.mxu0 0.0
  %237 = vmatprep.subr.mxu0 0.0
  %238 = vmatpush2.msra.mxu0 0.0
  %239 = vmatprep.subr.mxu0 0.0
  %240 = vmatpush2.msra.mxu0 0.0
  %241 = vmatprep.subr.mxu0 0.0
  %242 = vmatpush2.msra.mxu0 0.0
  %243 = vmatprep.subr.mxu0 0.0
  %244 = vmatpush2.msra.mxu0 0.0
  %245 = vmatprep.subr.mxu0 0.0
  %246 = vmatpush2.msra.mxu0 0.0
  %247 = vmatprep.subr.mxu0 0.0
  %248 = vmatpush2.msra.mxu0 0.0
  %249 = vmatprep.subr.mxu0 0.0
  %250 = vmatpush2.msra.mxu0 0.0
  %251 = vmatprep.subr.mxu0 0.0
  %252 = vmatpush2.msra.mxu0 0.0
  %253 = vmatprep.subr.mxu0 0.0
  %254 = vmatpush2.msra.mxu0 0.0
  %255 = vmatprep.subr.mxu0 0.0
  %256 = vmatpush2.msra.mxu0 0.0
  %257 = vmatprep.subr.mxu0 0.0
  %258 = vmatpush2.msra.mxu0 0.0
  %259 = vmatprep.subr.mxu0 0.0
  %260 = vmatpush2.msra.mxu0 0.0
  %261 = vmatprep.subr.mxu0 0.0
  %262 = vmatpush2.msra.mxu0 0.0
  %263 = vmatprep.subr.mxu0 0.0
  %264 = vmatpush2.msra.mxu0 0.0
  %265 = vmatprep.subr.mxu0 0.0
  %266 = vmatpush2.msra.mxu0 0.0
  %267 = vmatprep.mubr.f32.mxu0 0.0
  %268 = vmatmul.mubr.f32.gmra.mxu0 %v180
  %v269 = vpop.f32.mrf.mxu0
  %v270 = vadd.f32 %v177, %v269
  %v271 = vpop.f32.mrf.mxu0
  %272 = vmatprep.mubr.f32.mxu0 0.0
  %273 = vmatmul.mubr.f32.gmra.mxu0 %v183
  %v274 = vpop.f32.mrf.mxu0
  %v275 = vadd.f32 %v177, %v274
  %v276 = vpop.f32.mrf.mxu0
  %277 = vmatprep.mubr.f32.mxu0 0.0
  %278 = vmatmul.mubr.f32.gmra.mxu0 %v186
  %v279 = vpop.f32.mrf.mxu0
  %v280 = vadd.f32 %v177, %v279
  %v281 = vpop.f32.mrf.mxu0
  %282 = vmatprep.mubr.f32.mxu0 0.0
  %283 = vmatmul.mubr.f32.gmra.mxu0 %v189
  %v284 = vpop.f32.mrf.mxu0
  %v285 = vadd.f32 %v177, %v284
  %v286 = vpop.f32.mrf.mxu0
  %287 = vmatprep.mubr.f32.mxu0 0.0
  %288 = vmatmul.mubr.f32.gmra.mxu0 %v192
  %v289 = vpop.f32.mrf.mxu0
  %v290 = vadd.f32 %v177, %v289
  %v291 = vpop.f32.mrf.mxu0
  %292 = vmatprep.mubr.f32.mxu0 0.0
  %293 = vmatmul.mubr.f32.gmra.mxu0 %v195
  %v294 = vpop.f32.mrf.mxu0
  %v295 = vadd.f32 %v177, %v294
  %v296 = vpop.f32.mrf.mxu0
  %297 = vmatprep.mubr.f32.mxu0 0.0
  %298 = vmatmul.mubr.f32.gmra.mxu0 %v198
  %v299 = vpop.f32.mrf.mxu0
  %v300 = vadd.f32 %v177, %v299
  %v301 = vpop.f32.mrf.mxu0
  %302 = vmatprep.mubr.f32.mxu0 0.0
  %303 = vmatmul.mubr.f32.gmra.mxu0 %v201
  %v304 = vpop.f32.mrf.mxu0
  %v305 = vadd.f32 %v177, %v304
  %v306 = vpop.f32.mrf.mxu0
  %307 = vdwg.mxu0
  %v308 = vmul.f32 %v270, 0.70710677
  %v309 = vmul.f32 %v275, 0.70710677
  %v310 = vmul.f32 %v280, 0.70710677
  %v311 = vmul.f32 %v285, 0.70710677
  %v312 = vmul.f32 %v290, 0.70710677
  %v313 = vmul.f32 %v295, 0.70710677
  %v314 = vmul.f32 %v300, 0.70710677
  %v315 = vmul.f32 %v305, 0.70710677
  %v316 = vand.u32 2147483647, %v308
  %v317 = vand.u32 2147483647, %v309
  %v318 = vand.u32 2147483647, %v310
  %v319 = vand.u32 2147483647, %v311
  %v320 = vand.u32 2147483647, %v312
  %v321 = vand.u32 2147483647, %v313
  %v322 = vand.u32 2147483647, %v314
  %v323 = vand.u32 2147483647, %v315
  %v324 = vmul.f32 %v316, 0.3275911
  %v325 = vmul.f32 %v317, 0.3275911
  %v326 = vmul.f32 %v318, 0.3275911
  %v327 = vmul.f32 %v319, 0.3275911
  %v328 = vmul.f32 %v320, 0.3275911
  %v329 = vmul.f32 %v321, 0.3275911
  %v330 = vmul.f32 %v322, 0.3275911
  %v331 = vmul.f32 %v323, 0.3275911
  %v332 = vadd.f32 %v324, 1.0
  %v333 = vadd.f32 %v325, 1.0
  %v334 = vadd.f32 %v326, 1.0
  %v335 = vadd.f32 %v327, 1.0
  %v336 = vadd.f32 %v328, 1.0
  %v337 = vadd.f32 %v329, 1.0
  %v338 = vadd.f32 %v330, 1.0
  %v339 = vadd.f32 %v331, 1.0
  %v340 = vrcp.pop %v332
  %v341 = vmul.f32 1.0, %v340
  %v342 = vrcp.pop %v333
  %v343 = vmul.f32 1.0, %v342
  %v344 = vrcp.pop %v334
  %v345 = vmul.f32 1.0, %v344
  %v346 = vrcp.pop %v335
  %v347 = vmul.f32 1.0, %v346
  %v348 = vrcp.pop %v336
  %v349 = vmul.f32 1.0, %v348
  %v350 = vrcp.pop %v337
  %v351 = vmul.f32 1.0, %v350
  %v352 = vrcp.pop %v338
  %v353 = vmul.f32 1.0, %v352
  %v354 = vrcp.pop %v339
  %v355 = vmul.f32 1.0, %v354
  %v356 = vmul.f32 %v341, 1.0614054
  %v357 = vmul.f32 %v343, 1.0614054
  %v358 = vmul.f32 %v345, 1.0614054
  %v359 = vmul.f32 %v347, 1.0614054
  %v360 = vmul.f32 %v349, 1.0614054
  %v361 = vmul.f32 %v351, 1.0614054
  %v362 = vmul.f32 %v353, 1.0614054
  %v363 = vmul.f32 %v355, 1.0614054
  %v364 = vsub.f32 %v356, 1.4531521
  %v365 = vsub.f32 %v357, 1.4531521
  %v366 = vsub.f32 %v358, 1.4531521
  %v367 = vsub.f32 %v359, 1.4531521
  %v368 = vsub.f32 %v360, 1.4531521
  %v369 = vsub.f32 %v361, 1.4531521
  %v370 = vsub.f32 %v362, 1.4531521
  %v371 = vsub.f32 %v363, 1.4531521
  %v372 = vmul.f32 %v364, %v341
  %v373 = vmul.f32 %v365, %v343
  %v374 = vmul.f32 %v366, %v345
  %v375 = vmul.f32 %v367, %v347
  %v376 = vmul.f32 %v368, %v349
  %v377 = vmul.f32 %v369, %v351
  %v378 = vmul.f32 %v370, %v353
  %v379 = vmul.f32 %v371, %v355
  %v380 = vadd.f32 %v372, 1.4214138
  %v381 = vadd.f32 %v373, 1.4214138
  %v382 = vadd.f32 %v374, 1.4214138
  %v383 = vadd.f32 %v375, 1.4214138
  %v384 = vadd.f32 %v376, 1.4214138
  %v385 = vadd.f32 %v377, 1.4214138
  %v386 = vadd.f32 %v378, 1.4214138
  %v387 = vadd.f32 %v379, 1.4214138
  %v388 = vmul.f32 %v380, %v341
  %v389 = vmul.f32 %v381, %v343
  %v390 = vmul.f32 %v382, %v345
  %v391 = vmul.f32 %v383, %v347
  %v392 = vmul.f32 %v384, %v349
  %v393 = vmul.f32 %v385, %v351
  %v394 = vmul.f32 %v386, %v353
  %v395 = vmul.f32 %v387, %v355
  %v396 = vsub.f32 %v388, 0.28449672
  %v397 = vsub.f32 %v389, 0.28449672
  %v398 = vsub.f32 %v390, 0.28449672
  %v399 = vsub.f32 %v391, 0.28449672
  %v400 = vsub.f32 %v392, 0.28449672
  %v401 = vsub.f32 %v393, 0.28449672
  %v402 = vsub.f32 %v394, 0.28449672
  %v403 = vsub.f32 %v395, 0.28449672
  %v404 = vmul.f32 %v396, %v341
  %v405 = vmul.f32 %v397, %v343
  %v406 = vmul.f32 %v398, %v345
  %v407 = vmul.f32 %v399, %v347
  %v408 = vmul.f32 %v400, %v349
  %v409 = vmul.f32 %v401, %v351
  %v410 = vmul.f32 %v402, %v353
  %v411 = vmul.f32 %v403, %v355
  %v412 = vadd.f32 %v404, 0.2548296
  %v413 = vadd.f32 %v405, 0.2548296
  %v414 = vadd.f32 %v406, 0.2548296
  %v415 = vadd.f32 %v407, 0.2548296
  %v416 = vadd.f32 %v408, 0.2548296
  %v417 = vadd.f32 %v409, 0.2548296
  %v418 = vadd.f32 %v410, 0.2548296
  %v419 = vadd.f32 %v411, 0.2548296
  %v420 = vmul.f32 %v412, %v341
  %v421 = vmul.f32 %v413, %v343
  %v422 = vmul.f32 %v414, %v345
  %v423 = vmul.f32 %v415, %v347
  %v424 = vmul.f32 %v416, %v349
  %v425 = vmul.f32 %v417, %v351
  %v426 = vmul.f32 %v418, %v353
  %v427 = vmul.f32 %v419, %v355
  %v428 = vsub.f32 0.0, %v316
  %v429 = vsub.f32 0.0, %v317
  %v430 = vsub.f32 0.0, %v318
  %v431 = vsub.f32 0.0, %v319
  %v432 = vsub.f32 0.0, %v320
  %v433 = vsub.f32 0.0, %v321
  %v434 = vsub.f32 0.0, %v322
  %v435 = vsub.f32 0.0, %v323
  %v436 = vmul.f32 %v428, %v316
  %v437 = vmul.f32 %v429, %v317
  %v438 = vmul.f32 %v430, %v318
  %v439 = vmul.f32 %v431, %v319
  %v440 = vmul.f32 %v432, %v320
  %v441 = vmul.f32 %v433, %v321
  %v442 = vmul.f32 %v434, %v322
  %v443 = vmul.f32 %v435, %v323
  %v444 = vmul.f32 %v436, 1.442695
  %v445 = vpow.pop %v444
  %v446 = vmul.f32 %v437, 1.442695
  %v447 = vpow.pop %v446
  %v448 = vmul.f32 %v438, 1.442695
  %v449 = vpow.pop %v448
  %v450 = vmul.f32 %v439, 1.442695
  %v451 = vpow.pop %v450
  %v452 = vmul.f32 %v440, 1.442695
  %v453 = vpow.pop %v452
  %v454 = vmul.f32 %v441, 1.442695
  %v455 = vpow.pop %v454
  %v456 = vmul.f32 %v442, 1.442695
  %v457 = vpow.pop %v456
  %v458 = vmul.f32 %v443, 1.442695
  %v459 = vpow.pop %v458
  %v460 = vmul.f32 %v420, %v445
  %v461 = vmul.f32 %v421, %v447
  %v462 = vmul.f32 %v422, %v449
  %v463 = vmul.f32 %v423, %v451
  %v464 = vmul.f32 %v424, %v453
  %v465 = vmul.f32 %v425, %v455
  %v466 = vmul.f32 %v426, %v457
  %v467 = vmul.f32 %v427, %v459
  %v468 = vsub.f32 1.0, %v460
  %v469 = vsub.f32 1.0, %v461
  %v470 = vsub.f32 1.0, %v462
  %v471 = vsub.f32 1.0, %v463
  %v472 = vsub.f32 1.0, %v464
  %v473 = vsub.f32 1.0, %v465
  %v474 = vsub.f32 1.0, %v466
  %v475 = vsub.f32 1.0, %v467
  %vm476 = vcmp.ge.f32.partialorder %v308, 0.0
  %vm477 = vcmp.ge.f32.partialorder %v309, 0.0
  %vm478 = vcmp.ge.f32.partialorder %v310, 0.0
  %vm479 = vcmp.ge.f32.partialorder %v311, 0.0
  %vm480 = vcmp.ge.f32.partialorder %v312, 0.0
  %vm481 = vcmp.ge.f32.partialorder %v313, 0.0
  %vm482 = vcmp.ge.f32.partialorder %v314, 0.0
  %vm483 = vcmp.ge.f32.partialorder %v315, 0.0
  %v484 = vsub.f32 0.0, %v468
  %v485 = vsub.f32 0.0, %v469
  %v486 = vsub.f32 0.0, %v470
  %v487 = vsub.f32 0.0, %v471
  %v488 = vsub.f32 0.0, %v472
  %v489 = vsub.f32 0.0, %v473
  %v490 = vsub.f32 0.0, %v474
  %v491 = vsub.f32 0.0, %v475
  %v492 = vsel %vm476, %v468, %v484
  %v493 = vsel %vm477, %v469, %v485
  %v494 = vsel %vm478, %v470, %v486
  %v495 = vsel %vm479, %v471, %v487
  %v496 = vsel %vm480, %v472, %v488
  %v497 = vsel %vm481, %v473, %v489
  %v498 = vsel %vm482, %v474, %v490
  %v499 = vsel %vm483, %v475, %v491
  %v500 = vmul.f32 %v270, 0.5
  %v501 = vmul.f32 %v275, 0.5
  %v502 = vmul.f32 %v280, 0.5
  %v503 = vmul.f32 %v285, 0.5
  %v504 = vmul.f32 %v290, 0.5
  %v505 = vmul.f32 %v295, 0.5
  %v506 = vmul.f32 %v300, 0.5
  %v507 = vmul.f32 %v305, 0.5
  %v508 = vadd.f32 %v492, 1.0
  %v509 = vadd.f32 %v493, 1.0
  %v510 = vadd.f32 %v494, 1.0
  %v511 = vadd.f32 %v495, 1.0
  %v512 = vadd.f32 %v496, 1.0
  %v513 = vadd.f32 %v497, 1.0
  %v514 = vadd.f32 %v498, 1.0
  %v515 = vadd.f32 %v499, 1.0
  %v516 = vmul.f32 %v500, %v508
  %v517 = vmul.f32 %v501, %v509
  %v518 = vmul.f32 %v502, %v510
  %v519 = vmul.f32 %v503, %v511
  %v520 = vmul.f32 %v504, %v512
  %v521 = vmul.f32 %v505, %v513
  %v522 = vmul.f32 %v506, %v514
  %v523 = vmul.f32 %v507, %v515
  %v524 = vld [vmem:[%s5] sm:$0xff]
  %v525 = vld [vmem:[%s5 + $0x8] sm:$0xff]
  %v526 = vld [vmem:[%s5 + $0x10] sm:$0xff]
  %v527 = vld [vmem:[%s5 + $0x18] sm:$0xff]
  %v528 = vld [vmem:[%s5 + $0x20] sm:$0xff]
  %v529 = vld [vmem:[%s5 + $0x28] sm:$0xff]
  %v530 = vld [vmem:[%s5 + $0x30] sm:$0xff]
  %v531 = vld [vmem:[%s5 + $0x38] sm:$0xff]
  %v532 = vld [vmem:[%s6] sm:$0x1]
  %v534 = vlaneseq
  %v535 = vshrl.u32 %v534, 7
  %v536 = vsub.s32 0, %v535
  %v537 = vrot.slane %v532, %v536
  %vm539 = vcmask 523264
  %v541 = vsel %vm539, %v516, 0
  %v544 = vsel %vm539, %v517, 0
  %v547 = vsel %vm539, %v518, 0
  %v550 = vsel %vm539, %v519, 0
  %v553 = vsel %vm539, %v520, 0
  %v556 = vsel %vm539, %v521, 0
  %v559 = vsel %vm539, %v522, 0
  %v562 = vsel %vm539, %v523, 0
  %564 = vmatprep.subr.mxu0 0.0
  %565 = vmatpush1.msra.mxu0 0.0
  %566 = vmatprep.subr.mxu0 0.0
  %567 = vmatpush1.msra.mxu0 0.0
  %568 = vmatprep.subr.mxu0 0.0
  %569 = vmatpush1.msra.mxu0 0.0
  %570 = vmatprep.subr.mxu0 0.0
  %571 = vmatpush1.msra.mxu0 0.0
  %572 = vmatprep.subr.mxu0 0.0
  %573 = vmatpush1.msra.mxu0 0.0
  %574 = vmatprep.subr.mxu0 0.0
  %575 = vmatpush1.msra.mxu0 0.0
  %576 = vmatprep.subr.mxu0 0.0
  %577 = vmatpush1.msra.mxu0 0.0
  %578 = vmatprep.subr.mxu0 0.0
  %579 = vmatpush1.msra.mxu0 0.0
  %580 = vmatprep.subr.mxu0 0.0
  %581 = vmatpush1.msra.mxu0 %v531
  %582 = vmatprep.subr.mxu0 0.0
  %583 = vmatpush1.msra.mxu0 %v530
  %584 = vmatprep.subr.mxu0 0.0
  %585 = vmatpush1.msra.mxu0 %v529
  %586 = vmatprep.subr.mxu0 0.0
  %587 = vmatpush1.msra.mxu0 %v528
  %588 = vmatprep.subr.mxu0 0.0
  %589 = vmatpush1.msra.mxu0 %v527
  %590 = vmatprep.subr.mxu0 0.0
  %591 = vmatpush1.msra.mxu0 %v526
  %592 = vmatprep.subr.mxu0 0.0
  %593 = vmatpush1.msra.mxu0 %v525
  %594 = vmatprep.subr.mxu0 0.0
  %595 = vmatpush1.msra.mxu0 %v524
  %596 = vmatprep.subr.mxu0 0.0
  %597 = vmatpush2.msra.mxu0 0.0
  %598 = vmatprep.subr.mxu0 0.0
  %599 = vmatpush2.msra.mxu0 0.0
  %600 = vmatprep.subr.mxu0 0.0
  %601 = vmatpush2.msra.mxu0 0.0
  %602 = vmatprep.subr.mxu0 0.0
  %603 = vmatpush2.msra.mxu0 0.0
  %604 = vmatprep.subr.mxu0 0.0
  %605 = vmatpush2.msra.mxu0 0.0
  %606 = vmatprep.subr.mxu0 0.0
  %607 = vmatpush2.msra.mxu0 0.0
  %608 = vmatprep.subr.mxu0 0.0
  %609 = vmatpush2.msra.mxu0 0.0
  %610 = vmatprep.subr.mxu0 0.0
  %611 = vmatpush2.msra.mxu0 0.0
  %612 = vmatprep.subr.mxu0 0.0
  %613 = vmatpush2.msra.mxu0 0.0
  %614 = vmatprep.subr.mxu0 0.0
  %615 = vmatpush2.msra.mxu0 0.0
  %616 = vmatprep.subr.mxu0 0.0
  %617 = vmatpush2.msra.mxu0 0.0
  %618 = vmatprep.subr.mxu0 0.0
  %619 = vmatpush2.msra.mxu0 0.0
  %620 = vmatprep.subr.mxu0 0.0
  %621 = vmatpush2.msra.mxu0 0.0
  %622 = vmatprep.subr.mxu0 0.0
  %623 = vmatpush2.msra.mxu0 0.0
  %624 = vmatprep.subr.mxu0 0.0
  %625 = vmatpush2.msra.mxu0 0.0
  %626 = vmatprep.subr.mxu0 0.0
  %627 = vmatpush2.msra.mxu0 0.0
  %628 = vmatprep.mubr.f32.mxu0 0.0
  %629 = vmatmul.mubr.f32.gmra.mxu0 %v541
  %v630 = vpop.f32.mrf.mxu0
  %v631 = vadd.f32 %v537, %v630
  %v632 = vpop.f32.mrf.mxu0
  %633 = vmatprep.mubr.f32.mxu0 0.0
  %634 = vmatmul.mubr.f32.gmra.mxu0 %v544
  %v635 = vpop.f32.mrf.mxu0
  %v636 = vadd.f32 %v537, %v635
  %v637 = vpop.f32.mrf.mxu0
  %638 = vmatprep.mubr.f32.mxu0 0.0
  %639 = vmatmul.mubr.f32.gmra.mxu0 %v547
  %v640 = vpop.f32.mrf.mxu0
  %v641 = vadd.f32 %v537, %v640
  %v642 = vpop.f32.mrf.mxu0
  %643 = vmatprep.mubr.f32.mxu0 0.0
  %644 = vmatmul.mubr.f32.gmra.mxu0 %v550
  %v645 = vpop.f32.mrf.mxu0
  %v646 = vadd.f32 %v537, %v645
  %v647 = vpop.f32.mrf.mxu0
  %648 = vmatprep.mubr.f32.mxu0 0.0
  %649 = vmatmul.mubr.f32.gmra.mxu0 %v553
  %v650 = vpop.f32.mrf.mxu0
  %v651 = vadd.f32 %v537, %v650
  %v652 = vpop.f32.mrf.mxu0
  %653 = vmatprep.mubr.f32.mxu0 0.0
  %654 = vmatmul.mubr.f32.gmra.mxu0 %v556
  %v655 = vpop.f32.mrf.mxu0
  %v656 = vadd.f32 %v537, %v655
  %v657 = vpop.f32.mrf.mxu0
  %658 = vmatprep.mubr.f32.mxu0 0.0
  %659 = vmatmul.mubr.f32.gmra.mxu0 %v559
  %v660 = vpop.f32.mrf.mxu0
  %v661 = vadd.f32 %v537, %v660
  %v662 = vpop.f32.mrf.mxu0
  %663 = vmatprep.mubr.f32.mxu0 0.0
  %664 = vmatmul.mubr.f32.gmra.mxu0 %v562
  %v665 = vpop.f32.mrf.mxu0
  %v666 = vadd.f32 %v537, %v665
  %v667 = vpop.f32.mrf.mxu0
  %668 = vdwg.mxu0
  %v669 = vadd.f32 %v26, %v631
  %v670 = vadd.f32 %v27, %v636
  %v671 = vadd.f32 %v28, %v641
  %v672 = vadd.f32 %v29, %v646
  %v673 = vadd.f32 %v30, %v651
  %v674 = vadd.f32 %v31, %v656
  %v675 = vadd.f32 %v32, %v661
  %v676 = vadd.f32 %v33, %v666
  %677 = vst.msk [vmem:[%s7] sm:$0xff] %vm34, %v669
  %678 = vst.msk [vmem:[%s7 + $0x8] sm:$0xff] %vm34, %v670
  %679 = vst.msk [vmem:[%s7 + $0x10] sm:$0xff] %vm34, %v671
  %680 = vst.msk [vmem:[%s7 + $0x18] sm:$0xff] %vm34, %v672
  %681 = vst.msk [vmem:[%s7 + $0x20] sm:$0xff] %vm34, %v673
  %682 = vst.msk [vmem:[%s7 + $0x28] sm:$0xff] %vm34, %v674
  %683 = vst.msk [vmem:[%s7 + $0x30] sm:$0xff] %vm34, %v675
  %684 = vst.msk [vmem:[%s7 + $0x38] sm:$0xff] %vm34, %v676
  // Predicated region
  $region30: #{eegjepa_forward.25} parent=0 // pred_check
    _
  $region31: #{eegjepa_forward.25} parent=0 // pred_check_branch
    %686 = sbr.rel (0) target = $region33
  $region32: #{eegjepa_forward.25} parent=0 // pred_region
    _
  $region33: #{eegjepa_forward.25} parent=0 // pred_fallthru
    _
  // Predicated region
  $region34: #{eegjepa_forward.25} parent=0 // pred_check
    _
  $region35: #{eegjepa_forward.25} parent=0 // pred_check_branch
    %688 = sbr.rel (0) target = $region37
  $region36: #{eegjepa_forward.25} parent=0 // pred_region
    _
  $region37: #{eegjepa_forward.25} parent=0 // pred_fallthru
    _

</llo_original>
